<compile_context>
chip_gen: v7x
topology: tpu7x:2x2x1
jax: 0.10.0
libtpu: 0.0.40
codegen_flags: <defaults>
</compile_context>

<pallas_src>
import functools

import jax
import jax.numpy as jnp
from jax import lax
from jax.experimental import pallas as pl
from jax.experimental.pallas import tpu as pltpu


# ---------------------------------------------------------------------------
# In-kernel math on a chunk of images, flattened spatial layout (N, C, H*W).
# ---------------------------------------------------------------------------
def _apply_ops(x, fp, ip, *, H, W, shift_h, shift_w, cut_h, cut_w,
               do_color, do_translation, do_cutout):
    """x: (N, C, H*W) f32, fp: (N, 3) f32, ip: (N, 4) i32."""
    HW = H * W

    gi = gj = None
    if do_translation or do_cutout:
        flat = lax.broadcasted_iota(jnp.int32, (1, 1, HW), 2)
        if (W & (W - 1)) == 0:  # power of two -> cheap shift/and
            gj = jnp.bitwise_and(flat, W - 1)
            gi = jnp.right_shift(flat, W.bit_length() - 1)
        else:
            gi = flat // W
            gj = flat - gi * W

    if do_color:
        br = fp[:, 0][:, None, None]    # brightness delta in [-0.5, 0.5)
        sat = fp[:, 1][:, None, None]   # saturation factor in [0, 2)
        con = fp[:, 2][:, None, None]   # contrast factor in [0.5, 1.5)
        x = x + br
        cmean = jnp.mean(x, axis=1, keepdims=True)          # per-pixel channel mean
        x = (x - cmean) * sat + cmean
        gmean = jnp.mean(jnp.mean(x, axis=2, keepdims=True),
                         axis=1, keepdims=True)              # per-image mean
        x = (x - gmean) * con + gmean

    if do_translation:
        tx = ip[:, 0][:, None, None]
        ty = ip[:, 1][:, None, None]
        # Vertical zero-padded shift: out[i, j] = x[i + tx, j].
        sel = x
        for d in range(-shift_h, shift_h + 1):
            if d == 0:
                continue
            sel = jnp.where(tx == d, jnp.roll(x, -d * W, axis=2), sel)
        ii = gi + tx
        x = jnp.where((ii >= 0) & (ii < H), sel, 0.0)
        # Horizontal zero-padded shift: out[i, j] = x[i, j + ty].
        sel = x
        for e in range(-shift_w, shift_w + 1):
            if e == 0:
                continue
            sel = jnp.where(ty == e, jnp.roll(x, -e, axis=2), sel)
        jj = gj + ty
        x = jnp.where((jj >= 0) & (jj < W), sel, 0.0)

    if do_cutout:
        ox = ip[:, 2][:, None, None]
        oy = ip[:, 3][:, None, None]
        x0 = ox - cut_h // 2
        y0 = oy - cut_w // 2
        hole = ((gi >= x0) & (gi < x0 + cut_h) &
                (gj >= y0) & (gj < y0 + cut_w))
        x = jnp.where(hole, 0.0, x)

    return x


def _diffaug_kernel(x_ref, fp_ref, ip_ref, o_ref, *,
                    chunk, n_chunks, H, W, shift_h, shift_w, cut_h, cut_w,
                    do_color, do_translation, do_cutout):
    # Process the block in small fixed-size image chunks: block-sized DMAs,
    # chunk-sized live vector values (bounded vreg pressure).
    for c in range(n_chunks):
        sl = pl.ds(c * chunk, chunk)
        x = x_ref[sl].astype(jnp.float32)   # (chunk, C, H*W)
        fp = fp_ref[sl]                     # (chunk, 3) f32
        ip = ip_ref[sl]                     # (chunk, 4) i32
        y = _apply_ops(
            x, fp, ip, H=H, W=W, shift_h=shift_h, shift_w=shift_w,
            cut_h=cut_h, cut_w=cut_w, do_color=do_color,
            do_translation=do_translation, do_cutout=do_cutout)
        o_ref[sl] = y.astype(o_ref.dtype)


# ---------------------------------------------------------------------------
# Wrapper
# ---------------------------------------------------------------------------
def _pick_block_images(batch, per_image_bytes, *,
                       max_block_bytes=2 * 1024 * 1024, max_images=256):
    cap = max(1, min(max_images, max_block_bytes // max(per_image_bytes, 1)))
    if batch <= cap:
        return batch
    for tb in range(int(cap), 7, -1):
        if batch % tb == 0 and tb % 8 == 0:
            return tb
    return batch  # whole batch as one block (always spec-legal)


def diff_aug_layer(x, fparams, iparams, policy, *, block_images=None):
    """Pallas implementation of DiffAugLayer.forward (NCHW).

    fparams: (B, 3) f32 = [brightness delta, saturation factor, contrast factor]
    iparams: (B, 4) i32 = [translation_x, translation_y, cutout_offset_x, cutout_offset_y]
    """
    ops = [p.strip() for p in policy.split(',') if p.strip()] if policy else []
    if not ops:
        return x  # empty policy => identity (matches DiffAugment)

    B, C, H, W = x.shape
    HW = H * W
    shift_h = int(H * 0.125 + 0.5)
    shift_w = int(W * 0.125 + 0.5)
    cut_h = int(H * 0.5 + 0.5)
    cut_w = int(W * 0.5 + 0.5)

    per_image_bytes = C * HW * x.dtype.itemsize
    if block_images is None:
        tb = _pick_block_images(B, per_image_bytes)
    else:
        tb = int(block_images)
        if B % tb != 0 or not (tb % 8 == 0 or tb == B):
            raise ValueError(
                "block_images must divide the batch and be a multiple of 8 "
                "(or equal the batch size)")
    chunk = next(c for c in range(min(8, tb), 0, -1) if tb % c == 0)
    n_chunks = tb // chunk

    # Lane-dense layout: (B, C, H, W) -> (B, C, H*W) is a free metadata reshape.
    x_flat = x.reshape(B, C, HW)
    fparams = fparams.astype(jnp.float32)
    iparams = iparams.astype(jnp.int32)

    kernel = functools.partial(
        _diffaug_kernel,
        chunk=chunk, n_chunks=n_chunks,
        H=H, W=W, shift_h=shift_h, shift_w=shift_w,
        cut_h=cut_h, cut_w=cut_w,
        do_color='color' in ops,
        do_translation='translation' in ops,
        do_cutout='cutout' in ops)

    out_flat = pl.pallas_call(
        kernel,
        out_shape=jax.ShapeDtypeStruct((B, C, HW), x.dtype),
        grid=(B // tb,),
        in_specs=[
            pl.BlockSpec((tb, C, HW), lambda g: (g, 0, 0)),  # images
            pl.BlockSpec((tb, 3), lambda g: (g, 0)),          # float params
            pl.BlockSpec((tb, 4), lambda g: (g, 0)),          # int params
        ],
        out_specs=pl.BlockSpec((tb, C, HW), lambda g: (g, 0, 0)),
        compiler_params=pltpu.CompilerParams(
            dimension_semantics=("parallel",),
            vmem_limit_bytes=48 * 1024 * 1024),
    )(x_flat, fparams, iparams)

    return out_flat.reshape(B, C, H, W)


class DiffAugLayer:
    """Thin functional equivalent of the PyTorch module."""

    def __init__(self, policy=''):
        self.policy = policy

    def __call__(self, x, fparams, iparams):
        return diff_aug_layer(x, fparams, iparams, self.policy)


# ---------------------------------------------------------------------------
# Pure-JAX reference mirroring the PyTorch DiffAugment ops exactly.
# ---------------------------------------------------------------------------
def ref_diff_augment(x, fparams, iparams, policy):
    ops = [p.strip() for p in policy.split(',') if p.strip()] if policy else []
    B, C, H, W = x.shape
    out = x.astype(jnp.float32)
    if 'color' in ops:
        br = fparams[:, 0].reshape(B, 1, 1, 1)
        sat = fparams[:, 1].reshape(B, 1, 1, 1)
        con = fparams[:, 2].reshape(B, 1, 1, 1)
        out = out + br
        cm = out.mean(axis=1, keepdims=True)
        out = (out - cm) * sat + cm
        gm = out.mean(axis=(1, 2, 3), keepdims=True)
        out = (out - gm) * con + gm
    if 'translation' in ops:
        tx = iparams[:, 0]
        ty = iparams[:, 1]
        pad = jnp.pad(out, ((0, 0), (0, 0), (1, 1), (1, 1)))
        imgs = []
        for b in range(B):
            gi = jnp.clip(jnp.arange(H)[:, None] + tx[b] + 1, 0, H + 1)
            gj = jnp.clip(jnp.arange(W)[None, :] + ty[b] + 1, 0, W + 1)
            gi = jnp.broadcast_to(gi, (H, W))
            gj = jnp.broadcast_to(gj, (H, W))
            imgs.append(pad[b][:, gi, gj])
        out = jnp.stack(imgs, axis=0)
    if 'cutout' in ops:
        cut_h = int(H * 0.5 + 0.5)
        cut_w = int(W * 0.5 + 0.5)
        ox = iparams[:, 2]
        oy = iparams[:, 3]
        masks = []
        for b in range(B):
            gi = jnp.clip(jnp.arange(cut_h)[:, None] + ox[b] - cut_h // 2, 0, H - 1)
            gj = jnp.clip(jnp.arange(cut_w)[None, :] + oy[b] - cut_w // 2, 0, W - 1)
            gi = jnp.broadcast_to(gi, (cut_h, cut_w))
            gj = jnp.broadcast_to(gj, (cut_h, cut_w))
            masks.append(jnp.ones((H, W), jnp.float32).at[gi, gj].set(0.0))
        out = out * jnp.stack(masks, axis=0)[:, None, :, :]
    return out


if __name__ == "__main__":
    B, C, H, W = 32, 3, 16, 16
    policy = 'color,translation,cutout'

    key = jax.random.PRNGKey(0)
    kx, k1, k2, k3, k4, k5, k6, k7 = jax.random.split(key, 8)
    x = jax.random.normal(kx, (B, C, H, W), dtype=jnp.float32)

    shift_h = int(H * 0.125 + 0.5)
    shift_w = int(W * 0.125 + 0.5)
    cut_h = int(H * 0.5 + 0.5)
    cut_w = int(W * 0.5 + 0.5)

    # Augmentation randomness (replaces torch.rand / torch.randint).
    br = jax.random.uniform(k1, (B,)) - 0.5
    sat = jax.random.uniform(k2, (B,)) * 2.0
    con = jax.random.uniform(k3, (B,)) + 0.5
    tx = jax.random.randint(k4, (B,), -shift_h, shift_h + 1)
    ty = jax.random.randint(k5, (B,), -shift_w, shift_w + 1)
    ox = jax.random.randint(k6, (B,), 0, H + (1 - cut_h % 2))
    oy = jax.random.randint(k7, (B,), 0, W + (1 - cut_w % 2))

    fparams = jnp.stack([br, sat, con], axis=1).astype(jnp.float32)   # (B, 3)
    iparams = jnp.stack([tx, ty, ox, oy], axis=1).astype(jnp.int32)   # (B, 4)

    layer = DiffAugLayer(policy)
    out = layer(x, fparams, iparams)            # 16 images per block -> grid=(2,)
    out = diff_aug_layer(x, fparams, iparams, policy, block_images=16)
    out = jax.block_until_ready(out)

    assert out.shape == x.shape and out.dtype == x.dtype

    ref = ref_diff_augment(x, fparams, iparams, policy)
    max_err = float(jnp.max(jnp.abs(out.astype(jnp.float32) - ref)))
    if max_err > 1e-3:
        raise AssertionError(f"Pallas kernel mismatch vs reference: {max_err}")

    print("KERNEL_OK")
</pallas_src>

<mosaic_0001>
module attributes {stable_mosaic.version = 11 : i64} {
  func.func @_diffaug_kernel(%arg0: i32, %arg1: memref<32x3x256xf32, #tpu.memory_space<vmem>>, %arg2: memref<32x3xf32, #tpu.memory_space<vmem>>, %arg3: memref<32x4xi32, #tpu.memory_space<vmem>>, %arg4: memref<32x3x256xf32, #tpu.memory_space<vmem>>) attributes {dimension_semantics = [#tpu.dimension_semantics<parallel>], iteration_bounds = array<i64: 1>, scalar_prefetch = 0 : i64, scratch_operands = 0 : i64, tpu.core_type = #tpu.core_type<tc>, window_params = [{transform_indices = @transform_0, window_bounds = array<i64: 32, 3, 256>}, {transform_indices = @transform_1, window_bounds = array<i64: 32, 3>}, {transform_indices = @transform_2, window_bounds = array<i64: 32, 4>}, {transform_indices = @transform_3, window_bounds = array<i64: 32, 3, 256>}]} {
    %c0 = arith.constant 0 : index
    %c0_0 = arith.constant 0 : index
    %c0_1 = arith.constant 0 : index
    %0 = vector.load %arg1[%c0, %c0_0, %c0_1] : memref<32x3x256xf32, #tpu.memory_space<vmem>>, vector<8x3x256xf32>
    %c0_2 = arith.constant 0 : index
    %c0_3 = arith.constant 0 : index
    %1 = vector.load %arg2[%c0_2, %c0_3] : memref<32x3xf32, #tpu.memory_space<vmem>>, vector<8x3xf32>
    %c0_4 = arith.constant 0 : index
    %c0_5 = arith.constant 0 : index
    %2 = vector.load %arg3[%c0_4, %c0_5] : memref<32x4xi32, #tpu.memory_space<vmem>>, vector<8x4xi32>
    %3 = tpu.iota {dimensions = array<i32: 2>} : vector<1x1x256xi32>
    %c15_i32 = arith.constant 15 : i32
    %4 = vector.broadcast %c15_i32 : i32 to vector<1x1x256xi32>
    %5 = arith.andi %3, %4 : vector<1x1x256xi32>
    %c4_i32 = arith.constant 4 : i32
    %6 = vector.broadcast %c4_i32 : i32 to vector<1x1x256xi32>
    %7 = arith.shrsi %3, %6 : vector<1x1x256xi32>
    %8 = vector.extract_strided_slice %1 {offsets = [0, 0], sizes = [8, 1], strides = [1, 1]} : vector<8x3xf32> to vector<8x1xf32>
    %9 = vector.shape_cast %8 : vector<8x1xf32> to vector<8xf32>
    %10 = vector.shape_cast %9 : vector<8xf32> to vector<8x1x1xf32>
    %11 = vector.extract_strided_slice %1 {offsets = [0, 1], sizes = [8, 1], strides = [1, 1]} : vector<8x3xf32> to vector<8x1xf32>
    %12 = vector.shape_cast %11 : vector<8x1xf32> to vector<8xf32>
    %13 = vector.shape_cast %12 : vector<8xf32> to vector<8x1x1xf32>
    %14 = vector.extract_strided_slice %1 {offsets = [0, 2], sizes = [8, 1], strides = [1, 1]} : vector<8x3xf32> to vector<8x1xf32>
    %15 = vector.shape_cast %14 : vector<8x1xf32> to vector<8xf32>
    %16 = vector.shape_cast %15 : vector<8xf32> to vector<8x1x1xf32>
    %17 = vector.broadcast %10 : vector<8x1x1xf32> to vector<8x3x256xf32>
    %18 = arith.addf %0, %17 : vector<8x3x256xf32>
    %cst = arith.constant dense<0.000000e+00> : vector<8x256xf32>
    %19 = vector.multi_reduction <add>, %18, %cst [1] : vector<8x3x256xf32> to vector<8x256xf32>
    %20 = vector.shape_cast %19 : vector<8x256xf32> to vector<8x1x256xf32>
    %cst_6 = arith.constant 3.000000e+00 : f32
    %21 = vector.broadcast %cst_6 : f32 to vector<8x1x256xf32>
    %22 = arith.divf %20, %21 : vector<8x1x256xf32>
    %23 = vector.broadcast %22 : vector<8x1x256xf32> to vector<8x3x256xf32>
    %24 = arith.subf %18, %23 : vector<8x3x256xf32>
    %25 = vector.broadcast %13 : vector<8x1x1xf32> to vector<8x3x256xf32>
    %26 = arith.mulf %24, %25 : vector<8x3x256xf32>
    %27 = vector.broadcast %22 : vector<8x1x256xf32> to vector<8x3x256xf32>
    %28 = arith.addf %26, %27 : vector<8x3x256xf32>
    %cst_7 = arith.constant dense<0.000000e+00> : vector<8x3xf32>
    %29 = vector.multi_reduction <add>, %28, %cst_7 [2] : vector<8x3x256xf32> to vector<8x3xf32>
    %30 = vector.shape_cast %29 : vector<8x3xf32> to vector<8x3x1xf32>
    %cst_8 = arith.constant 2.560000e+02 : f32
    %31 = vector.broadcast %cst_8 : f32 to vector<8x3x1xf32>
    %32 = arith.divf %30, %31 : vector<8x3x1xf32>
    %cst_9 = arith.constant dense<0.000000e+00> : vector<8x1xf32>
    %33 = vector.multi_reduction <add>, %32, %cst_9 [1] : vector<8x3x1xf32> to vector<8x1xf32>
    %34 = vector.shape_cast %33 : vector<8x1xf32> to vector<8x1x1xf32>
    %cst_10 = arith.constant 3.000000e+00 : f32
    %35 = vector.broadcast %cst_10 : f32 to vector<8x1x1xf32>
    %36 = arith.divf %34, %35 : vector<8x1x1xf32>
    %37 = vector.broadcast %36 : vector<8x1x1xf32> to vector<8x3x256xf32>
    %38 = arith.subf %28, %37 : vector<8x3x256xf32>
    %39 = vector.broadcast %16 : vector<8x1x1xf32> to vector<8x3x256xf32>
    %40 = arith.mulf %38, %39 : vector<8x3x256xf32>
    %41 = vector.broadcast %36 : vector<8x1x1xf32> to vector<8x3x256xf32>
    %42 = arith.addf %40, %41 : vector<8x3x256xf32>
    %43 = vector.extract_strided_slice %2 {offsets = [0, 0], sizes = [8, 1], strides = [1, 1]} : vector<8x4xi32> to vector<8x1xi32>
    %44 = vector.shape_cast %43 : vector<8x1xi32> to vector<8xi32>
    %45 = vector.shape_cast %44 : vector<8xi32> to vector<8x1x1xi32>
    %46 = vector.extract_strided_slice %2 {offsets = [0, 1], sizes = [8, 1], strides = [1, 1]} : vector<8x4xi32> to vector<8x1xi32>
    %47 = vector.shape_cast %46 : vector<8x1xi32> to vector<8xi32>
    %48 = vector.shape_cast %47 : vector<8xi32> to vector<8x1x1xi32>
    %c-2_i32 = arith.constant -2 : i32
    %49 = vector.broadcast %c-2_i32 : i32 to vector<8x1x1xi32>
    %50 = arith.cmpi eq, %45, %49 : vector<8x1x1xi32>
    %51 = vector.extract_strided_slice %42 {offsets = [0, 0, 224], sizes = [8, 3, 32], strides = [1, 1, 1]} : vector<8x3x256xf32> to vector<8x3x32xf32>
    %52 = vector.extract_strided_slice %42 {offsets = [0, 0, 0], sizes = [8, 3, 224], strides = [1, 1, 1]} : vector<8x3x256xf32> to vector<8x3x224xf32>
    %53 = tpu.concatenate %51, %52 in 2 : vector<8x3x32xf32>, vector<8x3x224xf32> -> vector<8x3x256xf32>
    %54 = vector.shape_cast %50 : vector<8x1x1xi1> to vector<8x1x1xi1>
    %55 = vector.broadcast %54 : vector<8x1x1xi1> to vector<8x3x256xi1>
    %56 = arith.select %55, %53, %42 : vector<8x3x256xi1>, vector<8x3x256xf32>
    %c-1_i32 = arith.constant -1 : i32
    %57 = vector.broadcast %c-1_i32 : i32 to vector<8x1x1xi32>
    %58 = arith.cmpi eq, %45, %57 : vector<8x1x1xi32>
    %59 = vector.extract_strided_slice %42 {offsets = [0, 0, 240], sizes = [8, 3, 16], strides = [1, 1, 1]} : vector<8x3x256xf32> to vector<8x3x16xf32>
    %60 = vector.extract_strided_slice %42 {offsets = [0, 0, 0], sizes = [8, 3, 240], strides = [1, 1, 1]} : vector<8x3x256xf32> to vector<8x3x240xf32>
    %61 = tpu.concatenate %59, %60 in 2 : vector<8x3x16xf32>, vector<8x3x240xf32> -> vector<8x3x256xf32>
    %62 = vector.shape_cast %58 : vector<8x1x1xi1> to vector<8x1x1xi1>
    %63 = vector.broadcast %62 : vector<8x1x1xi1> to vector<8x3x256xi1>
    %64 = arith.select %63, %61, %56 : vector<8x3x256xi1>, vector<8x3x256xf32>
    %c1_i32 = arith.constant 1 : i32
    %65 = vector.broadcast %c1_i32 : i32 to vector<8x1x1xi32>
    %66 = arith.cmpi eq, %45, %65 : vector<8x1x1xi32>
    %67 = vector.extract_strided_slice %42 {offsets = [0, 0, 16], sizes = [8, 3, 240], strides = [1, 1, 1]} : vector<8x3x256xf32> to vector<8x3x240xf32>
    %68 = vector.extract_strided_slice %42 {offsets = [0, 0, 0], sizes = [8, 3, 16], strides = [1, 1, 1]} : vector<8x3x256xf32> to vector<8x3x16xf32>
    %69 = tpu.concatenate %67, %68 in 2 : vector<8x3x240xf32>, vector<8x3x16xf32> -> vector<8x3x256xf32>
    %70 = vector.shape_cast %66 : vector<8x1x1xi1> to vector<8x1x1xi1>
    %71 = vector.broadcast %70 : vector<8x1x1xi1> to vector<8x3x256xi1>
    %72 = arith.select %71, %69, %64 : vector<8x3x256xi1>, vector<8x3x256xf32>
    %c2_i32 = arith.constant 2 : i32
    %73 = vector.broadcast %c2_i32 : i32 to vector<8x1x1xi32>
    %74 = arith.cmpi eq, %45, %73 : vector<8x1x1xi32>
    %75 = vector.extract_strided_slice %42 {offsets = [0, 0, 32], sizes = [8, 3, 224], strides = [1, 1, 1]} : vector<8x3x256xf32> to vector<8x3x224xf32>
    %76 = vector.extract_strided_slice %42 {offsets = [0, 0, 0], sizes = [8, 3, 32], strides = [1, 1, 1]} : vector<8x3x256xf32> to vector<8x3x32xf32>
    %77 = tpu.concatenate %75, %76 in 2 : vector<8x3x224xf32>, vector<8x3x32xf32> -> vector<8x3x256xf32>
    %78 = vector.shape_cast %74 : vector<8x1x1xi1> to vector<8x1x1xi1>
    %79 = vector.broadcast %78 : vector<8x1x1xi1> to vector<8x3x256xi1>
    %80 = arith.select %79, %77, %72 : vector<8x3x256xi1>, vector<8x3x256xf32>
    %81 = vector.broadcast %7 : vector<1x1x256xi32> to vector<8x1x256xi32>
    %82 = vector.broadcast %45 : vector<8x1x1xi32> to vector<8x1x256xi32>
    %83 = arith.addi %81, %82 : vector<8x1x256xi32>
    %c0_i32 = arith.constant 0 : i32
    %84 = vector.broadcast %c0_i32 : i32 to vector<8x1x256xi32>
    %85 = arith.cmpi sge, %83, %84 : vector<8x1x256xi32>
    %c16_i32 = arith.constant 16 : i32
    %86 = vector.broadcast %c16_i32 : i32 to vector<8x1x256xi32>
    %87 = arith.cmpi slt, %83, %86 : vector<8x1x256xi32>
    %88 = arith.andi %85, %87 : vector<8x1x256xi1>
    %cst_11 = arith.constant 0.000000e+00 : f32
    %89 = vector.shape_cast %88 : vector<8x1x256xi1> to vector<8x1x256xi1>
    %90 = vector.broadcast %89 : vector<8x1x256xi1> to vector<8x3x256xi1>
    %91 = vector.broadcast %cst_11 : f32 to vector<8x3x256xf32>
    %92 = arith.select %90, %80, %91 : vector<8x3x256xi1>, vector<8x3x256xf32>
    %c-2_i32_12 = arith.constant -2 : i32
    %93 = vector.broadcast %c-2_i32_12 : i32 to vector<8x1x1xi32>
    %94 = arith.cmpi eq, %48, %93 : vector<8x1x1xi32>
    %95 = vector.extract_strided_slice %92 {offsets = [0, 0, 254], sizes = [8, 3, 2], strides = [1, 1, 1]} : vector<8x3x256xf32> to vector<8x3x2xf32>
    %96 = vector.extract_strided_slice %92 {offsets = [0, 0, 0], sizes = [8, 3, 254], strides = [1, 1, 1]} : vector<8x3x256xf32> to vector<8x3x254xf32>
    %97 = tpu.concatenate %95, %96 in 2 : vector<8x3x2xf32>, vector<8x3x254xf32> -> vector<8x3x256xf32>
    %98 = vector.shape_cast %94 : vector<8x1x1xi1> to vector<8x1x1xi1>
    %99 = vector.broadcast %98 : vector<8x1x1xi1> to vector<8x3x256xi1>
    %100 = arith.select %99, %97, %92 : vector<8x3x256xi1>, vector<8x3x256xf32>
    %c-1_i32_13 = arith.constant -1 : i32
    %101 = vector.broadcast %c-1_i32_13 : i32 to vector<8x1x1xi32>
    %102 = arith.cmpi eq, %48, %101 : vector<8x1x1xi32>
    %103 = vector.extract_strided_slice %92 {offsets = [0, 0, 255], sizes = [8, 3, 1], strides = [1, 1, 1]} : vector<8x3x256xf32> to vector<8x3x1xf32>
    %104 = vector.extract_strided_slice %92 {offsets = [0, 0, 0], sizes = [8, 3, 255], strides = [1, 1, 1]} : vector<8x3x256xf32> to vector<8x3x255xf32>
    %105 = tpu.concatenate %103, %104 in 2 : vector<8x3x1xf32>, vector<8x3x255xf32> -> vector<8x3x256xf32>
    %106 = vector.shape_cast %102 : vector<8x1x1xi1> to vector<8x1x1xi1>
    %107 = vector.broadcast %106 : vector<8x1x1xi1> to vector<8x3x256xi1>
    %108 = arith.select %107, %105, %100 : vector<8x3x256xi1>, vector<8x3x256xf32>
    %c1_i32_14 = arith.constant 1 : i32
    %109 = vector.broadcast %c1_i32_14 : i32 to vector<8x1x1xi32>
    %110 = arith.cmpi eq, %48, %109 : vector<8x1x1xi32>
    %111 = vector.extract_strided_slice %92 {offsets = [0, 0, 1], sizes = [8, 3, 255], strides = [1, 1, 1]} : vector<8x3x256xf32> to vector<8x3x255xf32>
    %112 = vector.extract_strided_slice %92 {offsets = [0, 0, 0], sizes = [8, 3, 1], strides = [1, 1, 1]} : vector<8x3x256xf32> to vector<8x3x1xf32>
    %113 = tpu.concatenate %111, %112 in 2 : vector<8x3x255xf32>, vector<8x3x1xf32> -> vector<8x3x256xf32>
    %114 = vector.shape_cast %110 : vector<8x1x1xi1> to vector<8x1x1xi1>
    %115 = vector.broadcast %114 : vector<8x1x1xi1> to vector<8x3x256xi1>
    %116 = arith.select %115, %113, %108 : vector<8x3x256xi1>, vector<8x3x256xf32>
    %c2_i32_15 = arith.constant 2 : i32
    %117 = vector.broadcast %c2_i32_15 : i32 to vector<8x1x1xi32>
    %118 = arith.cmpi eq, %48, %117 : vector<8x1x1xi32>
    %119 = vector.extract_strided_slice %92 {offsets = [0, 0, 2], sizes = [8, 3, 254], strides = [1, 1, 1]} : vector<8x3x256xf32> to vector<8x3x254xf32>
    %120 = vector.extract_strided_slice %92 {offsets = [0, 0, 0], sizes = [8, 3, 2], strides = [1, 1, 1]} : vector<8x3x256xf32> to vector<8x3x2xf32>
    %121 = tpu.concatenate %119, %120 in 2 : vector<8x3x254xf32>, vector<8x3x2xf32> -> vector<8x3x256xf32>
    %122 = vector.shape_cast %118 : vector<8x1x1xi1> to vector<8x1x1xi1>
    %123 = vector.broadcast %122 : vector<8x1x1xi1> to vector<8x3x256xi1>
    %124 = arith.select %123, %121, %116 : vector<8x3x256xi1>, vector<8x3x256xf32>
    %125 = vector.broadcast %5 : vector<1x1x256xi32> to vector<8x1x256xi32>
    %126 = vector.broadcast %48 : vector<8x1x1xi32> to vector<8x1x256xi32>
    %127 = arith.addi %125, %126 : vector<8x1x256xi32>
    %c0_i32_16 = arith.constant 0 : i32
    %128 = vector.broadcast %c0_i32_16 : i32 to vector<8x1x256xi32>
    %129 = arith.cmpi sge, %127, %128 : vector<8x1x256xi32>
    %c16_i32_17 = arith.constant 16 : i32
    %130 = vector.broadcast %c16_i32_17 : i32 to vector<8x1x256xi32>
    %131 = arith.cmpi slt, %127, %130 : vector<8x1x256xi32>
    %132 = arith.andi %129, %131 : vector<8x1x256xi1>
    %cst_18 = arith.constant 0.000000e+00 : f32
    %133 = vector.shape_cast %132 : vector<8x1x256xi1> to vector<8x1x256xi1>
    %134 = vector.broadcast %133 : vector<8x1x256xi1> to vector<8x3x256xi1>
    %135 = vector.broadcast %cst_18 : f32 to vector<8x3x256xf32>
    %136 = arith.select %134, %124, %135 : vector<8x3x256xi1>, vector<8x3x256xf32>
    %137 = vector.extract_strided_slice %2 {offsets = [0, 2], sizes = [8, 1], strides = [1, 1]} : vector<8x4xi32> to vector<8x1xi32>
    %138 = vector.shape_cast %137 : vector<8x1xi32> to vector<8xi32>
    %139 = vector.shape_cast %138 : vector<8xi32> to vector<8x1x1xi32>
    %140 = vector.extract_strided_slice %2 {offsets = [0, 3], sizes = [8, 1], strides = [1, 1]} : vector<8x4xi32> to vector<8x1xi32>
    %141 = vector.shape_cast %140 : vector<8x1xi32> to vector<8xi32>
    %142 = vector.shape_cast %141 : vector<8xi32> to vector<8x1x1xi32>
    %c4_i32_19 = arith.constant 4 : i32
    %143 = vector.broadcast %c4_i32_19 : i32 to vector<8x1x1xi32>
    %144 = arith.subi %139, %143 : vector<8x1x1xi32>
    %c4_i32_20 = arith.constant 4 : i32
    %145 = vector.broadcast %c4_i32_20 : i32 to vector<8x1x1xi32>
    %146 = arith.subi %142, %145 : vector<8x1x1xi32>
    %147 = vector.broadcast %7 : vector<1x1x256xi32> to vector<8x1x256xi32>
    %148 = vector.broadcast %144 : vector<8x1x1xi32> to vector<8x1x256xi32>
    %149 = arith.cmpi sge, %147, %148 : vector<8x1x256xi32>
    %c8_i32 = arith.constant 8 : i32
    %150 = vector.broadcast %c8_i32 : i32 to vector<8x1x1xi32>
    %151 = arith.addi %144, %150 : vector<8x1x1xi32>
    %152 = vector.broadcast %7 : vector<1x1x256xi32> to vector<8x1x256xi32>
    %153 = vector.broadcast %151 : vector<8x1x1xi32> to vector<8x1x256xi32>
    %154 = arith.cmpi slt, %152, %153 : vector<8x1x256xi32>
    %155 = arith.andi %149, %154 : vector<8x1x256xi1>
    %156 = vector.broadcast %5 : vector<1x1x256xi32> to vector<8x1x256xi32>
    %157 = vector.broadcast %146 : vector<8x1x1xi32> to vector<8x1x256xi32>
    %158 = arith.cmpi sge, %156, %157 : vector<8x1x256xi32>
    %159 = arith.andi %155, %158 : vector<8x1x256xi1>
    %c8_i32_21 = arith.constant 8 : i32
    %160 = vector.broadcast %c8_i32_21 : i32 to vector<8x1x1xi32>
    %161 = arith.addi %146, %160 : vector<8x1x1xi32>
    %162 = vector.broadcast %5 : vector<1x1x256xi32> to vector<8x1x256xi32>
    %163 = vector.broadcast %161 : vector<8x1x1xi32> to vector<8x1x256xi32>
    %164 = arith.cmpi slt, %162, %163 : vector<8x1x256xi32>
    %165 = arith.andi %159, %164 : vector<8x1x256xi1>
    %cst_22 = arith.constant 0.000000e+00 : f32
    %166 = vector.shape_cast %165 : vector<8x1x256xi1> to vector<8x1x256xi1>
    %167 = vector.broadcast %166 : vector<8x1x256xi1> to vector<8x3x256xi1>
    %168 = vector.broadcast %cst_22 : f32 to vector<8x3x256xf32>
    %169 = arith.select %167, %168, %136 : vector<8x3x256xi1>, vector<8x3x256xf32>
    %c0_23 = arith.constant 0 : index
    %c0_24 = arith.constant 0 : index
    %c0_25 = arith.constant 0 : index
    %170 = vector.load %arg4[%c0_23, %c0_24, %c0_25] : memref<32x3x256xf32, #tpu.memory_space<vmem>>, vector<8x3x256xf32>
    tpu.vector_store %arg4[%c0_23, %c0_24, %c0_25], %169 {strides = array<i32>} : memref<32x3x256xf32, #tpu.memory_space<vmem>>, vector<8x3x256xf32>,
    %c8 = arith.constant 8 : index
    %c0_26 = arith.constant 0 : index
    %c0_27 = arith.constant 0 : index
    %171 = vector.load %arg1[%c8, %c0_26, %c0_27] : memref<32x3x256xf32, #tpu.memory_space<vmem>>, vector<8x3x256xf32>
    %c8_28 = arith.constant 8 : index
    %c0_29 = arith.constant 0 : index
    %172 = vector.load %arg2[%c8_28, %c0_29] : memref<32x3xf32, #tpu.memory_space<vmem>>, vector<8x3xf32>
    %c8_30 = arith.constant 8 : index
    %c0_31 = arith.constant 0 : index
    %173 = vector.load %arg3[%c8_30, %c0_31] : memref<32x4xi32, #tpu.memory_space<vmem>>, vector<8x4xi32>
    %174 = tpu.iota {dimensions = array<i32: 2>} : vector<1x1x256xi32>
    %c15_i32_32 = arith.constant 15 : i32
    %175 = vector.broadcast %c15_i32_32 : i32 to vector<1x1x256xi32>
    %176 = arith.andi %174, %175 : vector<1x1x256xi32>
    %c4_i32_33 = arith.constant 4 : i32
    %177 = vector.broadcast %c4_i32_33 : i32 to vector<1x1x256xi32>
    %178 = arith.shrsi %174, %177 : vector<1x1x256xi32>
    %179 = vector.extract_strided_slice %172 {offsets = [0, 0], sizes = [8, 1], strides = [1, 1]} : vector<8x3xf32> to vector<8x1xf32>
    %180 = vector.shape_cast %179 : vector<8x1xf32> to vector<8xf32>
    %181 = vector.shape_cast %180 : vector<8xf32> to vector<8x1x1xf32>
    %182 = vector.extract_strided_slice %172 {offsets = [0, 1], sizes = [8, 1], strides = [1, 1]} : vector<8x3xf32> to vector<8x1xf32>
    %183 = vector.shape_cast %182 : vector<8x1xf32> to vector<8xf32>
    %184 = vector.shape_cast %183 : vector<8xf32> to vector<8x1x1xf32>
    %185 = vector.extract_strided_slice %172 {offsets = [0, 2], sizes = [8, 1], strides = [1, 1]} : vector<8x3xf32> to vector<8x1xf32>
    %186 = vector.shape_cast %185 : vector<8x1xf32> to vector<8xf32>
    %187 = vector.shape_cast %186 : vector<8xf32> to vector<8x1x1xf32>
    %188 = vector.broadcast %181 : vector<8x1x1xf32> to vector<8x3x256xf32>
    %189 = arith.addf %171, %188 : vector<8x3x256xf32>
    %cst_34 = arith.constant dense<0.000000e+00> : vector<8x256xf32>
    %190 = vector.multi_reduction <add>, %189, %cst_34 [1] : vector<8x3x256xf32> to vector<8x256xf32>
    %191 = vector.shape_cast %190 : vector<8x256xf32> to vector<8x1x256xf32>
    %cst_35 = arith.constant 3.000000e+00 : f32
    %192 = vector.broadcast %cst_35 : f32 to vector<8x1x256xf32>
    %193 = arith.divf %191, %192 : vector<8x1x256xf32>
    %194 = vector.broadcast %193 : vector<8x1x256xf32> to vector<8x3x256xf32>
    %195 = arith.subf %189, %194 : vector<8x3x256xf32>
    %196 = vector.broadcast %184 : vector<8x1x1xf32> to vector<8x3x256xf32>
    %197 = arith.mulf %195, %196 : vector<8x3x256xf32>
    %198 = vector.broadcast %193 : vector<8x1x256xf32> to vector<8x3x256xf32>
    %199 = arith.addf %197, %198 : vector<8x3x256xf32>
    %cst_36 = arith.constant dense<0.000000e+00> : vector<8x3xf32>
    %200 = vector.multi_reduction <add>, %199, %cst_36 [2] : vector<8x3x256xf32> to vector<8x3xf32>
    %201 = vector.shape_cast %200 : vector<8x3xf32> to vector<8x3x1xf32>
    %cst_37 = arith.constant 2.560000e+02 : f32
    %202 = vector.broadcast %cst_37 : f32 to vector<8x3x1xf32>
    %203 = arith.divf %201, %202 : vector<8x3x1xf32>
    %cst_38 = arith.constant dense<0.000000e+00> : vector<8x1xf32>
    %204 = vector.multi_reduction <add>, %203, %cst_38 [1] : vector<8x3x1xf32> to vector<8x1xf32>
    %205 = vector.shape_cast %204 : vector<8x1xf32> to vector<8x1x1xf32>
    %cst_39 = arith.constant 3.000000e+00 : f32
    %206 = vector.broadcast %cst_39 : f32 to vector<8x1x1xf32>
    %207 = arith.divf %205, %206 : vector<8x1x1xf32>
    %208 = vector.broadcast %207 : vector<8x1x1xf32> to vector<8x3x256xf32>
    %209 = arith.subf %199, %208 : vector<8x3x256xf32>
    %210 = vector.broadcast %187 : vector<8x1x1xf32> to vector<8x3x256xf32>
    %211 = arith.mulf %209, %210 : vector<8x3x256xf32>
    %212 = vector.broadcast %207 : vector<8x1x1xf32> to vector<8x3x256xf32>
    %213 = arith.addf %211, %212 : vector<8x3x256xf32>
    %214 = vector.extract_strided_slice %173 {offsets = [0, 0], sizes = [8, 1], strides = [1, 1]} : vector<8x4xi32> to vector<8x1xi32>
    %215 = vector.shape_cast %214 : vector<8x1xi32> to vector<8xi32>
    %216 = vector.shape_cast %215 : vector<8xi32> to vector<8x1x1xi32>
    %217 = vector.extract_strided_slice %173 {offsets = [0, 1], sizes = [8, 1], strides = [1, 1]} : vector<8x4xi32> to vector<8x1xi32>
    %218 = vector.shape_cast %217 : vector<8x1xi32> to vector<8xi32>
    %219 = vector.shape_cast %218 : vector<8xi32> to vector<8x1x1xi32>
    %c-2_i32_40 = arith.constant -2 : i32
    %220 = vector.broadcast %c-2_i32_40 : i32 to vector<8x1x1xi32>
    %221 = arith.cmpi eq, %216, %220 : vector<8x1x1xi32>
    %222 = vector.extract_strided_slice %213 {offsets = [0, 0, 224], sizes = [8, 3, 32], strides = [1, 1, 1]} : vector<8x3x256xf32> to vector<8x3x32xf32>
    %223 = vector.extract_strided_slice %213 {offsets = [0, 0, 0], sizes = [8, 3, 224], strides = [1, 1, 1]} : vector<8x3x256xf32> to vector<8x3x224xf32>
    %224 = tpu.concatenate %222, %223 in 2 : vector<8x3x32xf32>, vector<8x3x224xf32> -> vector<8x3x256xf32>
    %225 = vector.shape_cast %221 : vector<8x1x1xi1> to vector<8x1x1xi1>
    %226 = vector.broadcast %225 : vector<8x1x1xi1> to vector<8x3x256xi1>
    %227 = arith.select %226, %224, %213 : vector<8x3x256xi1>, vector<8x3x256xf32>
    %c-1_i32_41 = arith.constant -1 : i32
    %228 = vector.broadcast %c-1_i32_41 : i32 to vector<8x1x1xi32>
    %229 = arith.cmpi eq, %216, %228 : vector<8x1x1xi32>
    %230 = vector.extract_strided_slice %213 {offsets = [0, 0, 240], sizes = [8, 3, 16], strides = [1, 1, 1]} : vector<8x3x256xf32> to vector<8x3x16xf32>
    %231 = vector.extract_strided_slice %213 {offsets = [0, 0, 0], sizes = [8, 3, 240], strides = [1, 1, 1]} : vector<8x3x256xf32> to vector<8x3x240xf32>
    %232 = tpu.concatenate %230, %231 in 2 : vector<8x3x16xf32>, vector<8x3x240xf32> -> vector<8x3x256xf32>
    %233 = vector.shape_cast %229 : vector<8x1x1xi1> to vector<8x1x1xi1>
    %234 = vector.broadcast %233 : vector<8x1x1xi1> to vector<8x3x256xi1>
    %235 = arith.select %234, %232, %227 : vector<8x3x256xi1>, vector<8x3x256xf32>
    %c1_i32_42 = arith.constant 1 : i32
    %236 = vector.broadcast %c1_i32_42 : i32 to vector<8x1x1xi32>
    %237 = arith.cmpi eq, %216, %236 : vector<8x1x1xi32>
    %238 = vector.extract_strided_slice %213 {offsets = [0, 0, 16], sizes = [8, 3, 240], strides = [1, 1, 1]} : vector<8x3x256xf32> to vector<8x3x240xf32>
    %239 = vector.extract_strided_slice %213 {offsets = [0, 0, 0], sizes = [8, 3, 16], strides = [1, 1, 1]} : vector<8x3x256xf32> to vector<8x3x16xf32>
    %240 = tpu.concatenate %238, %239 in 2 : vector<8x3x240xf32>, vector<8x3x16xf32> -> vector<8x3x256xf32>
    %241 = vector.shape_cast %237 : vector<8x1x1xi1> to vector<8x1x1xi1>
    %242 = vector.broadcast %241 : vector<8x1x1xi1> to vector<8x3x256xi1>
    %243 = arith.select %242, %240, %235 : vector<8x3x256xi1>, vector<8x3x256xf32>
    %c2_i32_43 = arith.constant 2 : i32
    %244 = vector.broadcast %c2_i32_43 : i32 to vector<8x1x1xi32>
    %245 = arith.cmpi eq, %216, %244 : vector<8x1x1xi32>
    %246 = vector.extract_strided_slice %213 {offsets = [0, 0, 32], sizes = [8, 3, 224], strides = [1, 1, 1]} : vector<8x3x256xf32> to vector<8x3x224xf32>
    %247 = vector.extract_strided_slice %213 {offsets = [0, 0, 0], sizes = [8, 3, 32], strides = [1, 1, 1]} : vector<8x3x256xf32> to vector<8x3x32xf32>
    %248 = tpu.concatenate %246, %247 in 2 : vector<8x3x224xf32>, vector<8x3x32xf32> -> vector<8x3x256xf32>
    %249 = vector.shape_cast %245 : vector<8x1x1xi1> to vector<8x1x1xi1>
    %250 = vector.broadcast %249 : vector<8x1x1xi1> to vector<8x3x256xi1>
    %251 = arith.select %250, %248, %243 : vector<8x3x256xi1>, vector<8x3x256xf32>
    %252 = vector.broadcast %178 : vector<1x1x256xi32> to vector<8x1x256xi32>
    %253 = vector.broadcast %216 : vector<8x1x1xi32> to vector<8x1x256xi32>
    %254 = arith.addi %252, %253 : vector<8x1x256xi32>
    %c0_i32_44 = arith.constant 0 : i32
    %255 = vector.broadcast %c0_i32_44 : i32 to vector<8x1x256xi32>
    %256 = arith.cmpi sge, %254, %255 : vector<8x1x256xi32>
    %c16_i32_45 = arith.constant 16 : i32
    %257 = vector.broadcast %c16_i32_45 : i32 to vector<8x1x256xi32>
    %258 = arith.cmpi slt, %254, %257 : vector<8x1x256xi32>
    %259 = arith.andi %256, %258 : vector<8x1x256xi1>
    %cst_46 = arith.constant 0.000000e+00 : f32
    %260 = vector.shape_cast %259 : vector<8x1x256xi1> to vector<8x1x256xi1>
    %261 = vector.broadcast %260 : vector<8x1x256xi1> to vector<8x3x256xi1>
    %262 = vector.broadcast %cst_46 : f32 to vector<8x3x256xf32>
    %263 = arith.select %261, %251, %262 : vector<8x3x256xi1>, vector<8x3x256xf32>
    %c-2_i32_47 = arith.constant -2 : i32
    %264 = vector.broadcast %c-2_i32_47 : i32 to vector<8x1x1xi32>
    %265 = arith.cmpi eq, %219, %264 : vector<8x1x1xi32>
    %266 = vector.extract_strided_slice %263 {offsets = [0, 0, 254], sizes = [8, 3, 2], strides = [1, 1, 1]} : vector<8x3x256xf32> to vector<8x3x2xf32>
    %267 = vector.extract_strided_slice %263 {offsets = [0, 0, 0], sizes = [8, 3, 254], strides = [1, 1, 1]} : vector<8x3x256xf32> to vector<8x3x254xf32>
    %268 = tpu.concatenate %266, %267 in 2 : vector<8x3x2xf32>, vector<8x3x254xf32> -> vector<8x3x256xf32>
    %269 = vector.shape_cast %265 : vector<8x1x1xi1> to vector<8x1x1xi1>
    %270 = vector.broadcast %269 : vector<8x1x1xi1> to vector<8x3x256xi1>
    %271 = arith.select %270, %268, %263 : vector<8x3x256xi1>, vector<8x3x256xf32>
    %c-1_i32_48 = arith.constant -1 : i32
    %272 = vector.broadcast %c-1_i32_48 : i32 to vector<8x1x1xi32>
    %273 = arith.cmpi eq, %219, %272 : vector<8x1x1xi32>
    %274 = vector.extract_strided_slice %263 {offsets = [0, 0, 255], sizes = [8, 3, 1], strides = [1, 1, 1]} : vector<8x3x256xf32> to vector<8x3x1xf32>
    %275 = vector.extract_strided_slice %263 {offsets = [0, 0, 0], sizes = [8, 3, 255], strides = [1, 1, 1]} : vector<8x3x256xf32> to vector<8x3x255xf32>
    %276 = tpu.concatenate %274, %275 in 2 : vector<8x3x1xf32>, vector<8x3x255xf32> -> vector<8x3x256xf32>
    %277 = vector.shape_cast %273 : vector<8x1x1xi1> to vector<8x1x1xi1>
    %278 = vector.broadcast %277 : vector<8x1x1xi1> to vector<8x3x256xi1>
    %279 = arith.select %278, %276, %271 : vector<8x3x256xi1>, vector<8x3x256xf32>
    %c1_i32_49 = arith.constant 1 : i32
    %280 = vector.broadcast %c1_i32_49 : i32 to vector<8x1x1xi32>
    %281 = arith.cmpi eq, %219, %280 : vector<8x1x1xi32>
    %282 = vector.extract_strided_slice %263 {offsets = [0, 0, 1], sizes = [8, 3, 255], strides = [1, 1, 1]} : vector<8x3x256xf32> to vector<8x3x255xf32>
    %283 = vector.extract_strided_slice %263 {offsets = [0, 0, 0], sizes = [8, 3, 1], strides = [1, 1, 1]} : vector<8x3x256xf32> to vector<8x3x1xf32>
    %284 = tpu.concatenate %282, %283 in 2 : vector<8x3x255xf32>, vector<8x3x1xf32> -> vector<8x3x256xf32>
    %285 = vector.shape_cast %281 : vector<8x1x1xi1> to vector<8x1x1xi1>
    %286 = vector.broadcast %285 : vector<8x1x1xi1> to vector<8x3x256xi1>
    %287 = arith.select %286, %284, %279 : vector<8x3x256xi1>, vector<8x3x256xf32>
    %c2_i32_50 = arith.constant 2 : i32
    %288 = vector.broadcast %c2_i32_50 : i32 to vector<8x1x1xi32>
    %289 = arith.cmpi eq, %219, %288 : vector<8x1x1xi32>
    %290 = vector.extract_strided_slice %263 {offsets = [0, 0, 2], sizes = [8, 3, 254], strides = [1, 1, 1]} : vector<8x3x256xf32> to vector<8x3x254xf32>
    %291 = vector.extract_strided_slice %263 {offsets = [0, 0, 0], sizes = [8, 3, 2], strides = [1, 1, 1]} : vector<8x3x256xf32> to vector<8x3x2xf32>
    %292 = tpu.concatenate %290, %291 in 2 : vector<8x3x254xf32>, vector<8x3x2xf32> -> vector<8x3x256xf32>
    %293 = vector.shape_cast %289 : vector<8x1x1xi1> to vector<8x1x1xi1>
    %294 = vector.broadcast %293 : vector<8x1x1xi1> to vector<8x3x256xi1>
    %295 = arith.select %294, %292, %287 : vector<8x3x256xi1>, vector<8x3x256xf32>
    %296 = vector.broadcast %176 : vector<1x1x256xi32> to vector<8x1x256xi32>
    %297 = vector.broadcast %219 : vector<8x1x1xi32> to vector<8x1x256xi32>
    %298 = arith.addi %296, %297 : vector<8x1x256xi32>
    %c0_i32_51 = arith.constant 0 : i32
    %299 = vector.broadcast %c0_i32_51 : i32 to vector<8x1x256xi32>
    %300 = arith.cmpi sge, %298, %299 : vector<8x1x256xi32>
    %c16_i32_52 = arith.constant 16 : i32
    %301 = vector.broadcast %c16_i32_52 : i32 to vector<8x1x256xi32>
    %302 = arith.cmpi slt, %298, %301 : vector<8x1x256xi32>
    %303 = arith.andi %300, %302 : vector<8x1x256xi1>
    %cst_53 = arith.constant 0.000000e+00 : f32
    %304 = vector.shape_cast %303 : vector<8x1x256xi1> to vector<8x1x256xi1>
    %305 = vector.broadcast %304 : vector<8x1x256xi1> to vector<8x3x256xi1>
    %306 = vector.broadcast %cst_53 : f32 to vector<8x3x256xf32>
    %307 = arith.select %305, %295, %306 : vector<8x3x256xi1>, vector<8x3x256xf32>
    %308 = vector.extract_strided_slice %173 {offsets = [0, 2], sizes = [8, 1], strides = [1, 1]} : vector<8x4xi32> to vector<8x1xi32>
    %309 = vector.shape_cast %308 : vector<8x1xi32> to vector<8xi32>
    %310 = vector.shape_cast %309 : vector<8xi32> to vector<8x1x1xi32>
    %311 = vector.extract_strided_slice %173 {offsets = [0, 3], sizes = [8, 1], strides = [1, 1]} : vector<8x4xi32> to vector<8x1xi32>
    %312 = vector.shape_cast %311 : vector<8x1xi32> to vector<8xi32>
    %313 = vector.shape_cast %312 : vector<8xi32> to vector<8x1x1xi32>
    %c4_i32_54 = arith.constant 4 : i32
    %314 = vector.broadcast %c4_i32_54 : i32 to vector<8x1x1xi32>
    %315 = arith.subi %310, %314 : vector<8x1x1xi32>
    %c4_i32_55 = arith.constant 4 : i32
    %316 = vector.broadcast %c4_i32_55 : i32 to vector<8x1x1xi32>
    %317 = arith.subi %313, %316 : vector<8x1x1xi32>
    %318 = vector.broadcast %178 : vector<1x1x256xi32> to vector<8x1x256xi32>
    %319 = vector.broadcast %315 : vector<8x1x1xi32> to vector<8x1x256xi32>
    %320 = arith.cmpi sge, %318, %319 : vector<8x1x256xi32>
    %c8_i32_56 = arith.constant 8 : i32
    %321 = vector.broadcast %c8_i32_56 : i32 to vector<8x1x1xi32>
    %322 = arith.addi %315, %321 : vector<8x1x1xi32>
    %323 = vector.broadcast %178 : vector<1x1x256xi32> to vector<8x1x256xi32>
    %324 = vector.broadcast %322 : vector<8x1x1xi32> to vector<8x1x256xi32>
    %325 = arith.cmpi slt, %323, %324 : vector<8x1x256xi32>
    %326 = arith.andi %320, %325 : vector<8x1x256xi1>
    %327 = vector.broadcast %176 : vector<1x1x256xi32> to vector<8x1x256xi32>
    %328 = vector.broadcast %317 : vector<8x1x1xi32> to vector<8x1x256xi32>
    %329 = arith.cmpi sge, %327, %328 : vector<8x1x256xi32>
    %330 = arith.andi %326, %329 : vector<8x1x256xi1>
    %c8_i32_57 = arith.constant 8 : i32
    %331 = vector.broadcast %c8_i32_57 : i32 to vector<8x1x1xi32>
    %332 = arith.addi %317, %331 : vector<8x1x1xi32>
    %333 = vector.broadcast %176 : vector<1x1x256xi32> to vector<8x1x256xi32>
    %334 = vector.broadcast %332 : vector<8x1x1xi32> to vector<8x1x256xi32>
    %335 = arith.cmpi slt, %333, %334 : vector<8x1x256xi32>
    %336 = arith.andi %330, %335 : vector<8x1x256xi1>
    %cst_58 = arith.constant 0.000000e+00 : f32
    %337 = vector.shape_cast %336 : vector<8x1x256xi1> to vector<8x1x256xi1>
    %338 = vector.broadcast %337 : vector<8x1x256xi1> to vector<8x3x256xi1>
    %339 = vector.broadcast %cst_58 : f32 to vector<8x3x256xf32>
    %340 = arith.select %338, %339, %307 : vector<8x3x256xi1>, vector<8x3x256xf32>
    %c8_59 = arith.constant 8 : index
    %c0_60 = arith.constant 0 : index
    %c0_61 = arith.constant 0 : index
    %341 = vector.load %arg4[%c8_59, %c0_60, %c0_61] : memref<32x3x256xf32, #tpu.memory_space<vmem>>, vector<8x3x256xf32>
    tpu.vector_store %arg4[%c8_59, %c0_60, %c0_61], %340 {strides = array<i32>} : memref<32x3x256xf32, #tpu.memory_space<vmem>>, vector<8x3x256xf32>,
    %c16 = arith.constant 16 : index
    %c0_62 = arith.constant 0 : index
    %c0_63 = arith.constant 0 : index
    %342 = vector.load %arg1[%c16, %c0_62, %c0_63] : memref<32x3x256xf32, #tpu.memory_space<vmem>>, vector<8x3x256xf32>
    %c16_64 = arith.constant 16 : index
    %c0_65 = arith.constant 0 : index
    %343 = vector.load %arg2[%c16_64, %c0_65] : memref<32x3xf32, #tpu.memory_space<vmem>>, vector<8x3xf32>
    %c16_66 = arith.constant 16 : index
    %c0_67 = arith.constant 0 : index
    %344 = vector.load %arg3[%c16_66, %c0_67] : memref<32x4xi32, #tpu.memory_space<vmem>>, vector<8x4xi32>
    %345 = tpu.iota {dimensions = array<i32: 2>} : vector<1x1x256xi32>
    %c15_i32_68 = arith.constant 15 : i32
    %346 = vector.broadcast %c15_i32_68 : i32 to vector<1x1x256xi32>
    %347 = arith.andi %345, %346 : vector<1x1x256xi32>
    %c4_i32_69 = arith.constant 4 : i32
    %348 = vector.broadcast %c4_i32_69 : i32 to vector<1x1x256xi32>
    %349 = arith.shrsi %345, %348 : vector<1x1x256xi32>
    %350 = vector.extract_strided_slice %343 {offsets = [0, 0], sizes = [8, 1], strides = [1, 1]} : vector<8x3xf32> to vector<8x1xf32>
    %351 = vector.shape_cast %350 : vector<8x1xf32> to vector<8xf32>
    %352 = vector.shape_cast %351 : vector<8xf32> to vector<8x1x1xf32>
    %353 = vector.extract_strided_slice %343 {offsets = [0, 1], sizes = [8, 1], strides = [1, 1]} : vector<8x3xf32> to vector<8x1xf32>
    %354 = vector.shape_cast %353 : vector<8x1xf32> to vector<8xf32>
    %355 = vector.shape_cast %354 : vector<8xf32> to vector<8x1x1xf32>
    %356 = vector.extract_strided_slice %343 {offsets = [0, 2], sizes = [8, 1], strides = [1, 1]} : vector<8x3xf32> to vector<8x1xf32>
    %357 = vector.shape_cast %356 : vector<8x1xf32> to vector<8xf32>
    %358 = vector.shape_cast %357 : vector<8xf32> to vector<8x1x1xf32>
    %359 = vector.broadcast %352 : vector<8x1x1xf32> to vector<8x3x256xf32>
    %360 = arith.addf %342, %359 : vector<8x3x256xf32>
    %cst_70 = arith.constant dense<0.000000e+00> : vector<8x256xf32>
    %361 = vector.multi_reduction <add>, %360, %cst_70 [1] : vector<8x3x256xf32> to vector<8x256xf32>
    %362 = vector.shape_cast %361 : vector<8x256xf32> to vector<8x1x256xf32>
    %cst_71 = arith.constant 3.000000e+00 : f32
    %363 = vector.broadcast %cst_71 : f32 to vector<8x1x256xf32>
    %364 = arith.divf %362, %363 : vector<8x1x256xf32>
    %365 = vector.broadcast %364 : vector<8x1x256xf32> to vector<8x3x256xf32>
    %366 = arith.subf %360, %365 : vector<8x3x256xf32>
    %367 = vector.broadcast %355 : vector<8x1x1xf32> to vector<8x3x256xf32>
    %368 = arith.mulf %366, %367 : vector<8x3x256xf32>
    %369 = vector.broadcast %364 : vector<8x1x256xf32> to vector<8x3x256xf32>
    %370 = arith.addf %368, %369 : vector<8x3x256xf32>
    %cst_72 = arith.constant dense<0.000000e+00> : vector<8x3xf32>
    %371 = vector.multi_reduction <add>, %370, %cst_72 [2] : vector<8x3x256xf32> to vector<8x3xf32>
    %372 = vector.shape_cast %371 : vector<8x3xf32> to vector<8x3x1xf32>
    %cst_73 = arith.constant 2.560000e+02 : f32
    %373 = vector.broadcast %cst_73 : f32 to vector<8x3x1xf32>
    %374 = arith.divf %372, %373 : vector<8x3x1xf32>
    %cst_74 = arith.constant dense<0.000000e+00> : vector<8x1xf32>
    %375 = vector.multi_reduction <add>, %374, %cst_74 [1] : vector<8x3x1xf32> to vector<8x1xf32>
    %376 = vector.shape_cast %375 : vector<8x1xf32> to vector<8x1x1xf32>
    %cst_75 = arith.constant 3.000000e+00 : f32
    %377 = vector.broadcast %cst_75 : f32 to vector<8x1x1xf32>
    %378 = arith.divf %376, %377 : vector<8x1x1xf32>
    %379 = vector.broadcast %378 : vector<8x1x1xf32> to vector<8x3x256xf32>
    %380 = arith.subf %370, %379 : vector<8x3x256xf32>
    %381 = vector.broadcast %358 : vector<8x1x1xf32> to vector<8x3x256xf32>
    %382 = arith.mulf %380, %381 : vector<8x3x256xf32>
    %383 = vector.broadcast %378 : vector<8x1x1xf32> to vector<8x3x256xf32>
    %384 = arith.addf %382, %383 : vector<8x3x256xf32>
    %385 = vector.extract_strided_slice %344 {offsets = [0, 0], sizes = [8, 1], strides = [1, 1]} : vector<8x4xi32> to vector<8x1xi32>
    %386 = vector.shape_cast %385 : vector<8x1xi32> to vector<8xi32>
    %387 = vector.shape_cast %386 : vector<8xi32> to vector<8x1x1xi32>
    %388 = vector.extract_strided_slice %344 {offsets = [0, 1], sizes = [8, 1], strides = [1, 1]} : vector<8x4xi32> to vector<8x1xi32>
    %389 = vector.shape_cast %388 : vector<8x1xi32> to vector<8xi32>
    %390 = vector.shape_cast %389 : vector<8xi32> to vector<8x1x1xi32>
    %c-2_i32_76 = arith.constant -2 : i32
    %391 = vector.broadcast %c-2_i32_76 : i32 to vector<8x1x1xi32>
    %392 = arith.cmpi eq, %387, %391 : vector<8x1x1xi32>
    %393 = vector.extract_strided_slice %384 {offsets = [0, 0, 224], sizes = [8, 3, 32], strides = [1, 1, 1]} : vector<8x3x256xf32> to vector<8x3x32xf32>
    %394 = vector.extract_strided_slice %384 {offsets = [0, 0, 0], sizes = [8, 3, 224], strides = [1, 1, 1]} : vector<8x3x256xf32> to vector<8x3x224xf32>
    %395 = tpu.concatenate %393, %394 in 2 : vector<8x3x32xf32>, vector<8x3x224xf32> -> vector<8x3x256xf32>
    %396 = vector.shape_cast %392 : vector<8x1x1xi1> to vector<8x1x1xi1>
    %397 = vector.broadcast %396 : vector<8x1x1xi1> to vector<8x3x256xi1>
    %398 = arith.select %397, %395, %384 : vector<8x3x256xi1>, vector<8x3x256xf32>
    %c-1_i32_77 = arith.constant -1 : i32
    %399 = vector.broadcast %c-1_i32_77 : i32 to vector<8x1x1xi32>
    %400 = arith.cmpi eq, %387, %399 : vector<8x1x1xi32>
    %401 = vector.extract_strided_slice %384 {offsets = [0, 0, 240], sizes = [8, 3, 16], strides = [1, 1, 1]} : vector<8x3x256xf32> to vector<8x3x16xf32>
    %402 = vector.extract_strided_slice %384 {offsets = [0, 0, 0], sizes = [8, 3, 240], strides = [1, 1, 1]} : vector<8x3x256xf32> to vector<8x3x240xf32>
    %403 = tpu.concatenate %401, %402 in 2 : vector<8x3x16xf32>, vector<8x3x240xf32> -> vector<8x3x256xf32>
    %404 = vector.shape_cast %400 : vector<8x1x1xi1> to vector<8x1x1xi1>
    %405 = vector.broadcast %404 : vector<8x1x1xi1> to vector<8x3x256xi1>
    %406 = arith.select %405, %403, %398 : vector<8x3x256xi1>, vector<8x3x256xf32>
    %c1_i32_78 = arith.constant 1 : i32
    %407 = vector.broadcast %c1_i32_78 : i32 to vector<8x1x1xi32>
    %408 = arith.cmpi eq, %387, %407 : vector<8x1x1xi32>
    %409 = vector.extract_strided_slice %384 {offsets = [0, 0, 16], sizes = [8, 3, 240], strides = [1, 1, 1]} : vector<8x3x256xf32> to vector<8x3x240xf32>
    %410 = vector.extract_strided_slice %384 {offsets = [0, 0, 0], sizes = [8, 3, 16], strides = [1, 1, 1]} : vector<8x3x256xf32> to vector<8x3x16xf32>
    %411 = tpu.concatenate %409, %410 in 2 : vector<8x3x240xf32>, vector<8x3x16xf32> -> vector<8x3x256xf32>
    %412 = vector.shape_cast %408 : vector<8x1x1xi1> to vector<8x1x1xi1>
    %413 = vector.broadcast %412 : vector<8x1x1xi1> to vector<8x3x256xi1>
    %414 = arith.select %413, %411, %406 : vector<8x3x256xi1>, vector<8x3x256xf32>
    %c2_i32_79 = arith.constant 2 : i32
    %415 = vector.broadcast %c2_i32_79 : i32 to vector<8x1x1xi32>
    %416 = arith.cmpi eq, %387, %415 : vector<8x1x1xi32>
    %417 = vector.extract_strided_slice %384 {offsets = [0, 0, 32], sizes = [8, 3, 224], strides = [1, 1, 1]} : vector<8x3x256xf32> to vector<8x3x224xf32>
    %418 = vector.extract_strided_slice %384 {offsets = [0, 0, 0], sizes = [8, 3, 32], strides = [1, 1, 1]} : vector<8x3x256xf32> to vector<8x3x32xf32>
    %419 = tpu.concatenate %417, %418 in 2 : vector<8x3x224xf32>, vector<8x3x32xf32> -> vector<8x3x256xf32>
    %420 = vector.shape_cast %416 : vector<8x1x1xi1> to vector<8x1x1xi1>
    %421 = vector.broadcast %420 : vector<8x1x1xi1> to vector<8x3x256xi1>
    %422 = arith.select %421, %419, %414 : vector<8x3x256xi1>, vector<8x3x256xf32>
    %423 = vector.broadcast %349 : vector<1x1x256xi32> to vector<8x1x256xi32>
    %424 = vector.broadcast %387 : vector<8x1x1xi32> to vector<8x1x256xi32>
    %425 = arith.addi %423, %424 : vector<8x1x256xi32>
    %c0_i32_80 = arith.constant 0 : i32
    %426 = vector.broadcast %c0_i32_80 : i32 to vector<8x1x256xi32>
    %427 = arith.cmpi sge, %425, %426 : vector<8x1x256xi32>
    %c16_i32_81 = arith.constant 16 : i32
    %428 = vector.broadcast %c16_i32_81 : i32 to vector<8x1x256xi32>
    %429 = arith.cmpi slt, %425, %428 : vector<8x1x256xi32>
    %430 = arith.andi %427, %429 : vector<8x1x256xi1>
    %cst_82 = arith.constant 0.000000e+00 : f32
    %431 = vector.shape_cast %430 : vector<8x1x256xi1> to vector<8x1x256xi1>
    %432 = vector.broadcast %431 : vector<8x1x256xi1> to vector<8x3x256xi1>
    %433 = vector.broadcast %cst_82 : f32 to vector<8x3x256xf32>
    %434 = arith.select %432, %422, %433 : vector<8x3x256xi1>, vector<8x3x256xf32>
    %c-2_i32_83 = arith.constant -2 : i32
    %435 = vector.broadcast %c-2_i32_83 : i32 to vector<8x1x1xi32>
    %436 = arith.cmpi eq, %390, %435 : vector<8x1x1xi32>
    %437 = vector.extract_strided_slice %434 {offsets = [0, 0, 254], sizes = [8, 3, 2], strides = [1, 1, 1]} : vector<8x3x256xf32> to vector<8x3x2xf32>
    %438 = vector.extract_strided_slice %434 {offsets = [0, 0, 0], sizes = [8, 3, 254], strides = [1, 1, 1]} : vector<8x3x256xf32> to vector<8x3x254xf32>
    %439 = tpu.concatenate %437, %438 in 2 : vector<8x3x2xf32>, vector<8x3x254xf32> -> vector<8x3x256xf32>
    %440 = vector.shape_cast %436 : vector<8x1x1xi1> to vector<8x1x1xi1>
    %441 = vector.broadcast %440 : vector<8x1x1xi1> to vector<8x3x256xi1>
    %442 = arith.select %441, %439, %434 : vector<8x3x256xi1>, vector<8x3x256xf32>
    %c-1_i32_84 = arith.constant -1 : i32
    %443 = vector.broadcast %c-1_i32_84 : i32 to vector<8x1x1xi32>
    %444 = arith.cmpi eq, %390, %443 : vector<8x1x1xi32>
    %445 = vector.extract_strided_slice %434 {offsets = [0, 0, 255], sizes = [8, 3, 1], strides = [1, 1, 1]} : vector<8x3x256xf32> to vector<8x3x1xf32>
    %446 = vector.extract_strided_slice %434 {offsets = [0, 0, 0], sizes = [8, 3, 255], strides = [1, 1, 1]} : vector<8x3x256xf32> to vector<8x3x255xf32>
    %447 = tpu.concatenate %445, %446 in 2 : vector<8x3x1xf32>, vector<8x3x255xf32> -> vector<8x3x256xf32>
    %448 = vector.shape_cast %444 : vector<8x1x1xi1> to vector<8x1x1xi1>
    %449 = vector.broadcast %448 : vector<8x1x1xi1> to vector<8x3x256xi1>
    %450 = arith.select %449, %447, %442 : vector<8x3x256xi1>, vector<8x3x256xf32>
    %c1_i32_85 = arith.constant 1 : i32
    %451 = vector.broadcast %c1_i32_85 : i32 to vector<8x1x1xi32>
    %452 = arith.cmpi eq, %390, %451 : vector<8x1x1xi32>
    %453 = vector.extract_strided_slice %434 {offsets = [0, 0, 1], sizes = [8, 3, 255], strides = [1, 1, 1]} : vector<8x3x256xf32> to vector<8x3x255xf32>
    %454 = vector.extract_strided_slice %434 {offsets = [0, 0, 0], sizes = [8, 3, 1], strides = [1, 1, 1]} : vector<8x3x256xf32> to vector<8x3x1xf32>
    %455 = tpu.concatenate %453, %454 in 2 : vector<8x3x255xf32>, vector<8x3x1xf32> -> vector<8x3x256xf32>
    %456 = vector.shape_cast %452 : vector<8x1x1xi1> to vector<8x1x1xi1>
    %457 = vector.broadcast %456 : vector<8x1x1xi1> to vector<8x3x256xi1>
    %458 = arith.select %457, %455, %450 : vector<8x3x256xi1>, vector<8x3x256xf32>
    %c2_i32_86 = arith.constant 2 : i32
    %459 = vector.broadcast %c2_i32_86 : i32 to vector<8x1x1xi32>
    %460 = arith.cmpi eq, %390, %459 : vector<8x1x1xi32>
    %461 = vector.extract_strided_slice %434 {offsets = [0, 0, 2], sizes = [8, 3, 254], strides = [1, 1, 1]} : vector<8x3x256xf32> to vector<8x3x254xf32>
    %462 = vector.extract_strided_slice %434 {offsets = [0, 0, 0], sizes = [8, 3, 2], strides = [1, 1, 1]} : vector<8x3x256xf32> to vector<8x3x2xf32>
    %463 = tpu.concatenate %461, %462 in 2 : vector<8x3x254xf32>, vector<8x3x2xf32> -> vector<8x3x256xf32>
    %464 = vector.shape_cast %460 : vector<8x1x1xi1> to vector<8x1x1xi1>
    %465 = vector.broadcast %464 : vector<8x1x1xi1> to vector<8x3x256xi1>
    %466 = arith.select %465, %463, %458 : vector<8x3x256xi1>, vector<8x3x256xf32>
    %467 = vector.broadcast %347 : vector<1x1x256xi32> to vector<8x1x256xi32>
    %468 = vector.broadcast %390 : vector<8x1x1xi32> to vector<8x1x256xi32>
    %469 = arith.addi %467, %468 : vector<8x1x256xi32>
    %c0_i32_87 = arith.constant 0 : i32
    %470 = vector.broadcast %c0_i32_87 : i32 to vector<8x1x256xi32>
    %471 = arith.cmpi sge, %469, %470 : vector<8x1x256xi32>
    %c16_i32_88 = arith.constant 16 : i32
    %472 = vector.broadcast %c16_i32_88 : i32 to vector<8x1x256xi32>
    %473 = arith.cmpi slt, %469, %472 : vector<8x1x256xi32>
    %474 = arith.andi %471, %473 : vector<8x1x256xi1>
    %cst_89 = arith.constant 0.000000e+00 : f32
    %475 = vector.shape_cast %474 : vector<8x1x256xi1> to vector<8x1x256xi1>
    %476 = vector.broadcast %475 : vector<8x1x256xi1> to vector<8x3x256xi1>
    %477 = vector.broadcast %cst_89 : f32 to vector<8x3x256xf32>
    %478 = arith.select %476, %466, %477 : vector<8x3x256xi1>, vector<8x3x256xf32>
    %479 = vector.extract_strided_slice %344 {offsets = [0, 2], sizes = [8, 1], strides = [1, 1]} : vector<8x4xi32> to vector<8x1xi32>
    %480 = vector.shape_cast %479 : vector<8x1xi32> to vector<8xi32>
    %481 = vector.shape_cast %480 : vector<8xi32> to vector<8x1x1xi32>
    %482 = vector.extract_strided_slice %344 {offsets = [0, 3], sizes = [8, 1], strides = [1, 1]} : vector<8x4xi32> to vector<8x1xi32>
    %483 = vector.shape_cast %482 : vector<8x1xi32> to vector<8xi32>
    %484 = vector.shape_cast %483 : vector<8xi32> to vector<8x1x1xi32>
    %c4_i32_90 = arith.constant 4 : i32
    %485 = vector.broadcast %c4_i32_90 : i32 to vector<8x1x1xi32>
    %486 = arith.subi %481, %485 : vector<8x1x1xi32>
    %c4_i32_91 = arith.constant 4 : i32
    %487 = vector.broadcast %c4_i32_91 : i32 to vector<8x1x1xi32>
    %488 = arith.subi %484, %487 : vector<8x1x1xi32>
    %489 = vector.broadcast %349 : vector<1x1x256xi32> to vector<8x1x256xi32>
    %490 = vector.broadcast %486 : vector<8x1x1xi32> to vector<8x1x256xi32>
    %491 = arith.cmpi sge, %489, %490 : vector<8x1x256xi32>
    %c8_i32_92 = arith.constant 8 : i32
    %492 = vector.broadcast %c8_i32_92 : i32 to vector<8x1x1xi32>
    %493 = arith.addi %486, %492 : vector<8x1x1xi32>
    %494 = vector.broadcast %349 : vector<1x1x256xi32> to vector<8x1x256xi32>
    %495 = vector.broadcast %493 : vector<8x1x1xi32> to vector<8x1x256xi32>
    %496 = arith.cmpi slt, %494, %495 : vector<8x1x256xi32>
    %497 = arith.andi %491, %496 : vector<8x1x256xi1>
    %498 = vector.broadcast %347 : vector<1x1x256xi32> to vector<8x1x256xi32>
    %499 = vector.broadcast %488 : vector<8x1x1xi32> to vector<8x1x256xi32>
    %500 = arith.cmpi sge, %498, %499 : vector<8x1x256xi32>
    %501 = arith.andi %497, %500 : vector<8x1x256xi1>
    %c8_i32_93 = arith.constant 8 : i32
    %502 = vector.broadcast %c8_i32_93 : i32 to vector<8x1x1xi32>
    %503 = arith.addi %488, %502 : vector<8x1x1xi32>
    %504 = vector.broadcast %347 : vector<1x1x256xi32> to vector<8x1x256xi32>
    %505 = vector.broadcast %503 : vector<8x1x1xi32> to vector<8x1x256xi32>
    %506 = arith.cmpi slt, %504, %505 : vector<8x1x256xi32>
    %507 = arith.andi %501, %506 : vector<8x1x256xi1>
    %cst_94 = arith.constant 0.000000e+00 : f32
    %508 = vector.shape_cast %507 : vector<8x1x256xi1> to vector<8x1x256xi1>
    %509 = vector.broadcast %508 : vector<8x1x256xi1> to vector<8x3x256xi1>
    %510 = vector.broadcast %cst_94 : f32 to vector<8x3x256xf32>
    %511 = arith.select %509, %510, %478 : vector<8x3x256xi1>, vector<8x3x256xf32>
    %c16_95 = arith.constant 16 : index
    %c0_96 = arith.constant 0 : index
    %c0_97 = arith.constant 0 : index
    %512 = vector.load %arg4[%c16_95, %c0_96, %c0_97] : memref<32x3x256xf32, #tpu.memory_space<vmem>>, vector<8x3x256xf32>
    tpu.vector_store %arg4[%c16_95, %c0_96, %c0_97], %511 {strides = array<i32>} : memref<32x3x256xf32, #tpu.memory_space<vmem>>, vector<8x3x256xf32>,
    %c24 = arith.constant 24 : index
    %c0_98 = arith.constant 0 : index
    %c0_99 = arith.constant 0 : index
    %513 = vector.load %arg1[%c24, %c0_98, %c0_99] : memref<32x3x256xf32, #tpu.memory_space<vmem>>, vector<8x3x256xf32>
    %c24_100 = arith.constant 24 : index
    %c0_101 = arith.constant 0 : index
    %514 = vector.load %arg2[%c24_100, %c0_101] : memref<32x3xf32, #tpu.memory_space<vmem>>, vector<8x3xf32>
    %c24_102 = arith.constant 24 : index
    %c0_103 = arith.constant 0 : index
    %515 = vector.load %arg3[%c24_102, %c0_103] : memref<32x4xi32, #tpu.memory_space<vmem>>, vector<8x4xi32>
    %516 = tpu.iota {dimensions = array<i32: 2>} : vector<1x1x256xi32>
    %c15_i32_104 = arith.constant 15 : i32
    %517 = vector.broadcast %c15_i32_104 : i32 to vector<1x1x256xi32>
    %518 = arith.andi %516, %517 : vector<1x1x256xi32>
    %c4_i32_105 = arith.constant 4 : i32
    %519 = vector.broadcast %c4_i32_105 : i32 to vector<1x1x256xi32>
    %520 = arith.shrsi %516, %519 : vector<1x1x256xi32>
    %521 = vector.extract_strided_slice %514 {offsets = [0, 0], sizes = [8, 1], strides = [1, 1]} : vector<8x3xf32> to vector<8x1xf32>
    %522 = vector.shape_cast %521 : vector<8x1xf32> to vector<8xf32>
    %523 = vector.shape_cast %522 : vector<8xf32> to vector<8x1x1xf32>
    %524 = vector.extract_strided_slice %514 {offsets = [0, 1], sizes = [8, 1], strides = [1, 1]} : vector<8x3xf32> to vector<8x1xf32>
    %525 = vector.shape_cast %524 : vector<8x1xf32> to vector<8xf32>
    %526 = vector.shape_cast %525 : vector<8xf32> to vector<8x1x1xf32>
    %527 = vector.extract_strided_slice %514 {offsets = [0, 2], sizes = [8, 1], strides = [1, 1]} : vector<8x3xf32> to vector<8x1xf32>
    %528 = vector.shape_cast %527 : vector<8x1xf32> to vector<8xf32>
    %529 = vector.shape_cast %528 : vector<8xf32> to vector<8x1x1xf32>
    %530 = vector.broadcast %523 : vector<8x1x1xf32> to vector<8x3x256xf32>
    %531 = arith.addf %513, %530 : vector<8x3x256xf32>
    %cst_106 = arith.constant dense<0.000000e+00> : vector<8x256xf32>
    %532 = vector.multi_reduction <add>, %531, %cst_106 [1] : vector<8x3x256xf32> to vector<8x256xf32>
    %533 = vector.shape_cast %532 : vector<8x256xf32> to vector<8x1x256xf32>
    %cst_107 = arith.constant 3.000000e+00 : f32
    %534 = vector.broadcast %cst_107 : f32 to vector<8x1x256xf32>
    %535 = arith.divf %533, %534 : vector<8x1x256xf32>
    %536 = vector.broadcast %535 : vector<8x1x256xf32> to vector<8x3x256xf32>
    %537 = arith.subf %531, %536 : vector<8x3x256xf32>
    %538 = vector.broadcast %526 : vector<8x1x1xf32> to vector<8x3x256xf32>
    %539 = arith.mulf %537, %538 : vector<8x3x256xf32>
    %540 = vector.broadcast %535 : vector<8x1x256xf32> to vector<8x3x256xf32>
    %541 = arith.addf %539, %540 : vector<8x3x256xf32>
    %cst_108 = arith.constant dense<0.000000e+00> : vector<8x3xf32>
    %542 = vector.multi_reduction <add>, %541, %cst_108 [2] : vector<8x3x256xf32> to vector<8x3xf32>
    %543 = vector.shape_cast %542 : vector<8x3xf32> to vector<8x3x1xf32>
    %cst_109 = arith.constant 2.560000e+02 : f32
    %544 = vector.broadcast %cst_109 : f32 to vector<8x3x1xf32>
    %545 = arith.divf %543, %544 : vector<8x3x1xf32>
    %cst_110 = arith.constant dense<0.000000e+00> : vector<8x1xf32>
    %546 = vector.multi_reduction <add>, %545, %cst_110 [1] : vector<8x3x1xf32> to vector<8x1xf32>
    %547 = vector.shape_cast %546 : vector<8x1xf32> to vector<8x1x1xf32>
    %cst_111 = arith.constant 3.000000e+00 : f32
    %548 = vector.broadcast %cst_111 : f32 to vector<8x1x1xf32>
    %549 = arith.divf %547, %548 : vector<8x1x1xf32>
    %550 = vector.broadcast %549 : vector<8x1x1xf32> to vector<8x3x256xf32>
    %551 = arith.subf %541, %550 : vector<8x3x256xf32>
    %552 = vector.broadcast %529 : vector<8x1x1xf32> to vector<8x3x256xf32>
    %553 = arith.mulf %551, %552 : vector<8x3x256xf32>
    %554 = vector.broadcast %549 : vector<8x1x1xf32> to vector<8x3x256xf32>
    %555 = arith.addf %553, %554 : vector<8x3x256xf32>
    %556 = vector.extract_strided_slice %515 {offsets = [0, 0], sizes = [8, 1], strides = [1, 1]} : vector<8x4xi32> to vector<8x1xi32>
    %557 = vector.shape_cast %556 : vector<8x1xi32> to vector<8xi32>
    %558 = vector.shape_cast %557 : vector<8xi32> to vector<8x1x1xi32>
    %559 = vector.extract_strided_slice %515 {offsets = [0, 1], sizes = [8, 1], strides = [1, 1]} : vector<8x4xi32> to vector<8x1xi32>
    %560 = vector.shape_cast %559 : vector<8x1xi32> to vector<8xi32>
    %561 = vector.shape_cast %560 : vector<8xi32> to vector<8x1x1xi32>
    %c-2_i32_112 = arith.constant -2 : i32
    %562 = vector.broadcast %c-2_i32_112 : i32 to vector<8x1x1xi32>
    %563 = arith.cmpi eq, %558, %562 : vector<8x1x1xi32>
    %564 = vector.extract_strided_slice %555 {offsets = [0, 0, 224], sizes = [8, 3, 32], strides = [1, 1, 1]} : vector<8x3x256xf32> to vector<8x3x32xf32>
    %565 = vector.extract_strided_slice %555 {offsets = [0, 0, 0], sizes = [8, 3, 224], strides = [1, 1, 1]} : vector<8x3x256xf32> to vector<8x3x224xf32>
    %566 = tpu.concatenate %564, %565 in 2 : vector<8x3x32xf32>, vector<8x3x224xf32> -> vector<8x3x256xf32>
    %567 = vector.shape_cast %563 : vector<8x1x1xi1> to vector<8x1x1xi1>
    %568 = vector.broadcast %567 : vector<8x1x1xi1> to vector<8x3x256xi1>
    %569 = arith.select %568, %566, %555 : vector<8x3x256xi1>, vector<8x3x256xf32>
    %c-1_i32_113 = arith.constant -1 : i32
    %570 = vector.broadcast %c-1_i32_113 : i32 to vector<8x1x1xi32>
    %571 = arith.cmpi eq, %558, %570 : vector<8x1x1xi32>
    %572 = vector.extract_strided_slice %555 {offsets = [0, 0, 240], sizes = [8, 3, 16], strides = [1, 1, 1]} : vector<8x3x256xf32> to vector<8x3x16xf32>
    %573 = vector.extract_strided_slice %555 {offsets = [0, 0, 0], sizes = [8, 3, 240], strides = [1, 1, 1]} : vector<8x3x256xf32> to vector<8x3x240xf32>
    %574 = tpu.concatenate %572, %573 in 2 : vector<8x3x16xf32>, vector<8x3x240xf32> -> vector<8x3x256xf32>
    %575 = vector.shape_cast %571 : vector<8x1x1xi1> to vector<8x1x1xi1>
    %576 = vector.broadcast %575 : vector<8x1x1xi1> to vector<8x3x256xi1>
    %577 = arith.select %576, %574, %569 : vector<8x3x256xi1>, vector<8x3x256xf32>
    %c1_i32_114 = arith.constant 1 : i32
    %578 = vector.broadcast %c1_i32_114 : i32 to vector<8x1x1xi32>
    %579 = arith.cmpi eq, %558, %578 : vector<8x1x1xi32>
    %580 = vector.extract_strided_slice %555 {offsets = [0, 0, 16], sizes = [8, 3, 240], strides = [1, 1, 1]} : vector<8x3x256xf32> to vector<8x3x240xf32>
    %581 = vector.extract_strided_slice %555 {offsets = [0, 0, 0], sizes = [8, 3, 16], strides = [1, 1, 1]} : vector<8x3x256xf32> to vector<8x3x16xf32>
    %582 = tpu.concatenate %580, %581 in 2 : vector<8x3x240xf32>, vector<8x3x16xf32> -> vector<8x3x256xf32>
    %583 = vector.shape_cast %579 : vector<8x1x1xi1> to vector<8x1x1xi1>
    %584 = vector.broadcast %583 : vector<8x1x1xi1> to vector<8x3x256xi1>
    %585 = arith.select %584, %582, %577 : vector<8x3x256xi1>, vector<8x3x256xf32>
    %c2_i32_115 = arith.constant 2 : i32
    %586 = vector.broadcast %c2_i32_115 : i32 to vector<8x1x1xi32>
    %587 = arith.cmpi eq, %558, %586 : vector<8x1x1xi32>
    %588 = vector.extract_strided_slice %555 {offsets = [0, 0, 32], sizes = [8, 3, 224], strides = [1, 1, 1]} : vector<8x3x256xf32> to vector<8x3x224xf32>
    %589 = vector.extract_strided_slice %555 {offsets = [0, 0, 0], sizes = [8, 3, 32], strides = [1, 1, 1]} : vector<8x3x256xf32> to vector<8x3x32xf32>
    %590 = tpu.concatenate %588, %589 in 2 : vector<8x3x224xf32>, vector<8x3x32xf32> -> vector<8x3x256xf32>
    %591 = vector.shape_cast %587 : vector<8x1x1xi1> to vector<8x1x1xi1>
    %592 = vector.broadcast %591 : vector<8x1x1xi1> to vector<8x3x256xi1>
    %593 = arith.select %592, %590, %585 : vector<8x3x256xi1>, vector<8x3x256xf32>
    %594 = vector.broadcast %520 : vector<1x1x256xi32> to vector<8x1x256xi32>
    %595 = vector.broadcast %558 : vector<8x1x1xi32> to vector<8x1x256xi32>
    %596 = arith.addi %594, %595 : vector<8x1x256xi32>
    %c0_i32_116 = arith.constant 0 : i32
    %597 = vector.broadcast %c0_i32_116 : i32 to vector<8x1x256xi32>
    %598 = arith.cmpi sge, %596, %597 : vector<8x1x256xi32>
    %c16_i32_117 = arith.constant 16 : i32
    %599 = vector.broadcast %c16_i32_117 : i32 to vector<8x1x256xi32>
    %600 = arith.cmpi slt, %596, %599 : vector<8x1x256xi32>
    %601 = arith.andi %598, %600 : vector<8x1x256xi1>
    %cst_118 = arith.constant 0.000000e+00 : f32
    %602 = vector.shape_cast %601 : vector<8x1x256xi1> to vector<8x1x256xi1>
    %603 = vector.broadcast %602 : vector<8x1x256xi1> to vector<8x3x256xi1>
    %604 = vector.broadcast %cst_118 : f32 to vector<8x3x256xf32>
    %605 = arith.select %603, %593, %604 : vector<8x3x256xi1>, vector<8x3x256xf32>
    %c-2_i32_119 = arith.constant -2 : i32
    %606 = vector.broadcast %c-2_i32_119 : i32 to vector<8x1x1xi32>
    %607 = arith.cmpi eq, %561, %606 : vector<8x1x1xi32>
    %608 = vector.extract_strided_slice %605 {offsets = [0, 0, 254], sizes = [8, 3, 2], strides = [1, 1, 1]} : vector<8x3x256xf32> to vector<8x3x2xf32>
    %609 = vector.extract_strided_slice %605 {offsets = [0, 0, 0], sizes = [8, 3, 254], strides = [1, 1, 1]} : vector<8x3x256xf32> to vector<8x3x254xf32>
    %610 = tpu.concatenate %608, %609 in 2 : vector<8x3x2xf32>, vector<8x3x254xf32> -> vector<8x3x256xf32>
    %611 = vector.shape_cast %607 : vector<8x1x1xi1> to vector<8x1x1xi1>
    %612 = vector.broadcast %611 : vector<8x1x1xi1> to vector<8x3x256xi1>
    %613 = arith.select %612, %610, %605 : vector<8x3x256xi1>, vector<8x3x256xf32>
    %c-1_i32_120 = arith.constant -1 : i32
    %614 = vector.broadcast %c-1_i32_120 : i32 to vector<8x1x1xi32>
    %615 = arith.cmpi eq, %561, %614 : vector<8x1x1xi32>
    %616 = vector.extract_strided_slice %605 {offsets = [0, 0, 255], sizes = [8, 3, 1], strides = [1, 1, 1]} : vector<8x3x256xf32> to vector<8x3x1xf32>
    %617 = vector.extract_strided_slice %605 {offsets = [0, 0, 0], sizes = [8, 3, 255], strides = [1, 1, 1]} : vector<8x3x256xf32> to vector<8x3x255xf32>
    %618 = tpu.concatenate %616, %617 in 2 : vector<8x3x1xf32>, vector<8x3x255xf32> -> vector<8x3x256xf32>
    %619 = vector.shape_cast %615 : vector<8x1x1xi1> to vector<8x1x1xi1>
    %620 = vector.broadcast %619 : vector<8x1x1xi1> to vector<8x3x256xi1>
    %621 = arith.select %620, %618, %613 : vector<8x3x256xi1>, vector<8x3x256xf32>
    %c1_i32_121 = arith.constant 1 : i32
    %622 = vector.broadcast %c1_i32_121 : i32 to vector<8x1x1xi32>
    %623 = arith.cmpi eq, %561, %622 : vector<8x1x1xi32>
    %624 = vector.extract_strided_slice %605 {offsets = [0, 0, 1], sizes = [8, 3, 255], strides = [1, 1, 1]} : vector<8x3x256xf32> to vector<8x3x255xf32>
    %625 = vector.extract_strided_slice %605 {offsets = [0, 0, 0], sizes = [8, 3, 1], strides = [1, 1, 1]} : vector<8x3x256xf32> to vector<8x3x1xf32>
    %626 = tpu.concatenate %624, %625 in 2 : vector<8x3x255xf32>, vector<8x3x1xf32> -> vector<8x3x256xf32>
    %627 = vector.shape_cast %623 : vector<8x1x1xi1> to vector<8x1x1xi1>
    %628 = vector.broadcast %627 : vector<8x1x1xi1> to vector<8x3x256xi1>
    %629 = arith.select %628, %626, %621 : vector<8x3x256xi1>, vector<8x3x256xf32>
    %c2_i32_122 = arith.constant 2 : i32
    %630 = vector.broadcast %c2_i32_122 : i32 to vector<8x1x1xi32>
    %631 = arith.cmpi eq, %561, %630 : vector<8x1x1xi32>
    %632 = vector.extract_strided_slice %605 {offsets = [0, 0, 2], sizes = [8, 3, 254], strides = [1, 1, 1]} : vector<8x3x256xf32> to vector<8x3x254xf32>
    %633 = vector.extract_strided_slice %605 {offsets = [0, 0, 0], sizes = [8, 3, 2], strides = [1, 1, 1]} : vector<8x3x256xf32> to vector<8x3x2xf32>
    %634 = tpu.concatenate %632, %633 in 2 : vector<8x3x254xf32>, vector<8x3x2xf32> -> vector<8x3x256xf32>
    %635 = vector.shape_cast %631 : vector<8x1x1xi1> to vector<8x1x1xi1>
    %636 = vector.broadcast %635 : vector<8x1x1xi1> to vector<8x3x256xi1>
    %637 = arith.select %636, %634, %629 : vector<8x3x256xi1>, vector<8x3x256xf32>
    %638 = vector.broadcast %518 : vector<1x1x256xi32> to vector<8x1x256xi32>
    %639 = vector.broadcast %561 : vector<8x1x1xi32> to vector<8x1x256xi32>
    %640 = arith.addi %638, %639 : vector<8x1x256xi32>
    %c0_i32_123 = arith.constant 0 : i32
    %641 = vector.broadcast %c0_i32_123 : i32 to vector<8x1x256xi32>
    %642 = arith.cmpi sge, %640, %641 : vector<8x1x256xi32>
    %c16_i32_124 = arith.constant 16 : i32
    %643 = vector.broadcast %c16_i32_124 : i32 to vector<8x1x256xi32>
    %644 = arith.cmpi slt, %640, %643 : vector<8x1x256xi32>
    %645 = arith.andi %642, %644 : vector<8x1x256xi1>
    %cst_125 = arith.constant 0.000000e+00 : f32
    %646 = vector.shape_cast %645 : vector<8x1x256xi1> to vector<8x1x256xi1>
    %647 = vector.broadcast %646 : vector<8x1x256xi1> to vector<8x3x256xi1>
    %648 = vector.broadcast %cst_125 : f32 to vector<8x3x256xf32>
    %649 = arith.select %647, %637, %648 : vector<8x3x256xi1>, vector<8x3x256xf32>
    %650 = vector.extract_strided_slice %515 {offsets = [0, 2], sizes = [8, 1], strides = [1, 1]} : vector<8x4xi32> to vector<8x1xi32>
    %651 = vector.shape_cast %650 : vector<8x1xi32> to vector<8xi32>
    %652 = vector.shape_cast %651 : vector<8xi32> to vector<8x1x1xi32>
    %653 = vector.extract_strided_slice %515 {offsets = [0, 3], sizes = [8, 1], strides = [1, 1]} : vector<8x4xi32> to vector<8x1xi32>
    %654 = vector.shape_cast %653 : vector<8x1xi32> to vector<8xi32>
    %655 = vector.shape_cast %654 : vector<8xi32> to vector<8x1x1xi32>
    %c4_i32_126 = arith.constant 4 : i32
    %656 = vector.broadcast %c4_i32_126 : i32 to vector<8x1x1xi32>
    %657 = arith.subi %652, %656 : vector<8x1x1xi32>
    %c4_i32_127 = arith.constant 4 : i32
    %658 = vector.broadcast %c4_i32_127 : i32 to vector<8x1x1xi32>
    %659 = arith.subi %655, %658 : vector<8x1x1xi32>
    %660 = vector.broadcast %520 : vector<1x1x256xi32> to vector<8x1x256xi32>
    %661 = vector.broadcast %657 : vector<8x1x1xi32> to vector<8x1x256xi32>
    %662 = arith.cmpi sge, %660, %661 : vector<8x1x256xi32>
    %c8_i32_128 = arith.constant 8 : i32
    %663 = vector.broadcast %c8_i32_128 : i32 to vector<8x1x1xi32>
    %664 = arith.addi %657, %663 : vector<8x1x1xi32>
    %665 = vector.broadcast %520 : vector<1x1x256xi32> to vector<8x1x256xi32>
    %666 = vector.broadcast %664 : vector<8x1x1xi32> to vector<8x1x256xi32>
    %667 = arith.cmpi slt, %665, %666 : vector<8x1x256xi32>
    %668 = arith.andi %662, %667 : vector<8x1x256xi1>
    %669 = vector.broadcast %518 : vector<1x1x256xi32> to vector<8x1x256xi32>
    %670 = vector.broadcast %659 : vector<8x1x1xi32> to vector<8x1x256xi32>
    %671 = arith.cmpi sge, %669, %670 : vector<8x1x256xi32>
    %672 = arith.andi %668, %671 : vector<8x1x256xi1>
    %c8_i32_129 = arith.constant 8 : i32
    %673 = vector.broadcast %c8_i32_129 : i32 to vector<8x1x1xi32>
    %674 = arith.addi %659, %673 : vector<8x1x1xi32>
    %675 = vector.broadcast %518 : vector<1x1x256xi32> to vector<8x1x256xi32>
    %676 = vector.broadcast %674 : vector<8x1x1xi32> to vector<8x1x256xi32>
    %677 = arith.cmpi slt, %675, %676 : vector<8x1x256xi32>
    %678 = arith.andi %672, %677 : vector<8x1x256xi1>
    %cst_130 = arith.constant 0.000000e+00 : f32
    %679 = vector.shape_cast %678 : vector<8x1x256xi1> to vector<8x1x256xi1>
    %680 = vector.broadcast %679 : vector<8x1x256xi1> to vector<8x3x256xi1>
    %681 = vector.broadcast %cst_130 : f32 to vector<8x3x256xf32>
    %682 = arith.select %680, %681, %649 : vector<8x3x256xi1>, vector<8x3x256xf32>
    %c24_131 = arith.constant 24 : index
    %c0_132 = arith.constant 0 : index
    %c0_133 = arith.constant 0 : index
    %683 = vector.load %arg4[%c24_131, %c0_132, %c0_133] : memref<32x3x256xf32, #tpu.memory_space<vmem>>, vector<8x3x256xf32>
    tpu.vector_store %arg4[%c24_131, %c0_132, %c0_133], %682 {strides = array<i32>} : memref<32x3x256xf32, #tpu.memory_space<vmem>>, vector<8x3x256xf32>,
    return
  }
  func.func @transform_0(%arg0: i32) -> (i32, i32, i32) {
    %c0_i32 = arith.constant 0 : i32
    %c0_i32_0 = arith.constant 0 : i32
    %c0_i32_1 = arith.constant 0 : i32
    return %arg0, %c0_i32, %c0_i32_0 : i32, i32, i32
  }
  func.func @transform_1(%arg0: i32) -> (i32, i32) {
    %c0_i32 = arith.constant 0 : i32
    %c0_i32_0 = arith.constant 0 : i32
    return %arg0, %c0_i32 : i32, i32
  }
  func.func @transform_2(%arg0: i32) -> (i32, i32) {
    %c0_i32 = arith.constant 0 : i32
    %c0_i32_0 = arith.constant 0 : i32
    return %arg0, %c0_i32 : i32, i32
  }
  func.func @transform_3(%arg0: i32) -> (i32, i32, i32) {
    %c0_i32 = arith.constant 0 : i32
    %c0_i32_0 = arith.constant 0 : i32
    %c0_i32_1 = arith.constant 0 : i32
    return %arg0, %c0_i32, %c0_i32_0 : i32, i32, i32
  }
}

</mosaic_0001>

<llo_original>
// kernel: tpu_custom_call.1
$region0: #{tpu_custom_call.1}
  #allocation0 [shape = 'u32[]', space=smem, size = 0x4, offset = 0x4, fixed_abs, tag = 'smem constant byte address 0x4 - core index']
  #allocation1 [shape = 'u32[144,128]{1,0:T(1,128)}', space=vmem, size = 0x12000, scoped, tag = 'internal scratch']
  %s0 = inlined_call_operand.vmem [shape: f32[32,3,256], index: 0, kind: input, shape index: {}]
  %s1 = inlined_call_operand.vmem [shape: f32[32,3], index: 1, kind: input, shape index: {}]
  %s2 = inlined_call_operand.vmem [shape: s32[32,4], index: 2, kind: input, shape index: {}]
  %s3 = inlined_call_operand.vmem [shape: f32[32,3,256], index: 3, kind: output, shape index: {}]
  %s4 = sld [smem:[#allocation0]]
  $region22: #{tpu_custom_call.1} parent=0
    _
  %s6 = ssub.s32 1, %s4
  %s7 = scalar_select 0, %s6, %s4
  // Predicated region
  $region2: #{tpu_custom_call.1} parent=0 // pred_check
    _
  $region3: #{tpu_custom_call.1} parent=0 // pred_check_branch
    %9 = sbr.rel (0) target = $region5
  $region4: #{tpu_custom_call.1} parent=0 // pred_region
    _
  $region5: #{tpu_custom_call.1} parent=0 // pred_fallthru
    _
  // Predicated region
  $region6: #{tpu_custom_call.1} parent=0 // pred_check
    _
  $region7: #{tpu_custom_call.1} parent=0 // pred_check_branch
    %11 = sbr.rel (0) target = $region9
  $region8: #{tpu_custom_call.1} parent=0 // pred_region
    _
  $region9: #{tpu_custom_call.1} parent=0 // pred_fallthru
    _
  // Predicated region
  $region10: #{tpu_custom_call.1} parent=0 // pred_check
    _
  $region11: #{tpu_custom_call.1} parent=0 // pred_check_branch
    %13 = sbr.rel (0) target = $region13
  $region12: #{tpu_custom_call.1} parent=0 // pred_region
    _
  $region13: #{tpu_custom_call.1} parent=0 // pred_fallthru
    _
  %v14 = vld [vmem:[%s0] sm:$0x77]
  %v15 = vld [vmem:[%s0 + $0x8] sm:$0x77]
  %v16 = vld [vmem:[%s0 + $0x10] sm:$0x77]
  %v17 = vld [vmem:[%s0 + $0x18] sm:$0x77]
  %v18 = vld [vmem:[%s0 + $0x20] sm:$0x77]
  %v19 = vld [vmem:[%s0 + $0x28] sm:$0x77]
  %v20 = vld [vmem:[%s0 + $0x30] sm:$0x77]
  %v21 = vld [vmem:[%s0 + $0x38] sm:$0x77]
  %v22 = vld [vmem:[%s1] sm:$0xff]
  %v23 = vld [vmem:[%s2] sm:$0xff]
  %v24 = vlaneseq
  %v25 = vand.u32 %v24, 127
  %v26 = vadd.s32 %v25, 128
  %v27 = vand.u32 %v25, 15
  %v28 = vand.u32 %v26, 15
  %v29 = vshra.s32 %v25, 4
  %v30 = vshra.s32 %v26, 4
  %v32 = vcombine.high %v22, %v22
  %v34 = vunpack.c.l.s4 1966171168
  %v35 = vunpack.c.0.s8 %v34
  %v36 = vlaneseq
  %v37 = vshrl.u32 %v36, 7
  %v38 = vsub.s32 %v35, %v37
  %v39 = vrot.slane %v22, %v38
  %v41 = vunpack.c.l.s4 1966171168
  %v42 = vunpack.c.0.s8 %v41
  %v43 = vlaneseq
  %v44 = vshrl.u32 %v43, 7
  %v45 = vsub.s32 %v42, %v44
  %v46 = vrot.slane %v32, %v45
  %v47 = vcombine.high %v39, %v39
  %v48 = vcombine.high %v46, %v46
  %v50 = vunpack.c.l.s4 1966171168
  %v51 = vunpack.c.0.s8 %v50
  %v52 = vlaneseq
  %v53 = vshrl.u32 %v52, 7
  %v54 = vsub.s32 %v51, %v53
  %v55 = vrot.slane %v39, %v54
  %v57 = vunpack.c.l.s4 1966171168
  %v58 = vunpack.c.0.s8 %v57
  %v59 = vlaneseq
  %v60 = vshrl.u32 %v59, 7
  %v61 = vsub.s32 %v58, %v60
  %v62 = vrot.slane %v46, %v61
  %v64 = vunpack.c.l.s4 1966171168
  %v65 = vunpack.c.0.s8 %v64
  %v66 = vlaneseq
  %v67 = vshrl.u32 %v66, 7
  %v68 = vsub.s32 %v65, %v67
  %v69 = vrot.slane %v47, %v68
  %v71 = vunpack.c.l.s4 1966171168
  %v72 = vunpack.c.0.s8 %v71
  %v73 = vlaneseq
  %v74 = vshrl.u32 %v73, 7
  %v75 = vsub.s32 %v72, %v74
  %v76 = vrot.slane %v48, %v75
  %v77 = vcombine.high %v55, %v55
  %v78 = vcombine.high %v62, %v62
  %v79 = vcombine.high %v69, %v69
  %v80 = vcombine.high %v76, %v76
  %v81 = vlaneseq
  %v82 = vshrl.u32 %v81, 7
  %v83 = vsub.s32 0, %v82
  %v84 = vrot.slane %v55, %v83
  %v85 = vlaneseq
  %v86 = vshrl.u32 %v85, 7
  %v87 = vsub.s32 0, %v86
  %v88 = vrot.slane %v69, %v87
  %v89 = vlaneseq
  %v90 = vshrl.u32 %v89, 7
  %v91 = vsub.s32 0, %v90
  %v92 = vrot.slane %v77, %v91
  %v93 = vlaneseq
  %v94 = vshrl.u32 %v93, 7
  %v95 = vsub.s32 0, %v94
  %v96 = vrot.slane %v79, %v95
  %v97 = vlaneseq
  %v98 = vshrl.u32 %v97, 7
  %v99 = vsub.s32 0, %v98
  %v100 = vrot.slane %v62, %v99
  %v101 = vlaneseq
  %v102 = vshrl.u32 %v101, 7
  %v103 = vsub.s32 0, %v102
  %v104 = vrot.slane %v76, %v103
  %v105 = vlaneseq
  %v106 = vshrl.u32 %v105, 7
  %v107 = vsub.s32 0, %v106
  %v108 = vrot.slane %v78, %v107
  %v109 = vlaneseq
  %v110 = vshrl.u32 %v109, 7
  %v111 = vsub.s32 0, %v110
  %v112 = vrot.slane %v80, %v111
  %113 = vset.pattern.permute.xlu0 0
  %114 = vperm.xlu0 %113, %v84
  %v115 = vpop.permute.xlu0 %114
  %117 = vset.pattern.permute.xlu0 0
  %118 = vperm.xlu0 %117, %v88
  %v119 = vpop.permute.xlu0 %118
  %121 = vset.pattern.permute.xlu0 0
  %122 = vperm.xlu0 %121, %v92
  %v123 = vpop.permute.xlu0 %122
  %125 = vset.pattern.permute.xlu0 0
  %126 = vperm.xlu0 %125, %v96
  %v127 = vpop.permute.xlu0 %126
  %129 = vset.pattern.permute.xlu0 0
  %130 = vperm.xlu0 %129, %v100
  %v131 = vpop.permute.xlu0 %130
  %133 = vset.pattern.permute.xlu0 0
  %134 = vperm.xlu0 %133, %v104
  %v135 = vpop.permute.xlu0 %134
  %137 = vset.pattern.permute.xlu0 0
  %138 = vperm.xlu0 %137, %v108
  %v139 = vpop.permute.xlu0 %138
  %141 = vset.pattern.permute.xlu0 0
  %142 = vperm.xlu0 %141, %v112
  %v143 = vpop.permute.xlu0 %142
  %v145 = vadd.f32 %v14, %v115
  %v146 = vadd.f32 %v15, %v119
  %v147 = vadd.f32 %v16, %v123
  %v148 = vadd.f32 %v17, %v127
  %v149 = vadd.f32 %v18, %v131
  %v150 = vadd.f32 %v19, %v135
  %v151 = vadd.f32 %v20, %v139
  %v152 = vadd.f32 %v21, %v143
  %v161 = vcombine.high %v145, %v145
  %v162 = vcombine.high %v146, %v146
  %v163 = vcombine.high %v147, %v147
  %v164 = vcombine.high %v148, %v148
  %v165 = vcombine.high %v149, %v149
  %v166 = vcombine.high %v150, %v150
  %v167 = vcombine.high %v151, %v151
  %v168 = vcombine.high %v152, %v152
  %vm177 = vcmask 1042432
  %v178 = vsel %vm177, %v145, 0.0
  %v179 = vrot.slane %v178, 4
  %v180 = vadd.f32 %v178, %v179
  %v181 = vrot.slane %v180, 2
  %v182 = vadd.f32 %v180, %v181
  %v183 = vrot.slane %v182, 1
  %v184 = vadd.f32 %v182, %v183
  %v185 = vsel %vm177, %v161, 0.0
  %v186 = vrot.slane %v185, 4
  %v187 = vadd.f32 %v185, %v186
  %v188 = vrot.slane %v187, 2
  %v189 = vadd.f32 %v187, %v188
  %v190 = vrot.slane %v189, 1
  %v191 = vadd.f32 %v189, %v190
  %v192 = vsel %vm177, %v146, 0.0
  %v193 = vrot.slane %v192, 4
  %v194 = vadd.f32 %v192, %v193
  %v195 = vrot.slane %v194, 2
  %v196 = vadd.f32 %v194, %v195
  %v197 = vrot.slane %v196, 1
  %v198 = vadd.f32 %v196, %v197
  %v199 = vsel %vm177, %v162, 0.0
  %v200 = vrot.slane %v199, 4
  %v201 = vadd.f32 %v199, %v200
  %v202 = vrot.slane %v201, 2
  %v203 = vadd.f32 %v201, %v202
  %v204 = vrot.slane %v203, 1
  %v205 = vadd.f32 %v203, %v204
  %v206 = vsel %vm177, %v147, 0.0
  %v207 = vrot.slane %v206, 4
  %v208 = vadd.f32 %v206, %v207
  %v209 = vrot.slane %v208, 2
  %v210 = vadd.f32 %v208, %v209
  %v211 = vrot.slane %v210, 1
  %v212 = vadd.f32 %v210, %v211
  %v213 = vsel %vm177, %v163, 0.0
  %v214 = vrot.slane %v213, 4
  %v215 = vadd.f32 %v213, %v214
  %v216 = vrot.slane %v215, 2
  %v217 = vadd.f32 %v215, %v216
  %v218 = vrot.slane %v217, 1
  %v219 = vadd.f32 %v217, %v218
  %v220 = vsel %vm177, %v148, 0.0
  %v221 = vrot.slane %v220, 4
  %v222 = vadd.f32 %v220, %v221
  %v223 = vrot.slane %v222, 2
  %v224 = vadd.f32 %v222, %v223
  %v225 = vrot.slane %v224, 1
  %v226 = vadd.f32 %v224, %v225
  %v227 = vsel %vm177, %v164, 0.0
  %v228 = vrot.slane %v227, 4
  %v229 = vadd.f32 %v227, %v228
  %v230 = vrot.slane %v229, 2
  %v231 = vadd.f32 %v229, %v230
  %v232 = vrot.slane %v231, 1
  %v233 = vadd.f32 %v231, %v232
  %v234 = vsel %vm177, %v149, 0.0
  %v235 = vrot.slane %v234, 4
  %v236 = vadd.f32 %v234, %v235
  %v237 = vrot.slane %v236, 2
  %v238 = vadd.f32 %v236, %v237
  %v239 = vrot.slane %v238, 1
  %v240 = vadd.f32 %v238, %v239
  %v241 = vsel %vm177, %v165, 0.0
  %v242 = vrot.slane %v241, 4
  %v243 = vadd.f32 %v241, %v242
  %v244 = vrot.slane %v243, 2
  %v245 = vadd.f32 %v243, %v244
  %v246 = vrot.slane %v245, 1
  %v247 = vadd.f32 %v245, %v246
  %v248 = vsel %vm177, %v150, 0.0
  %v249 = vrot.slane %v248, 4
  %v250 = vadd.f32 %v248, %v249
  %v251 = vrot.slane %v250, 2
  %v252 = vadd.f32 %v250, %v251
  %v253 = vrot.slane %v252, 1
  %v254 = vadd.f32 %v252, %v253
  %v255 = vsel %vm177, %v166, 0.0
  %v256 = vrot.slane %v255, 4
  %v257 = vadd.f32 %v255, %v256
  %v258 = vrot.slane %v257, 2
  %v259 = vadd.f32 %v257, %v258
  %v260 = vrot.slane %v259, 1
  %v261 = vadd.f32 %v259, %v260
  %v262 = vsel %vm177, %v151, 0.0
  %v263 = vrot.slane %v262, 4
  %v264 = vadd.f32 %v262, %v263
  %v265 = vrot.slane %v264, 2
  %v266 = vadd.f32 %v264, %v265
  %v267 = vrot.slane %v266, 1
  %v268 = vadd.f32 %v266, %v267
  %v269 = vsel %vm177, %v167, 0.0
  %v270 = vrot.slane %v269, 4
  %v271 = vadd.f32 %v269, %v270
  %v272 = vrot.slane %v271, 2
  %v273 = vadd.f32 %v271, %v272
  %v274 = vrot.slane %v273, 1
  %v275 = vadd.f32 %v273, %v274
  %v276 = vsel %vm177, %v152, 0.0
  %v277 = vrot.slane %v276, 4
  %v278 = vadd.f32 %v276, %v277
  %v279 = vrot.slane %v278, 2
  %v280 = vadd.f32 %v278, %v279
  %v281 = vrot.slane %v280, 1
  %v282 = vadd.f32 %v280, %v281
  %v283 = vsel %vm177, %v168, 0.0
  %v284 = vrot.slane %v283, 4
  %v285 = vadd.f32 %v283, %v284
  %v286 = vrot.slane %v285, 2
  %v287 = vadd.f32 %v285, %v286
  %v288 = vrot.slane %v287, 1
  %v289 = vadd.f32 %v287, %v288
  %v290 = vrcp.pop 3.0
  %v291 = vmul.f32 %v184, %v290
  %v292 = vmul.f32 %v191, %v290
  %v293 = vmul.f32 %v198, %v290
  %v294 = vmul.f32 %v205, %v290
  %v295 = vmul.f32 %v212, %v290
  %v296 = vmul.f32 %v219, %v290
  %v297 = vmul.f32 %v226, %v290
  %v298 = vmul.f32 %v233, %v290
  %v299 = vmul.f32 %v240, %v290
  %v300 = vmul.f32 %v247, %v290
  %v301 = vmul.f32 %v254, %v290
  %v302 = vmul.f32 %v261, %v290
  %v303 = vmul.f32 %v268, %v290
  %v304 = vmul.f32 %v275, %v290
  %v305 = vmul.f32 %v282, %v290
  %v306 = vmul.f32 %v289, %v290
  %v323 = vcombine.low %v291, %v292
  %v324 = vcombine.low %v293, %v294
  %v325 = vcombine.low %v295, %v296
  %v326 = vcombine.low %v297, %v298
  %v327 = vcombine.low %v299, %v300
  %v328 = vcombine.low %v301, %v302
  %v329 = vcombine.low %v303, %v304
  %v330 = vcombine.low %v305, %v306
  %v339 = vsub.f32 %v145, %v323
  %v340 = vsub.f32 %v146, %v324
  %v341 = vsub.f32 %v147, %v325
  %v342 = vsub.f32 %v148, %v326
  %v343 = vsub.f32 %v149, %v327
  %v344 = vsub.f32 %v150, %v328
  %v345 = vsub.f32 %v151, %v329
  %v346 = vsub.f32 %v152, %v330
  %347 = vset.pattern.permute.xlu0 1
  %348 = vperm.xlu0 %347, %v84
  %v349 = vpop.permute.xlu0 %348
  %351 = vset.pattern.permute.xlu0 1
  %352 = vperm.xlu0 %351, %v88
  %v353 = vpop.permute.xlu0 %352
  %355 = vset.pattern.permute.xlu0 1
  %356 = vperm.xlu0 %355, %v92
  %v357 = vpop.permute.xlu0 %356
  %359 = vset.pattern.permute.xlu0 1
  %360 = vperm.xlu0 %359, %v96
  %v361 = vpop.permute.xlu0 %360
  %363 = vset.pattern.permute.xlu0 1
  %364 = vperm.xlu0 %363, %v100
  %v365 = vpop.permute.xlu0 %364
  %367 = vset.pattern.permute.xlu0 1
  %368 = vperm.xlu0 %367, %v104
  %v369 = vpop.permute.xlu0 %368
  %371 = vset.pattern.permute.xlu0 1
  %372 = vperm.xlu0 %371, %v108
  %v373 = vpop.permute.xlu0 %372
  %375 = vset.pattern.permute.xlu0 1
  %376 = vperm.xlu0 %375, %v112
  %v377 = vpop.permute.xlu0 %376
  %v379 = vmul.f32 %v339, %v349
  %v380 = vmul.f32 %v340, %v353
  %v381 = vmul.f32 %v341, %v357
  %v382 = vmul.f32 %v342, %v361
  %v383 = vmul.f32 %v343, %v365
  %v384 = vmul.f32 %v344, %v369
  %v385 = vmul.f32 %v345, %v373
  %v386 = vmul.f32 %v346, %v377
  %v387 = vadd.f32 %v379, %v323
  %v388 = vadd.f32 %v380, %v324
  %v389 = vadd.f32 %v381, %v325
  %v390 = vadd.f32 %v382, %v326
  %v391 = vadd.f32 %v383, %v327
  %v392 = vadd.f32 %v384, %v328
  %v393 = vadd.f32 %v385, %v329
  %v394 = vadd.f32 %v386, %v330
  %v403 = vcombine.high %v387, %v387
  %v404 = vcombine.high %v388, %v388
  %v405 = vcombine.high %v389, %v389
  %v406 = vcombine.high %v390, %v390
  %v407 = vcombine.high %v391, %v391
  %v408 = vcombine.high %v392, %v392
  %v409 = vcombine.high %v393, %v393
  %v410 = vcombine.high %v394, %v394
  %v419 = vsel %vm177, %v387, 0.0
  %v420 = vsel %vm177, %v403, 0.0
  %v421 = vadd.f32 %v419, %v420
  %422 = vadd.xlane.f32.xlu0 %v421
  %v423 = vpop.xlane.xlu0 %422
  %v424 = vsel %vm177, %v388, 0.0
  %v425 = vsel %vm177, %v404, 0.0
  %v426 = vadd.f32 %v424, %v425
  %427 = vadd.xlane.f32.xlu0 %v426
  %v428 = vpop.xlane.xlu0 %427
  %v429 = vsel %vm177, %v389, 0.0
  %v430 = vsel %vm177, %v405, 0.0
  %v431 = vadd.f32 %v429, %v430
  %432 = vadd.xlane.f32.xlu0 %v431
  %v433 = vpop.xlane.xlu0 %432
  %v434 = vsel %vm177, %v390, 0.0
  %v435 = vsel %vm177, %v406, 0.0
  %v436 = vadd.f32 %v434, %v435
  %437 = vadd.xlane.f32.xlu0 %v436
  %v438 = vpop.xlane.xlu0 %437
  %v439 = vsel %vm177, %v391, 0.0
  %v440 = vsel %vm177, %v407, 0.0
  %v441 = vadd.f32 %v439, %v440
  %442 = vadd.xlane.f32.xlu0 %v441
  %v443 = vpop.xlane.xlu0 %442
  %v444 = vsel %vm177, %v392, 0.0
  %v445 = vsel %vm177, %v408, 0.0
  %v446 = vadd.f32 %v444, %v445
  %447 = vadd.xlane.f32.xlu0 %v446
  %v448 = vpop.xlane.xlu0 %447
  %v449 = vsel %vm177, %v393, 0.0
  %v450 = vsel %vm177, %v409, 0.0
  %v451 = vadd.f32 %v449, %v450
  %452 = vadd.xlane.f32.xlu0 %v451
  %v453 = vpop.xlane.xlu0 %452
  %v454 = vsel %vm177, %v394, 0.0
  %v455 = vsel %vm177, %v410, 0.0
  %v456 = vadd.f32 %v454, %v455
  %457 = vadd.xlane.f32.xlu0 %v456
  %v458 = vpop.xlane.xlu0 %457
  %v459 = vrcp.pop 256.0
  %v460 = vmul.f32 %v423, %v459
  %v461 = vmul.f32 %v428, %v459
  %v462 = vmul.f32 %v433, %v459
  %v463 = vmul.f32 %v438, %v459
  %v464 = vmul.f32 %v443, %v459
  %v465 = vmul.f32 %v448, %v459
  %v466 = vmul.f32 %v453, %v459
  %v467 = vmul.f32 %v458, %v459
  %v468 = vsel %vm177, %v460, 0.0
  %v469 = vrot.slane %v468, 4
  %v470 = vadd.f32 %v468, %v469
  %v471 = vrot.slane %v470, 2
  %v472 = vadd.f32 %v470, %v471
  %v473 = vrot.slane %v472, 1
  %v474 = vadd.f32 %v472, %v473
  %v475 = vsel %vm177, %v461, 0.0
  %v476 = vrot.slane %v475, 4
  %v477 = vadd.f32 %v475, %v476
  %v478 = vrot.slane %v477, 2
  %v479 = vadd.f32 %v477, %v478
  %v480 = vrot.slane %v479, 1
  %v481 = vadd.f32 %v479, %v480
  %v482 = vsel %vm177, %v462, 0.0
  %v483 = vrot.slane %v482, 4
  %v484 = vadd.f32 %v482, %v483
  %v485 = vrot.slane %v484, 2
  %v486 = vadd.f32 %v484, %v485
  %v487 = vrot.slane %v486, 1
  %v488 = vadd.f32 %v486, %v487
  %v489 = vsel %vm177, %v463, 0.0
  %v490 = vrot.slane %v489, 4
  %v491 = vadd.f32 %v489, %v490
  %v492 = vrot.slane %v491, 2
  %v493 = vadd.f32 %v491, %v492
  %v494 = vrot.slane %v493, 1
  %v495 = vadd.f32 %v493, %v494
  %v496 = vsel %vm177, %v464, 0.0
  %v497 = vrot.slane %v496, 4
  %v498 = vadd.f32 %v496, %v497
  %v499 = vrot.slane %v498, 2
  %v500 = vadd.f32 %v498, %v499
  %v501 = vrot.slane %v500, 1
  %v502 = vadd.f32 %v500, %v501
  %v503 = vsel %vm177, %v465, 0.0
  %v504 = vrot.slane %v503, 4
  %v505 = vadd.f32 %v503, %v504
  %v506 = vrot.slane %v505, 2
  %v507 = vadd.f32 %v505, %v506
  %v508 = vrot.slane %v507, 1
  %v509 = vadd.f32 %v507, %v508
  %v510 = vsel %vm177, %v466, 0.0
  %v511 = vrot.slane %v510, 4
  %v512 = vadd.f32 %v510, %v511
  %v513 = vrot.slane %v512, 2
  %v514 = vadd.f32 %v512, %v513
  %v515 = vrot.slane %v514, 1
  %v516 = vadd.f32 %v514, %v515
  %v517 = vsel %vm177, %v467, 0.0
  %v518 = vrot.slane %v517, 4
  %v519 = vadd.f32 %v517, %v518
  %v520 = vrot.slane %v519, 2
  %v521 = vadd.f32 %v519, %v520
  %v522 = vrot.slane %v521, 1
  %v523 = vadd.f32 %v521, %v522
  %v524 = vmul.f32 %v474, %v290
  %v525 = vmul.f32 %v481, %v290
  %v526 = vmul.f32 %v488, %v290
  %v527 = vmul.f32 %v495, %v290
  %v528 = vmul.f32 %v502, %v290
  %v529 = vmul.f32 %v509, %v290
  %v530 = vmul.f32 %v516, %v290
  %v531 = vmul.f32 %v523, %v290
  %v532 = vsub.f32 %v387, %v524
  %v533 = vsub.f32 %v388, %v525
  %v534 = vsub.f32 %v389, %v526
  %v535 = vsub.f32 %v390, %v527
  %v536 = vsub.f32 %v391, %v528
  %v537 = vsub.f32 %v392, %v529
  %v538 = vsub.f32 %v393, %v530
  %v539 = vsub.f32 %v394, %v531
  %540 = vset.pattern.permute.xlu0 2
  %541 = vperm.xlu0 %540, %v84
  %v542 = vpop.permute.xlu0 %541
  %544 = vset.pattern.permute.xlu0 2
  %545 = vperm.xlu0 %544, %v88
  %v546 = vpop.permute.xlu0 %545
  %548 = vset.pattern.permute.xlu0 2
  %549 = vperm.xlu0 %548, %v92
  %v550 = vpop.permute.xlu0 %549
  %552 = vset.pattern.permute.xlu0 2
  %553 = vperm.xlu0 %552, %v96
  %v554 = vpop.permute.xlu0 %553
  %556 = vset.pattern.permute.xlu0 2
  %557 = vperm.xlu0 %556, %v100
  %v558 = vpop.permute.xlu0 %557
  %560 = vset.pattern.permute.xlu0 2
  %561 = vperm.xlu0 %560, %v104
  %v562 = vpop.permute.xlu0 %561
  %564 = vset.pattern.permute.xlu0 2
  %565 = vperm.xlu0 %564, %v108
  %v566 = vpop.permute.xlu0 %565
  %568 = vset.pattern.permute.xlu0 2
  %569 = vperm.xlu0 %568, %v112
  %v570 = vpop.permute.xlu0 %569
  %v572 = vmul.f32 %v532, %v542
  %v573 = vmul.f32 %v533, %v546
  %v574 = vmul.f32 %v534, %v550
  %v575 = vmul.f32 %v535, %v554
  %v576 = vmul.f32 %v536, %v558
  %v577 = vmul.f32 %v537, %v562
  %v578 = vmul.f32 %v538, %v566
  %v579 = vmul.f32 %v539, %v570
  %v580 = vadd.f32 %v572, %v524
  %v581 = vadd.f32 %v573, %v525
  %v582 = vadd.f32 %v574, %v526
  %v583 = vadd.f32 %v575, %v527
  %v584 = vadd.f32 %v576, %v528
  %v585 = vadd.f32 %v577, %v529
  %v586 = vadd.f32 %v578, %v530
  %v587 = vadd.f32 %v579, %v531
  %v588 = vcombine.high %v23, %v23
  %v590 = vunpack.c.l.s4 1966171168
  %v591 = vunpack.c.0.s8 %v590
  %v592 = vlaneseq
  %v593 = vshrl.u32 %v592, 7
  %v594 = vsub.s32 %v591, %v593
  %v595 = vrot.slane %v23, %v594
  %v597 = vunpack.c.l.s4 1966171168
  %v598 = vunpack.c.0.s8 %v597
  %v599 = vlaneseq
  %v600 = vshrl.u32 %v599, 7
  %v601 = vsub.s32 %v598, %v600
  %v602 = vrot.slane %v588, %v601
  %v603 = vcombine.high %v595, %v595
  %v604 = vcombine.high %v602, %v602
  %v606 = vunpack.c.l.s4 1966171168
  %v607 = vunpack.c.0.s8 %v606
  %v608 = vlaneseq
  %v609 = vshrl.u32 %v608, 7
  %v610 = vsub.s32 %v607, %v609
  %v611 = vrot.slane %v595, %v610
  %v613 = vunpack.c.l.s4 1966171168
  %v614 = vunpack.c.0.s8 %v613
  %v615 = vlaneseq
  %v616 = vshrl.u32 %v615, 7
  %v617 = vsub.s32 %v614, %v616
  %v618 = vrot.slane %v602, %v617
  %v620 = vunpack.c.l.s4 1966171168
  %v621 = vunpack.c.0.s8 %v620
  %v622 = vlaneseq
  %v623 = vshrl.u32 %v622, 7
  %v624 = vsub.s32 %v621, %v623
  %v625 = vrot.slane %v603, %v624
  %v627 = vunpack.c.l.s4 1966171168
  %v628 = vunpack.c.0.s8 %v627
  %v629 = vlaneseq
  %v630 = vshrl.u32 %v629, 7
  %v631 = vsub.s32 %v628, %v630
  %v632 = vrot.slane %v604, %v631
  %v633 = vcombine.high %v611, %v611
  %v634 = vcombine.high %v618, %v618
  %v635 = vcombine.high %v625, %v625
  %v636 = vcombine.high %v632, %v632
  %vm637 = vcmp.eq.s32.totalorder %v611, 4294967294
  %vm638 = vcmp.eq.s32.totalorder %v625, 4294967294
  %vm639 = vcmp.eq.s32.totalorder %v633, 4294967294
  %vm640 = vcmp.eq.s32.totalorder %v635, 4294967294
  %vm641 = vcmp.eq.s32.totalorder %v618, 4294967294
  %vm642 = vcmp.eq.s32.totalorder %v632, 4294967294
  %vm643 = vcmp.eq.s32.totalorder %v634, 4294967294
  %vm644 = vcmp.eq.s32.totalorder %v636, 4294967294
  %v653 = vcombine.high %v580, %v580
  %v654 = vcombine.high %v581, %v581
  %v655 = vcombine.high %v582, %v582
  %v656 = vcombine.high %v583, %v583
  %v657 = vcombine.high %v584, %v584
  %v658 = vcombine.high %v585, %v585
  %v659 = vcombine.high %v586, %v586
  %v660 = vcombine.high %v587, %v587
  %661 = vrot.lane.b32.xlu0 %v653, 32
  %v662 = vpop.permute.xlu0 %661
  %663 = vrot.lane.b32.xlu0 %v654, 32
  %v664 = vpop.permute.xlu0 %663
  %665 = vrot.lane.b32.xlu0 %v655, 32
  %v666 = vpop.permute.xlu0 %665
  %667 = vrot.lane.b32.xlu0 %v656, 32
  %v668 = vpop.permute.xlu0 %667
  %669 = vrot.lane.b32.xlu0 %v657, 32
  %v670 = vpop.permute.xlu0 %669
  %671 = vrot.lane.b32.xlu0 %v658, 32
  %v672 = vpop.permute.xlu0 %671
  %673 = vrot.lane.b32.xlu0 %v659, 32
  %v674 = vpop.permute.xlu0 %673
  %675 = vrot.lane.b32.xlu0 %v660, 32
  %v676 = vpop.permute.xlu0 %675
  %685 = vrot.lane.b32.xlu0 %v580, 32
  %v686 = vpop.permute.xlu0 %685
  %687 = vrot.lane.b32.xlu0 %v581, 32
  %v688 = vpop.permute.xlu0 %687
  %689 = vrot.lane.b32.xlu0 %v582, 32
  %v690 = vpop.permute.xlu0 %689
  %691 = vrot.lane.b32.xlu0 %v583, 32
  %v692 = vpop.permute.xlu0 %691
  %693 = vrot.lane.b32.xlu0 %v584, 32
  %v694 = vpop.permute.xlu0 %693
  %695 = vrot.lane.b32.xlu0 %v585, 32
  %v696 = vpop.permute.xlu0 %695
  %697 = vrot.lane.b32.xlu0 %v586, 32
  %v698 = vpop.permute.xlu0 %697
  %699 = vrot.lane.b32.xlu0 %v587, 32
  %v700 = vpop.permute.xlu0 %699
  %vm701 = vcmask 261120
  %v702 = vsel %vm701, %v686, %v662
  %v703 = vsel %vm701, %v688, %v664
  %v704 = vsel %vm701, %v690, %v666
  %v705 = vsel %vm701, %v692, %v668
  %v706 = vsel %vm701, %v694, %v670
  %v707 = vsel %vm701, %v696, %v672
  %v708 = vsel %vm701, %v698, %v674
  %v709 = vsel %vm701, %v700, %v676
  %v726 = vsel %vm701, %v662, %v686
  %v727 = vsel %vm701, %v664, %v688
  %v728 = vsel %vm701, %v666, %v690
  %v729 = vsel %vm701, %v668, %v692
  %v730 = vsel %vm701, %v670, %v694
  %v731 = vsel %vm701, %v672, %v696
  %v732 = vsel %vm701, %v674, %v698
  %v733 = vsel %vm701, %v676, %v700
  %v734 = vsel %vm637, 1, 0
  %v735 = vsel %vm638, 1, 0
  %v736 = vsel %vm639, 1, 0
  %v737 = vsel %vm640, 1, 0
  %v738 = vsel %vm641, 1, 0
  %v739 = vsel %vm642, 1, 0
  %v740 = vsel %vm643, 1, 0
  %v741 = vsel %vm644, 1, 0
  %v742 = vlaneseq
  %v743 = vshrl.u32 %v742, 7
  %v744 = vsub.s32 0, %v743
  %v745 = vrot.slane %v734, %v744
  %v746 = vlaneseq
  %v747 = vshrl.u32 %v746, 7
  %v748 = vsub.s32 0, %v747
  %v749 = vrot.slane %v735, %v748
  %v750 = vlaneseq
  %v751 = vshrl.u32 %v750, 7
  %v752 = vsub.s32 0, %v751
  %v753 = vrot.slane %v736, %v752
  %v754 = vlaneseq
  %v755 = vshrl.u32 %v754, 7
  %v756 = vsub.s32 0, %v755
  %v757 = vrot.slane %v737, %v756
  %v758 = vlaneseq
  %v759 = vshrl.u32 %v758, 7
  %v760 = vsub.s32 0, %v759
  %v761 = vrot.slane %v738, %v760
  %v762 = vlaneseq
  %v763 = vshrl.u32 %v762, 7
  %v764 = vsub.s32 0, %v763
  %v765 = vrot.slane %v739, %v764
  %v766 = vlaneseq
  %v767 = vshrl.u32 %v766, 7
  %v768 = vsub.s32 0, %v767
  %v769 = vrot.slane %v740, %v768
  %v770 = vlaneseq
  %v771 = vshrl.u32 %v770, 7
  %v772 = vsub.s32 0, %v771
  %v773 = vrot.slane %v741, %v772
  %774 = vset.pattern.permute.xlu0 0
  %775 = vperm.xlu0 %774, %v745
  %v776 = vpop.permute.xlu0 %775
  %777 = vset.pattern.permute.xlu0 0
  %778 = vperm.xlu0 %777, %v749
  %v779 = vpop.permute.xlu0 %778
  %780 = vset.pattern.permute.xlu0 0
  %781 = vperm.xlu0 %780, %v753
  %v782 = vpop.permute.xlu0 %781
  %783 = vset.pattern.permute.xlu0 0
  %784 = vperm.xlu0 %783, %v757
  %v785 = vpop.permute.xlu0 %784
  %786 = vset.pattern.permute.xlu0 0
  %787 = vperm.xlu0 %786, %v761
  %v788 = vpop.permute.xlu0 %787
  %789 = vset.pattern.permute.xlu0 0
  %790 = vperm.xlu0 %789, %v765
  %v791 = vpop.permute.xlu0 %790
  %792 = vset.pattern.permute.xlu0 0
  %793 = vperm.xlu0 %792, %v769
  %v794 = vpop.permute.xlu0 %793
  %795 = vset.pattern.permute.xlu0 0
  %796 = vperm.xlu0 %795, %v773
  %v797 = vpop.permute.xlu0 %796
  %vm798 = vcmp.eq.s32.totalorder %v776, 1
  %vm799 = vcmp.eq.s32.totalorder %v779, 1
  %vm800 = vcmp.eq.s32.totalorder %v782, 1
  %vm801 = vcmp.eq.s32.totalorder %v785, 1
  %vm802 = vcmp.eq.s32.totalorder %v788, 1
  %vm803 = vcmp.eq.s32.totalorder %v791, 1
  %vm804 = vcmp.eq.s32.totalorder %v794, 1
  %vm805 = vcmp.eq.s32.totalorder %v797, 1
  %v814 = vsel %vm798, %v726, %v580
  %v815 = vsel %vm798, %v702, %v653
  %v816 = vsel %vm799, %v727, %v581
  %v817 = vsel %vm799, %v703, %v654
  %v818 = vsel %vm800, %v728, %v582
  %v819 = vsel %vm800, %v704, %v655
  %v820 = vsel %vm801, %v729, %v583
  %v821 = vsel %vm801, %v705, %v656
  %v822 = vsel %vm802, %v730, %v584
  %v823 = vsel %vm802, %v706, %v657
  %v824 = vsel %vm803, %v731, %v585
  %v825 = vsel %vm803, %v707, %v658
  %v826 = vsel %vm804, %v732, %v586
  %v827 = vsel %vm804, %v708, %v659
  %v828 = vsel %vm805, %v733, %v587
  %v829 = vsel %vm805, %v709, %v660
  %vm830 = vcmp.eq.s32.totalorder %v611, 4294967295
  %vm831 = vcmp.eq.s32.totalorder %v625, 4294967295
  %vm832 = vcmp.eq.s32.totalorder %v633, 4294967295
  %vm833 = vcmp.eq.s32.totalorder %v635, 4294967295
  %vm834 = vcmp.eq.s32.totalorder %v618, 4294967295
  %vm835 = vcmp.eq.s32.totalorder %v632, 4294967295
  %vm836 = vcmp.eq.s32.totalorder %v634, 4294967295
  %vm837 = vcmp.eq.s32.totalorder %v636, 4294967295
  %838 = vrot.lane.b32.xlu0 %v653, 16
  %v839 = vpop.permute.xlu0 %838
  %840 = vrot.lane.b32.xlu0 %v654, 16
  %v841 = vpop.permute.xlu0 %840
  %842 = vrot.lane.b32.xlu0 %v655, 16
  %v843 = vpop.permute.xlu0 %842
  %844 = vrot.lane.b32.xlu0 %v656, 16
  %v845 = vpop.permute.xlu0 %844
  %846 = vrot.lane.b32.xlu0 %v657, 16
  %v847 = vpop.permute.xlu0 %846
  %848 = vrot.lane.b32.xlu0 %v658, 16
  %v849 = vpop.permute.xlu0 %848
  %850 = vrot.lane.b32.xlu0 %v659, 16
  %v851 = vpop.permute.xlu0 %850
  %852 = vrot.lane.b32.xlu0 %v660, 16
  %v853 = vpop.permute.xlu0 %852
  %862 = vrot.lane.b32.xlu0 %v580, 16
  %v863 = vpop.permute.xlu0 %862
  %864 = vrot.lane.b32.xlu0 %v581, 16
  %v865 = vpop.permute.xlu0 %864
  %866 = vrot.lane.b32.xlu0 %v582, 16
  %v867 = vpop.permute.xlu0 %866
  %868 = vrot.lane.b32.xlu0 %v583, 16
  %v869 = vpop.permute.xlu0 %868
  %870 = vrot.lane.b32.xlu0 %v584, 16
  %v871 = vpop.permute.xlu0 %870
  %872 = vrot.lane.b32.xlu0 %v585, 16
  %v873 = vpop.permute.xlu0 %872
  %874 = vrot.lane.b32.xlu0 %v586, 16
  %v875 = vpop.permute.xlu0 %874
  %876 = vrot.lane.b32.xlu0 %v587, 16
  %v877 = vpop.permute.xlu0 %876
  %vm878 = vcmask 130048
  %v879 = vsel %vm878, %v863, %v839
  %v880 = vsel %vm878, %v865, %v841
  %v881 = vsel %vm878, %v867, %v843
  %v882 = vsel %vm878, %v869, %v845
  %v883 = vsel %vm878, %v871, %v847
  %v884 = vsel %vm878, %v873, %v849
  %v885 = vsel %vm878, %v875, %v851
  %v886 = vsel %vm878, %v877, %v853
  %v903 = vsel %vm878, %v839, %v863
  %v904 = vsel %vm878, %v841, %v865
  %v905 = vsel %vm878, %v843, %v867
  %v906 = vsel %vm878, %v845, %v869
  %v907 = vsel %vm878, %v847, %v871
  %v908 = vsel %vm878, %v849, %v873
  %v909 = vsel %vm878, %v851, %v875
  %v910 = vsel %vm878, %v853, %v877
  %v911 = vsel %vm830, 1, 0
  %v912 = vsel %vm831, 1, 0
  %v913 = vsel %vm832, 1, 0
  %v914 = vsel %vm833, 1, 0
  %v915 = vsel %vm834, 1, 0
  %v916 = vsel %vm835, 1, 0
  %v917 = vsel %vm836, 1, 0
  %v918 = vsel %vm837, 1, 0
  %v919 = vlaneseq
  %v920 = vshrl.u32 %v919, 7
  %v921 = vsub.s32 0, %v920
  %v922 = vrot.slane %v911, %v921
  %v923 = vlaneseq
  %v924 = vshrl.u32 %v923, 7
  %v925 = vsub.s32 0, %v924
  %v926 = vrot.slane %v912, %v925
  %v927 = vlaneseq
  %v928 = vshrl.u32 %v927, 7
  %v929 = vsub.s32 0, %v928
  %v930 = vrot.slane %v913, %v929
  %v931 = vlaneseq
  %v932 = vshrl.u32 %v931, 7
  %v933 = vsub.s32 0, %v932
  %v934 = vrot.slane %v914, %v933
  %v935 = vlaneseq
  %v936 = vshrl.u32 %v935, 7
  %v937 = vsub.s32 0, %v936
  %v938 = vrot.slane %v915, %v937
  %v939 = vlaneseq
  %v940 = vshrl.u32 %v939, 7
  %v941 = vsub.s32 0, %v940
  %v942 = vrot.slane %v916, %v941
  %v943 = vlaneseq
  %v944 = vshrl.u32 %v943, 7
  %v945 = vsub.s32 0, %v944
  %v946 = vrot.slane %v917, %v945
  %v947 = vlaneseq
  %v948 = vshrl.u32 %v947, 7
  %v949 = vsub.s32 0, %v948
  %v950 = vrot.slane %v918, %v949
  %951 = vset.pattern.permute.xlu0 0
  %952 = vperm.xlu0 %951, %v922
  %v953 = vpop.permute.xlu0 %952
  %954 = vset.pattern.permute.xlu0 0
  %955 = vperm.xlu0 %954, %v926
  %v956 = vpop.permute.xlu0 %955
  %957 = vset.pattern.permute.xlu0 0
  %958 = vperm.xlu0 %957, %v930
  %v959 = vpop.permute.xlu0 %958
  %960 = vset.pattern.permute.xlu0 0
  %961 = vperm.xlu0 %960, %v934
  %v962 = vpop.permute.xlu0 %961
  %963 = vset.pattern.permute.xlu0 0
  %964 = vperm.xlu0 %963, %v938
  %v965 = vpop.permute.xlu0 %964
  %966 = vset.pattern.permute.xlu0 0
  %967 = vperm.xlu0 %966, %v942
  %v968 = vpop.permute.xlu0 %967
  %969 = vset.pattern.permute.xlu0 0
  %970 = vperm.xlu0 %969, %v946
  %v971 = vpop.permute.xlu0 %970
  %972 = vset.pattern.permute.xlu0 0
  %973 = vperm.xlu0 %972, %v950
  %v974 = vpop.permute.xlu0 %973
  %vm975 = vcmp.eq.s32.totalorder %v953, 1
  %vm976 = vcmp.eq.s32.totalorder %v956, 1
  %vm977 = vcmp.eq.s32.totalorder %v959, 1
  %vm978 = vcmp.eq.s32.totalorder %v962, 1
  %vm979 = vcmp.eq.s32.totalorder %v965, 1
  %vm980 = vcmp.eq.s32.totalorder %v968, 1
  %vm981 = vcmp.eq.s32.totalorder %v971, 1
  %vm982 = vcmp.eq.s32.totalorder %v974, 1
  %v983 = vsel %vm975, %v903, %v814
  %v984 = vsel %vm975, %v879, %v815
  %v985 = vsel %vm976, %v904, %v816
  %v986 = vsel %vm976, %v880, %v817
  %v987 = vsel %vm977, %v905, %v818
  %v988 = vsel %vm977, %v881, %v819
  %v989 = vsel %vm978, %v906, %v820
  %v990 = vsel %vm978, %v882, %v821
  %v991 = vsel %vm979, %v907, %v822
  %v992 = vsel %vm979, %v883, %v823
  %v993 = vsel %vm980, %v908, %v824
  %v994 = vsel %vm980, %v884, %v825
  %v995 = vsel %vm981, %v909, %v826
  %v996 = vsel %vm981, %v885, %v827
  %v997 = vsel %vm982, %v910, %v828
  %v998 = vsel %vm982, %v886, %v829
  %vm999 = vcmp.eq.s32.totalorder %v611, 1
  %vm1000 = vcmp.eq.s32.totalorder %v625, 1
  %vm1001 = vcmp.eq.s32.totalorder %v633, 1
  %vm1002 = vcmp.eq.s32.totalorder %v635, 1
  %vm1003 = vcmp.eq.s32.totalorder %v618, 1
  %vm1004 = vcmp.eq.s32.totalorder %v632, 1
  %vm1005 = vcmp.eq.s32.totalorder %v634, 1
  %vm1006 = vcmp.eq.s32.totalorder %v636, 1
  %1007 = vrot.lane.b32.xlu0 %v580, 112
  %v1008 = vpop.permute.xlu0 %1007
  %1009 = vrot.lane.b32.xlu0 %v653, 112
  %v1010 = vpop.permute.xlu0 %1009
  %1011 = vrot.lane.b32.xlu0 %v581, 112
  %v1012 = vpop.permute.xlu0 %1011
  %1013 = vrot.lane.b32.xlu0 %v654, 112
  %v1014 = vpop.permute.xlu0 %1013
  %1015 = vrot.lane.b32.xlu0 %v582, 112
  %v1016 = vpop.permute.xlu0 %1015
  %1017 = vrot.lane.b32.xlu0 %v655, 112
  %v1018 = vpop.permute.xlu0 %1017
  %1019 = vrot.lane.b32.xlu0 %v583, 112
  %v1020 = vpop.permute.xlu0 %1019
  %1021 = vrot.lane.b32.xlu0 %v656, 112
  %v1022 = vpop.permute.xlu0 %1021
  %1023 = vrot.lane.b32.xlu0 %v584, 112
  %v1024 = vpop.permute.xlu0 %1023
  %1025 = vrot.lane.b32.xlu0 %v657, 112
  %v1026 = vpop.permute.xlu0 %1025
  %1027 = vrot.lane.b32.xlu0 %v585, 112
  %v1028 = vpop.permute.xlu0 %1027
  %1029 = vrot.lane.b32.xlu0 %v658, 112
  %v1030 = vpop.permute.xlu0 %1029
  %1031 = vrot.lane.b32.xlu0 %v586, 112
  %v1032 = vpop.permute.xlu0 %1031
  %1033 = vrot.lane.b32.xlu0 %v659, 112
  %v1034 = vpop.permute.xlu0 %1033
  %1035 = vrot.lane.b32.xlu0 %v587, 112
  %v1036 = vpop.permute.xlu0 %1035
  %1037 = vrot.lane.b32.xlu0 %v660, 112
  %v1038 = vpop.permute.xlu0 %1037
  %vm1039 = vcmask 916480
  %v1040 = vsel %vm1039, %v1008, %v1010
  %v1041 = vsel %vm1039, %v1012, %v1014
  %v1042 = vsel %vm1039, %v1016, %v1018
  %v1043 = vsel %vm1039, %v1020, %v1022
  %v1044 = vsel %vm1039, %v1024, %v1026
  %v1045 = vsel %vm1039, %v1028, %v1030
  %v1046 = vsel %vm1039, %v1032, %v1034
  %v1047 = vsel %vm1039, %v1036, %v1038
  %v1072 = vsel %vm1039, %v1010, %v1008
  %v1073 = vsel %vm1039, %v1014, %v1012
  %v1074 = vsel %vm1039, %v1018, %v1016
  %v1075 = vsel %vm1039, %v1022, %v1020
  %v1076 = vsel %vm1039, %v1026, %v1024
  %v1077 = vsel %vm1039, %v1030, %v1028
  %v1078 = vsel %vm1039, %v1034, %v1032
  %v1079 = vsel %vm1039, %v1038, %v1036
  %v1080 = vsel %vm999, 1, 0
  %v1081 = vsel %vm1000, 1, 0
  %v1082 = vsel %vm1001, 1, 0
  %v1083 = vsel %vm1002, 1, 0
  %v1084 = vsel %vm1003, 1, 0
  %v1085 = vsel %vm1004, 1, 0
  %v1086 = vsel %vm1005, 1, 0
  %v1087 = vsel %vm1006, 1, 0
  %v1088 = vlaneseq
  %v1089 = vshrl.u32 %v1088, 7
  %v1090 = vsub.s32 0, %v1089
  %v1091 = vrot.slane %v1080, %v1090
  %v1092 = vlaneseq
  %v1093 = vshrl.u32 %v1092, 7
  %v1094 = vsub.s32 0, %v1093
  %v1095 = vrot.slane %v1081, %v1094
  %v1096 = vlaneseq
  %v1097 = vshrl.u32 %v1096, 7
  %v1098 = vsub.s32 0, %v1097
  %v1099 = vrot.slane %v1082, %v1098
  %v1100 = vlaneseq
  %v1101 = vshrl.u32 %v1100, 7
  %v1102 = vsub.s32 0, %v1101
  %v1103 = vrot.slane %v1083, %v1102
  %v1104 = vlaneseq
  %v1105 = vshrl.u32 %v1104, 7
  %v1106 = vsub.s32 0, %v1105
  %v1107 = vrot.slane %v1084, %v1106
  %v1108 = vlaneseq
  %v1109 = vshrl.u32 %v1108, 7
  %v1110 = vsub.s32 0, %v1109
  %v1111 = vrot.slane %v1085, %v1110
  %v1112 = vlaneseq
  %v1113 = vshrl.u32 %v1112, 7
  %v1114 = vsub.s32 0, %v1113
  %v1115 = vrot.slane %v1086, %v1114
  %v1116 = vlaneseq
  %v1117 = vshrl.u32 %v1116, 7
  %v1118 = vsub.s32 0, %v1117
  %v1119 = vrot.slane %v1087, %v1118
  %1120 = vset.pattern.permute.xlu0 0
  %1121 = vperm.xlu0 %1120, %v1091
  %v1122 = vpop.permute.xlu0 %1121
  %1123 = vset.pattern.permute.xlu0 0
  %1124 = vperm.xlu0 %1123, %v1095
  %v1125 = vpop.permute.xlu0 %1124
  %1126 = vset.pattern.permute.xlu0 0
  %1127 = vperm.xlu0 %1126, %v1099
  %v1128 = vpop.permute.xlu0 %1127
  %1129 = vset.pattern.permute.xlu0 0
  %1130 = vperm.xlu0 %1129, %v1103
  %v1131 = vpop.permute.xlu0 %1130
  %1132 = vset.pattern.permute.xlu0 0
  %1133 = vperm.xlu0 %1132, %v1107
  %v1134 = vpop.permute.xlu0 %1133
  %1135 = vset.pattern.permute.xlu0 0
  %1136 = vperm.xlu0 %1135, %v1111
  %v1137 = vpop.permute.xlu0 %1136
  %1138 = vset.pattern.permute.xlu0 0
  %1139 = vperm.xlu0 %1138, %v1115
  %v1140 = vpop.permute.xlu0 %1139
  %1141 = vset.pattern.permute.xlu0 0
  %1142 = vperm.xlu0 %1141, %v1119
  %v1143 = vpop.permute.xlu0 %1142
  %vm1144 = vcmp.eq.s32.totalorder %v1122, 1
  %vm1145 = vcmp.eq.s32.totalorder %v1125, 1
  %vm1146 = vcmp.eq.s32.totalorder %v1128, 1
  %vm1147 = vcmp.eq.s32.totalorder %v1131, 1
  %vm1148 = vcmp.eq.s32.totalorder %v1134, 1
  %vm1149 = vcmp.eq.s32.totalorder %v1137, 1
  %vm1150 = vcmp.eq.s32.totalorder %v1140, 1
  %vm1151 = vcmp.eq.s32.totalorder %v1143, 1
  %v1152 = vsel %vm1144, %v1040, %v983
  %v1153 = vsel %vm1144, %v1072, %v984
  %v1154 = vsel %vm1145, %v1041, %v985
  %v1155 = vsel %vm1145, %v1073, %v986
  %v1156 = vsel %vm1146, %v1042, %v987
  %v1157 = vsel %vm1146, %v1074, %v988
  %v1158 = vsel %vm1147, %v1043, %v989
  %v1159 = vsel %vm1147, %v1075, %v990
  %v1160 = vsel %vm1148, %v1044, %v991
  %v1161 = vsel %vm1148, %v1076, %v992
  %v1162 = vsel %vm1149, %v1045, %v993
  %v1163 = vsel %vm1149, %v1077, %v994
  %v1164 = vsel %vm1150, %v1046, %v995
  %v1165 = vsel %vm1150, %v1078, %v996
  %v1166 = vsel %vm1151, %v1047, %v997
  %v1167 = vsel %vm1151, %v1079, %v998
  %vm1168 = vcmp.eq.s32.totalorder %v611, 2
  %vm1169 = vcmp.eq.s32.totalorder %v625, 2
  %vm1170 = vcmp.eq.s32.totalorder %v633, 2
  %vm1171 = vcmp.eq.s32.totalorder %v635, 2
  %vm1172 = vcmp.eq.s32.totalorder %v618, 2
  %vm1173 = vcmp.eq.s32.totalorder %v632, 2
  %vm1174 = vcmp.eq.s32.totalorder %v634, 2
  %vm1175 = vcmp.eq.s32.totalorder %v636, 2
  %1176 = vrot.lane.b32.xlu0 %v580, 96
  %v1177 = vpop.permute.xlu0 %1176
  %1178 = vrot.lane.b32.xlu0 %v653, 96
  %v1179 = vpop.permute.xlu0 %1178
  %1180 = vrot.lane.b32.xlu0 %v581, 96
  %v1181 = vpop.permute.xlu0 %1180
  %1182 = vrot.lane.b32.xlu0 %v654, 96
  %v1183 = vpop.permute.xlu0 %1182
  %1184 = vrot.lane.b32.xlu0 %v582, 96
  %v1185 = vpop.permute.xlu0 %1184
  %1186 = vrot.lane.b32.xlu0 %v655, 96
  %v1187 = vpop.permute.xlu0 %1186
  %1188 = vrot.lane.b32.xlu0 %v583, 96
  %v1189 = vpop.permute.xlu0 %1188
  %1190 = vrot.lane.b32.xlu0 %v656, 96
  %v1191 = vpop.permute.xlu0 %1190
  %1192 = vrot.lane.b32.xlu0 %v584, 96
  %v1193 = vpop.permute.xlu0 %1192
  %1194 = vrot.lane.b32.xlu0 %v657, 96
  %v1195 = vpop.permute.xlu0 %1194
  %1196 = vrot.lane.b32.xlu0 %v585, 96
  %v1197 = vpop.permute.xlu0 %1196
  %1198 = vrot.lane.b32.xlu0 %v658, 96
  %v1199 = vpop.permute.xlu0 %1198
  %1200 = vrot.lane.b32.xlu0 %v586, 96
  %v1201 = vpop.permute.xlu0 %1200
  %1202 = vrot.lane.b32.xlu0 %v659, 96
  %v1203 = vpop.permute.xlu0 %1202
  %1204 = vrot.lane.b32.xlu0 %v587, 96
  %v1205 = vpop.permute.xlu0 %1204
  %1206 = vrot.lane.b32.xlu0 %v660, 96
  %v1207 = vpop.permute.xlu0 %1206
  %vm1208 = vcmask 785408
  %v1209 = vsel %vm1208, %v1177, %v1179
  %v1210 = vsel %vm1208, %v1181, %v1183
  %v1211 = vsel %vm1208, %v1185, %v1187
  %v1212 = vsel %vm1208, %v1189, %v1191
  %v1213 = vsel %vm1208, %v1193, %v1195
  %v1214 = vsel %vm1208, %v1197, %v1199
  %v1215 = vsel %vm1208, %v1201, %v1203
  %v1216 = vsel %vm1208, %v1205, %v1207
  %v1241 = vsel %vm1208, %v1179, %v1177
  %v1242 = vsel %vm1208, %v1183, %v1181
  %v1243 = vsel %vm1208, %v1187, %v1185
  %v1244 = vsel %vm1208, %v1191, %v1189
  %v1245 = vsel %vm1208, %v1195, %v1193
  %v1246 = vsel %vm1208, %v1199, %v1197
  %v1247 = vsel %vm1208, %v1203, %v1201
  %v1248 = vsel %vm1208, %v1207, %v1205
  %v1249 = vsel %vm1168, 1, 0
  %v1250 = vsel %vm1169, 1, 0
  %v1251 = vsel %vm1170, 1, 0
  %v1252 = vsel %vm1171, 1, 0
  %v1253 = vsel %vm1172, 1, 0
  %v1254 = vsel %vm1173, 1, 0
  %v1255 = vsel %vm1174, 1, 0
  %v1256 = vsel %vm1175, 1, 0
  %v1257 = vlaneseq
  %v1258 = vshrl.u32 %v1257, 7
  %v1259 = vsub.s32 0, %v1258
  %v1260 = vrot.slane %v1249, %v1259
  %v1261 = vlaneseq
  %v1262 = vshrl.u32 %v1261, 7
  %v1263 = vsub.s32 0, %v1262
  %v1264 = vrot.slane %v1250, %v1263
  %v1265 = vlaneseq
  %v1266 = vshrl.u32 %v1265, 7
  %v1267 = vsub.s32 0, %v1266
  %v1268 = vrot.slane %v1251, %v1267
  %v1269 = vlaneseq
  %v1270 = vshrl.u32 %v1269, 7
  %v1271 = vsub.s32 0, %v1270
  %v1272 = vrot.slane %v1252, %v1271
  %v1273 = vlaneseq
  %v1274 = vshrl.u32 %v1273, 7
  %v1275 = vsub.s32 0, %v1274
  %v1276 = vrot.slane %v1253, %v1275
  %v1277 = vlaneseq
  %v1278 = vshrl.u32 %v1277, 7
  %v1279 = vsub.s32 0, %v1278
  %v1280 = vrot.slane %v1254, %v1279
  %v1281 = vlaneseq
  %v1282 = vshrl.u32 %v1281, 7
  %v1283 = vsub.s32 0, %v1282
  %v1284 = vrot.slane %v1255, %v1283
  %v1285 = vlaneseq
  %v1286 = vshrl.u32 %v1285, 7
  %v1287 = vsub.s32 0, %v1286
  %v1288 = vrot.slane %v1256, %v1287
  %1289 = vset.pattern.permute.xlu0 0
  %1290 = vperm.xlu0 %1289, %v1260
  %v1291 = vpop.permute.xlu0 %1290
  %1292 = vset.pattern.permute.xlu0 0
  %1293 = vperm.xlu0 %1292, %v1264
  %v1294 = vpop.permute.xlu0 %1293
  %1295 = vset.pattern.permute.xlu0 0
  %1296 = vperm.xlu0 %1295, %v1268
  %v1297 = vpop.permute.xlu0 %1296
  %1298 = vset.pattern.permute.xlu0 0
  %1299 = vperm.xlu0 %1298, %v1272
  %v1300 = vpop.permute.xlu0 %1299
  %1301 = vset.pattern.permute.xlu0 0
  %1302 = vperm.xlu0 %1301, %v1276
  %v1303 = vpop.permute.xlu0 %1302
  %1304 = vset.pattern.permute.xlu0 0
  %1305 = vperm.xlu0 %1304, %v1280
  %v1306 = vpop.permute.xlu0 %1305
  %1307 = vset.pattern.permute.xlu0 0
  %1308 = vperm.xlu0 %1307, %v1284
  %v1309 = vpop.permute.xlu0 %1308
  %1310 = vset.pattern.permute.xlu0 0
  %1311 = vperm.xlu0 %1310, %v1288
  %v1312 = vpop.permute.xlu0 %1311
  %vm1313 = vcmp.eq.s32.totalorder %v1291, 1
  %vm1314 = vcmp.eq.s32.totalorder %v1294, 1
  %vm1315 = vcmp.eq.s32.totalorder %v1297, 1
  %vm1316 = vcmp.eq.s32.totalorder %v1300, 1
  %vm1317 = vcmp.eq.s32.totalorder %v1303, 1
  %vm1318 = vcmp.eq.s32.totalorder %v1306, 1
  %vm1319 = vcmp.eq.s32.totalorder %v1309, 1
  %vm1320 = vcmp.eq.s32.totalorder %v1312, 1
  %v1321 = vsel %vm1313, %v1209, %v1152
  %v1322 = vsel %vm1313, %v1241, %v1153
  %v1323 = vsel %vm1314, %v1210, %v1154
  %v1324 = vsel %vm1314, %v1242, %v1155
  %v1325 = vsel %vm1315, %v1211, %v1156
  %v1326 = vsel %vm1315, %v1243, %v1157
  %v1327 = vsel %vm1316, %v1212, %v1158
  %v1328 = vsel %vm1316, %v1244, %v1159
  %v1329 = vsel %vm1317, %v1213, %v1160
  %v1330 = vsel %vm1317, %v1245, %v1161
  %v1331 = vsel %vm1318, %v1214, %v1162
  %v1332 = vsel %vm1318, %v1246, %v1163
  %v1333 = vsel %vm1319, %v1215, %v1164
  %v1334 = vsel %vm1319, %v1247, %v1165
  %v1335 = vsel %vm1320, %v1216, %v1166
  %v1336 = vsel %vm1320, %v1248, %v1167
  %1337 = vset.pattern.permute.xlu0 0
  %1338 = vperm.xlu0 %1337, %v611
  %v1339 = vpop.permute.xlu0 %1338
  %v1340 = vlaneseq
  %v1341 = vshrl.u32 %v1340, 7
  %v1342 = vsub.s32 0, %v1341
  %v1343 = vrot.slane %v1339, %v1342
  %1344 = vset.pattern.permute.xlu0 0
  %1345 = vperm.xlu0 %1344, %v625
  %v1346 = vpop.permute.xlu0 %1345
  %v1347 = vlaneseq
  %v1348 = vshrl.u32 %v1347, 7
  %v1349 = vsub.s32 0, %v1348
  %v1350 = vrot.slane %v1346, %v1349
  %1351 = vset.pattern.permute.xlu0 0
  %1352 = vperm.xlu0 %1351, %v633
  %v1353 = vpop.permute.xlu0 %1352
  %v1354 = vlaneseq
  %v1355 = vshrl.u32 %v1354, 7
  %v1356 = vsub.s32 0, %v1355
  %v1357 = vrot.slane %v1353, %v1356
  %1358 = vset.pattern.permute.xlu0 0
  %1359 = vperm.xlu0 %1358, %v635
  %v1360 = vpop.permute.xlu0 %1359
  %v1361 = vlaneseq
  %v1362 = vshrl.u32 %v1361, 7
  %v1363 = vsub.s32 0, %v1362
  %v1364 = vrot.slane %v1360, %v1363
  %1365 = vset.pattern.permute.xlu0 0
  %1366 = vperm.xlu0 %1365, %v618
  %v1367 = vpop.permute.xlu0 %1366
  %v1368 = vlaneseq
  %v1369 = vshrl.u32 %v1368, 7
  %v1370 = vsub.s32 0, %v1369
  %v1371 = vrot.slane %v1367, %v1370
  %1372 = vset.pattern.permute.xlu0 0
  %1373 = vperm.xlu0 %1372, %v632
  %v1374 = vpop.permute.xlu0 %1373
  %v1375 = vlaneseq
  %v1376 = vshrl.u32 %v1375, 7
  %v1377 = vsub.s32 0, %v1376
  %v1378 = vrot.slane %v1374, %v1377
  %1379 = vset.pattern.permute.xlu0 0
  %1380 = vperm.xlu0 %1379, %v634
  %v1381 = vpop.permute.xlu0 %1380
  %v1382 = vlaneseq
  %v1383 = vshrl.u32 %v1382, 7
  %v1384 = vsub.s32 0, %v1383
  %v1385 = vrot.slane %v1381, %v1384
  %1386 = vset.pattern.permute.xlu0 0
  %1387 = vperm.xlu0 %1386, %v636
  %v1388 = vpop.permute.xlu0 %1387
  %v1389 = vlaneseq
  %v1390 = vshrl.u32 %v1389, 7
  %v1391 = vsub.s32 0, %v1390
  %v1392 = vrot.slane %v1388, %v1391
  %v1393 = vadd.s32 %v29, %v1343
  %v1394 = vadd.s32 %v30, %v1343
  %v1395 = vadd.s32 %v29, %v1350
  %v1396 = vadd.s32 %v30, %v1350
  %v1397 = vadd.s32 %v29, %v1357
  %v1398 = vadd.s32 %v30, %v1357
  %v1399 = vadd.s32 %v29, %v1364
  %v1400 = vadd.s32 %v30, %v1364
  %v1401 = vadd.s32 %v29, %v1371
  %v1402 = vadd.s32 %v30, %v1371
  %v1403 = vadd.s32 %v29, %v1378
  %v1404 = vadd.s32 %v30, %v1378
  %v1405 = vadd.s32 %v29, %v1385
  %v1406 = vadd.s32 %v30, %v1385
  %v1407 = vadd.s32 %v29, %v1392
  %v1408 = vadd.s32 %v30, %v1392
  %vm1409 = vcmp.ge.s32.totalorder %v1393, 0
  %vm1410 = vcmp.ge.s32.totalorder %v1394, 0
  %vm1411 = vcmp.ge.s32.totalorder %v1395, 0
  %vm1412 = vcmp.ge.s32.totalorder %v1396, 0
  %vm1413 = vcmp.ge.s32.totalorder %v1397, 0
  %vm1414 = vcmp.ge.s32.totalorder %v1398, 0
  %vm1415 = vcmp.ge.s32.totalorder %v1399, 0
  %vm1416 = vcmp.ge.s32.totalorder %v1400, 0
  %vm1417 = vcmp.ge.s32.totalorder %v1401, 0
  %vm1418 = vcmp.ge.s32.totalorder %v1402, 0
  %vm1419 = vcmp.ge.s32.totalorder %v1403, 0
  %vm1420 = vcmp.ge.s32.totalorder %v1404, 0
  %vm1421 = vcmp.ge.s32.totalorder %v1405, 0
  %vm1422 = vcmp.ge.s32.totalorder %v1406, 0
  %vm1423 = vcmp.ge.s32.totalorder %v1407, 0
  %vm1424 = vcmp.ge.s32.totalorder %v1408, 0
  %vm1425 = vcmp.lt.s32.totalorder %v1393, 16
  %vm1426 = vcmp.lt.s32.totalorder %v1394, 16
  %vm1427 = vcmp.lt.s32.totalorder %v1395, 16
  %vm1428 = vcmp.lt.s32.totalorder %v1396, 16
  %vm1429 = vcmp.lt.s32.totalorder %v1397, 16
  %vm1430 = vcmp.lt.s32.totalorder %v1398, 16
  %vm1431 = vcmp.lt.s32.totalorder %v1399, 16
  %vm1432 = vcmp.lt.s32.totalorder %v1400, 16
  %vm1433 = vcmp.lt.s32.totalorder %v1401, 16
  %vm1434 = vcmp.lt.s32.totalorder %v1402, 16
  %vm1435 = vcmp.lt.s32.totalorder %v1403, 16
  %vm1436 = vcmp.lt.s32.totalorder %v1404, 16
  %vm1437 = vcmp.lt.s32.totalorder %v1405, 16
  %vm1438 = vcmp.lt.s32.totalorder %v1406, 16
  %vm1439 = vcmp.lt.s32.totalorder %v1407, 16
  %vm1440 = vcmp.lt.s32.totalorder %v1408, 16
  %vm1441 = vmand %vm1409, %vm1425
  %vm1442 = vmand %vm1410, %vm1426
  %vm1443 = vmand %vm1411, %vm1427
  %vm1444 = vmand %vm1412, %vm1428
  %vm1445 = vmand %vm1413, %vm1429
  %vm1446 = vmand %vm1414, %vm1430
  %vm1447 = vmand %vm1415, %vm1431
  %vm1448 = vmand %vm1416, %vm1432
  %vm1449 = vmand %vm1417, %vm1433
  %vm1450 = vmand %vm1418, %vm1434
  %vm1451 = vmand %vm1419, %vm1435
  %vm1452 = vmand %vm1420, %vm1436
  %vm1453 = vmand %vm1421, %vm1437
  %vm1454 = vmand %vm1422, %vm1438
  %vm1455 = vmand %vm1423, %vm1439
  %vm1456 = vmand %vm1424, %vm1440
  %v1457 = vsel %vm1441, 1, 0
  %v1458 = vsel %vm1442, 1, 0
  %v1459 = vsel %vm1443, 1, 0
  %v1460 = vsel %vm1444, 1, 0
  %v1461 = vsel %vm1445, 1, 0
  %v1462 = vsel %vm1446, 1, 0
  %v1463 = vsel %vm1447, 1, 0
  %v1464 = vsel %vm1448, 1, 0
  %v1465 = vsel %vm1449, 1, 0
  %v1466 = vsel %vm1450, 1, 0
  %v1467 = vsel %vm1451, 1, 0
  %v1468 = vsel %vm1452, 1, 0
  %v1469 = vsel %vm1453, 1, 0
  %v1470 = vsel %vm1454, 1, 0
  %v1471 = vsel %vm1455, 1, 0
  %v1472 = vsel %vm1456, 1, 0
  %vm1473 = vcmp.eq.s32.totalorder %v1457, 1
  %vm1474 = vcmp.eq.s32.totalorder %v1458, 1
  %vm1475 = vcmp.eq.s32.totalorder %v1459, 1
  %vm1476 = vcmp.eq.s32.totalorder %v1460, 1
  %vm1477 = vcmp.eq.s32.totalorder %v1461, 1
  %vm1478 = vcmp.eq.s32.totalorder %v1462, 1
  %vm1479 = vcmp.eq.s32.totalorder %v1463, 1
  %vm1480 = vcmp.eq.s32.totalorder %v1464, 1
  %vm1481 = vcmp.eq.s32.totalorder %v1465, 1
  %vm1482 = vcmp.eq.s32.totalorder %v1466, 1
  %vm1483 = vcmp.eq.s32.totalorder %v1467, 1
  %vm1484 = vcmp.eq.s32.totalorder %v1468, 1
  %vm1485 = vcmp.eq.s32.totalorder %v1469, 1
  %vm1486 = vcmp.eq.s32.totalorder %v1470, 1
  %vm1487 = vcmp.eq.s32.totalorder %v1471, 1
  %vm1488 = vcmp.eq.s32.totalorder %v1472, 1
  %v1489 = vsel %vm1473, %v1321, 0.0
  %v1490 = vsel %vm1474, %v1322, 0.0
  %v1491 = vsel %vm1475, %v1323, 0.0
  %v1492 = vsel %vm1476, %v1324, 0.0
  %v1493 = vsel %vm1477, %v1325, 0.0
  %v1494 = vsel %vm1478, %v1326, 0.0
  %v1495 = vsel %vm1479, %v1327, 0.0
  %v1496 = vsel %vm1480, %v1328, 0.0
  %v1497 = vsel %vm1481, %v1329, 0.0
  %v1498 = vsel %vm1482, %v1330, 0.0
  %v1499 = vsel %vm1483, %v1331, 0.0
  %v1500 = vsel %vm1484, %v1332, 0.0
  %v1501 = vsel %vm1485, %v1333, 0.0
  %v1502 = vsel %vm1486, %v1334, 0.0
  %v1503 = vsel %vm1487, %v1335, 0.0
  %v1504 = vsel %vm1488, %v1336, 0.0
  %1513 = vrot.lane.b32.xlu0 %v1490, 2
  %v1514 = vpop.permute.xlu0 %1513
  %1515 = vrot.lane.b32.xlu0 %v1492, 2
  %v1516 = vpop.permute.xlu0 %1515
  %1517 = vrot.lane.b32.xlu0 %v1494, 2
  %v1518 = vpop.permute.xlu0 %1517
  %1519 = vrot.lane.b32.xlu0 %v1496, 2
  %v1520 = vpop.permute.xlu0 %1519
  %1521 = vrot.lane.b32.xlu0 %v1498, 2
  %v1522 = vpop.permute.xlu0 %1521
  %1523 = vrot.lane.b32.xlu0 %v1500, 2
  %v1524 = vpop.permute.xlu0 %1523
  %1525 = vrot.lane.b32.xlu0 %v1502, 2
  %v1526 = vpop.permute.xlu0 %1525
  %1527 = vrot.lane.b32.xlu0 %v1504, 2
  %v1528 = vpop.permute.xlu0 %1527
  %1545 = vrot.lane.b32.xlu0 %v1489, 2
  %v1546 = vpop.permute.xlu0 %1545
  %1547 = vrot.lane.b32.xlu0 %v1491, 2
  %v1548 = vpop.permute.xlu0 %1547
  %1549 = vrot.lane.b32.xlu0 %v1493, 2
  %v1550 = vpop.permute.xlu0 %1549
  %1551 = vrot.lane.b32.xlu0 %v1495, 2
  %v1552 = vpop.permute.xlu0 %1551
  %1553 = vrot.lane.b32.xlu0 %v1497, 2
  %v1554 = vpop.permute.xlu0 %1553
  %1555 = vrot.lane.b32.xlu0 %v1499, 2
  %v1556 = vpop.permute.xlu0 %1555
  %1557 = vrot.lane.b32.xlu0 %v1501, 2
  %v1558 = vpop.permute.xlu0 %1557
  %1559 = vrot.lane.b32.xlu0 %v1503, 2
  %v1560 = vpop.permute.xlu0 %1559
  %vm1561 = vcmask 15360
  %v1562 = vsel %vm1561, %v1546, %v1514
  %v1563 = vsel %vm1561, %v1548, %v1516
  %v1564 = vsel %vm1561, %v1550, %v1518
  %v1565 = vsel %vm1561, %v1552, %v1520
  %v1566 = vsel %vm1561, %v1554, %v1522
  %v1567 = vsel %vm1561, %v1556, %v1524
  %v1568 = vsel %vm1561, %v1558, %v1526
  %v1569 = vsel %vm1561, %v1560, %v1528
  %v1586 = vsel %vm1561, %v1514, %v1546
  %v1587 = vsel %vm1561, %v1516, %v1548
  %v1588 = vsel %vm1561, %v1518, %v1550
  %v1589 = vsel %vm1561, %v1520, %v1552
  %v1590 = vsel %vm1561, %v1522, %v1554
  %v1591 = vsel %vm1561, %v1524, %v1556
  %v1592 = vsel %vm1561, %v1526, %v1558
  %v1593 = vsel %vm1561, %v1528, %v1560
  %1594 = vset.pattern.permute.xlu0 1
  %1595 = vperm.xlu0 %1594, %v745
  %v1596 = vpop.permute.xlu0 %1595
  %1597 = vset.pattern.permute.xlu0 1
  %1598 = vperm.xlu0 %1597, %v749
  %v1599 = vpop.permute.xlu0 %1598
  %1600 = vset.pattern.permute.xlu0 1
  %1601 = vperm.xlu0 %1600, %v753
  %v1602 = vpop.permute.xlu0 %1601
  %1603 = vset.pattern.permute.xlu0 1
  %1604 = vperm.xlu0 %1603, %v757
  %v1605 = vpop.permute.xlu0 %1604
  %1606 = vset.pattern.permute.xlu0 1
  %1607 = vperm.xlu0 %1606, %v761
  %v1608 = vpop.permute.xlu0 %1607
  %1609 = vset.pattern.permute.xlu0 1
  %1610 = vperm.xlu0 %1609, %v765
  %v1611 = vpop.permute.xlu0 %1610
  %1612 = vset.pattern.permute.xlu0 1
  %1613 = vperm.xlu0 %1612, %v769
  %v1614 = vpop.permute.xlu0 %1613
  %1615 = vset.pattern.permute.xlu0 1
  %1616 = vperm.xlu0 %1615, %v773
  %v1617 = vpop.permute.xlu0 %1616
  %vm1618 = vcmp.eq.s32.totalorder %v1596, 1
  %vm1619 = vcmp.eq.s32.totalorder %v1599, 1
  %vm1620 = vcmp.eq.s32.totalorder %v1602, 1
  %vm1621 = vcmp.eq.s32.totalorder %v1605, 1
  %vm1622 = vcmp.eq.s32.totalorder %v1608, 1
  %vm1623 = vcmp.eq.s32.totalorder %v1611, 1
  %vm1624 = vcmp.eq.s32.totalorder %v1614, 1
  %vm1625 = vcmp.eq.s32.totalorder %v1617, 1
  %v1626 = vsel %vm1618, %v1586, %v1489
  %v1627 = vsel %vm1618, %v1562, %v1490
  %v1628 = vsel %vm1619, %v1587, %v1491
  %v1629 = vsel %vm1619, %v1563, %v1492
  %v1630 = vsel %vm1620, %v1588, %v1493
  %v1631 = vsel %vm1620, %v1564, %v1494
  %v1632 = vsel %vm1621, %v1589, %v1495
  %v1633 = vsel %vm1621, %v1565, %v1496
  %v1634 = vsel %vm1622, %v1590, %v1497
  %v1635 = vsel %vm1622, %v1566, %v1498
  %v1636 = vsel %vm1623, %v1591, %v1499
  %v1637 = vsel %vm1623, %v1567, %v1500
  %v1638 = vsel %vm1624, %v1592, %v1501
  %v1639 = vsel %vm1624, %v1568, %v1502
  %v1640 = vsel %vm1625, %v1593, %v1503
  %v1641 = vsel %vm1625, %v1569, %v1504
  %1642 = vrot.lane.b32.xlu0 %v1490, 1
  %v1643 = vpop.permute.xlu0 %1642
  %1644 = vrot.lane.b32.xlu0 %v1492, 1
  %v1645 = vpop.permute.xlu0 %1644
  %1646 = vrot.lane.b32.xlu0 %v1494, 1
  %v1647 = vpop.permute.xlu0 %1646
  %1648 = vrot.lane.b32.xlu0 %v1496, 1
  %v1649 = vpop.permute.xlu0 %1648
  %1650 = vrot.lane.b32.xlu0 %v1498, 1
  %v1651 = vpop.permute.xlu0 %1650
  %1652 = vrot.lane.b32.xlu0 %v1500, 1
  %v1653 = vpop.permute.xlu0 %1652
  %1654 = vrot.lane.b32.xlu0 %v1502, 1
  %v1655 = vpop.permute.xlu0 %1654
  %1656 = vrot.lane.b32.xlu0 %v1504, 1
  %v1657 = vpop.permute.xlu0 %1656
  %1666 = vrot.lane.b32.xlu0 %v1489, 1
  %v1667 = vpop.permute.xlu0 %1666
  %1668 = vrot.lane.b32.xlu0 %v1491, 1
  %v1669 = vpop.permute.xlu0 %1668
  %1670 = vrot.lane.b32.xlu0 %v1493, 1
  %v1671 = vpop.permute.xlu0 %1670
  %1672 = vrot.lane.b32.xlu0 %v1495, 1
  %v1673 = vpop.permute.xlu0 %1672
  %1674 = vrot.lane.b32.xlu0 %v1497, 1
  %v1675 = vpop.permute.xlu0 %1674
  %1676 = vrot.lane.b32.xlu0 %v1499, 1
  %v1677 = vpop.permute.xlu0 %1676
  %1678 = vrot.lane.b32.xlu0 %v1501, 1
  %v1679 = vpop.permute.xlu0 %1678
  %1680 = vrot.lane.b32.xlu0 %v1503, 1
  %v1681 = vpop.permute.xlu0 %1680
  %vm1682 = vcmask 7168
  %v1683 = vsel %vm1682, %v1667, %v1643
  %v1684 = vsel %vm1682, %v1669, %v1645
  %v1685 = vsel %vm1682, %v1671, %v1647
  %v1686 = vsel %vm1682, %v1673, %v1649
  %v1687 = vsel %vm1682, %v1675, %v1651
  %v1688 = vsel %vm1682, %v1677, %v1653
  %v1689 = vsel %vm1682, %v1679, %v1655
  %v1690 = vsel %vm1682, %v1681, %v1657
  %v1707 = vsel %vm1682, %v1643, %v1667
  %v1708 = vsel %vm1682, %v1645, %v1669
  %v1709 = vsel %vm1682, %v1647, %v1671
  %v1710 = vsel %vm1682, %v1649, %v1673
  %v1711 = vsel %vm1682, %v1651, %v1675
  %v1712 = vsel %vm1682, %v1653, %v1677
  %v1713 = vsel %vm1682, %v1655, %v1679
  %v1714 = vsel %vm1682, %v1657, %v1681
  %1715 = vset.pattern.permute.xlu0 1
  %1716 = vperm.xlu0 %1715, %v922
  %v1717 = vpop.permute.xlu0 %1716
  %1718 = vset.pattern.permute.xlu0 1
  %1719 = vperm.xlu0 %1718, %v926
  %v1720 = vpop.permute.xlu0 %1719
  %1721 = vset.pattern.permute.xlu0 1
  %1722 = vperm.xlu0 %1721, %v930
  %v1723 = vpop.permute.xlu0 %1722
  %1724 = vset.pattern.permute.xlu0 1
  %1725 = vperm.xlu0 %1724, %v934
  %v1726 = vpop.permute.xlu0 %1725
  %1727 = vset.pattern.permute.xlu0 1
  %1728 = vperm.xlu0 %1727, %v938
  %v1729 = vpop.permute.xlu0 %1728
  %1730 = vset.pattern.permute.xlu0 1
  %1731 = vperm.xlu0 %1730, %v942
  %v1732 = vpop.permute.xlu0 %1731
  %1733 = vset.pattern.permute.xlu0 1
  %1734 = vperm.xlu0 %1733, %v946
  %v1735 = vpop.permute.xlu0 %1734
  %1736 = vset.pattern.permute.xlu0 1
  %1737 = vperm.xlu0 %1736, %v950
  %v1738 = vpop.permute.xlu0 %1737
  %vm1739 = vcmp.eq.s32.totalorder %v1717, 1
  %vm1740 = vcmp.eq.s32.totalorder %v1720, 1
  %vm1741 = vcmp.eq.s32.totalorder %v1723, 1
  %vm1742 = vcmp.eq.s32.totalorder %v1726, 1
  %vm1743 = vcmp.eq.s32.totalorder %v1729, 1
  %vm1744 = vcmp.eq.s32.totalorder %v1732, 1
  %vm1745 = vcmp.eq.s32.totalorder %v1735, 1
  %vm1746 = vcmp.eq.s32.totalorder %v1738, 1
  %v1747 = vsel %vm1739, %v1707, %v1626
  %v1748 = vsel %vm1739, %v1683, %v1627
  %v1749 = vsel %vm1740, %v1708, %v1628
  %v1750 = vsel %vm1740, %v1684, %v1629
  %v1751 = vsel %vm1741, %v1709, %v1630
  %v1752 = vsel %vm1741, %v1685, %v1631
  %v1753 = vsel %vm1742, %v1710, %v1632
  %v1754 = vsel %vm1742, %v1686, %v1633
  %v1755 = vsel %vm1743, %v1711, %v1634
  %v1756 = vsel %vm1743, %v1687, %v1635
  %v1757 = vsel %vm1744, %v1712, %v1636
  %v1758 = vsel %vm1744, %v1688, %v1637
  %v1759 = vsel %vm1745, %v1713, %v1638
  %v1760 = vsel %vm1745, %v1689, %v1639
  %v1761 = vsel %vm1746, %v1714, %v1640
  %v1762 = vsel %vm1746, %v1690, %v1641
  %1763 = vrot.lane.b32.xlu0 %v1489, 127
  %v1764 = vpop.permute.xlu0 %1763
  %1765 = vrot.lane.b32.xlu0 %v1490, 127
  %v1766 = vpop.permute.xlu0 %1765
  %1767 = vrot.lane.b32.xlu0 %v1491, 127
  %v1768 = vpop.permute.xlu0 %1767
  %1769 = vrot.lane.b32.xlu0 %v1492, 127
  %v1770 = vpop.permute.xlu0 %1769
  %1771 = vrot.lane.b32.xlu0 %v1493, 127
  %v1772 = vpop.permute.xlu0 %1771
  %1773 = vrot.lane.b32.xlu0 %v1494, 127
  %v1774 = vpop.permute.xlu0 %1773
  %1775 = vrot.lane.b32.xlu0 %v1495, 127
  %v1776 = vpop.permute.xlu0 %1775
  %1777 = vrot.lane.b32.xlu0 %v1496, 127
  %v1778 = vpop.permute.xlu0 %1777
  %1779 = vrot.lane.b32.xlu0 %v1497, 127
  %v1780 = vpop.permute.xlu0 %1779
  %1781 = vrot.lane.b32.xlu0 %v1498, 127
  %v1782 = vpop.permute.xlu0 %1781
  %1783 = vrot.lane.b32.xlu0 %v1499, 127
  %v1784 = vpop.permute.xlu0 %1783
  %1785 = vrot.lane.b32.xlu0 %v1500, 127
  %v1786 = vpop.permute.xlu0 %1785
  %1787 = vrot.lane.b32.xlu0 %v1501, 127
  %v1788 = vpop.permute.xlu0 %1787
  %1789 = vrot.lane.b32.xlu0 %v1502, 127
  %v1790 = vpop.permute.xlu0 %1789
  %1791 = vrot.lane.b32.xlu0 %v1503, 127
  %v1792 = vpop.permute.xlu0 %1791
  %1793 = vrot.lane.b32.xlu0 %v1504, 127
  %v1794 = vpop.permute.xlu0 %1793
  %vm1795 = vcmask 1039360
  %v1796 = vsel %vm1795, %v1764, %v1766
  %v1797 = vsel %vm1795, %v1768, %v1770
  %v1798 = vsel %vm1795, %v1772, %v1774
  %v1799 = vsel %vm1795, %v1776, %v1778
  %v1800 = vsel %vm1795, %v1780, %v1782
  %v1801 = vsel %vm1795, %v1784, %v1786
  %v1802 = vsel %vm1795, %v1788, %v1790
  %v1803 = vsel %vm1795, %v1792, %v1794
  %v1828 = vsel %vm1795, %v1766, %v1764
  %v1829 = vsel %vm1795, %v1770, %v1768
  %v1830 = vsel %vm1795, %v1774, %v1772
  %v1831 = vsel %vm1795, %v1778, %v1776
  %v1832 = vsel %vm1795, %v1782, %v1780
  %v1833 = vsel %vm1795, %v1786, %v1784
  %v1834 = vsel %vm1795, %v1790, %v1788
  %v1835 = vsel %vm1795, %v1794, %v1792
  %1836 = vset.pattern.permute.xlu0 1
  %1837 = vperm.xlu0 %1836, %v1091
  %v1838 = vpop.permute.xlu0 %1837
  %1839 = vset.pattern.permute.xlu0 1
  %1840 = vperm.xlu0 %1839, %v1095
  %v1841 = vpop.permute.xlu0 %1840
  %1842 = vset.pattern.permute.xlu0 1
  %1843 = vperm.xlu0 %1842, %v1099
  %v1844 = vpop.permute.xlu0 %1843
  %1845 = vset.pattern.permute.xlu0 1
  %1846 = vperm.xlu0 %1845, %v1103
  %v1847 = vpop.permute.xlu0 %1846
  %1848 = vset.pattern.permute.xlu0 1
  %1849 = vperm.xlu0 %1848, %v1107
  %v1850 = vpop.permute.xlu0 %1849
  %1851 = vset.pattern.permute.xlu0 1
  %1852 = vperm.xlu0 %1851, %v1111
  %v1853 = vpop.permute.xlu0 %1852
  %1854 = vset.pattern.permute.xlu0 1
  %1855 = vperm.xlu0 %1854, %v1115
  %v1856 = vpop.permute.xlu0 %1855
  %1857 = vset.pattern.permute.xlu0 1
  %1858 = vperm.xlu0 %1857, %v1119
  %v1859 = vpop.permute.xlu0 %1858
  %vm1860 = vcmp.eq.s32.totalorder %v1838, 1
  %vm1861 = vcmp.eq.s32.totalorder %v1841, 1
  %vm1862 = vcmp.eq.s32.totalorder %v1844, 1
  %vm1863 = vcmp.eq.s32.totalorder %v1847, 1
  %vm1864 = vcmp.eq.s32.totalorder %v1850, 1
  %vm1865 = vcmp.eq.s32.totalorder %v1853, 1
  %vm1866 = vcmp.eq.s32.totalorder %v1856, 1
  %vm1867 = vcmp.eq.s32.totalorder %v1859, 1
  %v1868 = vsel %vm1860, %v1796, %v1747
  %v1869 = vsel %vm1860, %v1828, %v1748
  %v1870 = vsel %vm1861, %v1797, %v1749
  %v1871 = vsel %vm1861, %v1829, %v1750
  %v1872 = vsel %vm1862, %v1798, %v1751
  %v1873 = vsel %vm1862, %v1830, %v1752
  %v1874 = vsel %vm1863, %v1799, %v1753
  %v1875 = vsel %vm1863, %v1831, %v1754
  %v1876 = vsel %vm1864, %v1800, %v1755
  %v1877 = vsel %vm1864, %v1832, %v1756
  %v1878 = vsel %vm1865, %v1801, %v1757
  %v1879 = vsel %vm1865, %v1833, %v1758
  %v1880 = vsel %vm1866, %v1802, %v1759
  %v1881 = vsel %vm1866, %v1834, %v1760
  %v1882 = vsel %vm1867, %v1803, %v1761
  %v1883 = vsel %vm1867, %v1835, %v1762
  %1884 = vrot.lane.b32.xlu0 %v1489, 126
  %v1885 = vpop.permute.xlu0 %1884
  %1886 = vrot.lane.b32.xlu0 %v1490, 126
  %v1887 = vpop.permute.xlu0 %1886
  %1888 = vrot.lane.b32.xlu0 %v1491, 126
  %v1889 = vpop.permute.xlu0 %1888
  %1890 = vrot.lane.b32.xlu0 %v1492, 126
  %v1891 = vpop.permute.xlu0 %1890
  %1892 = vrot.lane.b32.xlu0 %v1493, 126
  %v1893 = vpop.permute.xlu0 %1892
  %1894 = vrot.lane.b32.xlu0 %v1494, 126
  %v1895 = vpop.permute.xlu0 %1894
  %1896 = vrot.lane.b32.xlu0 %v1495, 126
  %v1897 = vpop.permute.xlu0 %1896
  %1898 = vrot.lane.b32.xlu0 %v1496, 126
  %v1899 = vpop.permute.xlu0 %1898
  %1900 = vrot.lane.b32.xlu0 %v1497, 126
  %v1901 = vpop.permute.xlu0 %1900
  %1902 = vrot.lane.b32.xlu0 %v1498, 126
  %v1903 = vpop.permute.xlu0 %1902
  %1904 = vrot.lane.b32.xlu0 %v1499, 126
  %v1905 = vpop.permute.xlu0 %1904
  %1906 = vrot.lane.b32.xlu0 %v1500, 126
  %v1907 = vpop.permute.xlu0 %1906
  %1908 = vrot.lane.b32.xlu0 %v1501, 126
  %v1909 = vpop.permute.xlu0 %1908
  %1910 = vrot.lane.b32.xlu0 %v1502, 126
  %v1911 = vpop.permute.xlu0 %1910
  %1912 = vrot.lane.b32.xlu0 %v1503, 126
  %v1913 = vpop.permute.xlu0 %1912
  %1914 = vrot.lane.b32.xlu0 %v1504, 126
  %v1915 = vpop.permute.xlu0 %1914
  %vm1916 = vcmask 1031168
  %v1917 = vsel %vm1916, %v1885, %v1887
  %v1918 = vsel %vm1916, %v1889, %v1891
  %v1919 = vsel %vm1916, %v1893, %v1895
  %v1920 = vsel %vm1916, %v1897, %v1899
  %v1921 = vsel %vm1916, %v1901, %v1903
  %v1922 = vsel %vm1916, %v1905, %v1907
  %v1923 = vsel %vm1916, %v1909, %v1911
  %v1924 = vsel %vm1916, %v1913, %v1915
  %v1949 = vsel %vm1916, %v1887, %v1885
  %v1950 = vsel %vm1916, %v1891, %v1889
  %v1951 = vsel %vm1916, %v1895, %v1893
  %v1952 = vsel %vm1916, %v1899, %v1897
  %v1953 = vsel %vm1916, %v1903, %v1901
  %v1954 = vsel %vm1916, %v1907, %v1905
  %v1955 = vsel %vm1916, %v1911, %v1909
  %v1956 = vsel %vm1916, %v1915, %v1913
  %1957 = vset.pattern.permute.xlu0 1
  %1958 = vperm.xlu0 %1957, %v1260
  %v1959 = vpop.permute.xlu0 %1958
  %1960 = vset.pattern.permute.xlu0 1
  %1961 = vperm.xlu0 %1960, %v1264
  %v1962 = vpop.permute.xlu0 %1961
  %1963 = vset.pattern.permute.xlu0 1
  %1964 = vperm.xlu0 %1963, %v1268
  %v1965 = vpop.permute.xlu0 %1964
  %1966 = vset.pattern.permute.xlu0 1
  %1967 = vperm.xlu0 %1966, %v1272
  %v1968 = vpop.permute.xlu0 %1967
  %1969 = vset.pattern.permute.xlu0 1
  %1970 = vperm.xlu0 %1969, %v1276
  %v1971 = vpop.permute.xlu0 %1970
  %1972 = vset.pattern.permute.xlu0 1
  %1973 = vperm.xlu0 %1972, %v1280
  %v1974 = vpop.permute.xlu0 %1973
  %1975 = vset.pattern.permute.xlu0 1
  %1976 = vperm.xlu0 %1975, %v1284
  %v1977 = vpop.permute.xlu0 %1976
  %1978 = vset.pattern.permute.xlu0 1
  %1979 = vperm.xlu0 %1978, %v1288
  %v1980 = vpop.permute.xlu0 %1979
  %vm1981 = vcmp.eq.s32.totalorder %v1959, 1
  %vm1982 = vcmp.eq.s32.totalorder %v1962, 1
  %vm1983 = vcmp.eq.s32.totalorder %v1965, 1
  %vm1984 = vcmp.eq.s32.totalorder %v1968, 1
  %vm1985 = vcmp.eq.s32.totalorder %v1971, 1
  %vm1986 = vcmp.eq.s32.totalorder %v1974, 1
  %vm1987 = vcmp.eq.s32.totalorder %v1977, 1
  %vm1988 = vcmp.eq.s32.totalorder %v1980, 1
  %v1989 = vsel %vm1981, %v1917, %v1868
  %v1990 = vsel %vm1981, %v1949, %v1869
  %v1991 = vsel %vm1982, %v1918, %v1870
  %v1992 = vsel %vm1982, %v1950, %v1871
  %v1993 = vsel %vm1983, %v1919, %v1872
  %v1994 = vsel %vm1983, %v1951, %v1873
  %v1995 = vsel %vm1984, %v1920, %v1874
  %v1996 = vsel %vm1984, %v1952, %v1875
  %v1997 = vsel %vm1985, %v1921, %v1876
  %v1998 = vsel %vm1985, %v1953, %v1877
  %v1999 = vsel %vm1986, %v1922, %v1878
  %v2000 = vsel %vm1986, %v1954, %v1879
  %v2001 = vsel %vm1987, %v1923, %v1880
  %v2002 = vsel %vm1987, %v1955, %v1881
  %v2003 = vsel %vm1988, %v1924, %v1882
  %v2004 = vsel %vm1988, %v1956, %v1883
  %2005 = vset.pattern.permute.xlu0 1
  %2006 = vperm.xlu0 %2005, %v611
  %v2007 = vpop.permute.xlu0 %2006
  %v2008 = vlaneseq
  %v2009 = vshrl.u32 %v2008, 7
  %v2010 = vsub.s32 0, %v2009
  %v2011 = vrot.slane %v2007, %v2010
  %2012 = vset.pattern.permute.xlu0 1
  %2013 = vperm.xlu0 %2012, %v625
  %v2014 = vpop.permute.xlu0 %2013
  %v2015 = vlaneseq
  %v2016 = vshrl.u32 %v2015, 7
  %v2017 = vsub.s32 0, %v2016
  %v2018 = vrot.slane %v2014, %v2017
  %2019 = vset.pattern.permute.xlu0 1
  %2020 = vperm.xlu0 %2019, %v633
  %v2021 = vpop.permute.xlu0 %2020
  %v2022 = vlaneseq
  %v2023 = vshrl.u32 %v2022, 7
  %v2024 = vsub.s32 0, %v2023
  %v2025 = vrot.slane %v2021, %v2024
  %2026 = vset.pattern.permute.xlu0 1
  %2027 = vperm.xlu0 %2026, %v635
  %v2028 = vpop.permute.xlu0 %2027
  %v2029 = vlaneseq
  %v2030 = vshrl.u32 %v2029, 7
  %v2031 = vsub.s32 0, %v2030
  %v2032 = vrot.slane %v2028, %v2031
  %2033 = vset.pattern.permute.xlu0 1
  %2034 = vperm.xlu0 %2033, %v618
  %v2035 = vpop.permute.xlu0 %2034
  %v2036 = vlaneseq
  %v2037 = vshrl.u32 %v2036, 7
  %v2038 = vsub.s32 0, %v2037
  %v2039 = vrot.slane %v2035, %v2038
  %2040 = vset.pattern.permute.xlu0 1
  %2041 = vperm.xlu0 %2040, %v632
  %v2042 = vpop.permute.xlu0 %2041
  %v2043 = vlaneseq
  %v2044 = vshrl.u32 %v2043, 7
  %v2045 = vsub.s32 0, %v2044
  %v2046 = vrot.slane %v2042, %v2045
  %2047 = vset.pattern.permute.xlu0 1
  %2048 = vperm.xlu0 %2047, %v634
  %v2049 = vpop.permute.xlu0 %2048
  %v2050 = vlaneseq
  %v2051 = vshrl.u32 %v2050, 7
  %v2052 = vsub.s32 0, %v2051
  %v2053 = vrot.slane %v2049, %v2052
  %2054 = vset.pattern.permute.xlu0 1
  %2055 = vperm.xlu0 %2054, %v636
  %v2056 = vpop.permute.xlu0 %2055
  %v2057 = vlaneseq
  %v2058 = vshrl.u32 %v2057, 7
  %v2059 = vsub.s32 0, %v2058
  %v2060 = vrot.slane %v2056, %v2059
  %v2061 = vadd.s32 %v27, %v2011
  %v2062 = vadd.s32 %v28, %v2011
  %v2063 = vadd.s32 %v27, %v2018
  %v2064 = vadd.s32 %v28, %v2018
  %v2065 = vadd.s32 %v27, %v2025
  %v2066 = vadd.s32 %v28, %v2025
  %v2067 = vadd.s32 %v27, %v2032
  %v2068 = vadd.s32 %v28, %v2032
  %v2069 = vadd.s32 %v27, %v2039
  %v2070 = vadd.s32 %v28, %v2039
  %v2071 = vadd.s32 %v27, %v2046
  %v2072 = vadd.s32 %v28, %v2046
  %v2073 = vadd.s32 %v27, %v2053
  %v2074 = vadd.s32 %v28, %v2053
  %v2075 = vadd.s32 %v27, %v2060
  %v2076 = vadd.s32 %v28, %v2060
  %vm2077 = vcmp.ge.s32.totalorder %v2061, 0
  %vm2078 = vcmp.ge.s32.totalorder %v2062, 0
  %vm2079 = vcmp.ge.s32.totalorder %v2063, 0
  %vm2080 = vcmp.ge.s32.totalorder %v2064, 0
  %vm2081 = vcmp.ge.s32.totalorder %v2065, 0
  %vm2082 = vcmp.ge.s32.totalorder %v2066, 0
  %vm2083 = vcmp.ge.s32.totalorder %v2067, 0
  %vm2084 = vcmp.ge.s32.totalorder %v2068, 0
  %vm2085 = vcmp.ge.s32.totalorder %v2069, 0
  %vm2086 = vcmp.ge.s32.totalorder %v2070, 0
  %vm2087 = vcmp.ge.s32.totalorder %v2071, 0
  %vm2088 = vcmp.ge.s32.totalorder %v2072, 0
  %vm2089 = vcmp.ge.s32.totalorder %v2073, 0
  %vm2090 = vcmp.ge.s32.totalorder %v2074, 0
  %vm2091 = vcmp.ge.s32.totalorder %v2075, 0
  %vm2092 = vcmp.ge.s32.totalorder %v2076, 0
  %vm2093 = vcmp.lt.s32.totalorder %v2061, 16
  %vm2094 = vcmp.lt.s32.totalorder %v2062, 16
  %vm2095 = vcmp.lt.s32.totalorder %v2063, 16
  %vm2096 = vcmp.lt.s32.totalorder %v2064, 16
  %vm2097 = vcmp.lt.s32.totalorder %v2065, 16
  %vm2098 = vcmp.lt.s32.totalorder %v2066, 16
  %vm2099 = vcmp.lt.s32.totalorder %v2067, 16
  %vm2100 = vcmp.lt.s32.totalorder %v2068, 16
  %vm2101 = vcmp.lt.s32.totalorder %v2069, 16
  %vm2102 = vcmp.lt.s32.totalorder %v2070, 16
  %vm2103 = vcmp.lt.s32.totalorder %v2071, 16
  %vm2104 = vcmp.lt.s32.totalorder %v2072, 16
  %vm2105 = vcmp.lt.s32.totalorder %v2073, 16
  %vm2106 = vcmp.lt.s32.totalorder %v2074, 16
  %vm2107 = vcmp.lt.s32.totalorder %v2075, 16
  %vm2108 = vcmp.lt.s32.totalorder %v2076, 16
  %vm2109 = vmand %vm2077, %vm2093
  %vm2110 = vmand %vm2078, %vm2094
  %vm2111 = vmand %vm2079, %vm2095
  %vm2112 = vmand %vm2080, %vm2096
  %vm2113 = vmand %vm2081, %vm2097
  %vm2114 = vmand %vm2082, %vm2098
  %vm2115 = vmand %vm2083, %vm2099
  %vm2116 = vmand %vm2084, %vm2100
  %vm2117 = vmand %vm2085, %vm2101
  %vm2118 = vmand %vm2086, %vm2102
  %vm2119 = vmand %vm2087, %vm2103
  %vm2120 = vmand %vm2088, %vm2104
  %vm2121 = vmand %vm2089, %vm2105
  %vm2122 = vmand %vm2090, %vm2106
  %vm2123 = vmand %vm2091, %vm2107
  %vm2124 = vmand %vm2092, %vm2108
  %v2125 = vsel %vm2109, 1, 0
  %v2126 = vsel %vm2110, 1, 0
  %v2127 = vsel %vm2111, 1, 0
  %v2128 = vsel %vm2112, 1, 0
  %v2129 = vsel %vm2113, 1, 0
  %v2130 = vsel %vm2114, 1, 0
  %v2131 = vsel %vm2115, 1, 0
  %v2132 = vsel %vm2116, 1, 0
  %v2133 = vsel %vm2117, 1, 0
  %v2134 = vsel %vm2118, 1, 0
  %v2135 = vsel %vm2119, 1, 0
  %v2136 = vsel %vm2120, 1, 0
  %v2137 = vsel %vm2121, 1, 0
  %v2138 = vsel %vm2122, 1, 0
  %v2139 = vsel %vm2123, 1, 0
  %v2140 = vsel %vm2124, 1, 0
  %vm2141 = vcmp.eq.s32.totalorder %v2125, 1
  %vm2142 = vcmp.eq.s32.totalorder %v2126, 1
  %vm2143 = vcmp.eq.s32.totalorder %v2127, 1
  %vm2144 = vcmp.eq.s32.totalorder %v2128, 1
  %vm2145 = vcmp.eq.s32.totalorder %v2129, 1
  %vm2146 = vcmp.eq.s32.totalorder %v2130, 1
  %vm2147 = vcmp.eq.s32.totalorder %v2131, 1
  %vm2148 = vcmp.eq.s32.totalorder %v2132, 1
  %vm2149 = vcmp.eq.s32.totalorder %v2133, 1
  %vm2150 = vcmp.eq.s32.totalorder %v2134, 1
  %vm2151 = vcmp.eq.s32.totalorder %v2135, 1
  %vm2152 = vcmp.eq.s32.totalorder %v2136, 1
  %vm2153 = vcmp.eq.s32.totalorder %v2137, 1
  %vm2154 = vcmp.eq.s32.totalorder %v2138, 1
  %vm2155 = vcmp.eq.s32.totalorder %v2139, 1
  %vm2156 = vcmp.eq.s32.totalorder %v2140, 1
  %v2157 = vsel %vm2141, %v1989, 0.0
  %v2158 = vsel %vm2142, %v1990, 0.0
  %v2159 = vsel %vm2143, %v1991, 0.0
  %v2160 = vsel %vm2144, %v1992, 0.0
  %v2161 = vsel %vm2145, %v1993, 0.0
  %v2162 = vsel %vm2146, %v1994, 0.0
  %v2163 = vsel %vm2147, %v1995, 0.0
  %v2164 = vsel %vm2148, %v1996, 0.0
  %v2165 = vsel %vm2149, %v1997, 0.0
  %v2166 = vsel %vm2150, %v1998, 0.0
  %v2167 = vsel %vm2151, %v1999, 0.0
  %v2168 = vsel %vm2152, %v2000, 0.0
  %v2169 = vsel %vm2153, %v2001, 0.0
  %v2170 = vsel %vm2154, %v2002, 0.0
  %v2171 = vsel %vm2155, %v2003, 0.0
  %v2172 = vsel %vm2156, %v2004, 0.0
  %v2173 = vsub.s32 %v611, 4
  %v2174 = vsub.s32 %v625, 4
  %v2175 = vsub.s32 %v633, 4
  %v2176 = vsub.s32 %v635, 4
  %v2177 = vsub.s32 %v618, 4
  %v2178 = vsub.s32 %v632, 4
  %v2179 = vsub.s32 %v634, 4
  %v2180 = vsub.s32 %v636, 4
  %2181 = vset.pattern.permute.xlu0 2
  %2182 = vperm.xlu0 %2181, %v2173
  %v2183 = vpop.permute.xlu0 %2182
  %v2184 = vlaneseq
  %v2185 = vshrl.u32 %v2184, 7
  %v2186 = vsub.s32 0, %v2185
  %v2187 = vrot.slane %v2183, %v2186
  %2188 = vset.pattern.permute.xlu0 2
  %2189 = vperm.xlu0 %2188, %v2174
  %v2190 = vpop.permute.xlu0 %2189
  %v2191 = vlaneseq
  %v2192 = vshrl.u32 %v2191, 7
  %v2193 = vsub.s32 0, %v2192
  %v2194 = vrot.slane %v2190, %v2193
  %2195 = vset.pattern.permute.xlu0 2
  %2196 = vperm.xlu0 %2195, %v2175
  %v2197 = vpop.permute.xlu0 %2196
  %v2198 = vlaneseq
  %v2199 = vshrl.u32 %v2198, 7
  %v2200 = vsub.s32 0, %v2199
  %v2201 = vrot.slane %v2197, %v2200
  %2202 = vset.pattern.permute.xlu0 2
  %2203 = vperm.xlu0 %2202, %v2176
  %v2204 = vpop.permute.xlu0 %2203
  %v2205 = vlaneseq
  %v2206 = vshrl.u32 %v2205, 7
  %v2207 = vsub.s32 0, %v2206
  %v2208 = vrot.slane %v2204, %v2207
  %2209 = vset.pattern.permute.xlu0 2
  %2210 = vperm.xlu0 %2209, %v2177
  %v2211 = vpop.permute.xlu0 %2210
  %v2212 = vlaneseq
  %v2213 = vshrl.u32 %v2212, 7
  %v2214 = vsub.s32 0, %v2213
  %v2215 = vrot.slane %v2211, %v2214
  %2216 = vset.pattern.permute.xlu0 2
  %2217 = vperm.xlu0 %2216, %v2178
  %v2218 = vpop.permute.xlu0 %2217
  %v2219 = vlaneseq
  %v2220 = vshrl.u32 %v2219, 7
  %v2221 = vsub.s32 0, %v2220
  %v2222 = vrot.slane %v2218, %v2221
  %2223 = vset.pattern.permute.xlu0 2
  %2224 = vperm.xlu0 %2223, %v2179
  %v2225 = vpop.permute.xlu0 %2224
  %v2226 = vlaneseq
  %v2227 = vshrl.u32 %v2226, 7
  %v2228 = vsub.s32 0, %v2227
  %v2229 = vrot.slane %v2225, %v2228
  %2230 = vset.pattern.permute.xlu0 2
  %2231 = vperm.xlu0 %2230, %v2180
  %v2232 = vpop.permute.xlu0 %2231
  %v2233 = vlaneseq
  %v2234 = vshrl.u32 %v2233, 7
  %v2235 = vsub.s32 0, %v2234
  %v2236 = vrot.slane %v2232, %v2235
  %vm2237 = vcmp.ge.s32.totalorder %v29, %v2187
  %vm2238 = vcmp.ge.s32.totalorder %v30, %v2187
  %vm2239 = vcmp.ge.s32.totalorder %v29, %v2194
  %vm2240 = vcmp.ge.s32.totalorder %v30, %v2194
  %vm2241 = vcmp.ge.s32.totalorder %v29, %v2201
  %vm2242 = vcmp.ge.s32.totalorder %v30, %v2201
  %vm2243 = vcmp.ge.s32.totalorder %v29, %v2208
  %vm2244 = vcmp.ge.s32.totalorder %v30, %v2208
  %vm2245 = vcmp.ge.s32.totalorder %v29, %v2215
  %vm2246 = vcmp.ge.s32.totalorder %v30, %v2215
  %vm2247 = vcmp.ge.s32.totalorder %v29, %v2222
  %vm2248 = vcmp.ge.s32.totalorder %v30, %v2222
  %vm2249 = vcmp.ge.s32.totalorder %v29, %v2229
  %vm2250 = vcmp.ge.s32.totalorder %v30, %v2229
  %vm2251 = vcmp.ge.s32.totalorder %v29, %v2236
  %vm2252 = vcmp.ge.s32.totalorder %v30, %v2236
  %v2253 = vadd.s32 %v2173, 8
  %v2254 = vadd.s32 %v2174, 8
  %v2255 = vadd.s32 %v2175, 8
  %v2256 = vadd.s32 %v2176, 8
  %v2257 = vadd.s32 %v2177, 8
  %v2258 = vadd.s32 %v2178, 8
  %v2259 = vadd.s32 %v2179, 8
  %v2260 = vadd.s32 %v2180, 8
  %2261 = vset.pattern.permute.xlu0 2
  %2262 = vperm.xlu0 %2261, %v2253
  %v2263 = vpop.permute.xlu0 %2262
  %v2264 = vlaneseq
  %v2265 = vshrl.u32 %v2264, 7
  %v2266 = vsub.s32 0, %v2265
  %v2267 = vrot.slane %v2263, %v2266
  %2268 = vset.pattern.permute.xlu0 2
  %2269 = vperm.xlu0 %2268, %v2254
  %v2270 = vpop.permute.xlu0 %2269
  %v2271 = vlaneseq
  %v2272 = vshrl.u32 %v2271, 7
  %v2273 = vsub.s32 0, %v2272
  %v2274 = vrot.slane %v2270, %v2273
  %2275 = vset.pattern.permute.xlu0 2
  %2276 = vperm.xlu0 %2275, %v2255
  %v2277 = vpop.permute.xlu0 %2276
  %v2278 = vlaneseq
  %v2279 = vshrl.u32 %v2278, 7
  %v2280 = vsub.s32 0, %v2279
  %v2281 = vrot.slane %v2277, %v2280
  %2282 = vset.pattern.permute.xlu0 2
  %2283 = vperm.xlu0 %2282, %v2256
  %v2284 = vpop.permute.xlu0 %2283
  %v2285 = vlaneseq
  %v2286 = vshrl.u32 %v2285, 7
  %v2287 = vsub.s32 0, %v2286
  %v2288 = vrot.slane %v2284, %v2287
  %2289 = vset.pattern.permute.xlu0 2
  %2290 = vperm.xlu0 %2289, %v2257
  %v2291 = vpop.permute.xlu0 %2290
  %v2292 = vlaneseq
  %v2293 = vshrl.u32 %v2292, 7
  %v2294 = vsub.s32 0, %v2293
  %v2295 = vrot.slane %v2291, %v2294
  %2296 = vset.pattern.permute.xlu0 2
  %2297 = vperm.xlu0 %2296, %v2258
  %v2298 = vpop.permute.xlu0 %2297
  %v2299 = vlaneseq
  %v2300 = vshrl.u32 %v2299, 7
  %v2301 = vsub.s32 0, %v2300
  %v2302 = vrot.slane %v2298, %v2301
  %2303 = vset.pattern.permute.xlu0 2
  %2304 = vperm.xlu0 %2303, %v2259
  %v2305 = vpop.permute.xlu0 %2304
  %v2306 = vlaneseq
  %v2307 = vshrl.u32 %v2306, 7
  %v2308 = vsub.s32 0, %v2307
  %v2309 = vrot.slane %v2305, %v2308
  %2310 = vset.pattern.permute.xlu0 2
  %2311 = vperm.xlu0 %2310, %v2260
  %v2312 = vpop.permute.xlu0 %2311
  %v2313 = vlaneseq
  %v2314 = vshrl.u32 %v2313, 7
  %v2315 = vsub.s32 0, %v2314
  %v2316 = vrot.slane %v2312, %v2315
  %vm2317 = vcmp.lt.s32.totalorder %v29, %v2267
  %vm2318 = vcmp.lt.s32.totalorder %v30, %v2267
  %vm2319 = vcmp.lt.s32.totalorder %v29, %v2274
  %vm2320 = vcmp.lt.s32.totalorder %v30, %v2274
  %vm2321 = vcmp.lt.s32.totalorder %v29, %v2281
  %vm2322 = vcmp.lt.s32.totalorder %v30, %v2281
  %vm2323 = vcmp.lt.s32.totalorder %v29, %v2288
  %vm2324 = vcmp.lt.s32.totalorder %v30, %v2288
  %vm2325 = vcmp.lt.s32.totalorder %v29, %v2295
  %vm2326 = vcmp.lt.s32.totalorder %v30, %v2295
  %vm2327 = vcmp.lt.s32.totalorder %v29, %v2302
  %vm2328 = vcmp.lt.s32.totalorder %v30, %v2302
  %vm2329 = vcmp.lt.s32.totalorder %v29, %v2309
  %vm2330 = vcmp.lt.s32.totalorder %v30, %v2309
  %vm2331 = vcmp.lt.s32.totalorder %v29, %v2316
  %vm2332 = vcmp.lt.s32.totalorder %v30, %v2316
  %vm2333 = vmand %vm2237, %vm2317
  %vm2334 = vmand %vm2238, %vm2318
  %vm2335 = vmand %vm2239, %vm2319
  %vm2336 = vmand %vm2240, %vm2320
  %vm2337 = vmand %vm2241, %vm2321
  %vm2338 = vmand %vm2242, %vm2322
  %vm2339 = vmand %vm2243, %vm2323
  %vm2340 = vmand %vm2244, %vm2324
  %vm2341 = vmand %vm2245, %vm2325
  %vm2342 = vmand %vm2246, %vm2326
  %vm2343 = vmand %vm2247, %vm2327
  %vm2344 = vmand %vm2248, %vm2328
  %vm2345 = vmand %vm2249, %vm2329
  %vm2346 = vmand %vm2250, %vm2330
  %vm2347 = vmand %vm2251, %vm2331
  %vm2348 = vmand %vm2252, %vm2332
  %2349 = vset.pattern.permute.xlu0 3
  %2350 = vperm.xlu0 %2349, %v2173
  %v2351 = vpop.permute.xlu0 %2350
  %v2352 = vlaneseq
  %v2353 = vshrl.u32 %v2352, 7
  %v2354 = vsub.s32 0, %v2353
  %v2355 = vrot.slane %v2351, %v2354
  %2356 = vset.pattern.permute.xlu0 3
  %2357 = vperm.xlu0 %2356, %v2174
  %v2358 = vpop.permute.xlu0 %2357
  %v2359 = vlaneseq
  %v2360 = vshrl.u32 %v2359, 7
  %v2361 = vsub.s32 0, %v2360
  %v2362 = vrot.slane %v2358, %v2361
  %2363 = vset.pattern.permute.xlu0 3
  %2364 = vperm.xlu0 %2363, %v2175
  %v2365 = vpop.permute.xlu0 %2364
  %v2366 = vlaneseq
  %v2367 = vshrl.u32 %v2366, 7
  %v2368 = vsub.s32 0, %v2367
  %v2369 = vrot.slane %v2365, %v2368
  %2370 = vset.pattern.permute.xlu0 3
  %2371 = vperm.xlu0 %2370, %v2176
  %v2372 = vpop.permute.xlu0 %2371
  %v2373 = vlaneseq
  %v2374 = vshrl.u32 %v2373, 7
  %v2375 = vsub.s32 0, %v2374
  %v2376 = vrot.slane %v2372, %v2375
  %2377 = vset.pattern.permute.xlu0 3
  %2378 = vperm.xlu0 %2377, %v2177
  %v2379 = vpop.permute.xlu0 %2378
  %v2380 = vlaneseq
  %v2381 = vshrl.u32 %v2380, 7
  %v2382 = vsub.s32 0, %v2381
  %v2383 = vrot.slane %v2379, %v2382
  %2384 = vset.pattern.permute.xlu0 3
  %2385 = vperm.xlu0 %2384, %v2178
  %v2386 = vpop.permute.xlu0 %2385
  %v2387 = vlaneseq
  %v2388 = vshrl.u32 %v2387, 7
  %v2389 = vsub.s32 0, %v2388
  %v2390 = vrot.slane %v2386, %v2389
  %2391 = vset.pattern.permute.xlu0 3
  %2392 = vperm.xlu0 %2391, %v2179
  %v2393 = vpop.permute.xlu0 %2392
  %v2394 = vlaneseq
  %v2395 = vshrl.u32 %v2394, 7
  %v2396 = vsub.s32 0, %v2395
  %v2397 = vrot.slane %v2393, %v2396
  %2398 = vset.pattern.permute.xlu0 3
  %2399 = vperm.xlu0 %2398, %v2180
  %v2400 = vpop.permute.xlu0 %2399
  %v2401 = vlaneseq
  %v2402 = vshrl.u32 %v2401, 7
  %v2403 = vsub.s32 0, %v2402
  %v2404 = vrot.slane %v2400, %v2403
  %vm2405 = vcmp.ge.s32.totalorder %v27, %v2355
  %vm2406 = vcmp.ge.s32.totalorder %v28, %v2355
  %vm2407 = vcmp.ge.s32.totalorder %v27, %v2362
  %vm2408 = vcmp.ge.s32.totalorder %v28, %v2362
  %vm2409 = vcmp.ge.s32.totalorder %v27, %v2369
  %vm2410 = vcmp.ge.s32.totalorder %v28, %v2369
  %vm2411 = vcmp.ge.s32.totalorder %v27, %v2376
  %vm2412 = vcmp.ge.s32.totalorder %v28, %v2376
  %vm2413 = vcmp.ge.s32.totalorder %v27, %v2383
  %vm2414 = vcmp.ge.s32.totalorder %v28, %v2383
  %vm2415 = vcmp.ge.s32.totalorder %v27, %v2390
  %vm2416 = vcmp.ge.s32.totalorder %v28, %v2390
  %vm2417 = vcmp.ge.s32.totalorder %v27, %v2397
  %vm2418 = vcmp.ge.s32.totalorder %v28, %v2397
  %vm2419 = vcmp.ge.s32.totalorder %v27, %v2404
  %vm2420 = vcmp.ge.s32.totalorder %v28, %v2404
  %vm2421 = vmand %vm2333, %vm2405
  %vm2422 = vmand %vm2334, %vm2406
  %vm2423 = vmand %vm2335, %vm2407
  %vm2424 = vmand %vm2336, %vm2408
  %vm2425 = vmand %vm2337, %vm2409
  %vm2426 = vmand %vm2338, %vm2410
  %vm2427 = vmand %vm2339, %vm2411
  %vm2428 = vmand %vm2340, %vm2412
  %vm2429 = vmand %vm2341, %vm2413
  %vm2430 = vmand %vm2342, %vm2414
  %vm2431 = vmand %vm2343, %vm2415
  %vm2432 = vmand %vm2344, %vm2416
  %vm2433 = vmand %vm2345, %vm2417
  %vm2434 = vmand %vm2346, %vm2418
  %vm2435 = vmand %vm2347, %vm2419
  %vm2436 = vmand %vm2348, %vm2420
  %2437 = vset.pattern.permute.xlu0 3
  %2438 = vperm.xlu0 %2437, %v2253
  %v2439 = vpop.permute.xlu0 %2438
  %v2440 = vlaneseq
  %v2441 = vshrl.u32 %v2440, 7
  %v2442 = vsub.s32 0, %v2441
  %v2443 = vrot.slane %v2439, %v2442
  %2444 = vset.pattern.permute.xlu0 3
  %2445 = vperm.xlu0 %2444, %v2254
  %v2446 = vpop.permute.xlu0 %2445
  %v2447 = vlaneseq
  %v2448 = vshrl.u32 %v2447, 7
  %v2449 = vsub.s32 0, %v2448
  %v2450 = vrot.slane %v2446, %v2449
  %2451 = vset.pattern.permute.xlu0 3
  %2452 = vperm.xlu0 %2451, %v2255
  %v2453 = vpop.permute.xlu0 %2452
  %v2454 = vlaneseq
  %v2455 = vshrl.u32 %v2454, 7
  %v2456 = vsub.s32 0, %v2455
  %v2457 = vrot.slane %v2453, %v2456
  %2458 = vset.pattern.permute.xlu0 3
  %2459 = vperm.xlu0 %2458, %v2256
  %v2460 = vpop.permute.xlu0 %2459
  %v2461 = vlaneseq
  %v2462 = vshrl.u32 %v2461, 7
  %v2463 = vsub.s32 0, %v2462
  %v2464 = vrot.slane %v2460, %v2463
  %2465 = vset.pattern.permute.xlu0 3
  %2466 = vperm.xlu0 %2465, %v2257
  %v2467 = vpop.permute.xlu0 %2466
  %v2468 = vlaneseq
  %v2469 = vshrl.u32 %v2468, 7
  %v2470 = vsub.s32 0, %v2469
  %v2471 = vrot.slane %v2467, %v2470
  %2472 = vset.pattern.permute.xlu0 3
  %2473 = vperm.xlu0 %2472, %v2258
  %v2474 = vpop.permute.xlu0 %2473
  %v2475 = vlaneseq
  %v2476 = vshrl.u32 %v2475, 7
  %v2477 = vsub.s32 0, %v2476
  %v2478 = vrot.slane %v2474, %v2477
  %2479 = vset.pattern.permute.xlu0 3
  %2480 = vperm.xlu0 %2479, %v2259
  %v2481 = vpop.permute.xlu0 %2480
  %v2482 = vlaneseq
  %v2483 = vshrl.u32 %v2482, 7
  %v2484 = vsub.s32 0, %v2483
  %v2485 = vrot.slane %v2481, %v2484
  %2486 = vset.pattern.permute.xlu0 3
  %2487 = vperm.xlu0 %2486, %v2260
  %v2488 = vpop.permute.xlu0 %2487
  %v2489 = vlaneseq
  %v2490 = vshrl.u32 %v2489, 7
  %v2491 = vsub.s32 0, %v2490
  %v2492 = vrot.slane %v2488, %v2491
  %vm2493 = vcmp.lt.s32.totalorder %v27, %v2443
  %vm2494 = vcmp.lt.s32.totalorder %v28, %v2443
  %vm2495 = vcmp.lt.s32.totalorder %v27, %v2450
  %vm2496 = vcmp.lt.s32.totalorder %v28, %v2450
  %vm2497 = vcmp.lt.s32.totalorder %v27, %v2457
  %vm2498 = vcmp.lt.s32.totalorder %v28, %v2457
  %vm2499 = vcmp.lt.s32.totalorder %v27, %v2464
  %vm2500 = vcmp.lt.s32.totalorder %v28, %v2464
  %vm2501 = vcmp.lt.s32.totalorder %v27, %v2471
  %vm2502 = vcmp.lt.s32.totalorder %v28, %v2471
  %vm2503 = vcmp.lt.s32.totalorder %v27, %v2478
  %vm2504 = vcmp.lt.s32.totalorder %v28, %v2478
  %vm2505 = vcmp.lt.s32.totalorder %v27, %v2485
  %vm2506 = vcmp.lt.s32.totalorder %v28, %v2485
  %vm2507 = vcmp.lt.s32.totalorder %v27, %v2492
  %vm2508 = vcmp.lt.s32.totalorder %v28, %v2492
  %vm2509 = vmand %vm2421, %vm2493
  %vm2510 = vmand %vm2422, %vm2494
  %vm2511 = vmand %vm2423, %vm2495
  %vm2512 = vmand %vm2424, %vm2496
  %vm2513 = vmand %vm2425, %vm2497
  %vm2514 = vmand %vm2426, %vm2498
  %vm2515 = vmand %vm2427, %vm2499
  %vm2516 = vmand %vm2428, %vm2500
  %vm2517 = vmand %vm2429, %vm2501
  %vm2518 = vmand %vm2430, %vm2502
  %vm2519 = vmand %vm2431, %vm2503
  %vm2520 = vmand %vm2432, %vm2504
  %vm2521 = vmand %vm2433, %vm2505
  %vm2522 = vmand %vm2434, %vm2506
  %vm2523 = vmand %vm2435, %vm2507
  %vm2524 = vmand %vm2436, %vm2508
  %v2525 = vsel %vm2509, 1, 0
  %v2526 = vsel %vm2510, 1, 0
  %v2527 = vsel %vm2511, 1, 0
  %v2528 = vsel %vm2512, 1, 0
  %v2529 = vsel %vm2513, 1, 0
  %v2530 = vsel %vm2514, 1, 0
  %v2531 = vsel %vm2515, 1, 0
  %v2532 = vsel %vm2516, 1, 0
  %v2533 = vsel %vm2517, 1, 0
  %v2534 = vsel %vm2518, 1, 0
  %v2535 = vsel %vm2519, 1, 0
  %v2536 = vsel %vm2520, 1, 0
  %v2537 = vsel %vm2521, 1, 0
  %v2538 = vsel %vm2522, 1, 0
  %v2539 = vsel %vm2523, 1, 0
  %v2540 = vsel %vm2524, 1, 0
  %vm2541 = vcmp.eq.s32.totalorder %v2525, 1
  %vm2542 = vcmp.eq.s32.totalorder %v2526, 1
  %vm2543 = vcmp.eq.s32.totalorder %v2527, 1
  %vm2544 = vcmp.eq.s32.totalorder %v2528, 1
  %vm2545 = vcmp.eq.s32.totalorder %v2529, 1
  %vm2546 = vcmp.eq.s32.totalorder %v2530, 1
  %vm2547 = vcmp.eq.s32.totalorder %v2531, 1
  %vm2548 = vcmp.eq.s32.totalorder %v2532, 1
  %vm2549 = vcmp.eq.s32.totalorder %v2533, 1
  %vm2550 = vcmp.eq.s32.totalorder %v2534, 1
  %vm2551 = vcmp.eq.s32.totalorder %v2535, 1
  %vm2552 = vcmp.eq.s32.totalorder %v2536, 1
  %vm2553 = vcmp.eq.s32.totalorder %v2537, 1
  %vm2554 = vcmp.eq.s32.totalorder %v2538, 1
  %vm2555 = vcmp.eq.s32.totalorder %v2539, 1
  %vm2556 = vcmp.eq.s32.totalorder %v2540, 1
  %v2557 = vsel %vm2541, 0.0, %v2157
  %v2558 = vsel %vm2542, 0.0, %v2158
  %v2559 = vsel %vm2543, 0.0, %v2159
  %v2560 = vsel %vm2544, 0.0, %v2160
  %v2561 = vsel %vm2545, 0.0, %v2161
  %v2562 = vsel %vm2546, 0.0, %v2162
  %v2563 = vsel %vm2547, 0.0, %v2163
  %v2564 = vsel %vm2548, 0.0, %v2164
  %v2565 = vsel %vm2549, 0.0, %v2165
  %v2566 = vsel %vm2550, 0.0, %v2166
  %v2567 = vsel %vm2551, 0.0, %v2167
  %v2568 = vsel %vm2552, 0.0, %v2168
  %v2569 = vsel %vm2553, 0.0, %v2169
  %v2570 = vsel %vm2554, 0.0, %v2170
  %v2571 = vsel %vm2555, 0.0, %v2171
  %v2572 = vsel %vm2556, 0.0, %v2172
  %v2589 = vcombine.low %v2557, %v2558
  %v2590 = vcombine.low %v2559, %v2560
  %v2591 = vcombine.low %v2561, %v2562
  %v2592 = vcombine.low %v2563, %v2564
  %v2593 = vcombine.low %v2565, %v2566
  %v2594 = vcombine.low %v2567, %v2568
  %v2595 = vcombine.low %v2569, %v2570
  %v2596 = vcombine.low %v2571, %v2572
  %2605 = vst [vmem:[%s3] sm:$0x77] %v2589
  %2606 = vst [vmem:[%s3 + $0x8] sm:$0x77] %v2590
  %2607 = vst [vmem:[%s3 + $0x10] sm:$0x77] %v2591
  %2608 = vst [vmem:[%s3 + $0x18] sm:$0x77] %v2592
  %2609 = vst [vmem:[%s3 + $0x20] sm:$0x77] %v2593
  %2610 = vst [vmem:[%s3 + $0x28] sm:$0x77] %v2594
  %2611 = vst [vmem:[%s3 + $0x30] sm:$0x77] %v2595
  %2612 = vst [vmem:[%s3 + $0x38] sm:$0x77] %v2596
  %s2613 = scalar_lea.vmem %s0, 64
  %v2614 = vld [vmem:[%s2613] sm:$0x77]
  %v2615 = vld [vmem:[%s2613 + $0x8] sm:$0x77]
  %v2616 = vld [vmem:[%s2613 + $0x10] sm:$0x77]
  %v2617 = vld [vmem:[%s2613 + $0x18] sm:$0x77]
  %v2618 = vld [vmem:[%s2613 + $0x20] sm:$0x77]
  %v2619 = vld [vmem:[%s2613 + $0x28] sm:$0x77]
  %v2620 = vld [vmem:[%s2613 + $0x30] sm:$0x77]
  %v2621 = vld [vmem:[%s2613 + $0x38] sm:$0x77]
  %v2622 = vld [vmem:[%s1 + $0x8] sm:$0xff]
  %v2623 = vld [vmem:[%s2 + $0x8] sm:$0xff]
  %v2625 = vcombine.high %v2622, %v2622
  %v2627 = vunpack.c.l.s4 1966171168
  %v2628 = vunpack.c.0.s8 %v2627
  %v2629 = vlaneseq
  %v2630 = vshrl.u32 %v2629, 7
  %v2631 = vsub.s32 %v2628, %v2630
  %v2632 = vrot.slane %v2622, %v2631
  %v2634 = vunpack.c.l.s4 1966171168
  %v2635 = vunpack.c.0.s8 %v2634
  %v2636 = vlaneseq
  %v2637 = vshrl.u32 %v2636, 7
  %v2638 = vsub.s32 %v2635, %v2637
  %v2639 = vrot.slane %v2625, %v2638
  %v2640 = vcombine.high %v2632, %v2632
  %v2641 = vcombine.high %v2639, %v2639
  %v2643 = vunpack.c.l.s4 1966171168
  %v2644 = vunpack.c.0.s8 %v2643
  %v2645 = vlaneseq
  %v2646 = vshrl.u32 %v2645, 7
  %v2647 = vsub.s32 %v2644, %v2646
  %v2648 = vrot.slane %v2632, %v2647
  %v2650 = vunpack.c.l.s4 1966171168
  %v2651 = vunpack.c.0.s8 %v2650
  %v2652 = vlaneseq
  %v2653 = vshrl.u32 %v2652, 7
  %v2654 = vsub.s32 %v2651, %v2653
  %v2655 = vrot.slane %v2639, %v2654
  %v2657 = vunpack.c.l.s4 1966171168
  %v2658 = vunpack.c.0.s8 %v2657
  %v2659 = vlaneseq
  %v2660 = vshrl.u32 %v2659, 7
  %v2661 = vsub.s32 %v2658, %v2660
  %v2662 = vrot.slane %v2640, %v2661
  %v2664 = vunpack.c.l.s4 1966171168
  %v2665 = vunpack.c.0.s8 %v2664
  %v2666 = vlaneseq
  %v2667 = vshrl.u32 %v2666, 7
  %v2668 = vsub.s32 %v2665, %v2667
  %v2669 = vrot.slane %v2641, %v2668
  %v2670 = vcombine.high %v2648, %v2648
  %v2671 = vcombine.high %v2655, %v2655
  %v2672 = vcombine.high %v2662, %v2662
  %v2673 = vcombine.high %v2669, %v2669
  %v2674 = vlaneseq
  %v2675 = vshrl.u32 %v2674, 7
  %v2676 = vsub.s32 0, %v2675
  %v2677 = vrot.slane %v2648, %v2676
  %v2678 = vlaneseq
  %v2679 = vshrl.u32 %v2678, 7
  %v2680 = vsub.s32 0, %v2679
  %v2681 = vrot.slane %v2662, %v2680
  %v2682 = vlaneseq
  %v2683 = vshrl.u32 %v2682, 7
  %v2684 = vsub.s32 0, %v2683
  %v2685 = vrot.slane %v2670, %v2684
  %v2686 = vlaneseq
  %v2687 = vshrl.u32 %v2686, 7
  %v2688 = vsub.s32 0, %v2687
  %v2689 = vrot.slane %v2672, %v2688
  %v2690 = vlaneseq
  %v2691 = vshrl.u32 %v2690, 7
  %v2692 = vsub.s32 0, %v2691
  %v2693 = vrot.slane %v2655, %v2692
  %v2694 = vlaneseq
  %v2695 = vshrl.u32 %v2694, 7
  %v2696 = vsub.s32 0, %v2695
  %v2697 = vrot.slane %v2669, %v2696
  %v2698 = vlaneseq
  %v2699 = vshrl.u32 %v2698, 7
  %v2700 = vsub.s32 0, %v2699
  %v2701 = vrot.slane %v2671, %v2700
  %v2702 = vlaneseq
  %v2703 = vshrl.u32 %v2702, 7
  %v2704 = vsub.s32 0, %v2703
  %v2705 = vrot.slane %v2673, %v2704
  %2706 = vset.pattern.permute.xlu0 0
  %2707 = vperm.xlu0 %2706, %v2677
  %v2708 = vpop.permute.xlu0 %2707
  %2710 = vset.pattern.permute.xlu0 0
  %2711 = vperm.xlu0 %2710, %v2681
  %v2712 = vpop.permute.xlu0 %2711
  %2714 = vset.pattern.permute.xlu0 0
  %2715 = vperm.xlu0 %2714, %v2685
  %v2716 = vpop.permute.xlu0 %2715
  %2718 = vset.pattern.permute.xlu0 0
  %2719 = vperm.xlu0 %2718, %v2689
  %v2720 = vpop.permute.xlu0 %2719
  %2722 = vset.pattern.permute.xlu0 0
  %2723 = vperm.xlu0 %2722, %v2693
  %v2724 = vpop.permute.xlu0 %2723
  %2726 = vset.pattern.permute.xlu0 0
  %2727 = vperm.xlu0 %2726, %v2697
  %v2728 = vpop.permute.xlu0 %2727
  %2730 = vset.pattern.permute.xlu0 0
  %2731 = vperm.xlu0 %2730, %v2701
  %v2732 = vpop.permute.xlu0 %2731
  %2734 = vset.pattern.permute.xlu0 0
  %2735 = vperm.xlu0 %2734, %v2705
  %v2736 = vpop.permute.xlu0 %2735
  %v2738 = vadd.f32 %v2614, %v2708
  %v2739 = vadd.f32 %v2615, %v2712
  %v2740 = vadd.f32 %v2616, %v2716
  %v2741 = vadd.f32 %v2617, %v2720
  %v2742 = vadd.f32 %v2618, %v2724
  %v2743 = vadd.f32 %v2619, %v2728
  %v2744 = vadd.f32 %v2620, %v2732
  %v2745 = vadd.f32 %v2621, %v2736
  %v2754 = vcombine.high %v2738, %v2738
  %v2755 = vcombine.high %v2739, %v2739
  %v2756 = vcombine.high %v2740, %v2740
  %v2757 = vcombine.high %v2741, %v2741
  %v2758 = vcombine.high %v2742, %v2742
  %v2759 = vcombine.high %v2743, %v2743
  %v2760 = vcombine.high %v2744, %v2744
  %v2761 = vcombine.high %v2745, %v2745
  %v2770 = vsel %vm177, %v2738, 0.0
  %v2771 = vrot.slane %v2770, 4
  %v2772 = vadd.f32 %v2770, %v2771
  %v2773 = vrot.slane %v2772, 2
  %v2774 = vadd.f32 %v2772, %v2773
  %v2775 = vrot.slane %v2774, 1
  %v2776 = vadd.f32 %v2774, %v2775
  %v2777 = vsel %vm177, %v2754, 0.0
  %v2778 = vrot.slane %v2777, 4
  %v2779 = vadd.f32 %v2777, %v2778
  %v2780 = vrot.slane %v2779, 2
  %v2781 = vadd.f32 %v2779, %v2780
  %v2782 = vrot.slane %v2781, 1
  %v2783 = vadd.f32 %v2781, %v2782
  %v2784 = vsel %vm177, %v2739, 0.0
  %v2785 = vrot.slane %v2784, 4
  %v2786 = vadd.f32 %v2784, %v2785
  %v2787 = vrot.slane %v2786, 2
  %v2788 = vadd.f32 %v2786, %v2787
  %v2789 = vrot.slane %v2788, 1
  %v2790 = vadd.f32 %v2788, %v2789
  %v2791 = vsel %vm177, %v2755, 0.0
  %v2792 = vrot.slane %v2791, 4
  %v2793 = vadd.f32 %v2791, %v2792
  %v2794 = vrot.slane %v2793, 2
  %v2795 = vadd.f32 %v2793, %v2794
  %v2796 = vrot.slane %v2795, 1
  %v2797 = vadd.f32 %v2795, %v2796
  %v2798 = vsel %vm177, %v2740, 0.0
  %v2799 = vrot.slane %v2798, 4
  %v2800 = vadd.f32 %v2798, %v2799
  %v2801 = vrot.slane %v2800, 2
  %v2802 = vadd.f32 %v2800, %v2801
  %v2803 = vrot.slane %v2802, 1
  %v2804 = vadd.f32 %v2802, %v2803
  %v2805 = vsel %vm177, %v2756, 0.0
  %v2806 = vrot.slane %v2805, 4
  %v2807 = vadd.f32 %v2805, %v2806
  %v2808 = vrot.slane %v2807, 2
  %v2809 = vadd.f32 %v2807, %v2808
  %v2810 = vrot.slane %v2809, 1
  %v2811 = vadd.f32 %v2809, %v2810
  %v2812 = vsel %vm177, %v2741, 0.0
  %v2813 = vrot.slane %v2812, 4
  %v2814 = vadd.f32 %v2812, %v2813
  %v2815 = vrot.slane %v2814, 2
  %v2816 = vadd.f32 %v2814, %v2815
  %v2817 = vrot.slane %v2816, 1
  %v2818 = vadd.f32 %v2816, %v2817
  %v2819 = vsel %vm177, %v2757, 0.0
  %v2820 = vrot.slane %v2819, 4
  %v2821 = vadd.f32 %v2819, %v2820
  %v2822 = vrot.slane %v2821, 2
  %v2823 = vadd.f32 %v2821, %v2822
  %v2824 = vrot.slane %v2823, 1
  %v2825 = vadd.f32 %v2823, %v2824
  %v2826 = vsel %vm177, %v2742, 0.0
  %v2827 = vrot.slane %v2826, 4
  %v2828 = vadd.f32 %v2826, %v2827
  %v2829 = vrot.slane %v2828, 2
  %v2830 = vadd.f32 %v2828, %v2829
  %v2831 = vrot.slane %v2830, 1
  %v2832 = vadd.f32 %v2830, %v2831
  %v2833 = vsel %vm177, %v2758, 0.0
  %v2834 = vrot.slane %v2833, 4
  %v2835 = vadd.f32 %v2833, %v2834
  %v2836 = vrot.slane %v2835, 2
  %v2837 = vadd.f32 %v2835, %v2836
  %v2838 = vrot.slane %v2837, 1
  %v2839 = vadd.f32 %v2837, %v2838
  %v2840 = vsel %vm177, %v2743, 0.0
  %v2841 = vrot.slane %v2840, 4
  %v2842 = vadd.f32 %v2840, %v2841
  %v2843 = vrot.slane %v2842, 2
  %v2844 = vadd.f32 %v2842, %v2843
  %v2845 = vrot.slane %v2844, 1
  %v2846 = vadd.f32 %v2844, %v2845
  %v2847 = vsel %vm177, %v2759, 0.0
  %v2848 = vrot.slane %v2847, 4
  %v2849 = vadd.f32 %v2847, %v2848
  %v2850 = vrot.slane %v2849, 2
  %v2851 = vadd.f32 %v2849, %v2850
  %v2852 = vrot.slane %v2851, 1
  %v2853 = vadd.f32 %v2851, %v2852
  %v2854 = vsel %vm177, %v2744, 0.0
  %v2855 = vrot.slane %v2854, 4
  %v2856 = vadd.f32 %v2854, %v2855
  %v2857 = vrot.slane %v2856, 2
  %v2858 = vadd.f32 %v2856, %v2857
  %v2859 = vrot.slane %v2858, 1
  %v2860 = vadd.f32 %v2858, %v2859
  %v2861 = vsel %vm177, %v2760, 0.0
  %v2862 = vrot.slane %v2861, 4
  %v2863 = vadd.f32 %v2861, %v2862
  %v2864 = vrot.slane %v2863, 2
  %v2865 = vadd.f32 %v2863, %v2864
  %v2866 = vrot.slane %v2865, 1
  %v2867 = vadd.f32 %v2865, %v2866
  %v2868 = vsel %vm177, %v2745, 0.0
  %v2869 = vrot.slane %v2868, 4
  %v2870 = vadd.f32 %v2868, %v2869
  %v2871 = vrot.slane %v2870, 2
  %v2872 = vadd.f32 %v2870, %v2871
  %v2873 = vrot.slane %v2872, 1
  %v2874 = vadd.f32 %v2872, %v2873
  %v2875 = vsel %vm177, %v2761, 0.0
  %v2876 = vrot.slane %v2875, 4
  %v2877 = vadd.f32 %v2875, %v2876
  %v2878 = vrot.slane %v2877, 2
  %v2879 = vadd.f32 %v2877, %v2878
  %v2880 = vrot.slane %v2879, 1
  %v2881 = vadd.f32 %v2879, %v2880
  %v2882 = vmul.f32 %v2776, %v290
  %v2883 = vmul.f32 %v2783, %v290
  %v2884 = vmul.f32 %v2790, %v290
  %v2885 = vmul.f32 %v2797, %v290
  %v2886 = vmul.f32 %v2804, %v290
  %v2887 = vmul.f32 %v2811, %v290
  %v2888 = vmul.f32 %v2818, %v290
  %v2889 = vmul.f32 %v2825, %v290
  %v2890 = vmul.f32 %v2832, %v290
  %v2891 = vmul.f32 %v2839, %v290
  %v2892 = vmul.f32 %v2846, %v290
  %v2893 = vmul.f32 %v2853, %v290
  %v2894 = vmul.f32 %v2860, %v290
  %v2895 = vmul.f32 %v2867, %v290
  %v2896 = vmul.f32 %v2874, %v290
  %v2897 = vmul.f32 %v2881, %v290
  %v2914 = vcombine.low %v2882, %v2883
  %v2915 = vcombine.low %v2884, %v2885
  %v2916 = vcombine.low %v2886, %v2887
  %v2917 = vcombine.low %v2888, %v2889
  %v2918 = vcombine.low %v2890, %v2891
  %v2919 = vcombine.low %v2892, %v2893
  %v2920 = vcombine.low %v2894, %v2895
  %v2921 = vcombine.low %v2896, %v2897
  %v2930 = vsub.f32 %v2738, %v2914
  %v2931 = vsub.f32 %v2739, %v2915
  %v2932 = vsub.f32 %v2740, %v2916
  %v2933 = vsub.f32 %v2741, %v2917
  %v2934 = vsub.f32 %v2742, %v2918
  %v2935 = vsub.f32 %v2743, %v2919
  %v2936 = vsub.f32 %v2744, %v2920
  %v2937 = vsub.f32 %v2745, %v2921
  %2938 = vset.pattern.permute.xlu0 1
  %2939 = vperm.xlu0 %2938, %v2677
  %v2940 = vpop.permute.xlu0 %2939
  %2942 = vset.pattern.permute.xlu0 1
  %2943 = vperm.xlu0 %2942, %v2681
  %v2944 = vpop.permute.xlu0 %2943
  %2946 = vset.pattern.permute.xlu0 1
  %2947 = vperm.xlu0 %2946, %v2685
  %v2948 = vpop.permute.xlu0 %2947
  %2950 = vset.pattern.permute.xlu0 1
  %2951 = vperm.xlu0 %2950, %v2689
  %v2952 = vpop.permute.xlu0 %2951
  %2954 = vset.pattern.permute.xlu0 1
  %2955 = vperm.xlu0 %2954, %v2693
  %v2956 = vpop.permute.xlu0 %2955
  %2958 = vset.pattern.permute.xlu0 1
  %2959 = vperm.xlu0 %2958, %v2697
  %v2960 = vpop.permute.xlu0 %2959
  %2962 = vset.pattern.permute.xlu0 1
  %2963 = vperm.xlu0 %2962, %v2701
  %v2964 = vpop.permute.xlu0 %2963
  %2966 = vset.pattern.permute.xlu0 1
  %2967 = vperm.xlu0 %2966, %v2705
  %v2968 = vpop.permute.xlu0 %2967
  %v2970 = vmul.f32 %v2930, %v2940
  %v2971 = vmul.f32 %v2931, %v2944
  %v2972 = vmul.f32 %v2932, %v2948
  %v2973 = vmul.f32 %v2933, %v2952
  %v2974 = vmul.f32 %v2934, %v2956
  %v2975 = vmul.f32 %v2935, %v2960
  %v2976 = vmul.f32 %v2936, %v2964
  %v2977 = vmul.f32 %v2937, %v2968
  %v2978 = vadd.f32 %v2970, %v2914
  %v2979 = vadd.f32 %v2971, %v2915
  %v2980 = vadd.f32 %v2972, %v2916
  %v2981 = vadd.f32 %v2973, %v2917
  %v2982 = vadd.f32 %v2974, %v2918
  %v2983 = vadd.f32 %v2975, %v2919
  %v2984 = vadd.f32 %v2976, %v2920
  %v2985 = vadd.f32 %v2977, %v2921
  %v2994 = vcombine.high %v2978, %v2978
  %v2995 = vcombine.high %v2979, %v2979
  %v2996 = vcombine.high %v2980, %v2980
  %v2997 = vcombine.high %v2981, %v2981
  %v2998 = vcombine.high %v2982, %v2982
  %v2999 = vcombine.high %v2983, %v2983
  %v3000 = vcombine.high %v2984, %v2984
  %v3001 = vcombine.high %v2985, %v2985
  %v3010 = vsel %vm177, %v2978, 0.0
  %v3011 = vsel %vm177, %v2994, 0.0
  %v3012 = vadd.f32 %v3010, %v3011
  %3013 = vadd.xlane.f32.xlu0 %v3012
  %v3014 = vpop.xlane.xlu0 %3013
  %v3015 = vsel %vm177, %v2979, 0.0
  %v3016 = vsel %vm177, %v2995, 0.0
  %v3017 = vadd.f32 %v3015, %v3016
  %3018 = vadd.xlane.f32.xlu0 %v3017
  %v3019 = vpop.xlane.xlu0 %3018
  %v3020 = vsel %vm177, %v2980, 0.0
  %v3021 = vsel %vm177, %v2996, 0.0
  %v3022 = vadd.f32 %v3020, %v3021
  %3023 = vadd.xlane.f32.xlu0 %v3022
  %v3024 = vpop.xlane.xlu0 %3023
  %v3025 = vsel %vm177, %v2981, 0.0
  %v3026 = vsel %vm177, %v2997, 0.0
  %v3027 = vadd.f32 %v3025, %v3026
  %3028 = vadd.xlane.f32.xlu0 %v3027
  %v3029 = vpop.xlane.xlu0 %3028
  %v3030 = vsel %vm177, %v2982, 0.0
  %v3031 = vsel %vm177, %v2998, 0.0
  %v3032 = vadd.f32 %v3030, %v3031
  %3033 = vadd.xlane.f32.xlu0 %v3032
  %v3034 = vpop.xlane.xlu0 %3033
  %v3035 = vsel %vm177, %v2983, 0.0
  %v3036 = vsel %vm177, %v2999, 0.0
  %v3037 = vadd.f32 %v3035, %v3036
  %3038 = vadd.xlane.f32.xlu0 %v3037
  %v3039 = vpop.xlane.xlu0 %3038
  %v3040 = vsel %vm177, %v2984, 0.0
  %v3041 = vsel %vm177, %v3000, 0.0
  %v3042 = vadd.f32 %v3040, %v3041
  %3043 = vadd.xlane.f32.xlu0 %v3042
  %v3044 = vpop.xlane.xlu0 %3043
  %v3045 = vsel %vm177, %v2985, 0.0
  %v3046 = vsel %vm177, %v3001, 0.0
  %v3047 = vadd.f32 %v3045, %v3046
  %3048 = vadd.xlane.f32.xlu0 %v3047
  %v3049 = vpop.xlane.xlu0 %3048
  %v3050 = vmul.f32 %v3014, %v459
  %v3051 = vmul.f32 %v3019, %v459
  %v3052 = vmul.f32 %v3024, %v459
  %v3053 = vmul.f32 %v3029, %v459
  %v3054 = vmul.f32 %v3034, %v459
  %v3055 = vmul.f32 %v3039, %v459
  %v3056 = vmul.f32 %v3044, %v459
  %v3057 = vmul.f32 %v3049, %v459
  %v3058 = vsel %vm177, %v3050, 0.0
  %v3059 = vrot.slane %v3058, 4
  %v3060 = vadd.f32 %v3058, %v3059
  %v3061 = vrot.slane %v3060, 2
  %v3062 = vadd.f32 %v3060, %v3061
  %v3063 = vrot.slane %v3062, 1
  %v3064 = vadd.f32 %v3062, %v3063
  %v3065 = vsel %vm177, %v3051, 0.0
  %v3066 = vrot.slane %v3065, 4
  %v3067 = vadd.f32 %v3065, %v3066
  %v3068 = vrot.slane %v3067, 2
  %v3069 = vadd.f32 %v3067, %v3068
  %v3070 = vrot.slane %v3069, 1
  %v3071 = vadd.f32 %v3069, %v3070
  %v3072 = vsel %vm177, %v3052, 0.0
  %v3073 = vrot.slane %v3072, 4
  %v3074 = vadd.f32 %v3072, %v3073
  %v3075 = vrot.slane %v3074, 2
  %v3076 = vadd.f32 %v3074, %v3075
  %v3077 = vrot.slane %v3076, 1
  %v3078 = vadd.f32 %v3076, %v3077
  %v3079 = vsel %vm177, %v3053, 0.0
  %v3080 = vrot.slane %v3079, 4
  %v3081 = vadd.f32 %v3079, %v3080
  %v3082 = vrot.slane %v3081, 2
  %v3083 = vadd.f32 %v3081, %v3082
  %v3084 = vrot.slane %v3083, 1
  %v3085 = vadd.f32 %v3083, %v3084
  %v3086 = vsel %vm177, %v3054, 0.0
  %v3087 = vrot.slane %v3086, 4
  %v3088 = vadd.f32 %v3086, %v3087
  %v3089 = vrot.slane %v3088, 2
  %v3090 = vadd.f32 %v3088, %v3089
  %v3091 = vrot.slane %v3090, 1
  %v3092 = vadd.f32 %v3090, %v3091
  %v3093 = vsel %vm177, %v3055, 0.0
  %v3094 = vrot.slane %v3093, 4
  %v3095 = vadd.f32 %v3093, %v3094
  %v3096 = vrot.slane %v3095, 2
  %v3097 = vadd.f32 %v3095, %v3096
  %v3098 = vrot.slane %v3097, 1
  %v3099 = vadd.f32 %v3097, %v3098
  %v3100 = vsel %vm177, %v3056, 0.0
  %v3101 = vrot.slane %v3100, 4
  %v3102 = vadd.f32 %v3100, %v3101
  %v3103 = vrot.slane %v3102, 2
  %v3104 = vadd.f32 %v3102, %v3103
  %v3105 = vrot.slane %v3104, 1
  %v3106 = vadd.f32 %v3104, %v3105
  %v3107 = vsel %vm177, %v3057, 0.0
  %v3108 = vrot.slane %v3107, 4
  %v3109 = vadd.f32 %v3107, %v3108
  %v3110 = vrot.slane %v3109, 2
  %v3111 = vadd.f32 %v3109, %v3110
  %v3112 = vrot.slane %v3111, 1
  %v3113 = vadd.f32 %v3111, %v3112
  %v3114 = vmul.f32 %v3064, %v290
  %v3115 = vmul.f32 %v3071, %v290
  %v3116 = vmul.f32 %v3078, %v290
  %v3117 = vmul.f32 %v3085, %v290
  %v3118 = vmul.f32 %v3092, %v290
  %v3119 = vmul.f32 %v3099, %v290
  %v3120 = vmul.f32 %v3106, %v290
  %v3121 = vmul.f32 %v3113, %v290
  %v3122 = vsub.f32 %v2978, %v3114
  %v3123 = vsub.f32 %v2979, %v3115
  %v3124 = vsub.f32 %v2980, %v3116
  %v3125 = vsub.f32 %v2981, %v3117
  %v3126 = vsub.f32 %v2982, %v3118
  %v3127 = vsub.f32 %v2983, %v3119
  %v3128 = vsub.f32 %v2984, %v3120
  %v3129 = vsub.f32 %v2985, %v3121
  %3130 = vset.pattern.permute.xlu0 2
  %3131 = vperm.xlu0 %3130, %v2677
  %v3132 = vpop.permute.xlu0 %3131
  %3134 = vset.pattern.permute.xlu0 2
  %3135 = vperm.xlu0 %3134, %v2681
  %v3136 = vpop.permute.xlu0 %3135
  %3138 = vset.pattern.permute.xlu0 2
  %3139 = vperm.xlu0 %3138, %v2685
  %v3140 = vpop.permute.xlu0 %3139
  %3142 = vset.pattern.permute.xlu0 2
  %3143 = vperm.xlu0 %3142, %v2689
  %v3144 = vpop.permute.xlu0 %3143
  %3146 = vset.pattern.permute.xlu0 2
  %3147 = vperm.xlu0 %3146, %v2693
  %v3148 = vpop.permute.xlu0 %3147
  %3150 = vset.pattern.permute.xlu0 2
  %3151 = vperm.xlu0 %3150, %v2697
  %v3152 = vpop.permute.xlu0 %3151
  %3154 = vset.pattern.permute.xlu0 2
  %3155 = vperm.xlu0 %3154, %v2701
  %v3156 = vpop.permute.xlu0 %3155
  %3158 = vset.pattern.permute.xlu0 2
  %3159 = vperm.xlu0 %3158, %v2705
  %v3160 = vpop.permute.xlu0 %3159
  %v3162 = vmul.f32 %v3122, %v3132
  %v3163 = vmul.f32 %v3123, %v3136
  %v3164 = vmul.f32 %v3124, %v3140
  %v3165 = vmul.f32 %v3125, %v3144
  %v3166 = vmul.f32 %v3126, %v3148
  %v3167 = vmul.f32 %v3127, %v3152
  %v3168 = vmul.f32 %v3128, %v3156
  %v3169 = vmul.f32 %v3129, %v3160
  %v3170 = vadd.f32 %v3162, %v3114
  %v3171 = vadd.f32 %v3163, %v3115
  %v3172 = vadd.f32 %v3164, %v3116
  %v3173 = vadd.f32 %v3165, %v3117
  %v3174 = vadd.f32 %v3166, %v3118
  %v3175 = vadd.f32 %v3167, %v3119
  %v3176 = vadd.f32 %v3168, %v3120
  %v3177 = vadd.f32 %v3169, %v3121
  %v3178 = vcombine.high %v2623, %v2623
  %v3180 = vunpack.c.l.s4 1966171168
  %v3181 = vunpack.c.0.s8 %v3180
  %v3182 = vlaneseq
  %v3183 = vshrl.u32 %v3182, 7
  %v3184 = vsub.s32 %v3181, %v3183
  %v3185 = vrot.slane %v2623, %v3184
  %v3187 = vunpack.c.l.s4 1966171168
  %v3188 = vunpack.c.0.s8 %v3187
  %v3189 = vlaneseq
  %v3190 = vshrl.u32 %v3189, 7
  %v3191 = vsub.s32 %v3188, %v3190
  %v3192 = vrot.slane %v3178, %v3191
  %v3193 = vcombine.high %v3185, %v3185
  %v3194 = vcombine.high %v3192, %v3192
  %v3196 = vunpack.c.l.s4 1966171168
  %v3197 = vunpack.c.0.s8 %v3196
  %v3198 = vlaneseq
  %v3199 = vshrl.u32 %v3198, 7
  %v3200 = vsub.s32 %v3197, %v3199
  %v3201 = vrot.slane %v3185, %v3200
  %v3203 = vunpack.c.l.s4 1966171168
  %v3204 = vunpack.c.0.s8 %v3203
  %v3205 = vlaneseq
  %v3206 = vshrl.u32 %v3205, 7
  %v3207 = vsub.s32 %v3204, %v3206
  %v3208 = vrot.slane %v3192, %v3207
  %v3210 = vunpack.c.l.s4 1966171168
  %v3211 = vunpack.c.0.s8 %v3210
  %v3212 = vlaneseq
  %v3213 = vshrl.u32 %v3212, 7
  %v3214 = vsub.s32 %v3211, %v3213
  %v3215 = vrot.slane %v3193, %v3214
  %v3217 = vunpack.c.l.s4 1966171168
  %v3218 = vunpack.c.0.s8 %v3217
  %v3219 = vlaneseq
  %v3220 = vshrl.u32 %v3219, 7
  %v3221 = vsub.s32 %v3218, %v3220
  %v3222 = vrot.slane %v3194, %v3221
  %v3223 = vcombine.high %v3201, %v3201
  %v3224 = vcombine.high %v3208, %v3208
  %v3225 = vcombine.high %v3215, %v3215
  %v3226 = vcombine.high %v3222, %v3222
  %vm3227 = vcmp.eq.s32.totalorder %v3201, 4294967294
  %vm3228 = vcmp.eq.s32.totalorder %v3215, 4294967294
  %vm3229 = vcmp.eq.s32.totalorder %v3223, 4294967294
  %vm3230 = vcmp.eq.s32.totalorder %v3225, 4294967294
  %vm3231 = vcmp.eq.s32.totalorder %v3208, 4294967294
  %vm3232 = vcmp.eq.s32.totalorder %v3222, 4294967294
  %vm3233 = vcmp.eq.s32.totalorder %v3224, 4294967294
  %vm3234 = vcmp.eq.s32.totalorder %v3226, 4294967294
  %v3243 = vcombine.high %v3170, %v3170
  %v3244 = vcombine.high %v3171, %v3171
  %v3245 = vcombine.high %v3172, %v3172
  %v3246 = vcombine.high %v3173, %v3173
  %v3247 = vcombine.high %v3174, %v3174
  %v3248 = vcombine.high %v3175, %v3175
  %v3249 = vcombine.high %v3176, %v3176
  %v3250 = vcombine.high %v3177, %v3177
  %3251 = vrot.lane.b32.xlu0 %v3243, 32
  %v3252 = vpop.permute.xlu0 %3251
  %3253 = vrot.lane.b32.xlu0 %v3244, 32
  %v3254 = vpop.permute.xlu0 %3253
  %3255 = vrot.lane.b32.xlu0 %v3245, 32
  %v3256 = vpop.permute.xlu0 %3255
  %3257 = vrot.lane.b32.xlu0 %v3246, 32
  %v3258 = vpop.permute.xlu0 %3257
  %3259 = vrot.lane.b32.xlu0 %v3247, 32
  %v3260 = vpop.permute.xlu0 %3259
  %3261 = vrot.lane.b32.xlu0 %v3248, 32
  %v3262 = vpop.permute.xlu0 %3261
  %3263 = vrot.lane.b32.xlu0 %v3249, 32
  %v3264 = vpop.permute.xlu0 %3263
  %3265 = vrot.lane.b32.xlu0 %v3250, 32
  %v3266 = vpop.permute.xlu0 %3265
  %3275 = vrot.lane.b32.xlu0 %v3170, 32
  %v3276 = vpop.permute.xlu0 %3275
  %3277 = vrot.lane.b32.xlu0 %v3171, 32
  %v3278 = vpop.permute.xlu0 %3277
  %3279 = vrot.lane.b32.xlu0 %v3172, 32
  %v3280 = vpop.permute.xlu0 %3279
  %3281 = vrot.lane.b32.xlu0 %v3173, 32
  %v3282 = vpop.permute.xlu0 %3281
  %3283 = vrot.lane.b32.xlu0 %v3174, 32
  %v3284 = vpop.permute.xlu0 %3283
  %3285 = vrot.lane.b32.xlu0 %v3175, 32
  %v3286 = vpop.permute.xlu0 %3285
  %3287 = vrot.lane.b32.xlu0 %v3176, 32
  %v3288 = vpop.permute.xlu0 %3287
  %3289 = vrot.lane.b32.xlu0 %v3177, 32
  %v3290 = vpop.permute.xlu0 %3289
  %v3291 = vsel %vm701, %v3276, %v3252
  %v3292 = vsel %vm701, %v3278, %v3254
  %v3293 = vsel %vm701, %v3280, %v3256
  %v3294 = vsel %vm701, %v3282, %v3258
  %v3295 = vsel %vm701, %v3284, %v3260
  %v3296 = vsel %vm701, %v3286, %v3262
  %v3297 = vsel %vm701, %v3288, %v3264
  %v3298 = vsel %vm701, %v3290, %v3266
  %v3315 = vsel %vm701, %v3252, %v3276
  %v3316 = vsel %vm701, %v3254, %v3278
  %v3317 = vsel %vm701, %v3256, %v3280
  %v3318 = vsel %vm701, %v3258, %v3282
  %v3319 = vsel %vm701, %v3260, %v3284
  %v3320 = vsel %vm701, %v3262, %v3286
  %v3321 = vsel %vm701, %v3264, %v3288
  %v3322 = vsel %vm701, %v3266, %v3290
  %v3323 = vsel %vm3227, 1, 0
  %v3324 = vsel %vm3228, 1, 0
  %v3325 = vsel %vm3229, 1, 0
  %v3326 = vsel %vm3230, 1, 0
  %v3327 = vsel %vm3231, 1, 0
  %v3328 = vsel %vm3232, 1, 0
  %v3329 = vsel %vm3233, 1, 0
  %v3330 = vsel %vm3234, 1, 0
  %v3331 = vlaneseq
  %v3332 = vshrl.u32 %v3331, 7
  %v3333 = vsub.s32 0, %v3332
  %v3334 = vrot.slane %v3323, %v3333
  %v3335 = vlaneseq
  %v3336 = vshrl.u32 %v3335, 7
  %v3337 = vsub.s32 0, %v3336
  %v3338 = vrot.slane %v3324, %v3337
  %v3339 = vlaneseq
  %v3340 = vshrl.u32 %v3339, 7
  %v3341 = vsub.s32 0, %v3340
  %v3342 = vrot.slane %v3325, %v3341
  %v3343 = vlaneseq
  %v3344 = vshrl.u32 %v3343, 7
  %v3345 = vsub.s32 0, %v3344
  %v3346 = vrot.slane %v3326, %v3345
  %v3347 = vlaneseq
  %v3348 = vshrl.u32 %v3347, 7
  %v3349 = vsub.s32 0, %v3348
  %v3350 = vrot.slane %v3327, %v3349
  %v3351 = vlaneseq
  %v3352 = vshrl.u32 %v3351, 7
  %v3353 = vsub.s32 0, %v3352
  %v3354 = vrot.slane %v3328, %v3353
  %v3355 = vlaneseq
  %v3356 = vshrl.u32 %v3355, 7
  %v3357 = vsub.s32 0, %v3356
  %v3358 = vrot.slane %v3329, %v3357
  %v3359 = vlaneseq
  %v3360 = vshrl.u32 %v3359, 7
  %v3361 = vsub.s32 0, %v3360
  %v3362 = vrot.slane %v3330, %v3361
  %3363 = vset.pattern.permute.xlu0 0
  %3364 = vperm.xlu0 %3363, %v3334
  %v3365 = vpop.permute.xlu0 %3364
  %3366 = vset.pattern.permute.xlu0 0
  %3367 = vperm.xlu0 %3366, %v3338
  %v3368 = vpop.permute.xlu0 %3367
  %3369 = vset.pattern.permute.xlu0 0
  %3370 = vperm.xlu0 %3369, %v3342
  %v3371 = vpop.permute.xlu0 %3370
  %3372 = vset.pattern.permute.xlu0 0
  %3373 = vperm.xlu0 %3372, %v3346
  %v3374 = vpop.permute.xlu0 %3373
  %3375 = vset.pattern.permute.xlu0 0
  %3376 = vperm.xlu0 %3375, %v3350
  %v3377 = vpop.permute.xlu0 %3376
  %3378 = vset.pattern.permute.xlu0 0
  %3379 = vperm.xlu0 %3378, %v3354
  %v3380 = vpop.permute.xlu0 %3379
  %3381 = vset.pattern.permute.xlu0 0
  %3382 = vperm.xlu0 %3381, %v3358
  %v3383 = vpop.permute.xlu0 %3382
  %3384 = vset.pattern.permute.xlu0 0
  %3385 = vperm.xlu0 %3384, %v3362
  %v3386 = vpop.permute.xlu0 %3385
  %vm3387 = vcmp.eq.s32.totalorder %v3365, 1
  %vm3388 = vcmp.eq.s32.totalorder %v3368, 1
  %vm3389 = vcmp.eq.s32.totalorder %v3371, 1
  %vm3390 = vcmp.eq.s32.totalorder %v3374, 1
  %vm3391 = vcmp.eq.s32.totalorder %v3377, 1
  %vm3392 = vcmp.eq.s32.totalorder %v3380, 1
  %vm3393 = vcmp.eq.s32.totalorder %v3383, 1
  %vm3394 = vcmp.eq.s32.totalorder %v3386, 1
  %v3403 = vsel %vm3387, %v3315, %v3170
  %v3404 = vsel %vm3387, %v3291, %v3243
  %v3405 = vsel %vm3388, %v3316, %v3171
  %v3406 = vsel %vm3388, %v3292, %v3244
  %v3407 = vsel %vm3389, %v3317, %v3172
  %v3408 = vsel %vm3389, %v3293, %v3245
  %v3409 = vsel %vm3390, %v3318, %v3173
  %v3410 = vsel %vm3390, %v3294, %v3246
  %v3411 = vsel %vm3391, %v3319, %v3174
  %v3412 = vsel %vm3391, %v3295, %v3247
  %v3413 = vsel %vm3392, %v3320, %v3175
  %v3414 = vsel %vm3392, %v3296, %v3248
  %v3415 = vsel %vm3393, %v3321, %v3176
  %v3416 = vsel %vm3393, %v3297, %v3249
  %v3417 = vsel %vm3394, %v3322, %v3177
  %v3418 = vsel %vm3394, %v3298, %v3250
  %vm3419 = vcmp.eq.s32.totalorder %v3201, 4294967295
  %vm3420 = vcmp.eq.s32.totalorder %v3215, 4294967295
  %vm3421 = vcmp.eq.s32.totalorder %v3223, 4294967295
  %vm3422 = vcmp.eq.s32.totalorder %v3225, 4294967295
  %vm3423 = vcmp.eq.s32.totalorder %v3208, 4294967295
  %vm3424 = vcmp.eq.s32.totalorder %v3222, 4294967295
  %vm3425 = vcmp.eq.s32.totalorder %v3224, 4294967295
  %vm3426 = vcmp.eq.s32.totalorder %v3226, 4294967295
  %3427 = vrot.lane.b32.xlu0 %v3243, 16
  %v3428 = vpop.permute.xlu0 %3427
  %3429 = vrot.lane.b32.xlu0 %v3244, 16
  %v3430 = vpop.permute.xlu0 %3429
  %3431 = vrot.lane.b32.xlu0 %v3245, 16
  %v3432 = vpop.permute.xlu0 %3431
  %3433 = vrot.lane.b32.xlu0 %v3246, 16
  %v3434 = vpop.permute.xlu0 %3433
  %3435 = vrot.lane.b32.xlu0 %v3247, 16
  %v3436 = vpop.permute.xlu0 %3435
  %3437 = vrot.lane.b32.xlu0 %v3248, 16
  %v3438 = vpop.permute.xlu0 %3437
  %3439 = vrot.lane.b32.xlu0 %v3249, 16
  %v3440 = vpop.permute.xlu0 %3439
  %3441 = vrot.lane.b32.xlu0 %v3250, 16
  %v3442 = vpop.permute.xlu0 %3441
  %3451 = vrot.lane.b32.xlu0 %v3170, 16
  %v3452 = vpop.permute.xlu0 %3451
  %3453 = vrot.lane.b32.xlu0 %v3171, 16
  %v3454 = vpop.permute.xlu0 %3453
  %3455 = vrot.lane.b32.xlu0 %v3172, 16
  %v3456 = vpop.permute.xlu0 %3455
  %3457 = vrot.lane.b32.xlu0 %v3173, 16
  %v3458 = vpop.permute.xlu0 %3457
  %3459 = vrot.lane.b32.xlu0 %v3174, 16
  %v3460 = vpop.permute.xlu0 %3459
  %3461 = vrot.lane.b32.xlu0 %v3175, 16
  %v3462 = vpop.permute.xlu0 %3461
  %3463 = vrot.lane.b32.xlu0 %v3176, 16
  %v3464 = vpop.permute.xlu0 %3463
  %3465 = vrot.lane.b32.xlu0 %v3177, 16
  %v3466 = vpop.permute.xlu0 %3465
  %v3467 = vsel %vm878, %v3452, %v3428
  %v3468 = vsel %vm878, %v3454, %v3430
  %v3469 = vsel %vm878, %v3456, %v3432
  %v3470 = vsel %vm878, %v3458, %v3434
  %v3471 = vsel %vm878, %v3460, %v3436
  %v3472 = vsel %vm878, %v3462, %v3438
  %v3473 = vsel %vm878, %v3464, %v3440
  %v3474 = vsel %vm878, %v3466, %v3442
  %v3491 = vsel %vm878, %v3428, %v3452
  %v3492 = vsel %vm878, %v3430, %v3454
  %v3493 = vsel %vm878, %v3432, %v3456
  %v3494 = vsel %vm878, %v3434, %v3458
  %v3495 = vsel %vm878, %v3436, %v3460
  %v3496 = vsel %vm878, %v3438, %v3462
  %v3497 = vsel %vm878, %v3440, %v3464
  %v3498 = vsel %vm878, %v3442, %v3466
  %v3499 = vsel %vm3419, 1, 0
  %v3500 = vsel %vm3420, 1, 0
  %v3501 = vsel %vm3421, 1, 0
  %v3502 = vsel %vm3422, 1, 0
  %v3503 = vsel %vm3423, 1, 0
  %v3504 = vsel %vm3424, 1, 0
  %v3505 = vsel %vm3425, 1, 0
  %v3506 = vsel %vm3426, 1, 0
  %v3507 = vlaneseq
  %v3508 = vshrl.u32 %v3507, 7
  %v3509 = vsub.s32 0, %v3508
  %v3510 = vrot.slane %v3499, %v3509
  %v3511 = vlaneseq
  %v3512 = vshrl.u32 %v3511, 7
  %v3513 = vsub.s32 0, %v3512
  %v3514 = vrot.slane %v3500, %v3513
  %v3515 = vlaneseq
  %v3516 = vshrl.u32 %v3515, 7
  %v3517 = vsub.s32 0, %v3516
  %v3518 = vrot.slane %v3501, %v3517
  %v3519 = vlaneseq
  %v3520 = vshrl.u32 %v3519, 7
  %v3521 = vsub.s32 0, %v3520
  %v3522 = vrot.slane %v3502, %v3521
  %v3523 = vlaneseq
  %v3524 = vshrl.u32 %v3523, 7
  %v3525 = vsub.s32 0, %v3524
  %v3526 = vrot.slane %v3503, %v3525
  %v3527 = vlaneseq
  %v3528 = vshrl.u32 %v3527, 7
  %v3529 = vsub.s32 0, %v3528
  %v3530 = vrot.slane %v3504, %v3529
  %v3531 = vlaneseq
  %v3532 = vshrl.u32 %v3531, 7
  %v3533 = vsub.s32 0, %v3532
  %v3534 = vrot.slane %v3505, %v3533
  %v3535 = vlaneseq
  %v3536 = vshrl.u32 %v3535, 7
  %v3537 = vsub.s32 0, %v3536
  %v3538 = vrot.slane %v3506, %v3537
  %3539 = vset.pattern.permute.xlu0 0
  %3540 = vperm.xlu0 %3539, %v3510
  %v3541 = vpop.permute.xlu0 %3540
  %3542 = vset.pattern.permute.xlu0 0
  %3543 = vperm.xlu0 %3542, %v3514
  %v3544 = vpop.permute.xlu0 %3543
  %3545 = vset.pattern.permute.xlu0 0
  %3546 = vperm.xlu0 %3545, %v3518
  %v3547 = vpop.permute.xlu0 %3546
  %3548 = vset.pattern.permute.xlu0 0
  %3549 = vperm.xlu0 %3548, %v3522
  %v3550 = vpop.permute.xlu0 %3549
  %3551 = vset.pattern.permute.xlu0 0
  %3552 = vperm.xlu0 %3551, %v3526
  %v3553 = vpop.permute.xlu0 %3552
  %3554 = vset.pattern.permute.xlu0 0
  %3555 = vperm.xlu0 %3554, %v3530
  %v3556 = vpop.permute.xlu0 %3555
  %3557 = vset.pattern.permute.xlu0 0
  %3558 = vperm.xlu0 %3557, %v3534
  %v3559 = vpop.permute.xlu0 %3558
  %3560 = vset.pattern.permute.xlu0 0
  %3561 = vperm.xlu0 %3560, %v3538
  %v3562 = vpop.permute.xlu0 %3561
  %vm3563 = vcmp.eq.s32.totalorder %v3541, 1
  %vm3564 = vcmp.eq.s32.totalorder %v3544, 1
  %vm3565 = vcmp.eq.s32.totalorder %v3547, 1
  %vm3566 = vcmp.eq.s32.totalorder %v3550, 1
  %vm3567 = vcmp.eq.s32.totalorder %v3553, 1
  %vm3568 = vcmp.eq.s32.totalorder %v3556, 1
  %vm3569 = vcmp.eq.s32.totalorder %v3559, 1
  %vm3570 = vcmp.eq.s32.totalorder %v3562, 1
  %v3571 = vsel %vm3563, %v3491, %v3403
  %v3572 = vsel %vm3563, %v3467, %v3404
  %v3573 = vsel %vm3564, %v3492, %v3405
  %v3574 = vsel %vm3564, %v3468, %v3406
  %v3575 = vsel %vm3565, %v3493, %v3407
  %v3576 = vsel %vm3565, %v3469, %v3408
  %v3577 = vsel %vm3566, %v3494, %v3409
  %v3578 = vsel %vm3566, %v3470, %v3410
  %v3579 = vsel %vm3567, %v3495, %v3411
  %v3580 = vsel %vm3567, %v3471, %v3412
  %v3581 = vsel %vm3568, %v3496, %v3413
  %v3582 = vsel %vm3568, %v3472, %v3414
  %v3583 = vsel %vm3569, %v3497, %v3415
  %v3584 = vsel %vm3569, %v3473, %v3416
  %v3585 = vsel %vm3570, %v3498, %v3417
  %v3586 = vsel %vm3570, %v3474, %v3418
  %vm3587 = vcmp.eq.s32.totalorder %v3201, 1
  %vm3588 = vcmp.eq.s32.totalorder %v3215, 1
  %vm3589 = vcmp.eq.s32.totalorder %v3223, 1
  %vm3590 = vcmp.eq.s32.totalorder %v3225, 1
  %vm3591 = vcmp.eq.s32.totalorder %v3208, 1
  %vm3592 = vcmp.eq.s32.totalorder %v3222, 1
  %vm3593 = vcmp.eq.s32.totalorder %v3224, 1
  %vm3594 = vcmp.eq.s32.totalorder %v3226, 1
  %3595 = vrot.lane.b32.xlu0 %v3170, 112
  %v3596 = vpop.permute.xlu0 %3595
  %3597 = vrot.lane.b32.xlu0 %v3243, 112
  %v3598 = vpop.permute.xlu0 %3597
  %3599 = vrot.lane.b32.xlu0 %v3171, 112
  %v3600 = vpop.permute.xlu0 %3599
  %3601 = vrot.lane.b32.xlu0 %v3244, 112
  %v3602 = vpop.permute.xlu0 %3601
  %3603 = vrot.lane.b32.xlu0 %v3172, 112
  %v3604 = vpop.permute.xlu0 %3603
  %3605 = vrot.lane.b32.xlu0 %v3245, 112
  %v3606 = vpop.permute.xlu0 %3605
  %3607 = vrot.lane.b32.xlu0 %v3173, 112
  %v3608 = vpop.permute.xlu0 %3607
  %3609 = vrot.lane.b32.xlu0 %v3246, 112
  %v3610 = vpop.permute.xlu0 %3609
  %3611 = vrot.lane.b32.xlu0 %v3174, 112
  %v3612 = vpop.permute.xlu0 %3611
  %3613 = vrot.lane.b32.xlu0 %v3247, 112
  %v3614 = vpop.permute.xlu0 %3613
  %3615 = vrot.lane.b32.xlu0 %v3175, 112
  %v3616 = vpop.permute.xlu0 %3615
  %3617 = vrot.lane.b32.xlu0 %v3248, 112
  %v3618 = vpop.permute.xlu0 %3617
  %3619 = vrot.lane.b32.xlu0 %v3176, 112
  %v3620 = vpop.permute.xlu0 %3619
  %3621 = vrot.lane.b32.xlu0 %v3249, 112
  %v3622 = vpop.permute.xlu0 %3621
  %3623 = vrot.lane.b32.xlu0 %v3177, 112
  %v3624 = vpop.permute.xlu0 %3623
  %3625 = vrot.lane.b32.xlu0 %v3250, 112
  %v3626 = vpop.permute.xlu0 %3625
  %v3627 = vsel %vm1039, %v3596, %v3598
  %v3628 = vsel %vm1039, %v3600, %v3602
  %v3629 = vsel %vm1039, %v3604, %v3606
  %v3630 = vsel %vm1039, %v3608, %v3610
  %v3631 = vsel %vm1039, %v3612, %v3614
  %v3632 = vsel %vm1039, %v3616, %v3618
  %v3633 = vsel %vm1039, %v3620, %v3622
  %v3634 = vsel %vm1039, %v3624, %v3626
  %v3659 = vsel %vm1039, %v3598, %v3596
  %v3660 = vsel %vm1039, %v3602, %v3600
  %v3661 = vsel %vm1039, %v3606, %v3604
  %v3662 = vsel %vm1039, %v3610, %v3608
  %v3663 = vsel %vm1039, %v3614, %v3612
  %v3664 = vsel %vm1039, %v3618, %v3616
  %v3665 = vsel %vm1039, %v3622, %v3620
  %v3666 = vsel %vm1039, %v3626, %v3624
  %v3667 = vsel %vm3587, 1, 0
  %v3668 = vsel %vm3588, 1, 0
  %v3669 = vsel %vm3589, 1, 0
  %v3670 = vsel %vm3590, 1, 0
  %v3671 = vsel %vm3591, 1, 0
  %v3672 = vsel %vm3592, 1, 0
  %v3673 = vsel %vm3593, 1, 0
  %v3674 = vsel %vm3594, 1, 0
  %v3675 = vlaneseq
  %v3676 = vshrl.u32 %v3675, 7
  %v3677 = vsub.s32 0, %v3676
  %v3678 = vrot.slane %v3667, %v3677
  %v3679 = vlaneseq
  %v3680 = vshrl.u32 %v3679, 7
  %v3681 = vsub.s32 0, %v3680
  %v3682 = vrot.slane %v3668, %v3681
  %v3683 = vlaneseq
  %v3684 = vshrl.u32 %v3683, 7
  %v3685 = vsub.s32 0, %v3684
  %v3686 = vrot.slane %v3669, %v3685
  %v3687 = vlaneseq
  %v3688 = vshrl.u32 %v3687, 7
  %v3689 = vsub.s32 0, %v3688
  %v3690 = vrot.slane %v3670, %v3689
  %v3691 = vlaneseq
  %v3692 = vshrl.u32 %v3691, 7
  %v3693 = vsub.s32 0, %v3692
  %v3694 = vrot.slane %v3671, %v3693
  %v3695 = vlaneseq
  %v3696 = vshrl.u32 %v3695, 7
  %v3697 = vsub.s32 0, %v3696
  %v3698 = vrot.slane %v3672, %v3697
  %v3699 = vlaneseq
  %v3700 = vshrl.u32 %v3699, 7
  %v3701 = vsub.s32 0, %v3700
  %v3702 = vrot.slane %v3673, %v3701
  %v3703 = vlaneseq
  %v3704 = vshrl.u32 %v3703, 7
  %v3705 = vsub.s32 0, %v3704
  %v3706 = vrot.slane %v3674, %v3705
  %3707 = vset.pattern.permute.xlu0 0
  %3708 = vperm.xlu0 %3707, %v3678
  %v3709 = vpop.permute.xlu0 %3708
  %3710 = vset.pattern.permute.xlu0 0
  %3711 = vperm.xlu0 %3710, %v3682
  %v3712 = vpop.permute.xlu0 %3711
  %3713 = vset.pattern.permute.xlu0 0
  %3714 = vperm.xlu0 %3713, %v3686
  %v3715 = vpop.permute.xlu0 %3714
  %3716 = vset.pattern.permute.xlu0 0
  %3717 = vperm.xlu0 %3716, %v3690
  %v3718 = vpop.permute.xlu0 %3717
  %3719 = vset.pattern.permute.xlu0 0
  %3720 = vperm.xlu0 %3719, %v3694
  %v3721 = vpop.permute.xlu0 %3720
  %3722 = vset.pattern.permute.xlu0 0
  %3723 = vperm.xlu0 %3722, %v3698
  %v3724 = vpop.permute.xlu0 %3723
  %3725 = vset.pattern.permute.xlu0 0
  %3726 = vperm.xlu0 %3725, %v3702
  %v3727 = vpop.permute.xlu0 %3726
  %3728 = vset.pattern.permute.xlu0 0
  %3729 = vperm.xlu0 %3728, %v3706
  %v3730 = vpop.permute.xlu0 %3729
  %vm3731 = vcmp.eq.s32.totalorder %v3709, 1
  %vm3732 = vcmp.eq.s32.totalorder %v3712, 1
  %vm3733 = vcmp.eq.s32.totalorder %v3715, 1
  %vm3734 = vcmp.eq.s32.totalorder %v3718, 1
  %vm3735 = vcmp.eq.s32.totalorder %v3721, 1
  %vm3736 = vcmp.eq.s32.totalorder %v3724, 1
  %vm3737 = vcmp.eq.s32.totalorder %v3727, 1
  %vm3738 = vcmp.eq.s32.totalorder %v3730, 1
  %v3739 = vsel %vm3731, %v3627, %v3571
  %v3740 = vsel %vm3731, %v3659, %v3572
  %v3741 = vsel %vm3732, %v3628, %v3573
  %v3742 = vsel %vm3732, %v3660, %v3574
  %v3743 = vsel %vm3733, %v3629, %v3575
  %v3744 = vsel %vm3733, %v3661, %v3576
  %v3745 = vsel %vm3734, %v3630, %v3577
  %v3746 = vsel %vm3734, %v3662, %v3578
  %v3747 = vsel %vm3735, %v3631, %v3579
  %v3748 = vsel %vm3735, %v3663, %v3580
  %v3749 = vsel %vm3736, %v3632, %v3581
  %v3750 = vsel %vm3736, %v3664, %v3582
  %v3751 = vsel %vm3737, %v3633, %v3583
  %v3752 = vsel %vm3737, %v3665, %v3584
  %v3753 = vsel %vm3738, %v3634, %v3585
  %v3754 = vsel %vm3738, %v3666, %v3586
  %vm3755 = vcmp.eq.s32.totalorder %v3201, 2
  %vm3756 = vcmp.eq.s32.totalorder %v3215, 2
  %vm3757 = vcmp.eq.s32.totalorder %v3223, 2
  %vm3758 = vcmp.eq.s32.totalorder %v3225, 2
  %vm3759 = vcmp.eq.s32.totalorder %v3208, 2
  %vm3760 = vcmp.eq.s32.totalorder %v3222, 2
  %vm3761 = vcmp.eq.s32.totalorder %v3224, 2
  %vm3762 = vcmp.eq.s32.totalorder %v3226, 2
  %3763 = vrot.lane.b32.xlu0 %v3170, 96
  %v3764 = vpop.permute.xlu0 %3763
  %3765 = vrot.lane.b32.xlu0 %v3243, 96
  %v3766 = vpop.permute.xlu0 %3765
  %3767 = vrot.lane.b32.xlu0 %v3171, 96
  %v3768 = vpop.permute.xlu0 %3767
  %3769 = vrot.lane.b32.xlu0 %v3244, 96
  %v3770 = vpop.permute.xlu0 %3769
  %3771 = vrot.lane.b32.xlu0 %v3172, 96
  %v3772 = vpop.permute.xlu0 %3771
  %3773 = vrot.lane.b32.xlu0 %v3245, 96
  %v3774 = vpop.permute.xlu0 %3773
  %3775 = vrot.lane.b32.xlu0 %v3173, 96
  %v3776 = vpop.permute.xlu0 %3775
  %3777 = vrot.lane.b32.xlu0 %v3246, 96
  %v3778 = vpop.permute.xlu0 %3777
  %3779 = vrot.lane.b32.xlu0 %v3174, 96
  %v3780 = vpop.permute.xlu0 %3779
  %3781 = vrot.lane.b32.xlu0 %v3247, 96
  %v3782 = vpop.permute.xlu0 %3781
  %3783 = vrot.lane.b32.xlu0 %v3175, 96
  %v3784 = vpop.permute.xlu0 %3783
  %3785 = vrot.lane.b32.xlu0 %v3248, 96
  %v3786 = vpop.permute.xlu0 %3785
  %3787 = vrot.lane.b32.xlu0 %v3176, 96
  %v3788 = vpop.permute.xlu0 %3787
  %3789 = vrot.lane.b32.xlu0 %v3249, 96
  %v3790 = vpop.permute.xlu0 %3789
  %3791 = vrot.lane.b32.xlu0 %v3177, 96
  %v3792 = vpop.permute.xlu0 %3791
  %3793 = vrot.lane.b32.xlu0 %v3250, 96
  %v3794 = vpop.permute.xlu0 %3793
  %v3795 = vsel %vm1208, %v3764, %v3766
  %v3796 = vsel %vm1208, %v3768, %v3770
  %v3797 = vsel %vm1208, %v3772, %v3774
  %v3798 = vsel %vm1208, %v3776, %v3778
  %v3799 = vsel %vm1208, %v3780, %v3782
  %v3800 = vsel %vm1208, %v3784, %v3786
  %v3801 = vsel %vm1208, %v3788, %v3790
  %v3802 = vsel %vm1208, %v3792, %v3794
  %v3827 = vsel %vm1208, %v3766, %v3764
  %v3828 = vsel %vm1208, %v3770, %v3768
  %v3829 = vsel %vm1208, %v3774, %v3772
  %v3830 = vsel %vm1208, %v3778, %v3776
  %v3831 = vsel %vm1208, %v3782, %v3780
  %v3832 = vsel %vm1208, %v3786, %v3784
  %v3833 = vsel %vm1208, %v3790, %v3788
  %v3834 = vsel %vm1208, %v3794, %v3792
  %v3835 = vsel %vm3755, 1, 0
  %v3836 = vsel %vm3756, 1, 0
  %v3837 = vsel %vm3757, 1, 0
  %v3838 = vsel %vm3758, 1, 0
  %v3839 = vsel %vm3759, 1, 0
  %v3840 = vsel %vm3760, 1, 0
  %v3841 = vsel %vm3761, 1, 0
  %v3842 = vsel %vm3762, 1, 0
  %v3843 = vlaneseq
  %v3844 = vshrl.u32 %v3843, 7
  %v3845 = vsub.s32 0, %v3844
  %v3846 = vrot.slane %v3835, %v3845
  %v3847 = vlaneseq
  %v3848 = vshrl.u32 %v3847, 7
  %v3849 = vsub.s32 0, %v3848
  %v3850 = vrot.slane %v3836, %v3849
  %v3851 = vlaneseq
  %v3852 = vshrl.u32 %v3851, 7
  %v3853 = vsub.s32 0, %v3852
  %v3854 = vrot.slane %v3837, %v3853
  %v3855 = vlaneseq
  %v3856 = vshrl.u32 %v3855, 7
  %v3857 = vsub.s32 0, %v3856
  %v3858 = vrot.slane %v3838, %v3857
  %v3859 = vlaneseq
  %v3860 = vshrl.u32 %v3859, 7
  %v3861 = vsub.s32 0, %v3860
  %v3862 = vrot.slane %v3839, %v3861
  %v3863 = vlaneseq
  %v3864 = vshrl.u32 %v3863, 7
  %v3865 = vsub.s32 0, %v3864
  %v3866 = vrot.slane %v3840, %v3865
  %v3867 = vlaneseq
  %v3868 = vshrl.u32 %v3867, 7
  %v3869 = vsub.s32 0, %v3868
  %v3870 = vrot.slane %v3841, %v3869
  %v3871 = vlaneseq
  %v3872 = vshrl.u32 %v3871, 7
  %v3873 = vsub.s32 0, %v3872
  %v3874 = vrot.slane %v3842, %v3873
  %3875 = vset.pattern.permute.xlu0 0
  %3876 = vperm.xlu0 %3875, %v3846
  %v3877 = vpop.permute.xlu0 %3876
  %3878 = vset.pattern.permute.xlu0 0
  %3879 = vperm.xlu0 %3878, %v3850
  %v3880 = vpop.permute.xlu0 %3879
  %3881 = vset.pattern.permute.xlu0 0
  %3882 = vperm.xlu0 %3881, %v3854
  %v3883 = vpop.permute.xlu0 %3882
  %3884 = vset.pattern.permute.xlu0 0
  %3885 = vperm.xlu0 %3884, %v3858
  %v3886 = vpop.permute.xlu0 %3885
  %3887 = vset.pattern.permute.xlu0 0
  %3888 = vperm.xlu0 %3887, %v3862
  %v3889 = vpop.permute.xlu0 %3888
  %3890 = vset.pattern.permute.xlu0 0
  %3891 = vperm.xlu0 %3890, %v3866
  %v3892 = vpop.permute.xlu0 %3891
  %3893 = vset.pattern.permute.xlu0 0
  %3894 = vperm.xlu0 %3893, %v3870
  %v3895 = vpop.permute.xlu0 %3894
  %3896 = vset.pattern.permute.xlu0 0
  %3897 = vperm.xlu0 %3896, %v3874
  %v3898 = vpop.permute.xlu0 %3897
  %vm3899 = vcmp.eq.s32.totalorder %v3877, 1
  %vm3900 = vcmp.eq.s32.totalorder %v3880, 1
  %vm3901 = vcmp.eq.s32.totalorder %v3883, 1
  %vm3902 = vcmp.eq.s32.totalorder %v3886, 1
  %vm3903 = vcmp.eq.s32.totalorder %v3889, 1
  %vm3904 = vcmp.eq.s32.totalorder %v3892, 1
  %vm3905 = vcmp.eq.s32.totalorder %v3895, 1
  %vm3906 = vcmp.eq.s32.totalorder %v3898, 1
  %v3907 = vsel %vm3899, %v3795, %v3739
  %v3908 = vsel %vm3899, %v3827, %v3740
  %v3909 = vsel %vm3900, %v3796, %v3741
  %v3910 = vsel %vm3900, %v3828, %v3742
  %v3911 = vsel %vm3901, %v3797, %v3743
  %v3912 = vsel %vm3901, %v3829, %v3744
  %v3913 = vsel %vm3902, %v3798, %v3745
  %v3914 = vsel %vm3902, %v3830, %v3746
  %v3915 = vsel %vm3903, %v3799, %v3747
  %v3916 = vsel %vm3903, %v3831, %v3748
  %v3917 = vsel %vm3904, %v3800, %v3749
  %v3918 = vsel %vm3904, %v3832, %v3750
  %v3919 = vsel %vm3905, %v3801, %v3751
  %v3920 = vsel %vm3905, %v3833, %v3752
  %v3921 = vsel %vm3906, %v3802, %v3753
  %v3922 = vsel %vm3906, %v3834, %v3754
  %3923 = vset.pattern.permute.xlu0 0
  %3924 = vperm.xlu0 %3923, %v3201
  %v3925 = vpop.permute.xlu0 %3924
  %v3926 = vlaneseq
  %v3927 = vshrl.u32 %v3926, 7
  %v3928 = vsub.s32 0, %v3927
  %v3929 = vrot.slane %v3925, %v3928
  %3930 = vset.pattern.permute.xlu0 0
  %3931 = vperm.xlu0 %3930, %v3215
  %v3932 = vpop.permute.xlu0 %3931
  %v3933 = vlaneseq
  %v3934 = vshrl.u32 %v3933, 7
  %v3935 = vsub.s32 0, %v3934
  %v3936 = vrot.slane %v3932, %v3935
  %3937 = vset.pattern.permute.xlu0 0
  %3938 = vperm.xlu0 %3937, %v3223
  %v3939 = vpop.permute.xlu0 %3938
  %v3940 = vlaneseq
  %v3941 = vshrl.u32 %v3940, 7
  %v3942 = vsub.s32 0, %v3941
  %v3943 = vrot.slane %v3939, %v3942
  %3944 = vset.pattern.permute.xlu0 0
  %3945 = vperm.xlu0 %3944, %v3225
  %v3946 = vpop.permute.xlu0 %3945
  %v3947 = vlaneseq
  %v3948 = vshrl.u32 %v3947, 7
  %v3949 = vsub.s32 0, %v3948
  %v3950 = vrot.slane %v3946, %v3949
  %3951 = vset.pattern.permute.xlu0 0
  %3952 = vperm.xlu0 %3951, %v3208
  %v3953 = vpop.permute.xlu0 %3952
  %v3954 = vlaneseq
  %v3955 = vshrl.u32 %v3954, 7
  %v3956 = vsub.s32 0, %v3955
  %v3957 = vrot.slane %v3953, %v3956
  %3958 = vset.pattern.permute.xlu0 0
  %3959 = vperm.xlu0 %3958, %v3222
  %v3960 = vpop.permute.xlu0 %3959
  %v3961 = vlaneseq
  %v3962 = vshrl.u32 %v3961, 7
  %v3963 = vsub.s32 0, %v3962
  %v3964 = vrot.slane %v3960, %v3963
  %3965 = vset.pattern.permute.xlu0 0
  %3966 = vperm.xlu0 %3965, %v3224
  %v3967 = vpop.permute.xlu0 %3966
  %v3968 = vlaneseq
  %v3969 = vshrl.u32 %v3968, 7
  %v3970 = vsub.s32 0, %v3969
  %v3971 = vrot.slane %v3967, %v3970
  %3972 = vset.pattern.permute.xlu0 0
  %3973 = vperm.xlu0 %3972, %v3226
  %v3974 = vpop.permute.xlu0 %3973
  %v3975 = vlaneseq
  %v3976 = vshrl.u32 %v3975, 7
  %v3977 = vsub.s32 0, %v3976
  %v3978 = vrot.slane %v3974, %v3977
  %v3979 = vadd.s32 %v29, %v3929
  %v3980 = vadd.s32 %v30, %v3929
  %v3981 = vadd.s32 %v29, %v3936
  %v3982 = vadd.s32 %v30, %v3936
  %v3983 = vadd.s32 %v29, %v3943
  %v3984 = vadd.s32 %v30, %v3943
  %v3985 = vadd.s32 %v29, %v3950
  %v3986 = vadd.s32 %v30, %v3950
  %v3987 = vadd.s32 %v29, %v3957
  %v3988 = vadd.s32 %v30, %v3957
  %v3989 = vadd.s32 %v29, %v3964
  %v3990 = vadd.s32 %v30, %v3964
  %v3991 = vadd.s32 %v29, %v3971
  %v3992 = vadd.s32 %v30, %v3971
  %v3993 = vadd.s32 %v29, %v3978
  %v3994 = vadd.s32 %v30, %v3978
  %vm3995 = vcmp.ge.s32.totalorder %v3979, 0
  %vm3996 = vcmp.ge.s32.totalorder %v3980, 0
  %vm3997 = vcmp.ge.s32.totalorder %v3981, 0
  %vm3998 = vcmp.ge.s32.totalorder %v3982, 0
  %vm3999 = vcmp.ge.s32.totalorder %v3983, 0
  %vm4000 = vcmp.ge.s32.totalorder %v3984, 0
  %vm4001 = vcmp.ge.s32.totalorder %v3985, 0
  %vm4002 = vcmp.ge.s32.totalorder %v3986, 0
  %vm4003 = vcmp.ge.s32.totalorder %v3987, 0
  %vm4004 = vcmp.ge.s32.totalorder %v3988, 0
  %vm4005 = vcmp.ge.s32.totalorder %v3989, 0
  %vm4006 = vcmp.ge.s32.totalorder %v3990, 0
  %vm4007 = vcmp.ge.s32.totalorder %v3991, 0
  %vm4008 = vcmp.ge.s32.totalorder %v3992, 0
  %vm4009 = vcmp.ge.s32.totalorder %v3993, 0
  %vm4010 = vcmp.ge.s32.totalorder %v3994, 0
  %vm4011 = vcmp.lt.s32.totalorder %v3979, 16
  %vm4012 = vcmp.lt.s32.totalorder %v3980, 16
  %vm4013 = vcmp.lt.s32.totalorder %v3981, 16
  %vm4014 = vcmp.lt.s32.totalorder %v3982, 16
  %vm4015 = vcmp.lt.s32.totalorder %v3983, 16
  %vm4016 = vcmp.lt.s32.totalorder %v3984, 16
  %vm4017 = vcmp.lt.s32.totalorder %v3985, 16
  %vm4018 = vcmp.lt.s32.totalorder %v3986, 16
  %vm4019 = vcmp.lt.s32.totalorder %v3987, 16
  %vm4020 = vcmp.lt.s32.totalorder %v3988, 16
  %vm4021 = vcmp.lt.s32.totalorder %v3989, 16
  %vm4022 = vcmp.lt.s32.totalorder %v3990, 16
  %vm4023 = vcmp.lt.s32.totalorder %v3991, 16
  %vm4024 = vcmp.lt.s32.totalorder %v3992, 16
  %vm4025 = vcmp.lt.s32.totalorder %v3993, 16
  %vm4026 = vcmp.lt.s32.totalorder %v3994, 16
  %vm4027 = vmand %vm3995, %vm4011
  %vm4028 = vmand %vm3996, %vm4012
  %vm4029 = vmand %vm3997, %vm4013
  %vm4030 = vmand %vm3998, %vm4014
  %vm4031 = vmand %vm3999, %vm4015
  %vm4032 = vmand %vm4000, %vm4016
  %vm4033 = vmand %vm4001, %vm4017
  %vm4034 = vmand %vm4002, %vm4018
  %vm4035 = vmand %vm4003, %vm4019
  %vm4036 = vmand %vm4004, %vm4020
  %vm4037 = vmand %vm4005, %vm4021
  %vm4038 = vmand %vm4006, %vm4022
  %vm4039 = vmand %vm4007, %vm4023
  %vm4040 = vmand %vm4008, %vm4024
  %vm4041 = vmand %vm4009, %vm4025
  %vm4042 = vmand %vm4010, %vm4026
  %v4043 = vsel %vm4027, 1, 0
  %v4044 = vsel %vm4028, 1, 0
  %v4045 = vsel %vm4029, 1, 0
  %v4046 = vsel %vm4030, 1, 0
  %v4047 = vsel %vm4031, 1, 0
  %v4048 = vsel %vm4032, 1, 0
  %v4049 = vsel %vm4033, 1, 0
  %v4050 = vsel %vm4034, 1, 0
  %v4051 = vsel %vm4035, 1, 0
  %v4052 = vsel %vm4036, 1, 0
  %v4053 = vsel %vm4037, 1, 0
  %v4054 = vsel %vm4038, 1, 0
  %v4055 = vsel %vm4039, 1, 0
  %v4056 = vsel %vm4040, 1, 0
  %v4057 = vsel %vm4041, 1, 0
  %v4058 = vsel %vm4042, 1, 0
  %vm4059 = vcmp.eq.s32.totalorder %v4043, 1
  %vm4060 = vcmp.eq.s32.totalorder %v4044, 1
  %vm4061 = vcmp.eq.s32.totalorder %v4045, 1
  %vm4062 = vcmp.eq.s32.totalorder %v4046, 1
  %vm4063 = vcmp.eq.s32.totalorder %v4047, 1
  %vm4064 = vcmp.eq.s32.totalorder %v4048, 1
  %vm4065 = vcmp.eq.s32.totalorder %v4049, 1
  %vm4066 = vcmp.eq.s32.totalorder %v4050, 1
  %vm4067 = vcmp.eq.s32.totalorder %v4051, 1
  %vm4068 = vcmp.eq.s32.totalorder %v4052, 1
  %vm4069 = vcmp.eq.s32.totalorder %v4053, 1
  %vm4070 = vcmp.eq.s32.totalorder %v4054, 1
  %vm4071 = vcmp.eq.s32.totalorder %v4055, 1
  %vm4072 = vcmp.eq.s32.totalorder %v4056, 1
  %vm4073 = vcmp.eq.s32.totalorder %v4057, 1
  %vm4074 = vcmp.eq.s32.totalorder %v4058, 1
  %v4075 = vsel %vm4059, %v3907, 0.0
  %v4076 = vsel %vm4060, %v3908, 0.0
  %v4077 = vsel %vm4061, %v3909, 0.0
  %v4078 = vsel %vm4062, %v3910, 0.0
  %v4079 = vsel %vm4063, %v3911, 0.0
  %v4080 = vsel %vm4064, %v3912, 0.0
  %v4081 = vsel %vm4065, %v3913, 0.0
  %v4082 = vsel %vm4066, %v3914, 0.0
  %v4083 = vsel %vm4067, %v3915, 0.0
  %v4084 = vsel %vm4068, %v3916, 0.0
  %v4085 = vsel %vm4069, %v3917, 0.0
  %v4086 = vsel %vm4070, %v3918, 0.0
  %v4087 = vsel %vm4071, %v3919, 0.0
  %v4088 = vsel %vm4072, %v3920, 0.0
  %v4089 = vsel %vm4073, %v3921, 0.0
  %v4090 = vsel %vm4074, %v3922, 0.0
  %4099 = vrot.lane.b32.xlu0 %v4076, 2
  %v4100 = vpop.permute.xlu0 %4099
  %4101 = vrot.lane.b32.xlu0 %v4078, 2
  %v4102 = vpop.permute.xlu0 %4101
  %4103 = vrot.lane.b32.xlu0 %v4080, 2
  %v4104 = vpop.permute.xlu0 %4103
  %4105 = vrot.lane.b32.xlu0 %v4082, 2
  %v4106 = vpop.permute.xlu0 %4105
  %4107 = vrot.lane.b32.xlu0 %v4084, 2
  %v4108 = vpop.permute.xlu0 %4107
  %4109 = vrot.lane.b32.xlu0 %v4086, 2
  %v4110 = vpop.permute.xlu0 %4109
  %4111 = vrot.lane.b32.xlu0 %v4088, 2
  %v4112 = vpop.permute.xlu0 %4111
  %4113 = vrot.lane.b32.xlu0 %v4090, 2
  %v4114 = vpop.permute.xlu0 %4113
  %4131 = vrot.lane.b32.xlu0 %v4075, 2
  %v4132 = vpop.permute.xlu0 %4131
  %4133 = vrot.lane.b32.xlu0 %v4077, 2
  %v4134 = vpop.permute.xlu0 %4133
  %4135 = vrot.lane.b32.xlu0 %v4079, 2
  %v4136 = vpop.permute.xlu0 %4135
  %4137 = vrot.lane.b32.xlu0 %v4081, 2
  %v4138 = vpop.permute.xlu0 %4137
  %4139 = vrot.lane.b32.xlu0 %v4083, 2
  %v4140 = vpop.permute.xlu0 %4139
  %4141 = vrot.lane.b32.xlu0 %v4085, 2
  %v4142 = vpop.permute.xlu0 %4141
  %4143 = vrot.lane.b32.xlu0 %v4087, 2
  %v4144 = vpop.permute.xlu0 %4143
  %4145 = vrot.lane.b32.xlu0 %v4089, 2
  %v4146 = vpop.permute.xlu0 %4145
  %v4147 = vsel %vm1561, %v4132, %v4100
  %v4148 = vsel %vm1561, %v4134, %v4102
  %v4149 = vsel %vm1561, %v4136, %v4104
  %v4150 = vsel %vm1561, %v4138, %v4106
  %v4151 = vsel %vm1561, %v4140, %v4108
  %v4152 = vsel %vm1561, %v4142, %v4110
  %v4153 = vsel %vm1561, %v4144, %v4112
  %v4154 = vsel %vm1561, %v4146, %v4114
  %v4171 = vsel %vm1561, %v4100, %v4132
  %v4172 = vsel %vm1561, %v4102, %v4134
  %v4173 = vsel %vm1561, %v4104, %v4136
  %v4174 = vsel %vm1561, %v4106, %v4138
  %v4175 = vsel %vm1561, %v4108, %v4140
  %v4176 = vsel %vm1561, %v4110, %v4142
  %v4177 = vsel %vm1561, %v4112, %v4144
  %v4178 = vsel %vm1561, %v4114, %v4146
  %4179 = vset.pattern.permute.xlu0 1
  %4180 = vperm.xlu0 %4179, %v3334
  %v4181 = vpop.permute.xlu0 %4180
  %4182 = vset.pattern.permute.xlu0 1
  %4183 = vperm.xlu0 %4182, %v3338
  %v4184 = vpop.permute.xlu0 %4183
  %4185 = vset.pattern.permute.xlu0 1
  %4186 = vperm.xlu0 %4185, %v3342
  %v4187 = vpop.permute.xlu0 %4186
  %4188 = vset.pattern.permute.xlu0 1
  %4189 = vperm.xlu0 %4188, %v3346
  %v4190 = vpop.permute.xlu0 %4189
  %4191 = vset.pattern.permute.xlu0 1
  %4192 = vperm.xlu0 %4191, %v3350
  %v4193 = vpop.permute.xlu0 %4192
  %4194 = vset.pattern.permute.xlu0 1
  %4195 = vperm.xlu0 %4194, %v3354
  %v4196 = vpop.permute.xlu0 %4195
  %4197 = vset.pattern.permute.xlu0 1
  %4198 = vperm.xlu0 %4197, %v3358
  %v4199 = vpop.permute.xlu0 %4198
  %4200 = vset.pattern.permute.xlu0 1
  %4201 = vperm.xlu0 %4200, %v3362
  %v4202 = vpop.permute.xlu0 %4201
  %vm4203 = vcmp.eq.s32.totalorder %v4181, 1
  %vm4204 = vcmp.eq.s32.totalorder %v4184, 1
  %vm4205 = vcmp.eq.s32.totalorder %v4187, 1
  %vm4206 = vcmp.eq.s32.totalorder %v4190, 1
  %vm4207 = vcmp.eq.s32.totalorder %v4193, 1
  %vm4208 = vcmp.eq.s32.totalorder %v4196, 1
  %vm4209 = vcmp.eq.s32.totalorder %v4199, 1
  %vm4210 = vcmp.eq.s32.totalorder %v4202, 1
  %v4211 = vsel %vm4203, %v4171, %v4075
  %v4212 = vsel %vm4203, %v4147, %v4076
  %v4213 = vsel %vm4204, %v4172, %v4077
  %v4214 = vsel %vm4204, %v4148, %v4078
  %v4215 = vsel %vm4205, %v4173, %v4079
  %v4216 = vsel %vm4205, %v4149, %v4080
  %v4217 = vsel %vm4206, %v4174, %v4081
  %v4218 = vsel %vm4206, %v4150, %v4082
  %v4219 = vsel %vm4207, %v4175, %v4083
  %v4220 = vsel %vm4207, %v4151, %v4084
  %v4221 = vsel %vm4208, %v4176, %v4085
  %v4222 = vsel %vm4208, %v4152, %v4086
  %v4223 = vsel %vm4209, %v4177, %v4087
  %v4224 = vsel %vm4209, %v4153, %v4088
  %v4225 = vsel %vm4210, %v4178, %v4089
  %v4226 = vsel %vm4210, %v4154, %v4090
  %4227 = vrot.lane.b32.xlu0 %v4076, 1
  %v4228 = vpop.permute.xlu0 %4227
  %4229 = vrot.lane.b32.xlu0 %v4078, 1
  %v4230 = vpop.permute.xlu0 %4229
  %4231 = vrot.lane.b32.xlu0 %v4080, 1
  %v4232 = vpop.permute.xlu0 %4231
  %4233 = vrot.lane.b32.xlu0 %v4082, 1
  %v4234 = vpop.permute.xlu0 %4233
  %4235 = vrot.lane.b32.xlu0 %v4084, 1
  %v4236 = vpop.permute.xlu0 %4235
  %4237 = vrot.lane.b32.xlu0 %v4086, 1
  %v4238 = vpop.permute.xlu0 %4237
  %4239 = vrot.lane.b32.xlu0 %v4088, 1
  %v4240 = vpop.permute.xlu0 %4239
  %4241 = vrot.lane.b32.xlu0 %v4090, 1
  %v4242 = vpop.permute.xlu0 %4241
  %4251 = vrot.lane.b32.xlu0 %v4075, 1
  %v4252 = vpop.permute.xlu0 %4251
  %4253 = vrot.lane.b32.xlu0 %v4077, 1
  %v4254 = vpop.permute.xlu0 %4253
  %4255 = vrot.lane.b32.xlu0 %v4079, 1
  %v4256 = vpop.permute.xlu0 %4255
  %4257 = vrot.lane.b32.xlu0 %v4081, 1
  %v4258 = vpop.permute.xlu0 %4257
  %4259 = vrot.lane.b32.xlu0 %v4083, 1
  %v4260 = vpop.permute.xlu0 %4259
  %4261 = vrot.lane.b32.xlu0 %v4085, 1
  %v4262 = vpop.permute.xlu0 %4261
  %4263 = vrot.lane.b32.xlu0 %v4087, 1
  %v4264 = vpop.permute.xlu0 %4263
  %4265 = vrot.lane.b32.xlu0 %v4089, 1
  %v4266 = vpop.permute.xlu0 %4265
  %v4267 = vsel %vm1682, %v4252, %v4228
  %v4268 = vsel %vm1682, %v4254, %v4230
  %v4269 = vsel %vm1682, %v4256, %v4232
  %v4270 = vsel %vm1682, %v4258, %v4234
  %v4271 = vsel %vm1682, %v4260, %v4236
  %v4272 = vsel %vm1682, %v4262, %v4238
  %v4273 = vsel %vm1682, %v4264, %v4240
  %v4274 = vsel %vm1682, %v4266, %v4242
  %v4291 = vsel %vm1682, %v4228, %v4252
  %v4292 = vsel %vm1682, %v4230, %v4254
  %v4293 = vsel %vm1682, %v4232, %v4256
  %v4294 = vsel %vm1682, %v4234, %v4258
  %v4295 = vsel %vm1682, %v4236, %v4260
  %v4296 = vsel %vm1682, %v4238, %v4262
  %v4297 = vsel %vm1682, %v4240, %v4264
  %v4298 = vsel %vm1682, %v4242, %v4266
  %4299 = vset.pattern.permute.xlu0 1
  %4300 = vperm.xlu0 %4299, %v3510
  %v4301 = vpop.permute.xlu0 %4300
  %4302 = vset.pattern.permute.xlu0 1
  %4303 = vperm.xlu0 %4302, %v3514
  %v4304 = vpop.permute.xlu0 %4303
  %4305 = vset.pattern.permute.xlu0 1
  %4306 = vperm.xlu0 %4305, %v3518
  %v4307 = vpop.permute.xlu0 %4306
  %4308 = vset.pattern.permute.xlu0 1
  %4309 = vperm.xlu0 %4308, %v3522
  %v4310 = vpop.permute.xlu0 %4309
  %4311 = vset.pattern.permute.xlu0 1
  %4312 = vperm.xlu0 %4311, %v3526
  %v4313 = vpop.permute.xlu0 %4312
  %4314 = vset.pattern.permute.xlu0 1
  %4315 = vperm.xlu0 %4314, %v3530
  %v4316 = vpop.permute.xlu0 %4315
  %4317 = vset.pattern.permute.xlu0 1
  %4318 = vperm.xlu0 %4317, %v3534
  %v4319 = vpop.permute.xlu0 %4318
  %4320 = vset.pattern.permute.xlu0 1
  %4321 = vperm.xlu0 %4320, %v3538
  %v4322 = vpop.permute.xlu0 %4321
  %vm4323 = vcmp.eq.s32.totalorder %v4301, 1
  %vm4324 = vcmp.eq.s32.totalorder %v4304, 1
  %vm4325 = vcmp.eq.s32.totalorder %v4307, 1
  %vm4326 = vcmp.eq.s32.totalorder %v4310, 1
  %vm4327 = vcmp.eq.s32.totalorder %v4313, 1
  %vm4328 = vcmp.eq.s32.totalorder %v4316, 1
  %vm4329 = vcmp.eq.s32.totalorder %v4319, 1
  %vm4330 = vcmp.eq.s32.totalorder %v4322, 1
  %v4331 = vsel %vm4323, %v4291, %v4211
  %v4332 = vsel %vm4323, %v4267, %v4212
  %v4333 = vsel %vm4324, %v4292, %v4213
  %v4334 = vsel %vm4324, %v4268, %v4214
  %v4335 = vsel %vm4325, %v4293, %v4215
  %v4336 = vsel %vm4325, %v4269, %v4216
  %v4337 = vsel %vm4326, %v4294, %v4217
  %v4338 = vsel %vm4326, %v4270, %v4218
  %v4339 = vsel %vm4327, %v4295, %v4219
  %v4340 = vsel %vm4327, %v4271, %v4220
  %v4341 = vsel %vm4328, %v4296, %v4221
  %v4342 = vsel %vm4328, %v4272, %v4222
  %v4343 = vsel %vm4329, %v4297, %v4223
  %v4344 = vsel %vm4329, %v4273, %v4224
  %v4345 = vsel %vm4330, %v4298, %v4225
  %v4346 = vsel %vm4330, %v4274, %v4226
  %4347 = vrot.lane.b32.xlu0 %v4075, 127
  %v4348 = vpop.permute.xlu0 %4347
  %4349 = vrot.lane.b32.xlu0 %v4076, 127
  %v4350 = vpop.permute.xlu0 %4349
  %4351 = vrot.lane.b32.xlu0 %v4077, 127
  %v4352 = vpop.permute.xlu0 %4351
  %4353 = vrot.lane.b32.xlu0 %v4078, 127
  %v4354 = vpop.permute.xlu0 %4353
  %4355 = vrot.lane.b32.xlu0 %v4079, 127
  %v4356 = vpop.permute.xlu0 %4355
  %4357 = vrot.lane.b32.xlu0 %v4080, 127
  %v4358 = vpop.permute.xlu0 %4357
  %4359 = vrot.lane.b32.xlu0 %v4081, 127
  %v4360 = vpop.permute.xlu0 %4359
  %4361 = vrot.lane.b32.xlu0 %v4082, 127
  %v4362 = vpop.permute.xlu0 %4361
  %4363 = vrot.lane.b32.xlu0 %v4083, 127
  %v4364 = vpop.permute.xlu0 %4363
  %4365 = vrot.lane.b32.xlu0 %v4084, 127
  %v4366 = vpop.permute.xlu0 %4365
  %4367 = vrot.lane.b32.xlu0 %v4085, 127
  %v4368 = vpop.permute.xlu0 %4367
  %4369 = vrot.lane.b32.xlu0 %v4086, 127
  %v4370 = vpop.permute.xlu0 %4369
  %4371 = vrot.lane.b32.xlu0 %v4087, 127
  %v4372 = vpop.permute.xlu0 %4371
  %4373 = vrot.lane.b32.xlu0 %v4088, 127
  %v4374 = vpop.permute.xlu0 %4373
  %4375 = vrot.lane.b32.xlu0 %v4089, 127
  %v4376 = vpop.permute.xlu0 %4375
  %4377 = vrot.lane.b32.xlu0 %v4090, 127
  %v4378 = vpop.permute.xlu0 %4377
  %v4379 = vsel %vm1795, %v4348, %v4350
  %v4380 = vsel %vm1795, %v4352, %v4354
  %v4381 = vsel %vm1795, %v4356, %v4358
  %v4382 = vsel %vm1795, %v4360, %v4362
  %v4383 = vsel %vm1795, %v4364, %v4366
  %v4384 = vsel %vm1795, %v4368, %v4370
  %v4385 = vsel %vm1795, %v4372, %v4374
  %v4386 = vsel %vm1795, %v4376, %v4378
  %v4411 = vsel %vm1795, %v4350, %v4348
  %v4412 = vsel %vm1795, %v4354, %v4352
  %v4413 = vsel %vm1795, %v4358, %v4356
  %v4414 = vsel %vm1795, %v4362, %v4360
  %v4415 = vsel %vm1795, %v4366, %v4364
  %v4416 = vsel %vm1795, %v4370, %v4368
  %v4417 = vsel %vm1795, %v4374, %v4372
  %v4418 = vsel %vm1795, %v4378, %v4376
  %4419 = vset.pattern.permute.xlu0 1
  %4420 = vperm.xlu0 %4419, %v3678
  %v4421 = vpop.permute.xlu0 %4420
  %4422 = vset.pattern.permute.xlu0 1
  %4423 = vperm.xlu0 %4422, %v3682
  %v4424 = vpop.permute.xlu0 %4423
  %4425 = vset.pattern.permute.xlu0 1
  %4426 = vperm.xlu0 %4425, %v3686
  %v4427 = vpop.permute.xlu0 %4426
  %4428 = vset.pattern.permute.xlu0 1
  %4429 = vperm.xlu0 %4428, %v3690
  %v4430 = vpop.permute.xlu0 %4429
  %4431 = vset.pattern.permute.xlu0 1
  %4432 = vperm.xlu0 %4431, %v3694
  %v4433 = vpop.permute.xlu0 %4432
  %4434 = vset.pattern.permute.xlu0 1
  %4435 = vperm.xlu0 %4434, %v3698
  %v4436 = vpop.permute.xlu0 %4435
  %4437 = vset.pattern.permute.xlu0 1
  %4438 = vperm.xlu0 %4437, %v3702
  %v4439 = vpop.permute.xlu0 %4438
  %4440 = vset.pattern.permute.xlu0 1
  %4441 = vperm.xlu0 %4440, %v3706
  %v4442 = vpop.permute.xlu0 %4441
  %vm4443 = vcmp.eq.s32.totalorder %v4421, 1
  %vm4444 = vcmp.eq.s32.totalorder %v4424, 1
  %vm4445 = vcmp.eq.s32.totalorder %v4427, 1
  %vm4446 = vcmp.eq.s32.totalorder %v4430, 1
  %vm4447 = vcmp.eq.s32.totalorder %v4433, 1
  %vm4448 = vcmp.eq.s32.totalorder %v4436, 1
  %vm4449 = vcmp.eq.s32.totalorder %v4439, 1
  %vm4450 = vcmp.eq.s32.totalorder %v4442, 1
  %v4451 = vsel %vm4443, %v4379, %v4331
  %v4452 = vsel %vm4443, %v4411, %v4332
  %v4453 = vsel %vm4444, %v4380, %v4333
  %v4454 = vsel %vm4444, %v4412, %v4334
  %v4455 = vsel %vm4445, %v4381, %v4335
  %v4456 = vsel %vm4445, %v4413, %v4336
  %v4457 = vsel %vm4446, %v4382, %v4337
  %v4458 = vsel %vm4446, %v4414, %v4338
  %v4459 = vsel %vm4447, %v4383, %v4339
  %v4460 = vsel %vm4447, %v4415, %v4340
  %v4461 = vsel %vm4448, %v4384, %v4341
  %v4462 = vsel %vm4448, %v4416, %v4342
  %v4463 = vsel %vm4449, %v4385, %v4343
  %v4464 = vsel %vm4449, %v4417, %v4344
  %v4465 = vsel %vm4450, %v4386, %v4345
  %v4466 = vsel %vm4450, %v4418, %v4346
  %4467 = vrot.lane.b32.xlu0 %v4075, 126
  %v4468 = vpop.permute.xlu0 %4467
  %4469 = vrot.lane.b32.xlu0 %v4076, 126
  %v4470 = vpop.permute.xlu0 %4469
  %4471 = vrot.lane.b32.xlu0 %v4077, 126
  %v4472 = vpop.permute.xlu0 %4471
  %4473 = vrot.lane.b32.xlu0 %v4078, 126
  %v4474 = vpop.permute.xlu0 %4473
  %4475 = vrot.lane.b32.xlu0 %v4079, 126
  %v4476 = vpop.permute.xlu0 %4475
  %4477 = vrot.lane.b32.xlu0 %v4080, 126
  %v4478 = vpop.permute.xlu0 %4477
  %4479 = vrot.lane.b32.xlu0 %v4081, 126
  %v4480 = vpop.permute.xlu0 %4479
  %4481 = vrot.lane.b32.xlu0 %v4082, 126
  %v4482 = vpop.permute.xlu0 %4481
  %4483 = vrot.lane.b32.xlu0 %v4083, 126
  %v4484 = vpop.permute.xlu0 %4483
  %4485 = vrot.lane.b32.xlu0 %v4084, 126
  %v4486 = vpop.permute.xlu0 %4485
  %4487 = vrot.lane.b32.xlu0 %v4085, 126
  %v4488 = vpop.permute.xlu0 %4487
  %4489 = vrot.lane.b32.xlu0 %v4086, 126
  %v4490 = vpop.permute.xlu0 %4489
  %4491 = vrot.lane.b32.xlu0 %v4087, 126
  %v4492 = vpop.permute.xlu0 %4491
  %4493 = vrot.lane.b32.xlu0 %v4088, 126
  %v4494 = vpop.permute.xlu0 %4493
  %4495 = vrot.lane.b32.xlu0 %v4089, 126
  %v4496 = vpop.permute.xlu0 %4495
  %4497 = vrot.lane.b32.xlu0 %v4090, 126
  %v4498 = vpop.permute.xlu0 %4497
  %v4499 = vsel %vm1916, %v4468, %v4470
  %v4500 = vsel %vm1916, %v4472, %v4474
  %v4501 = vsel %vm1916, %v4476, %v4478
  %v4502 = vsel %vm1916, %v4480, %v4482
  %v4503 = vsel %vm1916, %v4484, %v4486
  %v4504 = vsel %vm1916, %v4488, %v4490
  %v4505 = vsel %vm1916, %v4492, %v4494
  %v4506 = vsel %vm1916, %v4496, %v4498
  %v4531 = vsel %vm1916, %v4470, %v4468
  %v4532 = vsel %vm1916, %v4474, %v4472
  %v4533 = vsel %vm1916, %v4478, %v4476
  %v4534 = vsel %vm1916, %v4482, %v4480
  %v4535 = vsel %vm1916, %v4486, %v4484
  %v4536 = vsel %vm1916, %v4490, %v4488
  %v4537 = vsel %vm1916, %v4494, %v4492
  %v4538 = vsel %vm1916, %v4498, %v4496
  %4539 = vset.pattern.permute.xlu0 1
  %4540 = vperm.xlu0 %4539, %v3846
  %v4541 = vpop.permute.xlu0 %4540
  %4542 = vset.pattern.permute.xlu0 1
  %4543 = vperm.xlu0 %4542, %v3850
  %v4544 = vpop.permute.xlu0 %4543
  %4545 = vset.pattern.permute.xlu0 1
  %4546 = vperm.xlu0 %4545, %v3854
  %v4547 = vpop.permute.xlu0 %4546
  %4548 = vset.pattern.permute.xlu0 1
  %4549 = vperm.xlu0 %4548, %v3858
  %v4550 = vpop.permute.xlu0 %4549
  %4551 = vset.pattern.permute.xlu0 1
  %4552 = vperm.xlu0 %4551, %v3862
  %v4553 = vpop.permute.xlu0 %4552
  %4554 = vset.pattern.permute.xlu0 1
  %4555 = vperm.xlu0 %4554, %v3866
  %v4556 = vpop.permute.xlu0 %4555
  %4557 = vset.pattern.permute.xlu0 1
  %4558 = vperm.xlu0 %4557, %v3870
  %v4559 = vpop.permute.xlu0 %4558
  %4560 = vset.pattern.permute.xlu0 1
  %4561 = vperm.xlu0 %4560, %v3874
  %v4562 = vpop.permute.xlu0 %4561
  %vm4563 = vcmp.eq.s32.totalorder %v4541, 1
  %vm4564 = vcmp.eq.s32.totalorder %v4544, 1
  %vm4565 = vcmp.eq.s32.totalorder %v4547, 1
  %vm4566 = vcmp.eq.s32.totalorder %v4550, 1
  %vm4567 = vcmp.eq.s32.totalorder %v4553, 1
  %vm4568 = vcmp.eq.s32.totalorder %v4556, 1
  %vm4569 = vcmp.eq.s32.totalorder %v4559, 1
  %vm4570 = vcmp.eq.s32.totalorder %v4562, 1
  %v4571 = vsel %vm4563, %v4499, %v4451
  %v4572 = vsel %vm4563, %v4531, %v4452
  %v4573 = vsel %vm4564, %v4500, %v4453
  %v4574 = vsel %vm4564, %v4532, %v4454
  %v4575 = vsel %vm4565, %v4501, %v4455
  %v4576 = vsel %vm4565, %v4533, %v4456
  %v4577 = vsel %vm4566, %v4502, %v4457
  %v4578 = vsel %vm4566, %v4534, %v4458
  %v4579 = vsel %vm4567, %v4503, %v4459
  %v4580 = vsel %vm4567, %v4535, %v4460
  %v4581 = vsel %vm4568, %v4504, %v4461
  %v4582 = vsel %vm4568, %v4536, %v4462
  %v4583 = vsel %vm4569, %v4505, %v4463
  %v4584 = vsel %vm4569, %v4537, %v4464
  %v4585 = vsel %vm4570, %v4506, %v4465
  %v4586 = vsel %vm4570, %v4538, %v4466
  %4587 = vset.pattern.permute.xlu0 1
  %4588 = vperm.xlu0 %4587, %v3201
  %v4589 = vpop.permute.xlu0 %4588
  %v4590 = vlaneseq
  %v4591 = vshrl.u32 %v4590, 7
  %v4592 = vsub.s32 0, %v4591
  %v4593 = vrot.slane %v4589, %v4592
  %4594 = vset.pattern.permute.xlu0 1
  %4595 = vperm.xlu0 %4594, %v3215
  %v4596 = vpop.permute.xlu0 %4595
  %v4597 = vlaneseq
  %v4598 = vshrl.u32 %v4597, 7
  %v4599 = vsub.s32 0, %v4598
  %v4600 = vrot.slane %v4596, %v4599
  %4601 = vset.pattern.permute.xlu0 1
  %4602 = vperm.xlu0 %4601, %v3223
  %v4603 = vpop.permute.xlu0 %4602
  %v4604 = vlaneseq
  %v4605 = vshrl.u32 %v4604, 7
  %v4606 = vsub.s32 0, %v4605
  %v4607 = vrot.slane %v4603, %v4606
  %4608 = vset.pattern.permute.xlu0 1
  %4609 = vperm.xlu0 %4608, %v3225
  %v4610 = vpop.permute.xlu0 %4609
  %v4611 = vlaneseq
  %v4612 = vshrl.u32 %v4611, 7
  %v4613 = vsub.s32 0, %v4612
  %v4614 = vrot.slane %v4610, %v4613
  %4615 = vset.pattern.permute.xlu0 1
  %4616 = vperm.xlu0 %4615, %v3208
  %v4617 = vpop.permute.xlu0 %4616
  %v4618 = vlaneseq
  %v4619 = vshrl.u32 %v4618, 7
  %v4620 = vsub.s32 0, %v4619
  %v4621 = vrot.slane %v4617, %v4620
  %4622 = vset.pattern.permute.xlu0 1
  %4623 = vperm.xlu0 %4622, %v3222
  %v4624 = vpop.permute.xlu0 %4623
  %v4625 = vlaneseq
  %v4626 = vshrl.u32 %v4625, 7
  %v4627 = vsub.s32 0, %v4626
  %v4628 = vrot.slane %v4624, %v4627
  %4629 = vset.pattern.permute.xlu0 1
  %4630 = vperm.xlu0 %4629, %v3224
  %v4631 = vpop.permute.xlu0 %4630
  %v4632 = vlaneseq
  %v4633 = vshrl.u32 %v4632, 7
  %v4634 = vsub.s32 0, %v4633
  %v4635 = vrot.slane %v4631, %v4634
  %4636 = vset.pattern.permute.xlu0 1
  %4637 = vperm.xlu0 %4636, %v3226
  %v4638 = vpop.permute.xlu0 %4637
  %v4639 = vlaneseq
  %v4640 = vshrl.u32 %v4639, 7
  %v4641 = vsub.s32 0, %v4640
  %v4642 = vrot.slane %v4638, %v4641
  %v4643 = vadd.s32 %v27, %v4593
  %v4644 = vadd.s32 %v28, %v4593
  %v4645 = vadd.s32 %v27, %v4600
  %v4646 = vadd.s32 %v28, %v4600
  %v4647 = vadd.s32 %v27, %v4607
  %v4648 = vadd.s32 %v28, %v4607
  %v4649 = vadd.s32 %v27, %v4614
  %v4650 = vadd.s32 %v28, %v4614
  %v4651 = vadd.s32 %v27, %v4621
  %v4652 = vadd.s32 %v28, %v4621
  %v4653 = vadd.s32 %v27, %v4628
  %v4654 = vadd.s32 %v28, %v4628
  %v4655 = vadd.s32 %v27, %v4635
  %v4656 = vadd.s32 %v28, %v4635
  %v4657 = vadd.s32 %v27, %v4642
  %v4658 = vadd.s32 %v28, %v4642
  %vm4659 = vcmp.ge.s32.totalorder %v4643, 0
  %vm4660 = vcmp.ge.s32.totalorder %v4644, 0
  %vm4661 = vcmp.ge.s32.totalorder %v4645, 0
  %vm4662 = vcmp.ge.s32.totalorder %v4646, 0
  %vm4663 = vcmp.ge.s32.totalorder %v4647, 0
  %vm4664 = vcmp.ge.s32.totalorder %v4648, 0
  %vm4665 = vcmp.ge.s32.totalorder %v4649, 0
  %vm4666 = vcmp.ge.s32.totalorder %v4650, 0
  %vm4667 = vcmp.ge.s32.totalorder %v4651, 0
  %vm4668 = vcmp.ge.s32.totalorder %v4652, 0
  %vm4669 = vcmp.ge.s32.totalorder %v4653, 0
  %vm4670 = vcmp.ge.s32.totalorder %v4654, 0
  %vm4671 = vcmp.ge.s32.totalorder %v4655, 0
  %vm4672 = vcmp.ge.s32.totalorder %v4656, 0
  %vm4673 = vcmp.ge.s32.totalorder %v4657, 0
  %vm4674 = vcmp.ge.s32.totalorder %v4658, 0
  %vm4675 = vcmp.lt.s32.totalorder %v4643, 16
  %vm4676 = vcmp.lt.s32.totalorder %v4644, 16
  %vm4677 = vcmp.lt.s32.totalorder %v4645, 16
  %vm4678 = vcmp.lt.s32.totalorder %v4646, 16
  %vm4679 = vcmp.lt.s32.totalorder %v4647, 16
  %vm4680 = vcmp.lt.s32.totalorder %v4648, 16
  %vm4681 = vcmp.lt.s32.totalorder %v4649, 16
  %vm4682 = vcmp.lt.s32.totalorder %v4650, 16
  %vm4683 = vcmp.lt.s32.totalorder %v4651, 16
  %vm4684 = vcmp.lt.s32.totalorder %v4652, 16
  %vm4685 = vcmp.lt.s32.totalorder %v4653, 16
  %vm4686 = vcmp.lt.s32.totalorder %v4654, 16
  %vm4687 = vcmp.lt.s32.totalorder %v4655, 16
  %vm4688 = vcmp.lt.s32.totalorder %v4656, 16
  %vm4689 = vcmp.lt.s32.totalorder %v4657, 16
  %vm4690 = vcmp.lt.s32.totalorder %v4658, 16
  %vm4691 = vmand %vm4659, %vm4675
  %vm4692 = vmand %vm4660, %vm4676
  %vm4693 = vmand %vm4661, %vm4677
  %vm4694 = vmand %vm4662, %vm4678
  %vm4695 = vmand %vm4663, %vm4679
  %vm4696 = vmand %vm4664, %vm4680
  %vm4697 = vmand %vm4665, %vm4681
  %vm4698 = vmand %vm4666, %vm4682
  %vm4699 = vmand %vm4667, %vm4683
  %vm4700 = vmand %vm4668, %vm4684
  %vm4701 = vmand %vm4669, %vm4685
  %vm4702 = vmand %vm4670, %vm4686
  %vm4703 = vmand %vm4671, %vm4687
  %vm4704 = vmand %vm4672, %vm4688
  %vm4705 = vmand %vm4673, %vm4689
  %vm4706 = vmand %vm4674, %vm4690
  %v4707 = vsel %vm4691, 1, 0
  %v4708 = vsel %vm4692, 1, 0
  %v4709 = vsel %vm4693, 1, 0
  %v4710 = vsel %vm4694, 1, 0
  %v4711 = vsel %vm4695, 1, 0
  %v4712 = vsel %vm4696, 1, 0
  %v4713 = vsel %vm4697, 1, 0
  %v4714 = vsel %vm4698, 1, 0
  %v4715 = vsel %vm4699, 1, 0
  %v4716 = vsel %vm4700, 1, 0
  %v4717 = vsel %vm4701, 1, 0
  %v4718 = vsel %vm4702, 1, 0
  %v4719 = vsel %vm4703, 1, 0
  %v4720 = vsel %vm4704, 1, 0
  %v4721 = vsel %vm4705, 1, 0
  %v4722 = vsel %vm4706, 1, 0
  %vm4723 = vcmp.eq.s32.totalorder %v4707, 1
  %vm4724 = vcmp.eq.s32.totalorder %v4708, 1
  %vm4725 = vcmp.eq.s32.totalorder %v4709, 1
  %vm4726 = vcmp.eq.s32.totalorder %v4710, 1
  %vm4727 = vcmp.eq.s32.totalorder %v4711, 1
  %vm4728 = vcmp.eq.s32.totalorder %v4712, 1
  %vm4729 = vcmp.eq.s32.totalorder %v4713, 1
  %vm4730 = vcmp.eq.s32.totalorder %v4714, 1
  %vm4731 = vcmp.eq.s32.totalorder %v4715, 1
  %vm4732 = vcmp.eq.s32.totalorder %v4716, 1
  %vm4733 = vcmp.eq.s32.totalorder %v4717, 1
  %vm4734 = vcmp.eq.s32.totalorder %v4718, 1
  %vm4735 = vcmp.eq.s32.totalorder %v4719, 1
  %vm4736 = vcmp.eq.s32.totalorder %v4720, 1
  %vm4737 = vcmp.eq.s32.totalorder %v4721, 1
  %vm4738 = vcmp.eq.s32.totalorder %v4722, 1
  %v4739 = vsel %vm4723, %v4571, 0.0
  %v4740 = vsel %vm4724, %v4572, 0.0
  %v4741 = vsel %vm4725, %v4573, 0.0
  %v4742 = vsel %vm4726, %v4574, 0.0
  %v4743 = vsel %vm4727, %v4575, 0.0
  %v4744 = vsel %vm4728, %v4576, 0.0
  %v4745 = vsel %vm4729, %v4577, 0.0
  %v4746 = vsel %vm4730, %v4578, 0.0
  %v4747 = vsel %vm4731, %v4579, 0.0
  %v4748 = vsel %vm4732, %v4580, 0.0
  %v4749 = vsel %vm4733, %v4581, 0.0
  %v4750 = vsel %vm4734, %v4582, 0.0
  %v4751 = vsel %vm4735, %v4583, 0.0
  %v4752 = vsel %vm4736, %v4584, 0.0
  %v4753 = vsel %vm4737, %v4585, 0.0
  %v4754 = vsel %vm4738, %v4586, 0.0
  %v4755 = vsub.s32 %v3201, 4
  %v4756 = vsub.s32 %v3215, 4
  %v4757 = vsub.s32 %v3223, 4
  %v4758 = vsub.s32 %v3225, 4
  %v4759 = vsub.s32 %v3208, 4
  %v4760 = vsub.s32 %v3222, 4
  %v4761 = vsub.s32 %v3224, 4
  %v4762 = vsub.s32 %v3226, 4
  %4763 = vset.pattern.permute.xlu0 2
  %4764 = vperm.xlu0 %4763, %v4755
  %v4765 = vpop.permute.xlu0 %4764
  %v4766 = vlaneseq
  %v4767 = vshrl.u32 %v4766, 7
  %v4768 = vsub.s32 0, %v4767
  %v4769 = vrot.slane %v4765, %v4768
  %4770 = vset.pattern.permute.xlu0 2
  %4771 = vperm.xlu0 %4770, %v4756
  %v4772 = vpop.permute.xlu0 %4771
  %v4773 = vlaneseq
  %v4774 = vshrl.u32 %v4773, 7
  %v4775 = vsub.s32 0, %v4774
  %v4776 = vrot.slane %v4772, %v4775
  %4777 = vset.pattern.permute.xlu0 2
  %4778 = vperm.xlu0 %4777, %v4757
  %v4779 = vpop.permute.xlu0 %4778
  %v4780 = vlaneseq
  %v4781 = vshrl.u32 %v4780, 7
  %v4782 = vsub.s32 0, %v4781
  %v4783 = vrot.slane %v4779, %v4782
  %4784 = vset.pattern.permute.xlu0 2
  %4785 = vperm.xlu0 %4784, %v4758
  %v4786 = vpop.permute.xlu0 %4785
  %v4787 = vlaneseq
  %v4788 = vshrl.u32 %v4787, 7
  %v4789 = vsub.s32 0, %v4788
  %v4790 = vrot.slane %v4786, %v4789
  %4791 = vset.pattern.permute.xlu0 2
  %4792 = vperm.xlu0 %4791, %v4759
  %v4793 = vpop.permute.xlu0 %4792
  %v4794 = vlaneseq
  %v4795 = vshrl.u32 %v4794, 7
  %v4796 = vsub.s32 0, %v4795
  %v4797 = vrot.slane %v4793, %v4796
  %4798 = vset.pattern.permute.xlu0 2
  %4799 = vperm.xlu0 %4798, %v4760
  %v4800 = vpop.permute.xlu0 %4799
  %v4801 = vlaneseq
  %v4802 = vshrl.u32 %v4801, 7
  %v4803 = vsub.s32 0, %v4802
  %v4804 = vrot.slane %v4800, %v4803
  %4805 = vset.pattern.permute.xlu0 2
  %4806 = vperm.xlu0 %4805, %v4761
  %v4807 = vpop.permute.xlu0 %4806
  %v4808 = vlaneseq
  %v4809 = vshrl.u32 %v4808, 7
  %v4810 = vsub.s32 0, %v4809
  %v4811 = vrot.slane %v4807, %v4810
  %4812 = vset.pattern.permute.xlu0 2
  %4813 = vperm.xlu0 %4812, %v4762
  %v4814 = vpop.permute.xlu0 %4813
  %v4815 = vlaneseq
  %v4816 = vshrl.u32 %v4815, 7
  %v4817 = vsub.s32 0, %v4816
  %v4818 = vrot.slane %v4814, %v4817
  %vm4819 = vcmp.ge.s32.totalorder %v29, %v4769
  %vm4820 = vcmp.ge.s32.totalorder %v30, %v4769
  %vm4821 = vcmp.ge.s32.totalorder %v29, %v4776
  %vm4822 = vcmp.ge.s32.totalorder %v30, %v4776
  %vm4823 = vcmp.ge.s32.totalorder %v29, %v4783
  %vm4824 = vcmp.ge.s32.totalorder %v30, %v4783
  %vm4825 = vcmp.ge.s32.totalorder %v29, %v4790
  %vm4826 = vcmp.ge.s32.totalorder %v30, %v4790
  %vm4827 = vcmp.ge.s32.totalorder %v29, %v4797
  %vm4828 = vcmp.ge.s32.totalorder %v30, %v4797
  %vm4829 = vcmp.ge.s32.totalorder %v29, %v4804
  %vm4830 = vcmp.ge.s32.totalorder %v30, %v4804
  %vm4831 = vcmp.ge.s32.totalorder %v29, %v4811
  %vm4832 = vcmp.ge.s32.totalorder %v30, %v4811
  %vm4833 = vcmp.ge.s32.totalorder %v29, %v4818
  %vm4834 = vcmp.ge.s32.totalorder %v30, %v4818
  %v4835 = vadd.s32 %v4755, 8
  %v4836 = vadd.s32 %v4756, 8
  %v4837 = vadd.s32 %v4757, 8
  %v4838 = vadd.s32 %v4758, 8
  %v4839 = vadd.s32 %v4759, 8
  %v4840 = vadd.s32 %v4760, 8
  %v4841 = vadd.s32 %v4761, 8
  %v4842 = vadd.s32 %v4762, 8
  %4843 = vset.pattern.permute.xlu0 2
  %4844 = vperm.xlu0 %4843, %v4835
  %v4845 = vpop.permute.xlu0 %4844
  %v4846 = vlaneseq
  %v4847 = vshrl.u32 %v4846, 7
  %v4848 = vsub.s32 0, %v4847
  %v4849 = vrot.slane %v4845, %v4848
  %4850 = vset.pattern.permute.xlu0 2
  %4851 = vperm.xlu0 %4850, %v4836
  %v4852 = vpop.permute.xlu0 %4851
  %v4853 = vlaneseq
  %v4854 = vshrl.u32 %v4853, 7
  %v4855 = vsub.s32 0, %v4854
  %v4856 = vrot.slane %v4852, %v4855
  %4857 = vset.pattern.permute.xlu0 2
  %4858 = vperm.xlu0 %4857, %v4837
  %v4859 = vpop.permute.xlu0 %4858
  %v4860 = vlaneseq
  %v4861 = vshrl.u32 %v4860, 7
  %v4862 = vsub.s32 0, %v4861
  %v4863 = vrot.slane %v4859, %v4862
  %4864 = vset.pattern.permute.xlu0 2
  %4865 = vperm.xlu0 %4864, %v4838
  %v4866 = vpop.permute.xlu0 %4865
  %v4867 = vlaneseq
  %v4868 = vshrl.u32 %v4867, 7
  %v4869 = vsub.s32 0, %v4868
  %v4870 = vrot.slane %v4866, %v4869
  %4871 = vset.pattern.permute.xlu0 2
  %4872 = vperm.xlu0 %4871, %v4839
  %v4873 = vpop.permute.xlu0 %4872
  %v4874 = vlaneseq
  %v4875 = vshrl.u32 %v4874, 7
  %v4876 = vsub.s32 0, %v4875
  %v4877 = vrot.slane %v4873, %v4876
  %4878 = vset.pattern.permute.xlu0 2
  %4879 = vperm.xlu0 %4878, %v4840
  %v4880 = vpop.permute.xlu0 %4879
  %v4881 = vlaneseq
  %v4882 = vshrl.u32 %v4881, 7
  %v4883 = vsub.s32 0, %v4882
  %v4884 = vrot.slane %v4880, %v4883
  %4885 = vset.pattern.permute.xlu0 2
  %4886 = vperm.xlu0 %4885, %v4841
  %v4887 = vpop.permute.xlu0 %4886
  %v4888 = vlaneseq
  %v4889 = vshrl.u32 %v4888, 7
  %v4890 = vsub.s32 0, %v4889
  %v4891 = vrot.slane %v4887, %v4890
  %4892 = vset.pattern.permute.xlu0 2
  %4893 = vperm.xlu0 %4892, %v4842
  %v4894 = vpop.permute.xlu0 %4893
  %v4895 = vlaneseq
  %v4896 = vshrl.u32 %v4895, 7
  %v4897 = vsub.s32 0, %v4896
  %v4898 = vrot.slane %v4894, %v4897
  %vm4899 = vcmp.lt.s32.totalorder %v29, %v4849
  %vm4900 = vcmp.lt.s32.totalorder %v30, %v4849
  %vm4901 = vcmp.lt.s32.totalorder %v29, %v4856
  %vm4902 = vcmp.lt.s32.totalorder %v30, %v4856
  %vm4903 = vcmp.lt.s32.totalorder %v29, %v4863
  %vm4904 = vcmp.lt.s32.totalorder %v30, %v4863
  %vm4905 = vcmp.lt.s32.totalorder %v29, %v4870
  %vm4906 = vcmp.lt.s32.totalorder %v30, %v4870
  %vm4907 = vcmp.lt.s32.totalorder %v29, %v4877
  %vm4908 = vcmp.lt.s32.totalorder %v30, %v4877
  %vm4909 = vcmp.lt.s32.totalorder %v29, %v4884
  %vm4910 = vcmp.lt.s32.totalorder %v30, %v4884
  %vm4911 = vcmp.lt.s32.totalorder %v29, %v4891
  %vm4912 = vcmp.lt.s32.totalorder %v30, %v4891
  %vm4913 = vcmp.lt.s32.totalorder %v29, %v4898
  %vm4914 = vcmp.lt.s32.totalorder %v30, %v4898
  %vm4915 = vmand %vm4819, %vm4899
  %vm4916 = vmand %vm4820, %vm4900
  %vm4917 = vmand %vm4821, %vm4901
  %vm4918 = vmand %vm4822, %vm4902
  %vm4919 = vmand %vm4823, %vm4903
  %vm4920 = vmand %vm4824, %vm4904
  %vm4921 = vmand %vm4825, %vm4905
  %vm4922 = vmand %vm4826, %vm4906
  %vm4923 = vmand %vm4827, %vm4907
  %vm4924 = vmand %vm4828, %vm4908
  %vm4925 = vmand %vm4829, %vm4909
  %vm4926 = vmand %vm4830, %vm4910
  %vm4927 = vmand %vm4831, %vm4911
  %vm4928 = vmand %vm4832, %vm4912
  %vm4929 = vmand %vm4833, %vm4913
  %vm4930 = vmand %vm4834, %vm4914
  %4931 = vset.pattern.permute.xlu0 3
  %4932 = vperm.xlu0 %4931, %v4755
  %v4933 = vpop.permute.xlu0 %4932
  %v4934 = vlaneseq
  %v4935 = vshrl.u32 %v4934, 7
  %v4936 = vsub.s32 0, %v4935
  %v4937 = vrot.slane %v4933, %v4936
  %4938 = vset.pattern.permute.xlu0 3
  %4939 = vperm.xlu0 %4938, %v4756
  %v4940 = vpop.permute.xlu0 %4939
  %v4941 = vlaneseq
  %v4942 = vshrl.u32 %v4941, 7
  %v4943 = vsub.s32 0, %v4942
  %v4944 = vrot.slane %v4940, %v4943
  %4945 = vset.pattern.permute.xlu0 3
  %4946 = vperm.xlu0 %4945, %v4757
  %v4947 = vpop.permute.xlu0 %4946
  %v4948 = vlaneseq
  %v4949 = vshrl.u32 %v4948, 7
  %v4950 = vsub.s32 0, %v4949
  %v4951 = vrot.slane %v4947, %v4950
  %4952 = vset.pattern.permute.xlu0 3
  %4953 = vperm.xlu0 %4952, %v4758
  %v4954 = vpop.permute.xlu0 %4953
  %v4955 = vlaneseq
  %v4956 = vshrl.u32 %v4955, 7
  %v4957 = vsub.s32 0, %v4956
  %v4958 = vrot.slane %v4954, %v4957
  %4959 = vset.pattern.permute.xlu0 3
  %4960 = vperm.xlu0 %4959, %v4759
  %v4961 = vpop.permute.xlu0 %4960
  %v4962 = vlaneseq
  %v4963 = vshrl.u32 %v4962, 7
  %v4964 = vsub.s32 0, %v4963
  %v4965 = vrot.slane %v4961, %v4964
  %4966 = vset.pattern.permute.xlu0 3
  %4967 = vperm.xlu0 %4966, %v4760
  %v4968 = vpop.permute.xlu0 %4967
  %v4969 = vlaneseq
  %v4970 = vshrl.u32 %v4969, 7
  %v4971 = vsub.s32 0, %v4970
  %v4972 = vrot.slane %v4968, %v4971
  %4973 = vset.pattern.permute.xlu0 3
  %4974 = vperm.xlu0 %4973, %v4761
  %v4975 = vpop.permute.xlu0 %4974
  %v4976 = vlaneseq
  %v4977 = vshrl.u32 %v4976, 7
  %v4978 = vsub.s32 0, %v4977
  %v4979 = vrot.slane %v4975, %v4978
  %4980 = vset.pattern.permute.xlu0 3
  %4981 = vperm.xlu0 %4980, %v4762
  %v4982 = vpop.permute.xlu0 %4981
  %v4983 = vlaneseq
  %v4984 = vshrl.u32 %v4983, 7
  %v4985 = vsub.s32 0, %v4984
  %v4986 = vrot.slane %v4982, %v4985
  %vm4987 = vcmp.ge.s32.totalorder %v27, %v4937
  %vm4988 = vcmp.ge.s32.totalorder %v28, %v4937
  %vm4989 = vcmp.ge.s32.totalorder %v27, %v4944
  %vm4990 = vcmp.ge.s32.totalorder %v28, %v4944
  %vm4991 = vcmp.ge.s32.totalorder %v27, %v4951
  %vm4992 = vcmp.ge.s32.totalorder %v28, %v4951
  %vm4993 = vcmp.ge.s32.totalorder %v27, %v4958
  %vm4994 = vcmp.ge.s32.totalorder %v28, %v4958
  %vm4995 = vcmp.ge.s32.totalorder %v27, %v4965
  %vm4996 = vcmp.ge.s32.totalorder %v28, %v4965
  %vm4997 = vcmp.ge.s32.totalorder %v27, %v4972
  %vm4998 = vcmp.ge.s32.totalorder %v28, %v4972
  %vm4999 = vcmp.ge.s32.totalorder %v27, %v4979
  %vm5000 = vcmp.ge.s32.totalorder %v28, %v4979
  %vm5001 = vcmp.ge.s32.totalorder %v27, %v4986
  %vm5002 = vcmp.ge.s32.totalorder %v28, %v4986
  %vm5003 = vmand %vm4915, %vm4987
  %vm5004 = vmand %vm4916, %vm4988
  %vm5005 = vmand %vm4917, %vm4989
  %vm5006 = vmand %vm4918, %vm4990
  %vm5007 = vmand %vm4919, %vm4991
  %vm5008 = vmand %vm4920, %vm4992
  %vm5009 = vmand %vm4921, %vm4993
  %vm5010 = vmand %vm4922, %vm4994
  %vm5011 = vmand %vm4923, %vm4995
  %vm5012 = vmand %vm4924, %vm4996
  %vm5013 = vmand %vm4925, %vm4997
  %vm5014 = vmand %vm4926, %vm4998
  %vm5015 = vmand %vm4927, %vm4999
  %vm5016 = vmand %vm4928, %vm5000
  %vm5017 = vmand %vm4929, %vm5001
  %vm5018 = vmand %vm4930, %vm5002
  %5019 = vset.pattern.permute.xlu0 3
  %5020 = vperm.xlu0 %5019, %v4835
  %v5021 = vpop.permute.xlu0 %5020
  %v5022 = vlaneseq
  %v5023 = vshrl.u32 %v5022, 7
  %v5024 = vsub.s32 0, %v5023
  %v5025 = vrot.slane %v5021, %v5024
  %5026 = vset.pattern.permute.xlu0 3
  %5027 = vperm.xlu0 %5026, %v4836
  %v5028 = vpop.permute.xlu0 %5027
  %v5029 = vlaneseq
  %v5030 = vshrl.u32 %v5029, 7
  %v5031 = vsub.s32 0, %v5030
  %v5032 = vrot.slane %v5028, %v5031
  %5033 = vset.pattern.permute.xlu0 3
  %5034 = vperm.xlu0 %5033, %v4837
  %v5035 = vpop.permute.xlu0 %5034
  %v5036 = vlaneseq
  %v5037 = vshrl.u32 %v5036, 7
  %v5038 = vsub.s32 0, %v5037
  %v5039 = vrot.slane %v5035, %v5038
  %5040 = vset.pattern.permute.xlu0 3
  %5041 = vperm.xlu0 %5040, %v4838
  %v5042 = vpop.permute.xlu0 %5041
  %v5043 = vlaneseq
  %v5044 = vshrl.u32 %v5043, 7
  %v5045 = vsub.s32 0, %v5044
  %v5046 = vrot.slane %v5042, %v5045
  %5047 = vset.pattern.permute.xlu0 3
  %5048 = vperm.xlu0 %5047, %v4839
  %v5049 = vpop.permute.xlu0 %5048
  %v5050 = vlaneseq
  %v5051 = vshrl.u32 %v5050, 7
  %v5052 = vsub.s32 0, %v5051
  %v5053 = vrot.slane %v5049, %v5052
  %5054 = vset.pattern.permute.xlu0 3
  %5055 = vperm.xlu0 %5054, %v4840
  %v5056 = vpop.permute.xlu0 %5055
  %v5057 = vlaneseq
  %v5058 = vshrl.u32 %v5057, 7
  %v5059 = vsub.s32 0, %v5058
  %v5060 = vrot.slane %v5056, %v5059
  %5061 = vset.pattern.permute.xlu0 3
  %5062 = vperm.xlu0 %5061, %v4841
  %v5063 = vpop.permute.xlu0 %5062
  %v5064 = vlaneseq
  %v5065 = vshrl.u32 %v5064, 7
  %v5066 = vsub.s32 0, %v5065
  %v5067 = vrot.slane %v5063, %v5066
  %5068 = vset.pattern.permute.xlu0 3
  %5069 = vperm.xlu0 %5068, %v4842
  %v5070 = vpop.permute.xlu0 %5069
  %v5071 = vlaneseq
  %v5072 = vshrl.u32 %v5071, 7
  %v5073 = vsub.s32 0, %v5072
  %v5074 = vrot.slane %v5070, %v5073
  %vm5075 = vcmp.lt.s32.totalorder %v27, %v5025
  %vm5076 = vcmp.lt.s32.totalorder %v28, %v5025
  %vm5077 = vcmp.lt.s32.totalorder %v27, %v5032
  %vm5078 = vcmp.lt.s32.totalorder %v28, %v5032
  %vm5079 = vcmp.lt.s32.totalorder %v27, %v5039
  %vm5080 = vcmp.lt.s32.totalorder %v28, %v5039
  %vm5081 = vcmp.lt.s32.totalorder %v27, %v5046
  %vm5082 = vcmp.lt.s32.totalorder %v28, %v5046
  %vm5083 = vcmp.lt.s32.totalorder %v27, %v5053
  %vm5084 = vcmp.lt.s32.totalorder %v28, %v5053
  %vm5085 = vcmp.lt.s32.totalorder %v27, %v5060
  %vm5086 = vcmp.lt.s32.totalorder %v28, %v5060
  %vm5087 = vcmp.lt.s32.totalorder %v27, %v5067
  %vm5088 = vcmp.lt.s32.totalorder %v28, %v5067
  %vm5089 = vcmp.lt.s32.totalorder %v27, %v5074
  %vm5090 = vcmp.lt.s32.totalorder %v28, %v5074
  %vm5091 = vmand %vm5003, %vm5075
  %vm5092 = vmand %vm5004, %vm5076
  %vm5093 = vmand %vm5005, %vm5077
  %vm5094 = vmand %vm5006, %vm5078
  %vm5095 = vmand %vm5007, %vm5079
  %vm5096 = vmand %vm5008, %vm5080
  %vm5097 = vmand %vm5009, %vm5081
  %vm5098 = vmand %vm5010, %vm5082
  %vm5099 = vmand %vm5011, %vm5083
  %vm5100 = vmand %vm5012, %vm5084
  %vm5101 = vmand %vm5013, %vm5085
  %vm5102 = vmand %vm5014, %vm5086
  %vm5103 = vmand %vm5015, %vm5087
  %vm5104 = vmand %vm5016, %vm5088
  %vm5105 = vmand %vm5017, %vm5089
  %vm5106 = vmand %vm5018, %vm5090
  %v5107 = vsel %vm5091, 1, 0
  %v5108 = vsel %vm5092, 1, 0
  %v5109 = vsel %vm5093, 1, 0
  %v5110 = vsel %vm5094, 1, 0
  %v5111 = vsel %vm5095, 1, 0
  %v5112 = vsel %vm5096, 1, 0
  %v5113 = vsel %vm5097, 1, 0
  %v5114 = vsel %vm5098, 1, 0
  %v5115 = vsel %vm5099, 1, 0
  %v5116 = vsel %vm5100, 1, 0
  %v5117 = vsel %vm5101, 1, 0
  %v5118 = vsel %vm5102, 1, 0
  %v5119 = vsel %vm5103, 1, 0
  %v5120 = vsel %vm5104, 1, 0
  %v5121 = vsel %vm5105, 1, 0
  %v5122 = vsel %vm5106, 1, 0
  %vm5123 = vcmp.eq.s32.totalorder %v5107, 1
  %vm5124 = vcmp.eq.s32.totalorder %v5108, 1
  %vm5125 = vcmp.eq.s32.totalorder %v5109, 1
  %vm5126 = vcmp.eq.s32.totalorder %v5110, 1
  %vm5127 = vcmp.eq.s32.totalorder %v5111, 1
  %vm5128 = vcmp.eq.s32.totalorder %v5112, 1
  %vm5129 = vcmp.eq.s32.totalorder %v5113, 1
  %vm5130 = vcmp.eq.s32.totalorder %v5114, 1
  %vm5131 = vcmp.eq.s32.totalorder %v5115, 1
  %vm5132 = vcmp.eq.s32.totalorder %v5116, 1
  %vm5133 = vcmp.eq.s32.totalorder %v5117, 1
  %vm5134 = vcmp.eq.s32.totalorder %v5118, 1
  %vm5135 = vcmp.eq.s32.totalorder %v5119, 1
  %vm5136 = vcmp.eq.s32.totalorder %v5120, 1
  %vm5137 = vcmp.eq.s32.totalorder %v5121, 1
  %vm5138 = vcmp.eq.s32.totalorder %v5122, 1
  %v5139 = vsel %vm5123, 0.0, %v4739
  %v5140 = vsel %vm5124, 0.0, %v4740
  %v5141 = vsel %vm5125, 0.0, %v4741
  %v5142 = vsel %vm5126, 0.0, %v4742
  %v5143 = vsel %vm5127, 0.0, %v4743
  %v5144 = vsel %vm5128, 0.0, %v4744
  %v5145 = vsel %vm5129, 0.0, %v4745
  %v5146 = vsel %vm5130, 0.0, %v4746
  %v5147 = vsel %vm5131, 0.0, %v4747
  %v5148 = vsel %vm5132, 0.0, %v4748
  %v5149 = vsel %vm5133, 0.0, %v4749
  %v5150 = vsel %vm5134, 0.0, %v4750
  %v5151 = vsel %vm5135, 0.0, %v4751
  %v5152 = vsel %vm5136, 0.0, %v4752
  %v5153 = vsel %vm5137, 0.0, %v4753
  %v5154 = vsel %vm5138, 0.0, %v4754
  %v5171 = vcombine.low %v5139, %v5140
  %v5172 = vcombine.low %v5141, %v5142
  %v5173 = vcombine.low %v5143, %v5144
  %v5174 = vcombine.low %v5145, %v5146
  %v5175 = vcombine.low %v5147, %v5148
  %v5176 = vcombine.low %v5149, %v5150
  %v5177 = vcombine.low %v5151, %v5152
  %v5178 = vcombine.low %v5153, %v5154
  %s5187 = scalar_lea.vmem %s3, 64
  %5188 = vst [vmem:[%s5187] sm:$0x77] %v5171
  %5189 = vst [vmem:[%s5187 + $0x8] sm:$0x77] %v5172
  %5190 = vst [vmem:[%s5187 + $0x10] sm:$0x77] %v5173
  %5191 = vst [vmem:[%s5187 + $0x18] sm:$0x77] %v5174
  %5192 = vst [vmem:[%s5187 + $0x20] sm:$0x77] %v5175
  %5193 = vst [vmem:[%s5187 + $0x28] sm:$0x77] %v5176
  %5194 = vst [vmem:[%s5187 + $0x30] sm:$0x77] %v5177
  %5195 = vst [vmem:[%s5187 + $0x38] sm:$0x77] %v5178
  %s5196 = scalar_lea.vmem %s0, 128
  %v5197 = vld [vmem:[%s5196] sm:$0x77]
  %v5198 = vld [vmem:[%s5196 + $0x8] sm:$0x77]
  %v5199 = vld [vmem:[%s5196 + $0x10] sm:$0x77]
  %v5200 = vld [vmem:[%s5196 + $0x18] sm:$0x77]
  %v5201 = vld [vmem:[%s5196 + $0x20] sm:$0x77]
  %v5202 = vld [vmem:[%s5196 + $0x28] sm:$0x77]
  %v5203 = vld [vmem:[%s5196 + $0x30] sm:$0x77]
  %v5204 = vld [vmem:[%s5196 + $0x38] sm:$0x77]
  %v5205 = vld [vmem:[%s1 + $0x10] sm:$0xff]
  %v5206 = vld [vmem:[%s2 + $0x10] sm:$0xff]
  %v5208 = vcombine.high %v5205, %v5205
  %v5210 = vunpack.c.l.s4 1966171168
  %v5211 = vunpack.c.0.s8 %v5210
  %v5212 = vlaneseq
  %v5213 = vshrl.u32 %v5212, 7
  %v5214 = vsub.s32 %v5211, %v5213
  %v5215 = vrot.slane %v5205, %v5214
  %v5217 = vunpack.c.l.s4 1966171168
  %v5218 = vunpack.c.0.s8 %v5217
  %v5219 = vlaneseq
  %v5220 = vshrl.u32 %v5219, 7
  %v5221 = vsub.s32 %v5218, %v5220
  %v5222 = vrot.slane %v5208, %v5221
  %v5223 = vcombine.high %v5215, %v5215
  %v5224 = vcombine.high %v5222, %v5222
  %v5226 = vunpack.c.l.s4 1966171168
  %v5227 = vunpack.c.0.s8 %v5226
  %v5228 = vlaneseq
  %v5229 = vshrl.u32 %v5228, 7
  %v5230 = vsub.s32 %v5227, %v5229
  %v5231 = vrot.slane %v5215, %v5230
  %v5233 = vunpack.c.l.s4 1966171168
  %v5234 = vunpack.c.0.s8 %v5233
  %v5235 = vlaneseq
  %v5236 = vshrl.u32 %v5235, 7
  %v5237 = vsub.s32 %v5234, %v5236
  %v5238 = vrot.slane %v5222, %v5237
  %v5240 = vunpack.c.l.s4 1966171168
  %v5241 = vunpack.c.0.s8 %v5240
  %v5242 = vlaneseq
  %v5243 = vshrl.u32 %v5242, 7
  %v5244 = vsub.s32 %v5241, %v5243
  %v5245 = vrot.slane %v5223, %v5244
  %v5247 = vunpack.c.l.s4 1966171168
  %v5248 = vunpack.c.0.s8 %v5247
  %v5249 = vlaneseq
  %v5250 = vshrl.u32 %v5249, 7
  %v5251 = vsub.s32 %v5248, %v5250
  %v5252 = vrot.slane %v5224, %v5251
  %v5253 = vcombine.high %v5231, %v5231
  %v5254 = vcombine.high %v5238, %v5238
  %v5255 = vcombine.high %v5245, %v5245
  %v5256 = vcombine.high %v5252, %v5252
  %v5257 = vlaneseq
  %v5258 = vshrl.u32 %v5257, 7
  %v5259 = vsub.s32 0, %v5258
  %v5260 = vrot.slane %v5231, %v5259
  %v5261 = vlaneseq
  %v5262 = vshrl.u32 %v5261, 7
  %v5263 = vsub.s32 0, %v5262
  %v5264 = vrot.slane %v5245, %v5263
  %v5265 = vlaneseq
  %v5266 = vshrl.u32 %v5265, 7
  %v5267 = vsub.s32 0, %v5266
  %v5268 = vrot.slane %v5253, %v5267
  %v5269 = vlaneseq
  %v5270 = vshrl.u32 %v5269, 7
  %v5271 = vsub.s32 0, %v5270
  %v5272 = vrot.slane %v5255, %v5271
  %v5273 = vlaneseq
  %v5274 = vshrl.u32 %v5273, 7
  %v5275 = vsub.s32 0, %v5274
  %v5276 = vrot.slane %v5238, %v5275
  %v5277 = vlaneseq
  %v5278 = vshrl.u32 %v5277, 7
  %v5279 = vsub.s32 0, %v5278
  %v5280 = vrot.slane %v5252, %v5279
  %v5281 = vlaneseq
  %v5282 = vshrl.u32 %v5281, 7
  %v5283 = vsub.s32 0, %v5282
  %v5284 = vrot.slane %v5254, %v5283
  %v5285 = vlaneseq
  %v5286 = vshrl.u32 %v5285, 7
  %v5287 = vsub.s32 0, %v5286
  %v5288 = vrot.slane %v5256, %v5287
  %5289 = vset.pattern.permute.xlu0 0
  %5290 = vperm.xlu0 %5289, %v5260
  %v5291 = vpop.permute.xlu0 %5290
  %5293 = vset.pattern.permute.xlu0 0
  %5294 = vperm.xlu0 %5293, %v5264
  %v5295 = vpop.permute.xlu0 %5294
  %5297 = vset.pattern.permute.xlu0 0
  %5298 = vperm.xlu0 %5297, %v5268
  %v5299 = vpop.permute.xlu0 %5298
  %5301 = vset.pattern.permute.xlu0 0
  %5302 = vperm.xlu0 %5301, %v5272
  %v5303 = vpop.permute.xlu0 %5302
  %5305 = vset.pattern.permute.xlu0 0
  %5306 = vperm.xlu0 %5305, %v5276
  %v5307 = vpop.permute.xlu0 %5306
  %5309 = vset.pattern.permute.xlu0 0
  %5310 = vperm.xlu0 %5309, %v5280
  %v5311 = vpop.permute.xlu0 %5310
  %5313 = vset.pattern.permute.xlu0 0
  %5314 = vperm.xlu0 %5313, %v5284
  %v5315 = vpop.permute.xlu0 %5314
  %5317 = vset.pattern.permute.xlu0 0
  %5318 = vperm.xlu0 %5317, %v5288
  %v5319 = vpop.permute.xlu0 %5318
  %v5321 = vadd.f32 %v5197, %v5291
  %v5322 = vadd.f32 %v5198, %v5295
  %v5323 = vadd.f32 %v5199, %v5299
  %v5324 = vadd.f32 %v5200, %v5303
  %v5325 = vadd.f32 %v5201, %v5307
  %v5326 = vadd.f32 %v5202, %v5311
  %v5327 = vadd.f32 %v5203, %v5315
  %v5328 = vadd.f32 %v5204, %v5319
  %v5337 = vcombine.high %v5321, %v5321
  %v5338 = vcombine.high %v5322, %v5322
  %v5339 = vcombine.high %v5323, %v5323
  %v5340 = vcombine.high %v5324, %v5324
  %v5341 = vcombine.high %v5325, %v5325
  %v5342 = vcombine.high %v5326, %v5326
  %v5343 = vcombine.high %v5327, %v5327
  %v5344 = vcombine.high %v5328, %v5328
  %v5353 = vsel %vm177, %v5321, 0.0
  %v5354 = vrot.slane %v5353, 4
  %v5355 = vadd.f32 %v5353, %v5354
  %v5356 = vrot.slane %v5355, 2
  %v5357 = vadd.f32 %v5355, %v5356
  %v5358 = vrot.slane %v5357, 1
  %v5359 = vadd.f32 %v5357, %v5358
  %v5360 = vsel %vm177, %v5337, 0.0
  %v5361 = vrot.slane %v5360, 4
  %v5362 = vadd.f32 %v5360, %v5361
  %v5363 = vrot.slane %v5362, 2
  %v5364 = vadd.f32 %v5362, %v5363
  %v5365 = vrot.slane %v5364, 1
  %v5366 = vadd.f32 %v5364, %v5365
  %v5367 = vsel %vm177, %v5322, 0.0
  %v5368 = vrot.slane %v5367, 4
  %v5369 = vadd.f32 %v5367, %v5368
  %v5370 = vrot.slane %v5369, 2
  %v5371 = vadd.f32 %v5369, %v5370
  %v5372 = vrot.slane %v5371, 1
  %v5373 = vadd.f32 %v5371, %v5372
  %v5374 = vsel %vm177, %v5338, 0.0
  %v5375 = vrot.slane %v5374, 4
  %v5376 = vadd.f32 %v5374, %v5375
  %v5377 = vrot.slane %v5376, 2
  %v5378 = vadd.f32 %v5376, %v5377
  %v5379 = vrot.slane %v5378, 1
  %v5380 = vadd.f32 %v5378, %v5379
  %v5381 = vsel %vm177, %v5323, 0.0
  %v5382 = vrot.slane %v5381, 4
  %v5383 = vadd.f32 %v5381, %v5382
  %v5384 = vrot.slane %v5383, 2
  %v5385 = vadd.f32 %v5383, %v5384
  %v5386 = vrot.slane %v5385, 1
  %v5387 = vadd.f32 %v5385, %v5386
  %v5388 = vsel %vm177, %v5339, 0.0
  %v5389 = vrot.slane %v5388, 4
  %v5390 = vadd.f32 %v5388, %v5389
  %v5391 = vrot.slane %v5390, 2
  %v5392 = vadd.f32 %v5390, %v5391
  %v5393 = vrot.slane %v5392, 1
  %v5394 = vadd.f32 %v5392, %v5393
  %v5395 = vsel %vm177, %v5324, 0.0
  %v5396 = vrot.slane %v5395, 4
  %v5397 = vadd.f32 %v5395, %v5396
  %v5398 = vrot.slane %v5397, 2
  %v5399 = vadd.f32 %v5397, %v5398
  %v5400 = vrot.slane %v5399, 1
  %v5401 = vadd.f32 %v5399, %v5400
  %v5402 = vsel %vm177, %v5340, 0.0
  %v5403 = vrot.slane %v5402, 4
  %v5404 = vadd.f32 %v5402, %v5403
  %v5405 = vrot.slane %v5404, 2
  %v5406 = vadd.f32 %v5404, %v5405
  %v5407 = vrot.slane %v5406, 1
  %v5408 = vadd.f32 %v5406, %v5407
  %v5409 = vsel %vm177, %v5325, 0.0
  %v5410 = vrot.slane %v5409, 4
  %v5411 = vadd.f32 %v5409, %v5410
  %v5412 = vrot.slane %v5411, 2
  %v5413 = vadd.f32 %v5411, %v5412
  %v5414 = vrot.slane %v5413, 1
  %v5415 = vadd.f32 %v5413, %v5414
  %v5416 = vsel %vm177, %v5341, 0.0
  %v5417 = vrot.slane %v5416, 4
  %v5418 = vadd.f32 %v5416, %v5417
  %v5419 = vrot.slane %v5418, 2
  %v5420 = vadd.f32 %v5418, %v5419
  %v5421 = vrot.slane %v5420, 1
  %v5422 = vadd.f32 %v5420, %v5421
  %v5423 = vsel %vm177, %v5326, 0.0
  %v5424 = vrot.slane %v5423, 4
  %v5425 = vadd.f32 %v5423, %v5424
  %v5426 = vrot.slane %v5425, 2
  %v5427 = vadd.f32 %v5425, %v5426
  %v5428 = vrot.slane %v5427, 1
  %v5429 = vadd.f32 %v5427, %v5428
  %v5430 = vsel %vm177, %v5342, 0.0
  %v5431 = vrot.slane %v5430, 4
  %v5432 = vadd.f32 %v5430, %v5431
  %v5433 = vrot.slane %v5432, 2
  %v5434 = vadd.f32 %v5432, %v5433
  %v5435 = vrot.slane %v5434, 1
  %v5436 = vadd.f32 %v5434, %v5435
  %v5437 = vsel %vm177, %v5327, 0.0
  %v5438 = vrot.slane %v5437, 4
  %v5439 = vadd.f32 %v5437, %v5438
  %v5440 = vrot.slane %v5439, 2
  %v5441 = vadd.f32 %v5439, %v5440
  %v5442 = vrot.slane %v5441, 1
  %v5443 = vadd.f32 %v5441, %v5442
  %v5444 = vsel %vm177, %v5343, 0.0
  %v5445 = vrot.slane %v5444, 4
  %v5446 = vadd.f32 %v5444, %v5445
  %v5447 = vrot.slane %v5446, 2
  %v5448 = vadd.f32 %v5446, %v5447
  %v5449 = vrot.slane %v5448, 1
  %v5450 = vadd.f32 %v5448, %v5449
  %v5451 = vsel %vm177, %v5328, 0.0
  %v5452 = vrot.slane %v5451, 4
  %v5453 = vadd.f32 %v5451, %v5452
  %v5454 = vrot.slane %v5453, 2
  %v5455 = vadd.f32 %v5453, %v5454
  %v5456 = vrot.slane %v5455, 1
  %v5457 = vadd.f32 %v5455, %v5456
  %v5458 = vsel %vm177, %v5344, 0.0
  %v5459 = vrot.slane %v5458, 4
  %v5460 = vadd.f32 %v5458, %v5459
  %v5461 = vrot.slane %v5460, 2
  %v5462 = vadd.f32 %v5460, %v5461
  %v5463 = vrot.slane %v5462, 1
  %v5464 = vadd.f32 %v5462, %v5463
  %v5465 = vmul.f32 %v5359, %v290
  %v5466 = vmul.f32 %v5366, %v290
  %v5467 = vmul.f32 %v5373, %v290
  %v5468 = vmul.f32 %v5380, %v290
  %v5469 = vmul.f32 %v5387, %v290
  %v5470 = vmul.f32 %v5394, %v290
  %v5471 = vmul.f32 %v5401, %v290
  %v5472 = vmul.f32 %v5408, %v290
  %v5473 = vmul.f32 %v5415, %v290
  %v5474 = vmul.f32 %v5422, %v290
  %v5475 = vmul.f32 %v5429, %v290
  %v5476 = vmul.f32 %v5436, %v290
  %v5477 = vmul.f32 %v5443, %v290
  %v5478 = vmul.f32 %v5450, %v290
  %v5479 = vmul.f32 %v5457, %v290
  %v5480 = vmul.f32 %v5464, %v290
  %v5497 = vcombine.low %v5465, %v5466
  %v5498 = vcombine.low %v5467, %v5468
  %v5499 = vcombine.low %v5469, %v5470
  %v5500 = vcombine.low %v5471, %v5472
  %v5501 = vcombine.low %v5473, %v5474
  %v5502 = vcombine.low %v5475, %v5476
  %v5503 = vcombine.low %v5477, %v5478
  %v5504 = vcombine.low %v5479, %v5480
  %v5513 = vsub.f32 %v5321, %v5497
  %v5514 = vsub.f32 %v5322, %v5498
  %v5515 = vsub.f32 %v5323, %v5499
  %v5516 = vsub.f32 %v5324, %v5500
  %v5517 = vsub.f32 %v5325, %v5501
  %v5518 = vsub.f32 %v5326, %v5502
  %v5519 = vsub.f32 %v5327, %v5503
  %v5520 = vsub.f32 %v5328, %v5504
  %5521 = vset.pattern.permute.xlu0 1
  %5522 = vperm.xlu0 %5521, %v5260
  %v5523 = vpop.permute.xlu0 %5522
  %5525 = vset.pattern.permute.xlu0 1
  %5526 = vperm.xlu0 %5525, %v5264
  %v5527 = vpop.permute.xlu0 %5526
  %5529 = vset.pattern.permute.xlu0 1
  %5530 = vperm.xlu0 %5529, %v5268
  %v5531 = vpop.permute.xlu0 %5530
  %5533 = vset.pattern.permute.xlu0 1
  %5534 = vperm.xlu0 %5533, %v5272
  %v5535 = vpop.permute.xlu0 %5534
  %5537 = vset.pattern.permute.xlu0 1
  %5538 = vperm.xlu0 %5537, %v5276
  %v5539 = vpop.permute.xlu0 %5538
  %5541 = vset.pattern.permute.xlu0 1
  %5542 = vperm.xlu0 %5541, %v5280
  %v5543 = vpop.permute.xlu0 %5542
  %5545 = vset.pattern.permute.xlu0 1
  %5546 = vperm.xlu0 %5545, %v5284
  %v5547 = vpop.permute.xlu0 %5546
  %5549 = vset.pattern.permute.xlu0 1
  %5550 = vperm.xlu0 %5549, %v5288
  %v5551 = vpop.permute.xlu0 %5550
  %v5553 = vmul.f32 %v5513, %v5523
  %v5554 = vmul.f32 %v5514, %v5527
  %v5555 = vmul.f32 %v5515, %v5531
  %v5556 = vmul.f32 %v5516, %v5535
  %v5557 = vmul.f32 %v5517, %v5539
  %v5558 = vmul.f32 %v5518, %v5543
  %v5559 = vmul.f32 %v5519, %v5547
  %v5560 = vmul.f32 %v5520, %v5551
  %v5561 = vadd.f32 %v5553, %v5497
  %v5562 = vadd.f32 %v5554, %v5498
  %v5563 = vadd.f32 %v5555, %v5499
  %v5564 = vadd.f32 %v5556, %v5500
  %v5565 = vadd.f32 %v5557, %v5501
  %v5566 = vadd.f32 %v5558, %v5502
  %v5567 = vadd.f32 %v5559, %v5503
  %v5568 = vadd.f32 %v5560, %v5504
  %v5577 = vcombine.high %v5561, %v5561
  %v5578 = vcombine.high %v5562, %v5562
  %v5579 = vcombine.high %v5563, %v5563
  %v5580 = vcombine.high %v5564, %v5564
  %v5581 = vcombine.high %v5565, %v5565
  %v5582 = vcombine.high %v5566, %v5566
  %v5583 = vcombine.high %v5567, %v5567
  %v5584 = vcombine.high %v5568, %v5568
  %v5593 = vsel %vm177, %v5561, 0.0
  %v5594 = vsel %vm177, %v5577, 0.0
  %v5595 = vadd.f32 %v5593, %v5594
  %5596 = vadd.xlane.f32.xlu0 %v5595
  %v5597 = vpop.xlane.xlu0 %5596
  %v5598 = vsel %vm177, %v5562, 0.0
  %v5599 = vsel %vm177, %v5578, 0.0
  %v5600 = vadd.f32 %v5598, %v5599
  %5601 = vadd.xlane.f32.xlu0 %v5600
  %v5602 = vpop.xlane.xlu0 %5601
  %v5603 = vsel %vm177, %v5563, 0.0
  %v5604 = vsel %vm177, %v5579, 0.0
  %v5605 = vadd.f32 %v5603, %v5604
  %5606 = vadd.xlane.f32.xlu0 %v5605
  %v5607 = vpop.xlane.xlu0 %5606
  %v5608 = vsel %vm177, %v5564, 0.0
  %v5609 = vsel %vm177, %v5580, 0.0
  %v5610 = vadd.f32 %v5608, %v5609
  %5611 = vadd.xlane.f32.xlu0 %v5610
  %v5612 = vpop.xlane.xlu0 %5611
  %v5613 = vsel %vm177, %v5565, 0.0
  %v5614 = vsel %vm177, %v5581, 0.0
  %v5615 = vadd.f32 %v5613, %v5614
  %5616 = vadd.xlane.f32.xlu0 %v5615
  %v5617 = vpop.xlane.xlu0 %5616
  %v5618 = vsel %vm177, %v5566, 0.0
  %v5619 = vsel %vm177, %v5582, 0.0
  %v5620 = vadd.f32 %v5618, %v5619
  %5621 = vadd.xlane.f32.xlu0 %v5620
  %v5622 = vpop.xlane.xlu0 %5621
  %v5623 = vsel %vm177, %v5567, 0.0
  %v5624 = vsel %vm177, %v5583, 0.0
  %v5625 = vadd.f32 %v5623, %v5624
  %5626 = vadd.xlane.f32.xlu0 %v5625
  %v5627 = vpop.xlane.xlu0 %5626
  %v5628 = vsel %vm177, %v5568, 0.0
  %v5629 = vsel %vm177, %v5584, 0.0
  %v5630 = vadd.f32 %v5628, %v5629
  %5631 = vadd.xlane.f32.xlu0 %v5630
  %v5632 = vpop.xlane.xlu0 %5631
  %v5633 = vmul.f32 %v5597, %v459
  %v5634 = vmul.f32 %v5602, %v459
  %v5635 = vmul.f32 %v5607, %v459
  %v5636 = vmul.f32 %v5612, %v459
  %v5637 = vmul.f32 %v5617, %v459
  %v5638 = vmul.f32 %v5622, %v459
  %v5639 = vmul.f32 %v5627, %v459
  %v5640 = vmul.f32 %v5632, %v459
  %v5641 = vsel %vm177, %v5633, 0.0
  %v5642 = vrot.slane %v5641, 4
  %v5643 = vadd.f32 %v5641, %v5642
  %v5644 = vrot.slane %v5643, 2
  %v5645 = vadd.f32 %v5643, %v5644
  %v5646 = vrot.slane %v5645, 1
  %v5647 = vadd.f32 %v5645, %v5646
  %v5648 = vsel %vm177, %v5634, 0.0
  %v5649 = vrot.slane %v5648, 4
  %v5650 = vadd.f32 %v5648, %v5649
  %v5651 = vrot.slane %v5650, 2
  %v5652 = vadd.f32 %v5650, %v5651
  %v5653 = vrot.slane %v5652, 1
  %v5654 = vadd.f32 %v5652, %v5653
  %v5655 = vsel %vm177, %v5635, 0.0
  %v5656 = vrot.slane %v5655, 4
  %v5657 = vadd.f32 %v5655, %v5656
  %v5658 = vrot.slane %v5657, 2
  %v5659 = vadd.f32 %v5657, %v5658
  %v5660 = vrot.slane %v5659, 1
  %v5661 = vadd.f32 %v5659, %v5660
  %v5662 = vsel %vm177, %v5636, 0.0
  %v5663 = vrot.slane %v5662, 4
  %v5664 = vadd.f32 %v5662, %v5663
  %v5665 = vrot.slane %v5664, 2
  %v5666 = vadd.f32 %v5664, %v5665
  %v5667 = vrot.slane %v5666, 1
  %v5668 = vadd.f32 %v5666, %v5667
  %v5669 = vsel %vm177, %v5637, 0.0
  %v5670 = vrot.slane %v5669, 4
  %v5671 = vadd.f32 %v5669, %v5670
  %v5672 = vrot.slane %v5671, 2
  %v5673 = vadd.f32 %v5671, %v5672
  %v5674 = vrot.slane %v5673, 1
  %v5675 = vadd.f32 %v5673, %v5674
  %v5676 = vsel %vm177, %v5638, 0.0
  %v5677 = vrot.slane %v5676, 4
  %v5678 = vadd.f32 %v5676, %v5677
  %v5679 = vrot.slane %v5678, 2
  %v5680 = vadd.f32 %v5678, %v5679
  %v5681 = vrot.slane %v5680, 1
  %v5682 = vadd.f32 %v5680, %v5681
  %v5683 = vsel %vm177, %v5639, 0.0
  %v5684 = vrot.slane %v5683, 4
  %v5685 = vadd.f32 %v5683, %v5684
  %v5686 = vrot.slane %v5685, 2
  %v5687 = vadd.f32 %v5685, %v5686
  %v5688 = vrot.slane %v5687, 1
  %v5689 = vadd.f32 %v5687, %v5688
  %v5690 = vsel %vm177, %v5640, 0.0
  %v5691 = vrot.slane %v5690, 4
  %v5692 = vadd.f32 %v5690, %v5691
  %v5693 = vrot.slane %v5692, 2
  %v5694 = vadd.f32 %v5692, %v5693
  %v5695 = vrot.slane %v5694, 1
  %v5696 = vadd.f32 %v5694, %v5695
  %v5697 = vmul.f32 %v5647, %v290
  %v5698 = vmul.f32 %v5654, %v290
  %v5699 = vmul.f32 %v5661, %v290
  %v5700 = vmul.f32 %v5668, %v290
  %v5701 = vmul.f32 %v5675, %v290
  %v5702 = vmul.f32 %v5682, %v290
  %v5703 = vmul.f32 %v5689, %v290
  %v5704 = vmul.f32 %v5696, %v290
  %v5705 = vsub.f32 %v5561, %v5697
  %v5706 = vsub.f32 %v5562, %v5698
  %v5707 = vsub.f32 %v5563, %v5699
  %v5708 = vsub.f32 %v5564, %v5700
  %v5709 = vsub.f32 %v5565, %v5701
  %v5710 = vsub.f32 %v5566, %v5702
  %v5711 = vsub.f32 %v5567, %v5703
  %v5712 = vsub.f32 %v5568, %v5704
  %5713 = vset.pattern.permute.xlu0 2
  %5714 = vperm.xlu0 %5713, %v5260
  %v5715 = vpop.permute.xlu0 %5714
  %5717 = vset.pattern.permute.xlu0 2
  %5718 = vperm.xlu0 %5717, %v5264
  %v5719 = vpop.permute.xlu0 %5718
  %5721 = vset.pattern.permute.xlu0 2
  %5722 = vperm.xlu0 %5721, %v5268
  %v5723 = vpop.permute.xlu0 %5722
  %5725 = vset.pattern.permute.xlu0 2
  %5726 = vperm.xlu0 %5725, %v5272
  %v5727 = vpop.permute.xlu0 %5726
  %5729 = vset.pattern.permute.xlu0 2
  %5730 = vperm.xlu0 %5729, %v5276
  %v5731 = vpop.permute.xlu0 %5730
  %5733 = vset.pattern.permute.xlu0 2
  %5734 = vperm.xlu0 %5733, %v5280
  %v5735 = vpop.permute.xlu0 %5734
  %5737 = vset.pattern.permute.xlu0 2
  %5738 = vperm.xlu0 %5737, %v5284
  %v5739 = vpop.permute.xlu0 %5738
  %5741 = vset.pattern.permute.xlu0 2
  %5742 = vperm.xlu0 %5741, %v5288
  %v5743 = vpop.permute.xlu0 %5742
  %v5745 = vmul.f32 %v5705, %v5715
  %v5746 = vmul.f32 %v5706, %v5719
  %v5747 = vmul.f32 %v5707, %v5723
  %v5748 = vmul.f32 %v5708, %v5727
  %v5749 = vmul.f32 %v5709, %v5731
  %v5750 = vmul.f32 %v5710, %v5735
  %v5751 = vmul.f32 %v5711, %v5739
  %v5752 = vmul.f32 %v5712, %v5743
  %v5753 = vadd.f32 %v5745, %v5697
  %v5754 = vadd.f32 %v5746, %v5698
  %v5755 = vadd.f32 %v5747, %v5699
  %v5756 = vadd.f32 %v5748, %v5700
  %v5757 = vadd.f32 %v5749, %v5701
  %v5758 = vadd.f32 %v5750, %v5702
  %v5759 = vadd.f32 %v5751, %v5703
  %v5760 = vadd.f32 %v5752, %v5704
  %v5761 = vcombine.high %v5206, %v5206
  %v5763 = vunpack.c.l.s4 1966171168
  %v5764 = vunpack.c.0.s8 %v5763
  %v5765 = vlaneseq
  %v5766 = vshrl.u32 %v5765, 7
  %v5767 = vsub.s32 %v5764, %v5766
  %v5768 = vrot.slane %v5206, %v5767
  %v5770 = vunpack.c.l.s4 1966171168
  %v5771 = vunpack.c.0.s8 %v5770
  %v5772 = vlaneseq
  %v5773 = vshrl.u32 %v5772, 7
  %v5774 = vsub.s32 %v5771, %v5773
  %v5775 = vrot.slane %v5761, %v5774
  %v5776 = vcombine.high %v5768, %v5768
  %v5777 = vcombine.high %v5775, %v5775
  %v5779 = vunpack.c.l.s4 1966171168
  %v5780 = vunpack.c.0.s8 %v5779
  %v5781 = vlaneseq
  %v5782 = vshrl.u32 %v5781, 7
  %v5783 = vsub.s32 %v5780, %v5782
  %v5784 = vrot.slane %v5768, %v5783
  %v5786 = vunpack.c.l.s4 1966171168
  %v5787 = vunpack.c.0.s8 %v5786
  %v5788 = vlaneseq
  %v5789 = vshrl.u32 %v5788, 7
  %v5790 = vsub.s32 %v5787, %v5789
  %v5791 = vrot.slane %v5775, %v5790
  %v5793 = vunpack.c.l.s4 1966171168
  %v5794 = vunpack.c.0.s8 %v5793
  %v5795 = vlaneseq
  %v5796 = vshrl.u32 %v5795, 7
  %v5797 = vsub.s32 %v5794, %v5796
  %v5798 = vrot.slane %v5776, %v5797
  %v5800 = vunpack.c.l.s4 1966171168
  %v5801 = vunpack.c.0.s8 %v5800
  %v5802 = vlaneseq
  %v5803 = vshrl.u32 %v5802, 7
  %v5804 = vsub.s32 %v5801, %v5803
  %v5805 = vrot.slane %v5777, %v5804
  %v5806 = vcombine.high %v5784, %v5784
  %v5807 = vcombine.high %v5791, %v5791
  %v5808 = vcombine.high %v5798, %v5798
  %v5809 = vcombine.high %v5805, %v5805
  %vm5810 = vcmp.eq.s32.totalorder %v5784, 4294967294
  %vm5811 = vcmp.eq.s32.totalorder %v5798, 4294967294
  %vm5812 = vcmp.eq.s32.totalorder %v5806, 4294967294
  %vm5813 = vcmp.eq.s32.totalorder %v5808, 4294967294
  %vm5814 = vcmp.eq.s32.totalorder %v5791, 4294967294
  %vm5815 = vcmp.eq.s32.totalorder %v5805, 4294967294
  %vm5816 = vcmp.eq.s32.totalorder %v5807, 4294967294
  %vm5817 = vcmp.eq.s32.totalorder %v5809, 4294967294
  %v5826 = vcombine.high %v5753, %v5753
  %v5827 = vcombine.high %v5754, %v5754
  %v5828 = vcombine.high %v5755, %v5755
  %v5829 = vcombine.high %v5756, %v5756
  %v5830 = vcombine.high %v5757, %v5757
  %v5831 = vcombine.high %v5758, %v5758
  %v5832 = vcombine.high %v5759, %v5759
  %v5833 = vcombine.high %v5760, %v5760
  %5834 = vrot.lane.b32.xlu0 %v5826, 32
  %v5835 = vpop.permute.xlu0 %5834
  %5836 = vrot.lane.b32.xlu0 %v5827, 32
  %v5837 = vpop.permute.xlu0 %5836
  %5838 = vrot.lane.b32.xlu0 %v5828, 32
  %v5839 = vpop.permute.xlu0 %5838
  %5840 = vrot.lane.b32.xlu0 %v5829, 32
  %v5841 = vpop.permute.xlu0 %5840
  %5842 = vrot.lane.b32.xlu0 %v5830, 32
  %v5843 = vpop.permute.xlu0 %5842
  %5844 = vrot.lane.b32.xlu0 %v5831, 32
  %v5845 = vpop.permute.xlu0 %5844
  %5846 = vrot.lane.b32.xlu0 %v5832, 32
  %v5847 = vpop.permute.xlu0 %5846
  %5848 = vrot.lane.b32.xlu0 %v5833, 32
  %v5849 = vpop.permute.xlu0 %5848
  %5858 = vrot.lane.b32.xlu0 %v5753, 32
  %v5859 = vpop.permute.xlu0 %5858
  %5860 = vrot.lane.b32.xlu0 %v5754, 32
  %v5861 = vpop.permute.xlu0 %5860
  %5862 = vrot.lane.b32.xlu0 %v5755, 32
  %v5863 = vpop.permute.xlu0 %5862
  %5864 = vrot.lane.b32.xlu0 %v5756, 32
  %v5865 = vpop.permute.xlu0 %5864
  %5866 = vrot.lane.b32.xlu0 %v5757, 32
  %v5867 = vpop.permute.xlu0 %5866
  %5868 = vrot.lane.b32.xlu0 %v5758, 32
  %v5869 = vpop.permute.xlu0 %5868
  %5870 = vrot.lane.b32.xlu0 %v5759, 32
  %v5871 = vpop.permute.xlu0 %5870
  %5872 = vrot.lane.b32.xlu0 %v5760, 32
  %v5873 = vpop.permute.xlu0 %5872
  %v5874 = vsel %vm701, %v5859, %v5835
  %v5875 = vsel %vm701, %v5861, %v5837
  %v5876 = vsel %vm701, %v5863, %v5839
  %v5877 = vsel %vm701, %v5865, %v5841
  %v5878 = vsel %vm701, %v5867, %v5843
  %v5879 = vsel %vm701, %v5869, %v5845
  %v5880 = vsel %vm701, %v5871, %v5847
  %v5881 = vsel %vm701, %v5873, %v5849
  %v5898 = vsel %vm701, %v5835, %v5859
  %v5899 = vsel %vm701, %v5837, %v5861
  %v5900 = vsel %vm701, %v5839, %v5863
  %v5901 = vsel %vm701, %v5841, %v5865
  %v5902 = vsel %vm701, %v5843, %v5867
  %v5903 = vsel %vm701, %v5845, %v5869
  %v5904 = vsel %vm701, %v5847, %v5871
  %v5905 = vsel %vm701, %v5849, %v5873
  %v5906 = vsel %vm5810, 1, 0
  %v5907 = vsel %vm5811, 1, 0
  %v5908 = vsel %vm5812, 1, 0
  %v5909 = vsel %vm5813, 1, 0
  %v5910 = vsel %vm5814, 1, 0
  %v5911 = vsel %vm5815, 1, 0
  %v5912 = vsel %vm5816, 1, 0
  %v5913 = vsel %vm5817, 1, 0
  %v5914 = vlaneseq
  %v5915 = vshrl.u32 %v5914, 7
  %v5916 = vsub.s32 0, %v5915
  %v5917 = vrot.slane %v5906, %v5916
  %v5918 = vlaneseq
  %v5919 = vshrl.u32 %v5918, 7
  %v5920 = vsub.s32 0, %v5919
  %v5921 = vrot.slane %v5907, %v5920
  %v5922 = vlaneseq
  %v5923 = vshrl.u32 %v5922, 7
  %v5924 = vsub.s32 0, %v5923
  %v5925 = vrot.slane %v5908, %v5924
  %v5926 = vlaneseq
  %v5927 = vshrl.u32 %v5926, 7
  %v5928 = vsub.s32 0, %v5927
  %v5929 = vrot.slane %v5909, %v5928
  %v5930 = vlaneseq
  %v5931 = vshrl.u32 %v5930, 7
  %v5932 = vsub.s32 0, %v5931
  %v5933 = vrot.slane %v5910, %v5932
  %v5934 = vlaneseq
  %v5935 = vshrl.u32 %v5934, 7
  %v5936 = vsub.s32 0, %v5935
  %v5937 = vrot.slane %v5911, %v5936
  %v5938 = vlaneseq
  %v5939 = vshrl.u32 %v5938, 7
  %v5940 = vsub.s32 0, %v5939
  %v5941 = vrot.slane %v5912, %v5940
  %v5942 = vlaneseq
  %v5943 = vshrl.u32 %v5942, 7
  %v5944 = vsub.s32 0, %v5943
  %v5945 = vrot.slane %v5913, %v5944
  %5946 = vset.pattern.permute.xlu0 0
  %5947 = vperm.xlu0 %5946, %v5917
  %v5948 = vpop.permute.xlu0 %5947
  %5949 = vset.pattern.permute.xlu0 0
  %5950 = vperm.xlu0 %5949, %v5921
  %v5951 = vpop.permute.xlu0 %5950
  %5952 = vset.pattern.permute.xlu0 0
  %5953 = vperm.xlu0 %5952, %v5925
  %v5954 = vpop.permute.xlu0 %5953
  %5955 = vset.pattern.permute.xlu0 0
  %5956 = vperm.xlu0 %5955, %v5929
  %v5957 = vpop.permute.xlu0 %5956
  %5958 = vset.pattern.permute.xlu0 0
  %5959 = vperm.xlu0 %5958, %v5933
  %v5960 = vpop.permute.xlu0 %5959
  %5961 = vset.pattern.permute.xlu0 0
  %5962 = vperm.xlu0 %5961, %v5937
  %v5963 = vpop.permute.xlu0 %5962
  %5964 = vset.pattern.permute.xlu0 0
  %5965 = vperm.xlu0 %5964, %v5941
  %v5966 = vpop.permute.xlu0 %5965
  %5967 = vset.pattern.permute.xlu0 0
  %5968 = vperm.xlu0 %5967, %v5945
  %v5969 = vpop.permute.xlu0 %5968
  %vm5970 = vcmp.eq.s32.totalorder %v5948, 1
  %vm5971 = vcmp.eq.s32.totalorder %v5951, 1
  %vm5972 = vcmp.eq.s32.totalorder %v5954, 1
  %vm5973 = vcmp.eq.s32.totalorder %v5957, 1
  %vm5974 = vcmp.eq.s32.totalorder %v5960, 1
  %vm5975 = vcmp.eq.s32.totalorder %v5963, 1
  %vm5976 = vcmp.eq.s32.totalorder %v5966, 1
  %vm5977 = vcmp.eq.s32.totalorder %v5969, 1
  %v5986 = vsel %vm5970, %v5898, %v5753
  %v5987 = vsel %vm5970, %v5874, %v5826
  %v5988 = vsel %vm5971, %v5899, %v5754
  %v5989 = vsel %vm5971, %v5875, %v5827
  %v5990 = vsel %vm5972, %v5900, %v5755
  %v5991 = vsel %vm5972, %v5876, %v5828
  %v5992 = vsel %vm5973, %v5901, %v5756
  %v5993 = vsel %vm5973, %v5877, %v5829
  %v5994 = vsel %vm5974, %v5902, %v5757
  %v5995 = vsel %vm5974, %v5878, %v5830
  %v5996 = vsel %vm5975, %v5903, %v5758
  %v5997 = vsel %vm5975, %v5879, %v5831
  %v5998 = vsel %vm5976, %v5904, %v5759
  %v5999 = vsel %vm5976, %v5880, %v5832
  %v6000 = vsel %vm5977, %v5905, %v5760
  %v6001 = vsel %vm5977, %v5881, %v5833
  %vm6002 = vcmp.eq.s32.totalorder %v5784, 4294967295
  %vm6003 = vcmp.eq.s32.totalorder %v5798, 4294967295
  %vm6004 = vcmp.eq.s32.totalorder %v5806, 4294967295
  %vm6005 = vcmp.eq.s32.totalorder %v5808, 4294967295
  %vm6006 = vcmp.eq.s32.totalorder %v5791, 4294967295
  %vm6007 = vcmp.eq.s32.totalorder %v5805, 4294967295
  %vm6008 = vcmp.eq.s32.totalorder %v5807, 4294967295
  %vm6009 = vcmp.eq.s32.totalorder %v5809, 4294967295
  %6010 = vrot.lane.b32.xlu0 %v5826, 16
  %v6011 = vpop.permute.xlu0 %6010
  %6012 = vrot.lane.b32.xlu0 %v5827, 16
  %v6013 = vpop.permute.xlu0 %6012
  %6014 = vrot.lane.b32.xlu0 %v5828, 16
  %v6015 = vpop.permute.xlu0 %6014
  %6016 = vrot.lane.b32.xlu0 %v5829, 16
  %v6017 = vpop.permute.xlu0 %6016
  %6018 = vrot.lane.b32.xlu0 %v5830, 16
  %v6019 = vpop.permute.xlu0 %6018
  %6020 = vrot.lane.b32.xlu0 %v5831, 16
  %v6021 = vpop.permute.xlu0 %6020
  %6022 = vrot.lane.b32.xlu0 %v5832, 16
  %v6023 = vpop.permute.xlu0 %6022
  %6024 = vrot.lane.b32.xlu0 %v5833, 16
  %v6025 = vpop.permute.xlu0 %6024
  %6034 = vrot.lane.b32.xlu0 %v5753, 16
  %v6035 = vpop.permute.xlu0 %6034
  %6036 = vrot.lane.b32.xlu0 %v5754, 16
  %v6037 = vpop.permute.xlu0 %6036
  %6038 = vrot.lane.b32.xlu0 %v5755, 16
  %v6039 = vpop.permute.xlu0 %6038
  %6040 = vrot.lane.b32.xlu0 %v5756, 16
  %v6041 = vpop.permute.xlu0 %6040
  %6042 = vrot.lane.b32.xlu0 %v5757, 16
  %v6043 = vpop.permute.xlu0 %6042
  %6044 = vrot.lane.b32.xlu0 %v5758, 16
  %v6045 = vpop.permute.xlu0 %6044
  %6046 = vrot.lane.b32.xlu0 %v5759, 16
  %v6047 = vpop.permute.xlu0 %6046
  %6048 = vrot.lane.b32.xlu0 %v5760, 16
  %v6049 = vpop.permute.xlu0 %6048
  %v6050 = vsel %vm878, %v6035, %v6011
  %v6051 = vsel %vm878, %v6037, %v6013
  %v6052 = vsel %vm878, %v6039, %v6015
  %v6053 = vsel %vm878, %v6041, %v6017
  %v6054 = vsel %vm878, %v6043, %v6019
  %v6055 = vsel %vm878, %v6045, %v6021
  %v6056 = vsel %vm878, %v6047, %v6023
  %v6057 = vsel %vm878, %v6049, %v6025
  %v6074 = vsel %vm878, %v6011, %v6035
  %v6075 = vsel %vm878, %v6013, %v6037
  %v6076 = vsel %vm878, %v6015, %v6039
  %v6077 = vsel %vm878, %v6017, %v6041
  %v6078 = vsel %vm878, %v6019, %v6043
  %v6079 = vsel %vm878, %v6021, %v6045
  %v6080 = vsel %vm878, %v6023, %v6047
  %v6081 = vsel %vm878, %v6025, %v6049
  %v6082 = vsel %vm6002, 1, 0
  %v6083 = vsel %vm6003, 1, 0
  %v6084 = vsel %vm6004, 1, 0
  %v6085 = vsel %vm6005, 1, 0
  %v6086 = vsel %vm6006, 1, 0
  %v6087 = vsel %vm6007, 1, 0
  %v6088 = vsel %vm6008, 1, 0
  %v6089 = vsel %vm6009, 1, 0
  %v6090 = vlaneseq
  %v6091 = vshrl.u32 %v6090, 7
  %v6092 = vsub.s32 0, %v6091
  %v6093 = vrot.slane %v6082, %v6092
  %v6094 = vlaneseq
  %v6095 = vshrl.u32 %v6094, 7
  %v6096 = vsub.s32 0, %v6095
  %v6097 = vrot.slane %v6083, %v6096
  %v6098 = vlaneseq
  %v6099 = vshrl.u32 %v6098, 7
  %v6100 = vsub.s32 0, %v6099
  %v6101 = vrot.slane %v6084, %v6100
  %v6102 = vlaneseq
  %v6103 = vshrl.u32 %v6102, 7
  %v6104 = vsub.s32 0, %v6103
  %v6105 = vrot.slane %v6085, %v6104
  %v6106 = vlaneseq
  %v6107 = vshrl.u32 %v6106, 7
  %v6108 = vsub.s32 0, %v6107
  %v6109 = vrot.slane %v6086, %v6108
  %v6110 = vlaneseq
  %v6111 = vshrl.u32 %v6110, 7
  %v6112 = vsub.s32 0, %v6111
  %v6113 = vrot.slane %v6087, %v6112
  %v6114 = vlaneseq
  %v6115 = vshrl.u32 %v6114, 7
  %v6116 = vsub.s32 0, %v6115
  %v6117 = vrot.slane %v6088, %v6116
  %v6118 = vlaneseq
  %v6119 = vshrl.u32 %v6118, 7
  %v6120 = vsub.s32 0, %v6119
  %v6121 = vrot.slane %v6089, %v6120
  %6122 = vset.pattern.permute.xlu0 0
  %6123 = vperm.xlu0 %6122, %v6093
  %v6124 = vpop.permute.xlu0 %6123
  %6125 = vset.pattern.permute.xlu0 0
  %6126 = vperm.xlu0 %6125, %v6097
  %v6127 = vpop.permute.xlu0 %6126
  %6128 = vset.pattern.permute.xlu0 0
  %6129 = vperm.xlu0 %6128, %v6101
  %v6130 = vpop.permute.xlu0 %6129
  %6131 = vset.pattern.permute.xlu0 0
  %6132 = vperm.xlu0 %6131, %v6105
  %v6133 = vpop.permute.xlu0 %6132
  %6134 = vset.pattern.permute.xlu0 0
  %6135 = vperm.xlu0 %6134, %v6109
  %v6136 = vpop.permute.xlu0 %6135
  %6137 = vset.pattern.permute.xlu0 0
  %6138 = vperm.xlu0 %6137, %v6113
  %v6139 = vpop.permute.xlu0 %6138
  %6140 = vset.pattern.permute.xlu0 0
  %6141 = vperm.xlu0 %6140, %v6117
  %v6142 = vpop.permute.xlu0 %6141
  %6143 = vset.pattern.permute.xlu0 0
  %6144 = vperm.xlu0 %6143, %v6121
  %v6145 = vpop.permute.xlu0 %6144
  %vm6146 = vcmp.eq.s32.totalorder %v6124, 1
  %vm6147 = vcmp.eq.s32.totalorder %v6127, 1
  %vm6148 = vcmp.eq.s32.totalorder %v6130, 1
  %vm6149 = vcmp.eq.s32.totalorder %v6133, 1
  %vm6150 = vcmp.eq.s32.totalorder %v6136, 1
  %vm6151 = vcmp.eq.s32.totalorder %v6139, 1
  %vm6152 = vcmp.eq.s32.totalorder %v6142, 1
  %vm6153 = vcmp.eq.s32.totalorder %v6145, 1
  %v6154 = vsel %vm6146, %v6074, %v5986
  %v6155 = vsel %vm6146, %v6050, %v5987
  %v6156 = vsel %vm6147, %v6075, %v5988
  %v6157 = vsel %vm6147, %v6051, %v5989
  %v6158 = vsel %vm6148, %v6076, %v5990
  %v6159 = vsel %vm6148, %v6052, %v5991
  %v6160 = vsel %vm6149, %v6077, %v5992
  %v6161 = vsel %vm6149, %v6053, %v5993
  %v6162 = vsel %vm6150, %v6078, %v5994
  %v6163 = vsel %vm6150, %v6054, %v5995
  %v6164 = vsel %vm6151, %v6079, %v5996
  %v6165 = vsel %vm6151, %v6055, %v5997
  %v6166 = vsel %vm6152, %v6080, %v5998
  %v6167 = vsel %vm6152, %v6056, %v5999
  %v6168 = vsel %vm6153, %v6081, %v6000
  %v6169 = vsel %vm6153, %v6057, %v6001
  %vm6170 = vcmp.eq.s32.totalorder %v5784, 1
  %vm6171 = vcmp.eq.s32.totalorder %v5798, 1
  %vm6172 = vcmp.eq.s32.totalorder %v5806, 1
  %vm6173 = vcmp.eq.s32.totalorder %v5808, 1
  %vm6174 = vcmp.eq.s32.totalorder %v5791, 1
  %vm6175 = vcmp.eq.s32.totalorder %v5805, 1
  %vm6176 = vcmp.eq.s32.totalorder %v5807, 1
  %vm6177 = vcmp.eq.s32.totalorder %v5809, 1
  %6178 = vrot.lane.b32.xlu0 %v5753, 112
  %v6179 = vpop.permute.xlu0 %6178
  %6180 = vrot.lane.b32.xlu0 %v5826, 112
  %v6181 = vpop.permute.xlu0 %6180
  %6182 = vrot.lane.b32.xlu0 %v5754, 112
  %v6183 = vpop.permute.xlu0 %6182
  %6184 = vrot.lane.b32.xlu0 %v5827, 112
  %v6185 = vpop.permute.xlu0 %6184
  %6186 = vrot.lane.b32.xlu0 %v5755, 112
  %v6187 = vpop.permute.xlu0 %6186
  %6188 = vrot.lane.b32.xlu0 %v5828, 112
  %v6189 = vpop.permute.xlu0 %6188
  %6190 = vrot.lane.b32.xlu0 %v5756, 112
  %v6191 = vpop.permute.xlu0 %6190
  %6192 = vrot.lane.b32.xlu0 %v5829, 112
  %v6193 = vpop.permute.xlu0 %6192
  %6194 = vrot.lane.b32.xlu0 %v5757, 112
  %v6195 = vpop.permute.xlu0 %6194
  %6196 = vrot.lane.b32.xlu0 %v5830, 112
  %v6197 = vpop.permute.xlu0 %6196
  %6198 = vrot.lane.b32.xlu0 %v5758, 112
  %v6199 = vpop.permute.xlu0 %6198
  %6200 = vrot.lane.b32.xlu0 %v5831, 112
  %v6201 = vpop.permute.xlu0 %6200
  %6202 = vrot.lane.b32.xlu0 %v5759, 112
  %v6203 = vpop.permute.xlu0 %6202
  %6204 = vrot.lane.b32.xlu0 %v5832, 112
  %v6205 = vpop.permute.xlu0 %6204
  %6206 = vrot.lane.b32.xlu0 %v5760, 112
  %v6207 = vpop.permute.xlu0 %6206
  %6208 = vrot.lane.b32.xlu0 %v5833, 112
  %v6209 = vpop.permute.xlu0 %6208
  %v6210 = vsel %vm1039, %v6179, %v6181
  %v6211 = vsel %vm1039, %v6183, %v6185
  %v6212 = vsel %vm1039, %v6187, %v6189
  %v6213 = vsel %vm1039, %v6191, %v6193
  %v6214 = vsel %vm1039, %v6195, %v6197
  %v6215 = vsel %vm1039, %v6199, %v6201
  %v6216 = vsel %vm1039, %v6203, %v6205
  %v6217 = vsel %vm1039, %v6207, %v6209
  %v6242 = vsel %vm1039, %v6181, %v6179
  %v6243 = vsel %vm1039, %v6185, %v6183
  %v6244 = vsel %vm1039, %v6189, %v6187
  %v6245 = vsel %vm1039, %v6193, %v6191
  %v6246 = vsel %vm1039, %v6197, %v6195
  %v6247 = vsel %vm1039, %v6201, %v6199
  %v6248 = vsel %vm1039, %v6205, %v6203
  %v6249 = vsel %vm1039, %v6209, %v6207
  %v6250 = vsel %vm6170, 1, 0
  %v6251 = vsel %vm6171, 1, 0
  %v6252 = vsel %vm6172, 1, 0
  %v6253 = vsel %vm6173, 1, 0
  %v6254 = vsel %vm6174, 1, 0
  %v6255 = vsel %vm6175, 1, 0
  %v6256 = vsel %vm6176, 1, 0
  %v6257 = vsel %vm6177, 1, 0
  %v6258 = vlaneseq
  %v6259 = vshrl.u32 %v6258, 7
  %v6260 = vsub.s32 0, %v6259
  %v6261 = vrot.slane %v6250, %v6260
  %v6262 = vlaneseq
  %v6263 = vshrl.u32 %v6262, 7
  %v6264 = vsub.s32 0, %v6263
  %v6265 = vrot.slane %v6251, %v6264
  %v6266 = vlaneseq
  %v6267 = vshrl.u32 %v6266, 7
  %v6268 = vsub.s32 0, %v6267
  %v6269 = vrot.slane %v6252, %v6268
  %v6270 = vlaneseq
  %v6271 = vshrl.u32 %v6270, 7
  %v6272 = vsub.s32 0, %v6271
  %v6273 = vrot.slane %v6253, %v6272
  %v6274 = vlaneseq
  %v6275 = vshrl.u32 %v6274, 7
  %v6276 = vsub.s32 0, %v6275
  %v6277 = vrot.slane %v6254, %v6276
  %v6278 = vlaneseq
  %v6279 = vshrl.u32 %v6278, 7
  %v6280 = vsub.s32 0, %v6279
  %v6281 = vrot.slane %v6255, %v6280
  %v6282 = vlaneseq
  %v6283 = vshrl.u32 %v6282, 7
  %v6284 = vsub.s32 0, %v6283
  %v6285 = vrot.slane %v6256, %v6284
  %v6286 = vlaneseq
  %v6287 = vshrl.u32 %v6286, 7
  %v6288 = vsub.s32 0, %v6287
  %v6289 = vrot.slane %v6257, %v6288
  %6290 = vset.pattern.permute.xlu0 0
  %6291 = vperm.xlu0 %6290, %v6261
  %v6292 = vpop.permute.xlu0 %6291
  %6293 = vset.pattern.permute.xlu0 0
  %6294 = vperm.xlu0 %6293, %v6265
  %v6295 = vpop.permute.xlu0 %6294
  %6296 = vset.pattern.permute.xlu0 0
  %6297 = vperm.xlu0 %6296, %v6269
  %v6298 = vpop.permute.xlu0 %6297
  %6299 = vset.pattern.permute.xlu0 0
  %6300 = vperm.xlu0 %6299, %v6273
  %v6301 = vpop.permute.xlu0 %6300
  %6302 = vset.pattern.permute.xlu0 0
  %6303 = vperm.xlu0 %6302, %v6277
  %v6304 = vpop.permute.xlu0 %6303
  %6305 = vset.pattern.permute.xlu0 0
  %6306 = vperm.xlu0 %6305, %v6281
  %v6307 = vpop.permute.xlu0 %6306
  %6308 = vset.pattern.permute.xlu0 0
  %6309 = vperm.xlu0 %6308, %v6285
  %v6310 = vpop.permute.xlu0 %6309
  %6311 = vset.pattern.permute.xlu0 0
  %6312 = vperm.xlu0 %6311, %v6289
  %v6313 = vpop.permute.xlu0 %6312
  %vm6314 = vcmp.eq.s32.totalorder %v6292, 1
  %vm6315 = vcmp.eq.s32.totalorder %v6295, 1
  %vm6316 = vcmp.eq.s32.totalorder %v6298, 1
  %vm6317 = vcmp.eq.s32.totalorder %v6301, 1
  %vm6318 = vcmp.eq.s32.totalorder %v6304, 1
  %vm6319 = vcmp.eq.s32.totalorder %v6307, 1
  %vm6320 = vcmp.eq.s32.totalorder %v6310, 1
  %vm6321 = vcmp.eq.s32.totalorder %v6313, 1
  %v6322 = vsel %vm6314, %v6210, %v6154
  %v6323 = vsel %vm6314, %v6242, %v6155
  %v6324 = vsel %vm6315, %v6211, %v6156
  %v6325 = vsel %vm6315, %v6243, %v6157
  %v6326 = vsel %vm6316, %v6212, %v6158
  %v6327 = vsel %vm6316, %v6244, %v6159
  %v6328 = vsel %vm6317, %v6213, %v6160
  %v6329 = vsel %vm6317, %v6245, %v6161
  %v6330 = vsel %vm6318, %v6214, %v6162
  %v6331 = vsel %vm6318, %v6246, %v6163
  %v6332 = vsel %vm6319, %v6215, %v6164
  %v6333 = vsel %vm6319, %v6247, %v6165
  %v6334 = vsel %vm6320, %v6216, %v6166
  %v6335 = vsel %vm6320, %v6248, %v6167
  %v6336 = vsel %vm6321, %v6217, %v6168
  %v6337 = vsel %vm6321, %v6249, %v6169
  %vm6338 = vcmp.eq.s32.totalorder %v5784, 2
  %vm6339 = vcmp.eq.s32.totalorder %v5798, 2
  %vm6340 = vcmp.eq.s32.totalorder %v5806, 2
  %vm6341 = vcmp.eq.s32.totalorder %v5808, 2
  %vm6342 = vcmp.eq.s32.totalorder %v5791, 2
  %vm6343 = vcmp.eq.s32.totalorder %v5805, 2
  %vm6344 = vcmp.eq.s32.totalorder %v5807, 2
  %vm6345 = vcmp.eq.s32.totalorder %v5809, 2
  %6346 = vrot.lane.b32.xlu0 %v5753, 96
  %v6347 = vpop.permute.xlu0 %6346
  %6348 = vrot.lane.b32.xlu0 %v5826, 96
  %v6349 = vpop.permute.xlu0 %6348
  %6350 = vrot.lane.b32.xlu0 %v5754, 96
  %v6351 = vpop.permute.xlu0 %6350
  %6352 = vrot.lane.b32.xlu0 %v5827, 96
  %v6353 = vpop.permute.xlu0 %6352
  %6354 = vrot.lane.b32.xlu0 %v5755, 96
  %v6355 = vpop.permute.xlu0 %6354
  %6356 = vrot.lane.b32.xlu0 %v5828, 96
  %v6357 = vpop.permute.xlu0 %6356
  %6358 = vrot.lane.b32.xlu0 %v5756, 96
  %v6359 = vpop.permute.xlu0 %6358
  %6360 = vrot.lane.b32.xlu0 %v5829, 96
  %v6361 = vpop.permute.xlu0 %6360
  %6362 = vrot.lane.b32.xlu0 %v5757, 96
  %v6363 = vpop.permute.xlu0 %6362
  %6364 = vrot.lane.b32.xlu0 %v5830, 96
  %v6365 = vpop.permute.xlu0 %6364
  %6366 = vrot.lane.b32.xlu0 %v5758, 96
  %v6367 = vpop.permute.xlu0 %6366
  %6368 = vrot.lane.b32.xlu0 %v5831, 96
  %v6369 = vpop.permute.xlu0 %6368
  %6370 = vrot.lane.b32.xlu0 %v5759, 96
  %v6371 = vpop.permute.xlu0 %6370
  %6372 = vrot.lane.b32.xlu0 %v5832, 96
  %v6373 = vpop.permute.xlu0 %6372
  %6374 = vrot.lane.b32.xlu0 %v5760, 96
  %v6375 = vpop.permute.xlu0 %6374
  %6376 = vrot.lane.b32.xlu0 %v5833, 96
  %v6377 = vpop.permute.xlu0 %6376
  %v6378 = vsel %vm1208, %v6347, %v6349
  %v6379 = vsel %vm1208, %v6351, %v6353
  %v6380 = vsel %vm1208, %v6355, %v6357
  %v6381 = vsel %vm1208, %v6359, %v6361
  %v6382 = vsel %vm1208, %v6363, %v6365
  %v6383 = vsel %vm1208, %v6367, %v6369
  %v6384 = vsel %vm1208, %v6371, %v6373
  %v6385 = vsel %vm1208, %v6375, %v6377
  %v6410 = vsel %vm1208, %v6349, %v6347
  %v6411 = vsel %vm1208, %v6353, %v6351
  %v6412 = vsel %vm1208, %v6357, %v6355
  %v6413 = vsel %vm1208, %v6361, %v6359
  %v6414 = vsel %vm1208, %v6365, %v6363
  %v6415 = vsel %vm1208, %v6369, %v6367
  %v6416 = vsel %vm1208, %v6373, %v6371
  %v6417 = vsel %vm1208, %v6377, %v6375
  %v6418 = vsel %vm6338, 1, 0
  %v6419 = vsel %vm6339, 1, 0
  %v6420 = vsel %vm6340, 1, 0
  %v6421 = vsel %vm6341, 1, 0
  %v6422 = vsel %vm6342, 1, 0
  %v6423 = vsel %vm6343, 1, 0
  %v6424 = vsel %vm6344, 1, 0
  %v6425 = vsel %vm6345, 1, 0
  %v6426 = vlaneseq
  %v6427 = vshrl.u32 %v6426, 7
  %v6428 = vsub.s32 0, %v6427
  %v6429 = vrot.slane %v6418, %v6428
  %v6430 = vlaneseq
  %v6431 = vshrl.u32 %v6430, 7
  %v6432 = vsub.s32 0, %v6431
  %v6433 = vrot.slane %v6419, %v6432
  %v6434 = vlaneseq
  %v6435 = vshrl.u32 %v6434, 7
  %v6436 = vsub.s32 0, %v6435
  %v6437 = vrot.slane %v6420, %v6436
  %v6438 = vlaneseq
  %v6439 = vshrl.u32 %v6438, 7
  %v6440 = vsub.s32 0, %v6439
  %v6441 = vrot.slane %v6421, %v6440
  %v6442 = vlaneseq
  %v6443 = vshrl.u32 %v6442, 7
  %v6444 = vsub.s32 0, %v6443
  %v6445 = vrot.slane %v6422, %v6444
  %v6446 = vlaneseq
  %v6447 = vshrl.u32 %v6446, 7
  %v6448 = vsub.s32 0, %v6447
  %v6449 = vrot.slane %v6423, %v6448
  %v6450 = vlaneseq
  %v6451 = vshrl.u32 %v6450, 7
  %v6452 = vsub.s32 0, %v6451
  %v6453 = vrot.slane %v6424, %v6452
  %v6454 = vlaneseq
  %v6455 = vshrl.u32 %v6454, 7
  %v6456 = vsub.s32 0, %v6455
  %v6457 = vrot.slane %v6425, %v6456
  %6458 = vset.pattern.permute.xlu0 0
  %6459 = vperm.xlu0 %6458, %v6429
  %v6460 = vpop.permute.xlu0 %6459
  %6461 = vset.pattern.permute.xlu0 0
  %6462 = vperm.xlu0 %6461, %v6433
  %v6463 = vpop.permute.xlu0 %6462
  %6464 = vset.pattern.permute.xlu0 0
  %6465 = vperm.xlu0 %6464, %v6437
  %v6466 = vpop.permute.xlu0 %6465
  %6467 = vset.pattern.permute.xlu0 0
  %6468 = vperm.xlu0 %6467, %v6441
  %v6469 = vpop.permute.xlu0 %6468
  %6470 = vset.pattern.permute.xlu0 0
  %6471 = vperm.xlu0 %6470, %v6445
  %v6472 = vpop.permute.xlu0 %6471
  %6473 = vset.pattern.permute.xlu0 0
  %6474 = vperm.xlu0 %6473, %v6449
  %v6475 = vpop.permute.xlu0 %6474
  %6476 = vset.pattern.permute.xlu0 0
  %6477 = vperm.xlu0 %6476, %v6453
  %v6478 = vpop.permute.xlu0 %6477
  %6479 = vset.pattern.permute.xlu0 0
  %6480 = vperm.xlu0 %6479, %v6457
  %v6481 = vpop.permute.xlu0 %6480
  %vm6482 = vcmp.eq.s32.totalorder %v6460, 1
  %vm6483 = vcmp.eq.s32.totalorder %v6463, 1
  %vm6484 = vcmp.eq.s32.totalorder %v6466, 1
  %vm6485 = vcmp.eq.s32.totalorder %v6469, 1
  %vm6486 = vcmp.eq.s32.totalorder %v6472, 1
  %vm6487 = vcmp.eq.s32.totalorder %v6475, 1
  %vm6488 = vcmp.eq.s32.totalorder %v6478, 1
  %vm6489 = vcmp.eq.s32.totalorder %v6481, 1
  %v6490 = vsel %vm6482, %v6378, %v6322
  %v6491 = vsel %vm6482, %v6410, %v6323
  %v6492 = vsel %vm6483, %v6379, %v6324
  %v6493 = vsel %vm6483, %v6411, %v6325
  %v6494 = vsel %vm6484, %v6380, %v6326
  %v6495 = vsel %vm6484, %v6412, %v6327
  %v6496 = vsel %vm6485, %v6381, %v6328
  %v6497 = vsel %vm6485, %v6413, %v6329
  %v6498 = vsel %vm6486, %v6382, %v6330
  %v6499 = vsel %vm6486, %v6414, %v6331
  %v6500 = vsel %vm6487, %v6383, %v6332
  %v6501 = vsel %vm6487, %v6415, %v6333
  %v6502 = vsel %vm6488, %v6384, %v6334
  %v6503 = vsel %vm6488, %v6416, %v6335
  %v6504 = vsel %vm6489, %v6385, %v6336
  %v6505 = vsel %vm6489, %v6417, %v6337
  %6506 = vset.pattern.permute.xlu0 0
  %6507 = vperm.xlu0 %6506, %v5784
  %v6508 = vpop.permute.xlu0 %6507
  %v6509 = vlaneseq
  %v6510 = vshrl.u32 %v6509, 7
  %v6511 = vsub.s32 0, %v6510
  %v6512 = vrot.slane %v6508, %v6511
  %6513 = vset.pattern.permute.xlu0 0
  %6514 = vperm.xlu0 %6513, %v5798
  %v6515 = vpop.permute.xlu0 %6514
  %v6516 = vlaneseq
  %v6517 = vshrl.u32 %v6516, 7
  %v6518 = vsub.s32 0, %v6517
  %v6519 = vrot.slane %v6515, %v6518
  %6520 = vset.pattern.permute.xlu0 0
  %6521 = vperm.xlu0 %6520, %v5806
  %v6522 = vpop.permute.xlu0 %6521
  %v6523 = vlaneseq
  %v6524 = vshrl.u32 %v6523, 7
  %v6525 = vsub.s32 0, %v6524
  %v6526 = vrot.slane %v6522, %v6525
  %6527 = vset.pattern.permute.xlu0 0
  %6528 = vperm.xlu0 %6527, %v5808
  %v6529 = vpop.permute.xlu0 %6528
  %v6530 = vlaneseq
  %v6531 = vshrl.u32 %v6530, 7
  %v6532 = vsub.s32 0, %v6531
  %v6533 = vrot.slane %v6529, %v6532
  %6534 = vset.pattern.permute.xlu0 0
  %6535 = vperm.xlu0 %6534, %v5791
  %v6536 = vpop.permute.xlu0 %6535
  %v6537 = vlaneseq
  %v6538 = vshrl.u32 %v6537, 7
  %v6539 = vsub.s32 0, %v6538
  %v6540 = vrot.slane %v6536, %v6539
  %6541 = vset.pattern.permute.xlu0 0
  %6542 = vperm.xlu0 %6541, %v5805
  %v6543 = vpop.permute.xlu0 %6542
  %v6544 = vlaneseq
  %v6545 = vshrl.u32 %v6544, 7
  %v6546 = vsub.s32 0, %v6545
  %v6547 = vrot.slane %v6543, %v6546
  %6548 = vset.pattern.permute.xlu0 0
  %6549 = vperm.xlu0 %6548, %v5807
  %v6550 = vpop.permute.xlu0 %6549
  %v6551 = vlaneseq
  %v6552 = vshrl.u32 %v6551, 7
  %v6553 = vsub.s32 0, %v6552
  %v6554 = vrot.slane %v6550, %v6553
  %6555 = vset.pattern.permute.xlu0 0
  %6556 = vperm.xlu0 %6555, %v5809
  %v6557 = vpop.permute.xlu0 %6556
  %v6558 = vlaneseq
  %v6559 = vshrl.u32 %v6558, 7
  %v6560 = vsub.s32 0, %v6559
  %v6561 = vrot.slane %v6557, %v6560
  %v6562 = vadd.s32 %v29, %v6512
  %v6563 = vadd.s32 %v30, %v6512
  %v6564 = vadd.s32 %v29, %v6519
  %v6565 = vadd.s32 %v30, %v6519
  %v6566 = vadd.s32 %v29, %v6526
  %v6567 = vadd.s32 %v30, %v6526
  %v6568 = vadd.s32 %v29, %v6533
  %v6569 = vadd.s32 %v30, %v6533
  %v6570 = vadd.s32 %v29, %v6540
  %v6571 = vadd.s32 %v30, %v6540
  %v6572 = vadd.s32 %v29, %v6547
  %v6573 = vadd.s32 %v30, %v6547
  %v6574 = vadd.s32 %v29, %v6554
  %v6575 = vadd.s32 %v30, %v6554
  %v6576 = vadd.s32 %v29, %v6561
  %v6577 = vadd.s32 %v30, %v6561
  %vm6578 = vcmp.ge.s32.totalorder %v6562, 0
  %vm6579 = vcmp.ge.s32.totalorder %v6563, 0
  %vm6580 = vcmp.ge.s32.totalorder %v6564, 0
  %vm6581 = vcmp.ge.s32.totalorder %v6565, 0
  %vm6582 = vcmp.ge.s32.totalorder %v6566, 0
  %vm6583 = vcmp.ge.s32.totalorder %v6567, 0
  %vm6584 = vcmp.ge.s32.totalorder %v6568, 0
  %vm6585 = vcmp.ge.s32.totalorder %v6569, 0
  %vm6586 = vcmp.ge.s32.totalorder %v6570, 0
  %vm6587 = vcmp.ge.s32.totalorder %v6571, 0
  %vm6588 = vcmp.ge.s32.totalorder %v6572, 0
  %vm6589 = vcmp.ge.s32.totalorder %v6573, 0
  %vm6590 = vcmp.ge.s32.totalorder %v6574, 0
  %vm6591 = vcmp.ge.s32.totalorder %v6575, 0
  %vm6592 = vcmp.ge.s32.totalorder %v6576, 0
  %vm6593 = vcmp.ge.s32.totalorder %v6577, 0
  %vm6594 = vcmp.lt.s32.totalorder %v6562, 16
  %vm6595 = vcmp.lt.s32.totalorder %v6563, 16
  %vm6596 = vcmp.lt.s32.totalorder %v6564, 16
  %vm6597 = vcmp.lt.s32.totalorder %v6565, 16
  %vm6598 = vcmp.lt.s32.totalorder %v6566, 16
  %vm6599 = vcmp.lt.s32.totalorder %v6567, 16
  %vm6600 = vcmp.lt.s32.totalorder %v6568, 16
  %vm6601 = vcmp.lt.s32.totalorder %v6569, 16
  %vm6602 = vcmp.lt.s32.totalorder %v6570, 16
  %vm6603 = vcmp.lt.s32.totalorder %v6571, 16
  %vm6604 = vcmp.lt.s32.totalorder %v6572, 16
  %vm6605 = vcmp.lt.s32.totalorder %v6573, 16
  %vm6606 = vcmp.lt.s32.totalorder %v6574, 16
  %vm6607 = vcmp.lt.s32.totalorder %v6575, 16
  %vm6608 = vcmp.lt.s32.totalorder %v6576, 16
  %vm6609 = vcmp.lt.s32.totalorder %v6577, 16
  %vm6610 = vmand %vm6578, %vm6594
  %vm6611 = vmand %vm6579, %vm6595
  %vm6612 = vmand %vm6580, %vm6596
  %vm6613 = vmand %vm6581, %vm6597
  %vm6614 = vmand %vm6582, %vm6598
  %vm6615 = vmand %vm6583, %vm6599
  %vm6616 = vmand %vm6584, %vm6600
  %vm6617 = vmand %vm6585, %vm6601
  %vm6618 = vmand %vm6586, %vm6602
  %vm6619 = vmand %vm6587, %vm6603
  %vm6620 = vmand %vm6588, %vm6604
  %vm6621 = vmand %vm6589, %vm6605
  %vm6622 = vmand %vm6590, %vm6606
  %vm6623 = vmand %vm6591, %vm6607
  %vm6624 = vmand %vm6592, %vm6608
  %vm6625 = vmand %vm6593, %vm6609
  %v6626 = vsel %vm6610, 1, 0
  %v6627 = vsel %vm6611, 1, 0
  %v6628 = vsel %vm6612, 1, 0
  %v6629 = vsel %vm6613, 1, 0
  %v6630 = vsel %vm6614, 1, 0
  %v6631 = vsel %vm6615, 1, 0
  %v6632 = vsel %vm6616, 1, 0
  %v6633 = vsel %vm6617, 1, 0
  %v6634 = vsel %vm6618, 1, 0
  %v6635 = vsel %vm6619, 1, 0
  %v6636 = vsel %vm6620, 1, 0
  %v6637 = vsel %vm6621, 1, 0
  %v6638 = vsel %vm6622, 1, 0
  %v6639 = vsel %vm6623, 1, 0
  %v6640 = vsel %vm6624, 1, 0
  %v6641 = vsel %vm6625, 1, 0
  %vm6642 = vcmp.eq.s32.totalorder %v6626, 1
  %vm6643 = vcmp.eq.s32.totalorder %v6627, 1
  %vm6644 = vcmp.eq.s32.totalorder %v6628, 1
  %vm6645 = vcmp.eq.s32.totalorder %v6629, 1
  %vm6646 = vcmp.eq.s32.totalorder %v6630, 1
  %vm6647 = vcmp.eq.s32.totalorder %v6631, 1
  %vm6648 = vcmp.eq.s32.totalorder %v6632, 1
  %vm6649 = vcmp.eq.s32.totalorder %v6633, 1
  %vm6650 = vcmp.eq.s32.totalorder %v6634, 1
  %vm6651 = vcmp.eq.s32.totalorder %v6635, 1
  %vm6652 = vcmp.eq.s32.totalorder %v6636, 1
  %vm6653 = vcmp.eq.s32.totalorder %v6637, 1
  %vm6654 = vcmp.eq.s32.totalorder %v6638, 1
  %vm6655 = vcmp.eq.s32.totalorder %v6639, 1
  %vm6656 = vcmp.eq.s32.totalorder %v6640, 1
  %vm6657 = vcmp.eq.s32.totalorder %v6641, 1
  %v6658 = vsel %vm6642, %v6490, 0.0
  %v6659 = vsel %vm6643, %v6491, 0.0
  %v6660 = vsel %vm6644, %v6492, 0.0
  %v6661 = vsel %vm6645, %v6493, 0.0
  %v6662 = vsel %vm6646, %v6494, 0.0
  %v6663 = vsel %vm6647, %v6495, 0.0
  %v6664 = vsel %vm6648, %v6496, 0.0
  %v6665 = vsel %vm6649, %v6497, 0.0
  %v6666 = vsel %vm6650, %v6498, 0.0
  %v6667 = vsel %vm6651, %v6499, 0.0
  %v6668 = vsel %vm6652, %v6500, 0.0
  %v6669 = vsel %vm6653, %v6501, 0.0
  %v6670 = vsel %vm6654, %v6502, 0.0
  %v6671 = vsel %vm6655, %v6503, 0.0
  %v6672 = vsel %vm6656, %v6504, 0.0
  %v6673 = vsel %vm6657, %v6505, 0.0
  %6682 = vrot.lane.b32.xlu0 %v6659, 2
  %v6683 = vpop.permute.xlu0 %6682
  %6684 = vrot.lane.b32.xlu0 %v6661, 2
  %v6685 = vpop.permute.xlu0 %6684
  %6686 = vrot.lane.b32.xlu0 %v6663, 2
  %v6687 = vpop.permute.xlu0 %6686
  %6688 = vrot.lane.b32.xlu0 %v6665, 2
  %v6689 = vpop.permute.xlu0 %6688
  %6690 = vrot.lane.b32.xlu0 %v6667, 2
  %v6691 = vpop.permute.xlu0 %6690
  %6692 = vrot.lane.b32.xlu0 %v6669, 2
  %v6693 = vpop.permute.xlu0 %6692
  %6694 = vrot.lane.b32.xlu0 %v6671, 2
  %v6695 = vpop.permute.xlu0 %6694
  %6696 = vrot.lane.b32.xlu0 %v6673, 2
  %v6697 = vpop.permute.xlu0 %6696
  %6714 = vrot.lane.b32.xlu0 %v6658, 2
  %v6715 = vpop.permute.xlu0 %6714
  %6716 = vrot.lane.b32.xlu0 %v6660, 2
  %v6717 = vpop.permute.xlu0 %6716
  %6718 = vrot.lane.b32.xlu0 %v6662, 2
  %v6719 = vpop.permute.xlu0 %6718
  %6720 = vrot.lane.b32.xlu0 %v6664, 2
  %v6721 = vpop.permute.xlu0 %6720
  %6722 = vrot.lane.b32.xlu0 %v6666, 2
  %v6723 = vpop.permute.xlu0 %6722
  %6724 = vrot.lane.b32.xlu0 %v6668, 2
  %v6725 = vpop.permute.xlu0 %6724
  %6726 = vrot.lane.b32.xlu0 %v6670, 2
  %v6727 = vpop.permute.xlu0 %6726
  %6728 = vrot.lane.b32.xlu0 %v6672, 2
  %v6729 = vpop.permute.xlu0 %6728
  %v6730 = vsel %vm1561, %v6715, %v6683
  %v6731 = vsel %vm1561, %v6717, %v6685
  %v6732 = vsel %vm1561, %v6719, %v6687
  %v6733 = vsel %vm1561, %v6721, %v6689
  %v6734 = vsel %vm1561, %v6723, %v6691
  %v6735 = vsel %vm1561, %v6725, %v6693
  %v6736 = vsel %vm1561, %v6727, %v6695
  %v6737 = vsel %vm1561, %v6729, %v6697
  %v6754 = vsel %vm1561, %v6683, %v6715
  %v6755 = vsel %vm1561, %v6685, %v6717
  %v6756 = vsel %vm1561, %v6687, %v6719
  %v6757 = vsel %vm1561, %v6689, %v6721
  %v6758 = vsel %vm1561, %v6691, %v6723
  %v6759 = vsel %vm1561, %v6693, %v6725
  %v6760 = vsel %vm1561, %v6695, %v6727
  %v6761 = vsel %vm1561, %v6697, %v6729
  %6762 = vset.pattern.permute.xlu0 1
  %6763 = vperm.xlu0 %6762, %v5917
  %v6764 = vpop.permute.xlu0 %6763
  %6765 = vset.pattern.permute.xlu0 1
  %6766 = vperm.xlu0 %6765, %v5921
  %v6767 = vpop.permute.xlu0 %6766
  %6768 = vset.pattern.permute.xlu0 1
  %6769 = vperm.xlu0 %6768, %v5925
  %v6770 = vpop.permute.xlu0 %6769
  %6771 = vset.pattern.permute.xlu0 1
  %6772 = vperm.xlu0 %6771, %v5929
  %v6773 = vpop.permute.xlu0 %6772
  %6774 = vset.pattern.permute.xlu0 1
  %6775 = vperm.xlu0 %6774, %v5933
  %v6776 = vpop.permute.xlu0 %6775
  %6777 = vset.pattern.permute.xlu0 1
  %6778 = vperm.xlu0 %6777, %v5937
  %v6779 = vpop.permute.xlu0 %6778
  %6780 = vset.pattern.permute.xlu0 1
  %6781 = vperm.xlu0 %6780, %v5941
  %v6782 = vpop.permute.xlu0 %6781
  %6783 = vset.pattern.permute.xlu0 1
  %6784 = vperm.xlu0 %6783, %v5945
  %v6785 = vpop.permute.xlu0 %6784
  %vm6786 = vcmp.eq.s32.totalorder %v6764, 1
  %vm6787 = vcmp.eq.s32.totalorder %v6767, 1
  %vm6788 = vcmp.eq.s32.totalorder %v6770, 1
  %vm6789 = vcmp.eq.s32.totalorder %v6773, 1
  %vm6790 = vcmp.eq.s32.totalorder %v6776, 1
  %vm6791 = vcmp.eq.s32.totalorder %v6779, 1
  %vm6792 = vcmp.eq.s32.totalorder %v6782, 1
  %vm6793 = vcmp.eq.s32.totalorder %v6785, 1
  %v6794 = vsel %vm6786, %v6754, %v6658
  %v6795 = vsel %vm6786, %v6730, %v6659
  %v6796 = vsel %vm6787, %v6755, %v6660
  %v6797 = vsel %vm6787, %v6731, %v6661
  %v6798 = vsel %vm6788, %v6756, %v6662
  %v6799 = vsel %vm6788, %v6732, %v6663
  %v6800 = vsel %vm6789, %v6757, %v6664
  %v6801 = vsel %vm6789, %v6733, %v6665
  %v6802 = vsel %vm6790, %v6758, %v6666
  %v6803 = vsel %vm6790, %v6734, %v6667
  %v6804 = vsel %vm6791, %v6759, %v6668
  %v6805 = vsel %vm6791, %v6735, %v6669
  %v6806 = vsel %vm6792, %v6760, %v6670
  %v6807 = vsel %vm6792, %v6736, %v6671
  %v6808 = vsel %vm6793, %v6761, %v6672
  %v6809 = vsel %vm6793, %v6737, %v6673
  %6810 = vrot.lane.b32.xlu0 %v6659, 1
  %v6811 = vpop.permute.xlu0 %6810
  %6812 = vrot.lane.b32.xlu0 %v6661, 1
  %v6813 = vpop.permute.xlu0 %6812
  %6814 = vrot.lane.b32.xlu0 %v6663, 1
  %v6815 = vpop.permute.xlu0 %6814
  %6816 = vrot.lane.b32.xlu0 %v6665, 1
  %v6817 = vpop.permute.xlu0 %6816
  %6818 = vrot.lane.b32.xlu0 %v6667, 1
  %v6819 = vpop.permute.xlu0 %6818
  %6820 = vrot.lane.b32.xlu0 %v6669, 1
  %v6821 = vpop.permute.xlu0 %6820
  %6822 = vrot.lane.b32.xlu0 %v6671, 1
  %v6823 = vpop.permute.xlu0 %6822
  %6824 = vrot.lane.b32.xlu0 %v6673, 1
  %v6825 = vpop.permute.xlu0 %6824
  %6834 = vrot.lane.b32.xlu0 %v6658, 1
  %v6835 = vpop.permute.xlu0 %6834
  %6836 = vrot.lane.b32.xlu0 %v6660, 1
  %v6837 = vpop.permute.xlu0 %6836
  %6838 = vrot.lane.b32.xlu0 %v6662, 1
  %v6839 = vpop.permute.xlu0 %6838
  %6840 = vrot.lane.b32.xlu0 %v6664, 1
  %v6841 = vpop.permute.xlu0 %6840
  %6842 = vrot.lane.b32.xlu0 %v6666, 1
  %v6843 = vpop.permute.xlu0 %6842
  %6844 = vrot.lane.b32.xlu0 %v6668, 1
  %v6845 = vpop.permute.xlu0 %6844
  %6846 = vrot.lane.b32.xlu0 %v6670, 1
  %v6847 = vpop.permute.xlu0 %6846
  %6848 = vrot.lane.b32.xlu0 %v6672, 1
  %v6849 = vpop.permute.xlu0 %6848
  %v6850 = vsel %vm1682, %v6835, %v6811
  %v6851 = vsel %vm1682, %v6837, %v6813
  %v6852 = vsel %vm1682, %v6839, %v6815
  %v6853 = vsel %vm1682, %v6841, %v6817
  %v6854 = vsel %vm1682, %v6843, %v6819
  %v6855 = vsel %vm1682, %v6845, %v6821
  %v6856 = vsel %vm1682, %v6847, %v6823
  %v6857 = vsel %vm1682, %v6849, %v6825
  %v6874 = vsel %vm1682, %v6811, %v6835
  %v6875 = vsel %vm1682, %v6813, %v6837
  %v6876 = vsel %vm1682, %v6815, %v6839
  %v6877 = vsel %vm1682, %v6817, %v6841
  %v6878 = vsel %vm1682, %v6819, %v6843
  %v6879 = vsel %vm1682, %v6821, %v6845
  %v6880 = vsel %vm1682, %v6823, %v6847
  %v6881 = vsel %vm1682, %v6825, %v6849
  %6882 = vset.pattern.permute.xlu0 1
  %6883 = vperm.xlu0 %6882, %v6093
  %v6884 = vpop.permute.xlu0 %6883
  %6885 = vset.pattern.permute.xlu0 1
  %6886 = vperm.xlu0 %6885, %v6097
  %v6887 = vpop.permute.xlu0 %6886
  %6888 = vset.pattern.permute.xlu0 1
  %6889 = vperm.xlu0 %6888, %v6101
  %v6890 = vpop.permute.xlu0 %6889
  %6891 = vset.pattern.permute.xlu0 1
  %6892 = vperm.xlu0 %6891, %v6105
  %v6893 = vpop.permute.xlu0 %6892
  %6894 = vset.pattern.permute.xlu0 1
  %6895 = vperm.xlu0 %6894, %v6109
  %v6896 = vpop.permute.xlu0 %6895
  %6897 = vset.pattern.permute.xlu0 1
  %6898 = vperm.xlu0 %6897, %v6113
  %v6899 = vpop.permute.xlu0 %6898
  %6900 = vset.pattern.permute.xlu0 1
  %6901 = vperm.xlu0 %6900, %v6117
  %v6902 = vpop.permute.xlu0 %6901
  %6903 = vset.pattern.permute.xlu0 1
  %6904 = vperm.xlu0 %6903, %v6121
  %v6905 = vpop.permute.xlu0 %6904
  %vm6906 = vcmp.eq.s32.totalorder %v6884, 1
  %vm6907 = vcmp.eq.s32.totalorder %v6887, 1
  %vm6908 = vcmp.eq.s32.totalorder %v6890, 1
  %vm6909 = vcmp.eq.s32.totalorder %v6893, 1
  %vm6910 = vcmp.eq.s32.totalorder %v6896, 1
  %vm6911 = vcmp.eq.s32.totalorder %v6899, 1
  %vm6912 = vcmp.eq.s32.totalorder %v6902, 1
  %vm6913 = vcmp.eq.s32.totalorder %v6905, 1
  %v6914 = vsel %vm6906, %v6874, %v6794
  %v6915 = vsel %vm6906, %v6850, %v6795
  %v6916 = vsel %vm6907, %v6875, %v6796
  %v6917 = vsel %vm6907, %v6851, %v6797
  %v6918 = vsel %vm6908, %v6876, %v6798
  %v6919 = vsel %vm6908, %v6852, %v6799
  %v6920 = vsel %vm6909, %v6877, %v6800
  %v6921 = vsel %vm6909, %v6853, %v6801
  %v6922 = vsel %vm6910, %v6878, %v6802
  %v6923 = vsel %vm6910, %v6854, %v6803
  %v6924 = vsel %vm6911, %v6879, %v6804
  %v6925 = vsel %vm6911, %v6855, %v6805
  %v6926 = vsel %vm6912, %v6880, %v6806
  %v6927 = vsel %vm6912, %v6856, %v6807
  %v6928 = vsel %vm6913, %v6881, %v6808
  %v6929 = vsel %vm6913, %v6857, %v6809
  %6930 = vrot.lane.b32.xlu0 %v6658, 127
  %v6931 = vpop.permute.xlu0 %6930
  %6932 = vrot.lane.b32.xlu0 %v6659, 127
  %v6933 = vpop.permute.xlu0 %6932
  %6934 = vrot.lane.b32.xlu0 %v6660, 127
  %v6935 = vpop.permute.xlu0 %6934
  %6936 = vrot.lane.b32.xlu0 %v6661, 127
  %v6937 = vpop.permute.xlu0 %6936
  %6938 = vrot.lane.b32.xlu0 %v6662, 127
  %v6939 = vpop.permute.xlu0 %6938
  %6940 = vrot.lane.b32.xlu0 %v6663, 127
  %v6941 = vpop.permute.xlu0 %6940
  %6942 = vrot.lane.b32.xlu0 %v6664, 127
  %v6943 = vpop.permute.xlu0 %6942
  %6944 = vrot.lane.b32.xlu0 %v6665, 127
  %v6945 = vpop.permute.xlu0 %6944
  %6946 = vrot.lane.b32.xlu0 %v6666, 127
  %v6947 = vpop.permute.xlu0 %6946
  %6948 = vrot.lane.b32.xlu0 %v6667, 127
  %v6949 = vpop.permute.xlu0 %6948
  %6950 = vrot.lane.b32.xlu0 %v6668, 127
  %v6951 = vpop.permute.xlu0 %6950
  %6952 = vrot.lane.b32.xlu0 %v6669, 127
  %v6953 = vpop.permute.xlu0 %6952
  %6954 = vrot.lane.b32.xlu0 %v6670, 127
  %v6955 = vpop.permute.xlu0 %6954
  %6956 = vrot.lane.b32.xlu0 %v6671, 127
  %v6957 = vpop.permute.xlu0 %6956
  %6958 = vrot.lane.b32.xlu0 %v6672, 127
  %v6959 = vpop.permute.xlu0 %6958
  %6960 = vrot.lane.b32.xlu0 %v6673, 127
  %v6961 = vpop.permute.xlu0 %6960
  %v6962 = vsel %vm1795, %v6931, %v6933
  %v6963 = vsel %vm1795, %v6935, %v6937
  %v6964 = vsel %vm1795, %v6939, %v6941
  %v6965 = vsel %vm1795, %v6943, %v6945
  %v6966 = vsel %vm1795, %v6947, %v6949
  %v6967 = vsel %vm1795, %v6951, %v6953
  %v6968 = vsel %vm1795, %v6955, %v6957
  %v6969 = vsel %vm1795, %v6959, %v6961
  %v6994 = vsel %vm1795, %v6933, %v6931
  %v6995 = vsel %vm1795, %v6937, %v6935
  %v6996 = vsel %vm1795, %v6941, %v6939
  %v6997 = vsel %vm1795, %v6945, %v6943
  %v6998 = vsel %vm1795, %v6949, %v6947
  %v6999 = vsel %vm1795, %v6953, %v6951
  %v7000 = vsel %vm1795, %v6957, %v6955
  %v7001 = vsel %vm1795, %v6961, %v6959
  %7002 = vset.pattern.permute.xlu0 1
  %7003 = vperm.xlu0 %7002, %v6261
  %v7004 = vpop.permute.xlu0 %7003
  %7005 = vset.pattern.permute.xlu0 1
  %7006 = vperm.xlu0 %7005, %v6265
  %v7007 = vpop.permute.xlu0 %7006
  %7008 = vset.pattern.permute.xlu0 1
  %7009 = vperm.xlu0 %7008, %v6269
  %v7010 = vpop.permute.xlu0 %7009
  %7011 = vset.pattern.permute.xlu0 1
  %7012 = vperm.xlu0 %7011, %v6273
  %v7013 = vpop.permute.xlu0 %7012
  %7014 = vset.pattern.permute.xlu0 1
  %7015 = vperm.xlu0 %7014, %v6277
  %v7016 = vpop.permute.xlu0 %7015
  %7017 = vset.pattern.permute.xlu0 1
  %7018 = vperm.xlu0 %7017, %v6281
  %v7019 = vpop.permute.xlu0 %7018
  %7020 = vset.pattern.permute.xlu0 1
  %7021 = vperm.xlu0 %7020, %v6285
  %v7022 = vpop.permute.xlu0 %7021
  %7023 = vset.pattern.permute.xlu0 1
  %7024 = vperm.xlu0 %7023, %v6289
  %v7025 = vpop.permute.xlu0 %7024
  %vm7026 = vcmp.eq.s32.totalorder %v7004, 1
  %vm7027 = vcmp.eq.s32.totalorder %v7007, 1
  %vm7028 = vcmp.eq.s32.totalorder %v7010, 1
  %vm7029 = vcmp.eq.s32.totalorder %v7013, 1
  %vm7030 = vcmp.eq.s32.totalorder %v7016, 1
  %vm7031 = vcmp.eq.s32.totalorder %v7019, 1
  %vm7032 = vcmp.eq.s32.totalorder %v7022, 1
  %vm7033 = vcmp.eq.s32.totalorder %v7025, 1
  %v7034 = vsel %vm7026, %v6962, %v6914
  %v7035 = vsel %vm7026, %v6994, %v6915
  %v7036 = vsel %vm7027, %v6963, %v6916
  %v7037 = vsel %vm7027, %v6995, %v6917
  %v7038 = vsel %vm7028, %v6964, %v6918
  %v7039 = vsel %vm7028, %v6996, %v6919
  %v7040 = vsel %vm7029, %v6965, %v6920
  %v7041 = vsel %vm7029, %v6997, %v6921
  %v7042 = vsel %vm7030, %v6966, %v6922
  %v7043 = vsel %vm7030, %v6998, %v6923
  %v7044 = vsel %vm7031, %v6967, %v6924
  %v7045 = vsel %vm7031, %v6999, %v6925
  %v7046 = vsel %vm7032, %v6968, %v6926
  %v7047 = vsel %vm7032, %v7000, %v6927
  %v7048 = vsel %vm7033, %v6969, %v6928
  %v7049 = vsel %vm7033, %v7001, %v6929
  %7050 = vrot.lane.b32.xlu0 %v6658, 126
  %v7051 = vpop.permute.xlu0 %7050
  %7052 = vrot.lane.b32.xlu0 %v6659, 126
  %v7053 = vpop.permute.xlu0 %7052
  %7054 = vrot.lane.b32.xlu0 %v6660, 126
  %v7055 = vpop.permute.xlu0 %7054
  %7056 = vrot.lane.b32.xlu0 %v6661, 126
  %v7057 = vpop.permute.xlu0 %7056
  %7058 = vrot.lane.b32.xlu0 %v6662, 126
  %v7059 = vpop.permute.xlu0 %7058
  %7060 = vrot.lane.b32.xlu0 %v6663, 126
  %v7061 = vpop.permute.xlu0 %7060
  %7062 = vrot.lane.b32.xlu0 %v6664, 126
  %v7063 = vpop.permute.xlu0 %7062
  %7064 = vrot.lane.b32.xlu0 %v6665, 126
  %v7065 = vpop.permute.xlu0 %7064
  %7066 = vrot.lane.b32.xlu0 %v6666, 126
  %v7067 = vpop.permute.xlu0 %7066
  %7068 = vrot.lane.b32.xlu0 %v6667, 126
  %v7069 = vpop.permute.xlu0 %7068
  %7070 = vrot.lane.b32.xlu0 %v6668, 126
  %v7071 = vpop.permute.xlu0 %7070
  %7072 = vrot.lane.b32.xlu0 %v6669, 126
  %v7073 = vpop.permute.xlu0 %7072
  %7074 = vrot.lane.b32.xlu0 %v6670, 126
  %v7075 = vpop.permute.xlu0 %7074
  %7076 = vrot.lane.b32.xlu0 %v6671, 126
  %v7077 = vpop.permute.xlu0 %7076
  %7078 = vrot.lane.b32.xlu0 %v6672, 126
  %v7079 = vpop.permute.xlu0 %7078
  %7080 = vrot.lane.b32.xlu0 %v6673, 126
  %v7081 = vpop.permute.xlu0 %7080
  %v7082 = vsel %vm1916, %v7051, %v7053
  %v7083 = vsel %vm1916, %v7055, %v7057
  %v7084 = vsel %vm1916, %v7059, %v7061
  %v7085 = vsel %vm1916, %v7063, %v7065
  %v7086 = vsel %vm1916, %v7067, %v7069
  %v7087 = vsel %vm1916, %v7071, %v7073
  %v7088 = vsel %vm1916, %v7075, %v7077
  %v7089 = vsel %vm1916, %v7079, %v7081
  %v7114 = vsel %vm1916, %v7053, %v7051
  %v7115 = vsel %vm1916, %v7057, %v7055
  %v7116 = vsel %vm1916, %v7061, %v7059
  %v7117 = vsel %vm1916, %v7065, %v7063
  %v7118 = vsel %vm1916, %v7069, %v7067
  %v7119 = vsel %vm1916, %v7073, %v7071
  %v7120 = vsel %vm1916, %v7077, %v7075
  %v7121 = vsel %vm1916, %v7081, %v7079
  %7122 = vset.pattern.permute.xlu0 1
  %7123 = vperm.xlu0 %7122, %v6429
  %v7124 = vpop.permute.xlu0 %7123
  %7125 = vset.pattern.permute.xlu0 1
  %7126 = vperm.xlu0 %7125, %v6433
  %v7127 = vpop.permute.xlu0 %7126
  %7128 = vset.pattern.permute.xlu0 1
  %7129 = vperm.xlu0 %7128, %v6437
  %v7130 = vpop.permute.xlu0 %7129
  %7131 = vset.pattern.permute.xlu0 1
  %7132 = vperm.xlu0 %7131, %v6441
  %v7133 = vpop.permute.xlu0 %7132
  %7134 = vset.pattern.permute.xlu0 1
  %7135 = vperm.xlu0 %7134, %v6445
  %v7136 = vpop.permute.xlu0 %7135
  %7137 = vset.pattern.permute.xlu0 1
  %7138 = vperm.xlu0 %7137, %v6449
  %v7139 = vpop.permute.xlu0 %7138
  %7140 = vset.pattern.permute.xlu0 1
  %7141 = vperm.xlu0 %7140, %v6453
  %v7142 = vpop.permute.xlu0 %7141
  %7143 = vset.pattern.permute.xlu0 1
  %7144 = vperm.xlu0 %7143, %v6457
  %v7145 = vpop.permute.xlu0 %7144
  %vm7146 = vcmp.eq.s32.totalorder %v7124, 1
  %vm7147 = vcmp.eq.s32.totalorder %v7127, 1
  %vm7148 = vcmp.eq.s32.totalorder %v7130, 1
  %vm7149 = vcmp.eq.s32.totalorder %v7133, 1
  %vm7150 = vcmp.eq.s32.totalorder %v7136, 1
  %vm7151 = vcmp.eq.s32.totalorder %v7139, 1
  %vm7152 = vcmp.eq.s32.totalorder %v7142, 1
  %vm7153 = vcmp.eq.s32.totalorder %v7145, 1
  %v7154 = vsel %vm7146, %v7082, %v7034
  %v7155 = vsel %vm7146, %v7114, %v7035
  %v7156 = vsel %vm7147, %v7083, %v7036
  %v7157 = vsel %vm7147, %v7115, %v7037
  %v7158 = vsel %vm7148, %v7084, %v7038
  %v7159 = vsel %vm7148, %v7116, %v7039
  %v7160 = vsel %vm7149, %v7085, %v7040
  %v7161 = vsel %vm7149, %v7117, %v7041
  %v7162 = vsel %vm7150, %v7086, %v7042
  %v7163 = vsel %vm7150, %v7118, %v7043
  %v7164 = vsel %vm7151, %v7087, %v7044
  %v7165 = vsel %vm7151, %v7119, %v7045
  %v7166 = vsel %vm7152, %v7088, %v7046
  %v7167 = vsel %vm7152, %v7120, %v7047
  %v7168 = vsel %vm7153, %v7089, %v7048
  %v7169 = vsel %vm7153, %v7121, %v7049
  %7170 = vset.pattern.permute.xlu0 1
  %7171 = vperm.xlu0 %7170, %v5784
  %v7172 = vpop.permute.xlu0 %7171
  %v7173 = vlaneseq
  %v7174 = vshrl.u32 %v7173, 7
  %v7175 = vsub.s32 0, %v7174
  %v7176 = vrot.slane %v7172, %v7175
  %7177 = vset.pattern.permute.xlu0 1
  %7178 = vperm.xlu0 %7177, %v5798
  %v7179 = vpop.permute.xlu0 %7178
  %v7180 = vlaneseq
  %v7181 = vshrl.u32 %v7180, 7
  %v7182 = vsub.s32 0, %v7181
  %v7183 = vrot.slane %v7179, %v7182
  %7184 = vset.pattern.permute.xlu0 1
  %7185 = vperm.xlu0 %7184, %v5806
  %v7186 = vpop.permute.xlu0 %7185
  %v7187 = vlaneseq
  %v7188 = vshrl.u32 %v7187, 7
  %v7189 = vsub.s32 0, %v7188
  %v7190 = vrot.slane %v7186, %v7189
  %7191 = vset.pattern.permute.xlu0 1
  %7192 = vperm.xlu0 %7191, %v5808
  %v7193 = vpop.permute.xlu0 %7192
  %v7194 = vlaneseq
  %v7195 = vshrl.u32 %v7194, 7
  %v7196 = vsub.s32 0, %v7195
  %v7197 = vrot.slane %v7193, %v7196
  %7198 = vset.pattern.permute.xlu0 1
  %7199 = vperm.xlu0 %7198, %v5791
  %v7200 = vpop.permute.xlu0 %7199
  %v7201 = vlaneseq
  %v7202 = vshrl.u32 %v7201, 7
  %v7203 = vsub.s32 0, %v7202
  %v7204 = vrot.slane %v7200, %v7203
  %7205 = vset.pattern.permute.xlu0 1
  %7206 = vperm.xlu0 %7205, %v5805
  %v7207 = vpop.permute.xlu0 %7206
  %v7208 = vlaneseq
  %v7209 = vshrl.u32 %v7208, 7
  %v7210 = vsub.s32 0, %v7209
  %v7211 = vrot.slane %v7207, %v7210
  %7212 = vset.pattern.permute.xlu0 1
  %7213 = vperm.xlu0 %7212, %v5807
  %v7214 = vpop.permute.xlu0 %7213
  %v7215 = vlaneseq
  %v7216 = vshrl.u32 %v7215, 7
  %v7217 = vsub.s32 0, %v7216
  %v7218 = vrot.slane %v7214, %v7217
  %7219 = vset.pattern.permute.xlu0 1
  %7220 = vperm.xlu0 %7219, %v5809
  %v7221 = vpop.permute.xlu0 %7220
  %v7222 = vlaneseq
  %v7223 = vshrl.u32 %v7222, 7
  %v7224 = vsub.s32 0, %v7223
  %v7225 = vrot.slane %v7221, %v7224
  %v7226 = vadd.s32 %v27, %v7176
  %v7227 = vadd.s32 %v28, %v7176
  %v7228 = vadd.s32 %v27, %v7183
  %v7229 = vadd.s32 %v28, %v7183
  %v7230 = vadd.s32 %v27, %v7190
  %v7231 = vadd.s32 %v28, %v7190
  %v7232 = vadd.s32 %v27, %v7197
  %v7233 = vadd.s32 %v28, %v7197
  %v7234 = vadd.s32 %v27, %v7204
  %v7235 = vadd.s32 %v28, %v7204
  %v7236 = vadd.s32 %v27, %v7211
  %v7237 = vadd.s32 %v28, %v7211
  %v7238 = vadd.s32 %v27, %v7218
  %v7239 = vadd.s32 %v28, %v7218
  %v7240 = vadd.s32 %v27, %v7225
  %v7241 = vadd.s32 %v28, %v7225
  %vm7242 = vcmp.ge.s32.totalorder %v7226, 0
  %vm7243 = vcmp.ge.s32.totalorder %v7227, 0
  %vm7244 = vcmp.ge.s32.totalorder %v7228, 0
  %vm7245 = vcmp.ge.s32.totalorder %v7229, 0
  %vm7246 = vcmp.ge.s32.totalorder %v7230, 0
  %vm7247 = vcmp.ge.s32.totalorder %v7231, 0
  %vm7248 = vcmp.ge.s32.totalorder %v7232, 0
  %vm7249 = vcmp.ge.s32.totalorder %v7233, 0
  %vm7250 = vcmp.ge.s32.totalorder %v7234, 0
  %vm7251 = vcmp.ge.s32.totalorder %v7235, 0
  %vm7252 = vcmp.ge.s32.totalorder %v7236, 0
  %vm7253 = vcmp.ge.s32.totalorder %v7237, 0
  %vm7254 = vcmp.ge.s32.totalorder %v7238, 0
  %vm7255 = vcmp.ge.s32.totalorder %v7239, 0
  %vm7256 = vcmp.ge.s32.totalorder %v7240, 0
  %vm7257 = vcmp.ge.s32.totalorder %v7241, 0
  %vm7258 = vcmp.lt.s32.totalorder %v7226, 16
  %vm7259 = vcmp.lt.s32.totalorder %v7227, 16
  %vm7260 = vcmp.lt.s32.totalorder %v7228, 16
  %vm7261 = vcmp.lt.s32.totalorder %v7229, 16
  %vm7262 = vcmp.lt.s32.totalorder %v7230, 16
  %vm7263 = vcmp.lt.s32.totalorder %v7231, 16
  %vm7264 = vcmp.lt.s32.totalorder %v7232, 16
  %vm7265 = vcmp.lt.s32.totalorder %v7233, 16
  %vm7266 = vcmp.lt.s32.totalorder %v7234, 16
  %vm7267 = vcmp.lt.s32.totalorder %v7235, 16
  %vm7268 = vcmp.lt.s32.totalorder %v7236, 16
  %vm7269 = vcmp.lt.s32.totalorder %v7237, 16
  %vm7270 = vcmp.lt.s32.totalorder %v7238, 16
  %vm7271 = vcmp.lt.s32.totalorder %v7239, 16
  %vm7272 = vcmp.lt.s32.totalorder %v7240, 16
  %vm7273 = vcmp.lt.s32.totalorder %v7241, 16
  %vm7274 = vmand %vm7242, %vm7258
  %vm7275 = vmand %vm7243, %vm7259
  %vm7276 = vmand %vm7244, %vm7260
  %vm7277 = vmand %vm7245, %vm7261
  %vm7278 = vmand %vm7246, %vm7262
  %vm7279 = vmand %vm7247, %vm7263
  %vm7280 = vmand %vm7248, %vm7264
  %vm7281 = vmand %vm7249, %vm7265
  %vm7282 = vmand %vm7250, %vm7266
  %vm7283 = vmand %vm7251, %vm7267
  %vm7284 = vmand %vm7252, %vm7268
  %vm7285 = vmand %vm7253, %vm7269
  %vm7286 = vmand %vm7254, %vm7270
  %vm7287 = vmand %vm7255, %vm7271
  %vm7288 = vmand %vm7256, %vm7272
  %vm7289 = vmand %vm7257, %vm7273
  %v7290 = vsel %vm7274, 1, 0
  %v7291 = vsel %vm7275, 1, 0
  %v7292 = vsel %vm7276, 1, 0
  %v7293 = vsel %vm7277, 1, 0
  %v7294 = vsel %vm7278, 1, 0
  %v7295 = vsel %vm7279, 1, 0
  %v7296 = vsel %vm7280, 1, 0
  %v7297 = vsel %vm7281, 1, 0
  %v7298 = vsel %vm7282, 1, 0
  %v7299 = vsel %vm7283, 1, 0
  %v7300 = vsel %vm7284, 1, 0
  %v7301 = vsel %vm7285, 1, 0
  %v7302 = vsel %vm7286, 1, 0
  %v7303 = vsel %vm7287, 1, 0
  %v7304 = vsel %vm7288, 1, 0
  %v7305 = vsel %vm7289, 1, 0
  %vm7306 = vcmp.eq.s32.totalorder %v7290, 1
  %vm7307 = vcmp.eq.s32.totalorder %v7291, 1
  %vm7308 = vcmp.eq.s32.totalorder %v7292, 1
  %vm7309 = vcmp.eq.s32.totalorder %v7293, 1
  %vm7310 = vcmp.eq.s32.totalorder %v7294, 1
  %vm7311 = vcmp.eq.s32.totalorder %v7295, 1
  %vm7312 = vcmp.eq.s32.totalorder %v7296, 1
  %vm7313 = vcmp.eq.s32.totalorder %v7297, 1
  %vm7314 = vcmp.eq.s32.totalorder %v7298, 1
  %vm7315 = vcmp.eq.s32.totalorder %v7299, 1
  %vm7316 = vcmp.eq.s32.totalorder %v7300, 1
  %vm7317 = vcmp.eq.s32.totalorder %v7301, 1
  %vm7318 = vcmp.eq.s32.totalorder %v7302, 1
  %vm7319 = vcmp.eq.s32.totalorder %v7303, 1
  %vm7320 = vcmp.eq.s32.totalorder %v7304, 1
  %vm7321 = vcmp.eq.s32.totalorder %v7305, 1
  %v7322 = vsel %vm7306, %v7154, 0.0
  %v7323 = vsel %vm7307, %v7155, 0.0
  %v7324 = vsel %vm7308, %v7156, 0.0
  %v7325 = vsel %vm7309, %v7157, 0.0
  %v7326 = vsel %vm7310, %v7158, 0.0
  %v7327 = vsel %vm7311, %v7159, 0.0
  %v7328 = vsel %vm7312, %v7160, 0.0
  %v7329 = vsel %vm7313, %v7161, 0.0
  %v7330 = vsel %vm7314, %v7162, 0.0
  %v7331 = vsel %vm7315, %v7163, 0.0
  %v7332 = vsel %vm7316, %v7164, 0.0
  %v7333 = vsel %vm7317, %v7165, 0.0
  %v7334 = vsel %vm7318, %v7166, 0.0
  %v7335 = vsel %vm7319, %v7167, 0.0
  %v7336 = vsel %vm7320, %v7168, 0.0
  %v7337 = vsel %vm7321, %v7169, 0.0
  %v7338 = vsub.s32 %v5784, 4
  %v7339 = vsub.s32 %v5798, 4
  %v7340 = vsub.s32 %v5806, 4
  %v7341 = vsub.s32 %v5808, 4
  %v7342 = vsub.s32 %v5791, 4
  %v7343 = vsub.s32 %v5805, 4
  %v7344 = vsub.s32 %v5807, 4
  %v7345 = vsub.s32 %v5809, 4
  %7346 = vset.pattern.permute.xlu0 2
  %7347 = vperm.xlu0 %7346, %v7338
  %v7348 = vpop.permute.xlu0 %7347
  %v7349 = vlaneseq
  %v7350 = vshrl.u32 %v7349, 7
  %v7351 = vsub.s32 0, %v7350
  %v7352 = vrot.slane %v7348, %v7351
  %7353 = vset.pattern.permute.xlu0 2
  %7354 = vperm.xlu0 %7353, %v7339
  %v7355 = vpop.permute.xlu0 %7354
  %v7356 = vlaneseq
  %v7357 = vshrl.u32 %v7356, 7
  %v7358 = vsub.s32 0, %v7357
  %v7359 = vrot.slane %v7355, %v7358
  %7360 = vset.pattern.permute.xlu0 2
  %7361 = vperm.xlu0 %7360, %v7340
  %v7362 = vpop.permute.xlu0 %7361
  %v7363 = vlaneseq
  %v7364 = vshrl.u32 %v7363, 7
  %v7365 = vsub.s32 0, %v7364
  %v7366 = vrot.slane %v7362, %v7365
  %7367 = vset.pattern.permute.xlu0 2
  %7368 = vperm.xlu0 %7367, %v7341
  %v7369 = vpop.permute.xlu0 %7368
  %v7370 = vlaneseq
  %v7371 = vshrl.u32 %v7370, 7
  %v7372 = vsub.s32 0, %v7371
  %v7373 = vrot.slane %v7369, %v7372
  %7374 = vset.pattern.permute.xlu0 2
  %7375 = vperm.xlu0 %7374, %v7342
  %v7376 = vpop.permute.xlu0 %7375
  %v7377 = vlaneseq
  %v7378 = vshrl.u32 %v7377, 7
  %v7379 = vsub.s32 0, %v7378
  %v7380 = vrot.slane %v7376, %v7379
  %7381 = vset.pattern.permute.xlu0 2
  %7382 = vperm.xlu0 %7381, %v7343
  %v7383 = vpop.permute.xlu0 %7382
  %v7384 = vlaneseq
  %v7385 = vshrl.u32 %v7384, 7
  %v7386 = vsub.s32 0, %v7385
  %v7387 = vrot.slane %v7383, %v7386
  %7388 = vset.pattern.permute.xlu0 2
  %7389 = vperm.xlu0 %7388, %v7344
  %v7390 = vpop.permute.xlu0 %7389
  %v7391 = vlaneseq
  %v7392 = vshrl.u32 %v7391, 7
  %v7393 = vsub.s32 0, %v7392
  %v7394 = vrot.slane %v7390, %v7393
  %7395 = vset.pattern.permute.xlu0 2
  %7396 = vperm.xlu0 %7395, %v7345
  %v7397 = vpop.permute.xlu0 %7396
  %v7398 = vlaneseq
  %v7399 = vshrl.u32 %v7398, 7
  %v7400 = vsub.s32 0, %v7399
  %v7401 = vrot.slane %v7397, %v7400
  %vm7402 = vcmp.ge.s32.totalorder %v29, %v7352
  %vm7403 = vcmp.ge.s32.totalorder %v30, %v7352
  %vm7404 = vcmp.ge.s32.totalorder %v29, %v7359
  %vm7405 = vcmp.ge.s32.totalorder %v30, %v7359
  %vm7406 = vcmp.ge.s32.totalorder %v29, %v7366
  %vm7407 = vcmp.ge.s32.totalorder %v30, %v7366
  %vm7408 = vcmp.ge.s32.totalorder %v29, %v7373
  %vm7409 = vcmp.ge.s32.totalorder %v30, %v7373
  %vm7410 = vcmp.ge.s32.totalorder %v29, %v7380
  %vm7411 = vcmp.ge.s32.totalorder %v30, %v7380
  %vm7412 = vcmp.ge.s32.totalorder %v29, %v7387
  %vm7413 = vcmp.ge.s32.totalorder %v30, %v7387
  %vm7414 = vcmp.ge.s32.totalorder %v29, %v7394
  %vm7415 = vcmp.ge.s32.totalorder %v30, %v7394
  %vm7416 = vcmp.ge.s32.totalorder %v29, %v7401
  %vm7417 = vcmp.ge.s32.totalorder %v30, %v7401
  %v7418 = vadd.s32 %v7338, 8
  %v7419 = vadd.s32 %v7339, 8
  %v7420 = vadd.s32 %v7340, 8
  %v7421 = vadd.s32 %v7341, 8
  %v7422 = vadd.s32 %v7342, 8
  %v7423 = vadd.s32 %v7343, 8
  %v7424 = vadd.s32 %v7344, 8
  %v7425 = vadd.s32 %v7345, 8
  %7426 = vset.pattern.permute.xlu0 2
  %7427 = vperm.xlu0 %7426, %v7418
  %v7428 = vpop.permute.xlu0 %7427
  %v7429 = vlaneseq
  %v7430 = vshrl.u32 %v7429, 7
  %v7431 = vsub.s32 0, %v7430
  %v7432 = vrot.slane %v7428, %v7431
  %7433 = vset.pattern.permute.xlu0 2
  %7434 = vperm.xlu0 %7433, %v7419
  %v7435 = vpop.permute.xlu0 %7434
  %v7436 = vlaneseq
  %v7437 = vshrl.u32 %v7436, 7
  %v7438 = vsub.s32 0, %v7437
  %v7439 = vrot.slane %v7435, %v7438
  %7440 = vset.pattern.permute.xlu0 2
  %7441 = vperm.xlu0 %7440, %v7420
  %v7442 = vpop.permute.xlu0 %7441
  %v7443 = vlaneseq
  %v7444 = vshrl.u32 %v7443, 7
  %v7445 = vsub.s32 0, %v7444
  %v7446 = vrot.slane %v7442, %v7445
  %7447 = vset.pattern.permute.xlu0 2
  %7448 = vperm.xlu0 %7447, %v7421
  %v7449 = vpop.permute.xlu0 %7448
  %v7450 = vlaneseq
  %v7451 = vshrl.u32 %v7450, 7
  %v7452 = vsub.s32 0, %v7451
  %v7453 = vrot.slane %v7449, %v7452
  %7454 = vset.pattern.permute.xlu0 2
  %7455 = vperm.xlu0 %7454, %v7422
  %v7456 = vpop.permute.xlu0 %7455
  %v7457 = vlaneseq
  %v7458 = vshrl.u32 %v7457, 7
  %v7459 = vsub.s32 0, %v7458
  %v7460 = vrot.slane %v7456, %v7459
  %7461 = vset.pattern.permute.xlu0 2
  %7462 = vperm.xlu0 %7461, %v7423
  %v7463 = vpop.permute.xlu0 %7462
  %v7464 = vlaneseq
  %v7465 = vshrl.u32 %v7464, 7
  %v7466 = vsub.s32 0, %v7465
  %v7467 = vrot.slane %v7463, %v7466
  %7468 = vset.pattern.permute.xlu0 2
  %7469 = vperm.xlu0 %7468, %v7424
  %v7470 = vpop.permute.xlu0 %7469
  %v7471 = vlaneseq
  %v7472 = vshrl.u32 %v7471, 7
  %v7473 = vsub.s32 0, %v7472
  %v7474 = vrot.slane %v7470, %v7473
  %7475 = vset.pattern.permute.xlu0 2
  %7476 = vperm.xlu0 %7475, %v7425
  %v7477 = vpop.permute.xlu0 %7476
  %v7478 = vlaneseq
  %v7479 = vshrl.u32 %v7478, 7
  %v7480 = vsub.s32 0, %v7479
  %v7481 = vrot.slane %v7477, %v7480
  %vm7482 = vcmp.lt.s32.totalorder %v29, %v7432
  %vm7483 = vcmp.lt.s32.totalorder %v30, %v7432
  %vm7484 = vcmp.lt.s32.totalorder %v29, %v7439
  %vm7485 = vcmp.lt.s32.totalorder %v30, %v7439
  %vm7486 = vcmp.lt.s32.totalorder %v29, %v7446
  %vm7487 = vcmp.lt.s32.totalorder %v30, %v7446
  %vm7488 = vcmp.lt.s32.totalorder %v29, %v7453
  %vm7489 = vcmp.lt.s32.totalorder %v30, %v7453
  %vm7490 = vcmp.lt.s32.totalorder %v29, %v7460
  %vm7491 = vcmp.lt.s32.totalorder %v30, %v7460
  %vm7492 = vcmp.lt.s32.totalorder %v29, %v7467
  %vm7493 = vcmp.lt.s32.totalorder %v30, %v7467
  %vm7494 = vcmp.lt.s32.totalorder %v29, %v7474
  %vm7495 = vcmp.lt.s32.totalorder %v30, %v7474
  %vm7496 = vcmp.lt.s32.totalorder %v29, %v7481
  %vm7497 = vcmp.lt.s32.totalorder %v30, %v7481
  %vm7498 = vmand %vm7402, %vm7482
  %vm7499 = vmand %vm7403, %vm7483
  %vm7500 = vmand %vm7404, %vm7484
  %vm7501 = vmand %vm7405, %vm7485
  %vm7502 = vmand %vm7406, %vm7486
  %vm7503 = vmand %vm7407, %vm7487
  %vm7504 = vmand %vm7408, %vm7488
  %vm7505 = vmand %vm7409, %vm7489
  %vm7506 = vmand %vm7410, %vm7490
  %vm7507 = vmand %vm7411, %vm7491
  %vm7508 = vmand %vm7412, %vm7492
  %vm7509 = vmand %vm7413, %vm7493
  %vm7510 = vmand %vm7414, %vm7494
  %vm7511 = vmand %vm7415, %vm7495
  %vm7512 = vmand %vm7416, %vm7496
  %vm7513 = vmand %vm7417, %vm7497
  %7514 = vset.pattern.permute.xlu0 3
  %7515 = vperm.xlu0 %7514, %v7338
  %v7516 = vpop.permute.xlu0 %7515
  %v7517 = vlaneseq
  %v7518 = vshrl.u32 %v7517, 7
  %v7519 = vsub.s32 0, %v7518
  %v7520 = vrot.slane %v7516, %v7519
  %7521 = vset.pattern.permute.xlu0 3
  %7522 = vperm.xlu0 %7521, %v7339
  %v7523 = vpop.permute.xlu0 %7522
  %v7524 = vlaneseq
  %v7525 = vshrl.u32 %v7524, 7
  %v7526 = vsub.s32 0, %v7525
  %v7527 = vrot.slane %v7523, %v7526
  %7528 = vset.pattern.permute.xlu0 3
  %7529 = vperm.xlu0 %7528, %v7340
  %v7530 = vpop.permute.xlu0 %7529
  %v7531 = vlaneseq
  %v7532 = vshrl.u32 %v7531, 7
  %v7533 = vsub.s32 0, %v7532
  %v7534 = vrot.slane %v7530, %v7533
  %7535 = vset.pattern.permute.xlu0 3
  %7536 = vperm.xlu0 %7535, %v7341
  %v7537 = vpop.permute.xlu0 %7536
  %v7538 = vlaneseq
  %v7539 = vshrl.u32 %v7538, 7
  %v7540 = vsub.s32 0, %v7539
  %v7541 = vrot.slane %v7537, %v7540
  %7542 = vset.pattern.permute.xlu0 3
  %7543 = vperm.xlu0 %7542, %v7342
  %v7544 = vpop.permute.xlu0 %7543
  %v7545 = vlaneseq
  %v7546 = vshrl.u32 %v7545, 7
  %v7547 = vsub.s32 0, %v7546
  %v7548 = vrot.slane %v7544, %v7547
  %7549 = vset.pattern.permute.xlu0 3
  %7550 = vperm.xlu0 %7549, %v7343
  %v7551 = vpop.permute.xlu0 %7550
  %v7552 = vlaneseq
  %v7553 = vshrl.u32 %v7552, 7
  %v7554 = vsub.s32 0, %v7553
  %v7555 = vrot.slane %v7551, %v7554
  %7556 = vset.pattern.permute.xlu0 3
  %7557 = vperm.xlu0 %7556, %v7344
  %v7558 = vpop.permute.xlu0 %7557
  %v7559 = vlaneseq
  %v7560 = vshrl.u32 %v7559, 7
  %v7561 = vsub.s32 0, %v7560
  %v7562 = vrot.slane %v7558, %v7561
  %7563 = vset.pattern.permute.xlu0 3
  %7564 = vperm.xlu0 %7563, %v7345
  %v7565 = vpop.permute.xlu0 %7564
  %v7566 = vlaneseq
  %v7567 = vshrl.u32 %v7566, 7
  %v7568 = vsub.s32 0, %v7567
  %v7569 = vrot.slane %v7565, %v7568
  %vm7570 = vcmp.ge.s32.totalorder %v27, %v7520
  %vm7571 = vcmp.ge.s32.totalorder %v28, %v7520
  %vm7572 = vcmp.ge.s32.totalorder %v27, %v7527
  %vm7573 = vcmp.ge.s32.totalorder %v28, %v7527
  %vm7574 = vcmp.ge.s32.totalorder %v27, %v7534
  %vm7575 = vcmp.ge.s32.totalorder %v28, %v7534
  %vm7576 = vcmp.ge.s32.totalorder %v27, %v7541
  %vm7577 = vcmp.ge.s32.totalorder %v28, %v7541
  %vm7578 = vcmp.ge.s32.totalorder %v27, %v7548
  %vm7579 = vcmp.ge.s32.totalorder %v28, %v7548
  %vm7580 = vcmp.ge.s32.totalorder %v27, %v7555
  %vm7581 = vcmp.ge.s32.totalorder %v28, %v7555
  %vm7582 = vcmp.ge.s32.totalorder %v27, %v7562
  %vm7583 = vcmp.ge.s32.totalorder %v28, %v7562
  %vm7584 = vcmp.ge.s32.totalorder %v27, %v7569
  %vm7585 = vcmp.ge.s32.totalorder %v28, %v7569
  %vm7586 = vmand %vm7498, %vm7570
  %vm7587 = vmand %vm7499, %vm7571
  %vm7588 = vmand %vm7500, %vm7572
  %vm7589 = vmand %vm7501, %vm7573
  %vm7590 = vmand %vm7502, %vm7574
  %vm7591 = vmand %vm7503, %vm7575
  %vm7592 = vmand %vm7504, %vm7576
  %vm7593 = vmand %vm7505, %vm7577
  %vm7594 = vmand %vm7506, %vm7578
  %vm7595 = vmand %vm7507, %vm7579
  %vm7596 = vmand %vm7508, %vm7580
  %vm7597 = vmand %vm7509, %vm7581
  %vm7598 = vmand %vm7510, %vm7582
  %vm7599 = vmand %vm7511, %vm7583
  %vm7600 = vmand %vm7512, %vm7584
  %vm7601 = vmand %vm7513, %vm7585
  %7602 = vset.pattern.permute.xlu0 3
  %7603 = vperm.xlu0 %7602, %v7418
  %v7604 = vpop.permute.xlu0 %7603
  %v7605 = vlaneseq
  %v7606 = vshrl.u32 %v7605, 7
  %v7607 = vsub.s32 0, %v7606
  %v7608 = vrot.slane %v7604, %v7607
  %7609 = vset.pattern.permute.xlu0 3
  %7610 = vperm.xlu0 %7609, %v7419
  %v7611 = vpop.permute.xlu0 %7610
  %v7612 = vlaneseq
  %v7613 = vshrl.u32 %v7612, 7
  %v7614 = vsub.s32 0, %v7613
  %v7615 = vrot.slane %v7611, %v7614
  %7616 = vset.pattern.permute.xlu0 3
  %7617 = vperm.xlu0 %7616, %v7420
  %v7618 = vpop.permute.xlu0 %7617
  %v7619 = vlaneseq
  %v7620 = vshrl.u32 %v7619, 7
  %v7621 = vsub.s32 0, %v7620
  %v7622 = vrot.slane %v7618, %v7621
  %7623 = vset.pattern.permute.xlu0 3
  %7624 = vperm.xlu0 %7623, %v7421
  %v7625 = vpop.permute.xlu0 %7624
  %v7626 = vlaneseq
  %v7627 = vshrl.u32 %v7626, 7
  %v7628 = vsub.s32 0, %v7627
  %v7629 = vrot.slane %v7625, %v7628
  %7630 = vset.pattern.permute.xlu0 3
  %7631 = vperm.xlu0 %7630, %v7422
  %v7632 = vpop.permute.xlu0 %7631
  %v7633 = vlaneseq
  %v7634 = vshrl.u32 %v7633, 7
  %v7635 = vsub.s32 0, %v7634
  %v7636 = vrot.slane %v7632, %v7635
  %7637 = vset.pattern.permute.xlu0 3
  %7638 = vperm.xlu0 %7637, %v7423
  %v7639 = vpop.permute.xlu0 %7638
  %v7640 = vlaneseq
  %v7641 = vshrl.u32 %v7640, 7
  %v7642 = vsub.s32 0, %v7641
  %v7643 = vrot.slane %v7639, %v7642
  %7644 = vset.pattern.permute.xlu0 3
  %7645 = vperm.xlu0 %7644, %v7424
  %v7646 = vpop.permute.xlu0 %7645
  %v7647 = vlaneseq
  %v7648 = vshrl.u32 %v7647, 7
  %v7649 = vsub.s32 0, %v7648
  %v7650 = vrot.slane %v7646, %v7649
  %7651 = vset.pattern.permute.xlu0 3
  %7652 = vperm.xlu0 %7651, %v7425
  %v7653 = vpop.permute.xlu0 %7652
  %v7654 = vlaneseq
  %v7655 = vshrl.u32 %v7654, 7
  %v7656 = vsub.s32 0, %v7655
  %v7657 = vrot.slane %v7653, %v7656
  %vm7658 = vcmp.lt.s32.totalorder %v27, %v7608
  %vm7659 = vcmp.lt.s32.totalorder %v28, %v7608
  %vm7660 = vcmp.lt.s32.totalorder %v27, %v7615
  %vm7661 = vcmp.lt.s32.totalorder %v28, %v7615
  %vm7662 = vcmp.lt.s32.totalorder %v27, %v7622
  %vm7663 = vcmp.lt.s32.totalorder %v28, %v7622
  %vm7664 = vcmp.lt.s32.totalorder %v27, %v7629
  %vm7665 = vcmp.lt.s32.totalorder %v28, %v7629
  %vm7666 = vcmp.lt.s32.totalorder %v27, %v7636
  %vm7667 = vcmp.lt.s32.totalorder %v28, %v7636
  %vm7668 = vcmp.lt.s32.totalorder %v27, %v7643
  %vm7669 = vcmp.lt.s32.totalorder %v28, %v7643
  %vm7670 = vcmp.lt.s32.totalorder %v27, %v7650
  %vm7671 = vcmp.lt.s32.totalorder %v28, %v7650
  %vm7672 = vcmp.lt.s32.totalorder %v27, %v7657
  %vm7673 = vcmp.lt.s32.totalorder %v28, %v7657
  %vm7674 = vmand %vm7586, %vm7658
  %vm7675 = vmand %vm7587, %vm7659
  %vm7676 = vmand %vm7588, %vm7660
  %vm7677 = vmand %vm7589, %vm7661
  %vm7678 = vmand %vm7590, %vm7662
  %vm7679 = vmand %vm7591, %vm7663
  %vm7680 = vmand %vm7592, %vm7664
  %vm7681 = vmand %vm7593, %vm7665
  %vm7682 = vmand %vm7594, %vm7666
  %vm7683 = vmand %vm7595, %vm7667
  %vm7684 = vmand %vm7596, %vm7668
  %vm7685 = vmand %vm7597, %vm7669
  %vm7686 = vmand %vm7598, %vm7670
  %vm7687 = vmand %vm7599, %vm7671
  %vm7688 = vmand %vm7600, %vm7672
  %vm7689 = vmand %vm7601, %vm7673
  %v7690 = vsel %vm7674, 1, 0
  %v7691 = vsel %vm7675, 1, 0
  %v7692 = vsel %vm7676, 1, 0
  %v7693 = vsel %vm7677, 1, 0
  %v7694 = vsel %vm7678, 1, 0
  %v7695 = vsel %vm7679, 1, 0
  %v7696 = vsel %vm7680, 1, 0
  %v7697 = vsel %vm7681, 1, 0
  %v7698 = vsel %vm7682, 1, 0
  %v7699 = vsel %vm7683, 1, 0
  %v7700 = vsel %vm7684, 1, 0
  %v7701 = vsel %vm7685, 1, 0
  %v7702 = vsel %vm7686, 1, 0
  %v7703 = vsel %vm7687, 1, 0
  %v7704 = vsel %vm7688, 1, 0
  %v7705 = vsel %vm7689, 1, 0
  %vm7706 = vcmp.eq.s32.totalorder %v7690, 1
  %vm7707 = vcmp.eq.s32.totalorder %v7691, 1
  %vm7708 = vcmp.eq.s32.totalorder %v7692, 1
  %vm7709 = vcmp.eq.s32.totalorder %v7693, 1
  %vm7710 = vcmp.eq.s32.totalorder %v7694, 1
  %vm7711 = vcmp.eq.s32.totalorder %v7695, 1
  %vm7712 = vcmp.eq.s32.totalorder %v7696, 1
  %vm7713 = vcmp.eq.s32.totalorder %v7697, 1
  %vm7714 = vcmp.eq.s32.totalorder %v7698, 1
  %vm7715 = vcmp.eq.s32.totalorder %v7699, 1
  %vm7716 = vcmp.eq.s32.totalorder %v7700, 1
  %vm7717 = vcmp.eq.s32.totalorder %v7701, 1
  %vm7718 = vcmp.eq.s32.totalorder %v7702, 1
  %vm7719 = vcmp.eq.s32.totalorder %v7703, 1
  %vm7720 = vcmp.eq.s32.totalorder %v7704, 1
  %vm7721 = vcmp.eq.s32.totalorder %v7705, 1
  %v7722 = vsel %vm7706, 0.0, %v7322
  %v7723 = vsel %vm7707, 0.0, %v7323
  %v7724 = vsel %vm7708, 0.0, %v7324
  %v7725 = vsel %vm7709, 0.0, %v7325
  %v7726 = vsel %vm7710, 0.0, %v7326
  %v7727 = vsel %vm7711, 0.0, %v7327
  %v7728 = vsel %vm7712, 0.0, %v7328
  %v7729 = vsel %vm7713, 0.0, %v7329
  %v7730 = vsel %vm7714, 0.0, %v7330
  %v7731 = vsel %vm7715, 0.0, %v7331
  %v7732 = vsel %vm7716, 0.0, %v7332
  %v7733 = vsel %vm7717, 0.0, %v7333
  %v7734 = vsel %vm7718, 0.0, %v7334
  %v7735 = vsel %vm7719, 0.0, %v7335
  %v7736 = vsel %vm7720, 0.0, %v7336
  %v7737 = vsel %vm7721, 0.0, %v7337
  %v7754 = vcombine.low %v7722, %v7723
  %v7755 = vcombine.low %v7724, %v7725
  %v7756 = vcombine.low %v7726, %v7727
  %v7757 = vcombine.low %v7728, %v7729
  %v7758 = vcombine.low %v7730, %v7731
  %v7759 = vcombine.low %v7732, %v7733
  %v7760 = vcombine.low %v7734, %v7735
  %v7761 = vcombine.low %v7736, %v7737
  %s7770 = scalar_lea.vmem %s3, 128
  %7771 = vst [vmem:[%s7770] sm:$0x77] %v7754
  %7772 = vst [vmem:[%s7770 + $0x8] sm:$0x77] %v7755
  %7773 = vst [vmem:[%s7770 + $0x10] sm:$0x77] %v7756
  %7774 = vst [vmem:[%s7770 + $0x18] sm:$0x77] %v7757
  %7775 = vst [vmem:[%s7770 + $0x20] sm:$0x77] %v7758
  %7776 = vst [vmem:[%s7770 + $0x28] sm:$0x77] %v7759
  %7777 = vst [vmem:[%s7770 + $0x30] sm:$0x77] %v7760
  %7778 = vst [vmem:[%s7770 + $0x38] sm:$0x77] %v7761
  %s7779 = scalar_lea.vmem %s0, 192
  %v7780 = vld [vmem:[%s7779] sm:$0x77]
  %v7781 = vld [vmem:[%s7779 + $0x8] sm:$0x77]
  %v7782 = vld [vmem:[%s7779 + $0x10] sm:$0x77]
  %v7783 = vld [vmem:[%s7779 + $0x18] sm:$0x77]
  %v7784 = vld [vmem:[%s7779 + $0x20] sm:$0x77]
  %v7785 = vld [vmem:[%s7779 + $0x28] sm:$0x77]
  %v7786 = vld [vmem:[%s7779 + $0x30] sm:$0x77]
  %v7787 = vld [vmem:[%s7779 + $0x38] sm:$0x77]
  %v7788 = vld [vmem:[%s1 + $0x18] sm:$0xff]
  %v7789 = vld [vmem:[%s2 + $0x18] sm:$0xff]
  %v7791 = vcombine.high %v7788, %v7788
  %v7793 = vunpack.c.l.s4 1966171168
  %v7794 = vunpack.c.0.s8 %v7793
  %v7795 = vlaneseq
  %v7796 = vshrl.u32 %v7795, 7
  %v7797 = vsub.s32 %v7794, %v7796
  %v7798 = vrot.slane %v7788, %v7797
  %v7800 = vunpack.c.l.s4 1966171168
  %v7801 = vunpack.c.0.s8 %v7800
  %v7802 = vlaneseq
  %v7803 = vshrl.u32 %v7802, 7
  %v7804 = vsub.s32 %v7801, %v7803
  %v7805 = vrot.slane %v7791, %v7804
  %v7806 = vcombine.high %v7798, %v7798
  %v7807 = vcombine.high %v7805, %v7805
  %v7809 = vunpack.c.l.s4 1966171168
  %v7810 = vunpack.c.0.s8 %v7809
  %v7811 = vlaneseq
  %v7812 = vshrl.u32 %v7811, 7
  %v7813 = vsub.s32 %v7810, %v7812
  %v7814 = vrot.slane %v7798, %v7813
  %v7816 = vunpack.c.l.s4 1966171168
  %v7817 = vunpack.c.0.s8 %v7816
  %v7818 = vlaneseq
  %v7819 = vshrl.u32 %v7818, 7
  %v7820 = vsub.s32 %v7817, %v7819
  %v7821 = vrot.slane %v7805, %v7820
  %v7823 = vunpack.c.l.s4 1966171168
  %v7824 = vunpack.c.0.s8 %v7823
  %v7825 = vlaneseq
  %v7826 = vshrl.u32 %v7825, 7
  %v7827 = vsub.s32 %v7824, %v7826
  %v7828 = vrot.slane %v7806, %v7827
  %v7830 = vunpack.c.l.s4 1966171168
  %v7831 = vunpack.c.0.s8 %v7830
  %v7832 = vlaneseq
  %v7833 = vshrl.u32 %v7832, 7
  %v7834 = vsub.s32 %v7831, %v7833
  %v7835 = vrot.slane %v7807, %v7834
  %v7836 = vcombine.high %v7814, %v7814
  %v7837 = vcombine.high %v7821, %v7821
  %v7838 = vcombine.high %v7828, %v7828
  %v7839 = vcombine.high %v7835, %v7835
  %v7840 = vlaneseq
  %v7841 = vshrl.u32 %v7840, 7
  %v7842 = vsub.s32 0, %v7841
  %v7843 = vrot.slane %v7814, %v7842
  %v7844 = vlaneseq
  %v7845 = vshrl.u32 %v7844, 7
  %v7846 = vsub.s32 0, %v7845
  %v7847 = vrot.slane %v7828, %v7846
  %v7848 = vlaneseq
  %v7849 = vshrl.u32 %v7848, 7
  %v7850 = vsub.s32 0, %v7849
  %v7851 = vrot.slane %v7836, %v7850
  %v7852 = vlaneseq
  %v7853 = vshrl.u32 %v7852, 7
  %v7854 = vsub.s32 0, %v7853
  %v7855 = vrot.slane %v7838, %v7854
  %v7856 = vlaneseq
  %v7857 = vshrl.u32 %v7856, 7
  %v7858 = vsub.s32 0, %v7857
  %v7859 = vrot.slane %v7821, %v7858
  %v7860 = vlaneseq
  %v7861 = vshrl.u32 %v7860, 7
  %v7862 = vsub.s32 0, %v7861
  %v7863 = vrot.slane %v7835, %v7862
  %v7864 = vlaneseq
  %v7865 = vshrl.u32 %v7864, 7
  %v7866 = vsub.s32 0, %v7865
  %v7867 = vrot.slane %v7837, %v7866
  %v7868 = vlaneseq
  %v7869 = vshrl.u32 %v7868, 7
  %v7870 = vsub.s32 0, %v7869
  %v7871 = vrot.slane %v7839, %v7870
  %7872 = vset.pattern.permute.xlu0 0
  %7873 = vperm.xlu0 %7872, %v7843
  %v7874 = vpop.permute.xlu0 %7873
  %7876 = vset.pattern.permute.xlu0 0
  %7877 = vperm.xlu0 %7876, %v7847
  %v7878 = vpop.permute.xlu0 %7877
  %7880 = vset.pattern.permute.xlu0 0
  %7881 = vperm.xlu0 %7880, %v7851
  %v7882 = vpop.permute.xlu0 %7881
  %7884 = vset.pattern.permute.xlu0 0
  %7885 = vperm.xlu0 %7884, %v7855
  %v7886 = vpop.permute.xlu0 %7885
  %7888 = vset.pattern.permute.xlu0 0
  %7889 = vperm.xlu0 %7888, %v7859
  %v7890 = vpop.permute.xlu0 %7889
  %7892 = vset.pattern.permute.xlu0 0
  %7893 = vperm.xlu0 %7892, %v7863
  %v7894 = vpop.permute.xlu0 %7893
  %7896 = vset.pattern.permute.xlu0 0
  %7897 = vperm.xlu0 %7896, %v7867
  %v7898 = vpop.permute.xlu0 %7897
  %7900 = vset.pattern.permute.xlu0 0
  %7901 = vperm.xlu0 %7900, %v7871
  %v7902 = vpop.permute.xlu0 %7901
  %v7904 = vadd.f32 %v7780, %v7874
  %v7905 = vadd.f32 %v7781, %v7878
  %v7906 = vadd.f32 %v7782, %v7882
  %v7907 = vadd.f32 %v7783, %v7886
  %v7908 = vadd.f32 %v7784, %v7890
  %v7909 = vadd.f32 %v7785, %v7894
  %v7910 = vadd.f32 %v7786, %v7898
  %v7911 = vadd.f32 %v7787, %v7902
  %v7920 = vcombine.high %v7904, %v7904
  %v7921 = vcombine.high %v7905, %v7905
  %v7922 = vcombine.high %v7906, %v7906
  %v7923 = vcombine.high %v7907, %v7907
  %v7924 = vcombine.high %v7908, %v7908
  %v7925 = vcombine.high %v7909, %v7909
  %v7926 = vcombine.high %v7910, %v7910
  %v7927 = vcombine.high %v7911, %v7911
  %v7936 = vsel %vm177, %v7904, 0.0
  %v7937 = vrot.slane %v7936, 4
  %v7938 = vadd.f32 %v7936, %v7937
  %v7939 = vrot.slane %v7938, 2
  %v7940 = vadd.f32 %v7938, %v7939
  %v7941 = vrot.slane %v7940, 1
  %v7942 = vadd.f32 %v7940, %v7941
  %v7943 = vsel %vm177, %v7920, 0.0
  %v7944 = vrot.slane %v7943, 4
  %v7945 = vadd.f32 %v7943, %v7944
  %v7946 = vrot.slane %v7945, 2
  %v7947 = vadd.f32 %v7945, %v7946
  %v7948 = vrot.slane %v7947, 1
  %v7949 = vadd.f32 %v7947, %v7948
  %v7950 = vsel %vm177, %v7905, 0.0
  %v7951 = vrot.slane %v7950, 4
  %v7952 = vadd.f32 %v7950, %v7951
  %v7953 = vrot.slane %v7952, 2
  %v7954 = vadd.f32 %v7952, %v7953
  %v7955 = vrot.slane %v7954, 1
  %v7956 = vadd.f32 %v7954, %v7955
  %v7957 = vsel %vm177, %v7921, 0.0
  %v7958 = vrot.slane %v7957, 4
  %v7959 = vadd.f32 %v7957, %v7958
  %v7960 = vrot.slane %v7959, 2
  %v7961 = vadd.f32 %v7959, %v7960
  %v7962 = vrot.slane %v7961, 1
  %v7963 = vadd.f32 %v7961, %v7962
  %v7964 = vsel %vm177, %v7906, 0.0
  %v7965 = vrot.slane %v7964, 4
  %v7966 = vadd.f32 %v7964, %v7965
  %v7967 = vrot.slane %v7966, 2
  %v7968 = vadd.f32 %v7966, %v7967
  %v7969 = vrot.slane %v7968, 1
  %v7970 = vadd.f32 %v7968, %v7969
  %v7971 = vsel %vm177, %v7922, 0.0
  %v7972 = vrot.slane %v7971, 4
  %v7973 = vadd.f32 %v7971, %v7972
  %v7974 = vrot.slane %v7973, 2
  %v7975 = vadd.f32 %v7973, %v7974
  %v7976 = vrot.slane %v7975, 1
  %v7977 = vadd.f32 %v7975, %v7976
  %v7978 = vsel %vm177, %v7907, 0.0
  %v7979 = vrot.slane %v7978, 4
  %v7980 = vadd.f32 %v7978, %v7979
  %v7981 = vrot.slane %v7980, 2
  %v7982 = vadd.f32 %v7980, %v7981
  %v7983 = vrot.slane %v7982, 1
  %v7984 = vadd.f32 %v7982, %v7983
  %v7985 = vsel %vm177, %v7923, 0.0
  %v7986 = vrot.slane %v7985, 4
  %v7987 = vadd.f32 %v7985, %v7986
  %v7988 = vrot.slane %v7987, 2
  %v7989 = vadd.f32 %v7987, %v7988
  %v7990 = vrot.slane %v7989, 1
  %v7991 = vadd.f32 %v7989, %v7990
  %v7992 = vsel %vm177, %v7908, 0.0
  %v7993 = vrot.slane %v7992, 4
  %v7994 = vadd.f32 %v7992, %v7993
  %v7995 = vrot.slane %v7994, 2
  %v7996 = vadd.f32 %v7994, %v7995
  %v7997 = vrot.slane %v7996, 1
  %v7998 = vadd.f32 %v7996, %v7997
  %v7999 = vsel %vm177, %v7924, 0.0
  %v8000 = vrot.slane %v7999, 4
  %v8001 = vadd.f32 %v7999, %v8000
  %v8002 = vrot.slane %v8001, 2
  %v8003 = vadd.f32 %v8001, %v8002
  %v8004 = vrot.slane %v8003, 1
  %v8005 = vadd.f32 %v8003, %v8004
  %v8006 = vsel %vm177, %v7909, 0.0
  %v8007 = vrot.slane %v8006, 4
  %v8008 = vadd.f32 %v8006, %v8007
  %v8009 = vrot.slane %v8008, 2
  %v8010 = vadd.f32 %v8008, %v8009
  %v8011 = vrot.slane %v8010, 1
  %v8012 = vadd.f32 %v8010, %v8011
  %v8013 = vsel %vm177, %v7925, 0.0
  %v8014 = vrot.slane %v8013, 4
  %v8015 = vadd.f32 %v8013, %v8014
  %v8016 = vrot.slane %v8015, 2
  %v8017 = vadd.f32 %v8015, %v8016
  %v8018 = vrot.slane %v8017, 1
  %v8019 = vadd.f32 %v8017, %v8018
  %v8020 = vsel %vm177, %v7910, 0.0
  %v8021 = vrot.slane %v8020, 4
  %v8022 = vadd.f32 %v8020, %v8021
  %v8023 = vrot.slane %v8022, 2
  %v8024 = vadd.f32 %v8022, %v8023
  %v8025 = vrot.slane %v8024, 1
  %v8026 = vadd.f32 %v8024, %v8025
  %v8027 = vsel %vm177, %v7926, 0.0
  %v8028 = vrot.slane %v8027, 4
  %v8029 = vadd.f32 %v8027, %v8028
  %v8030 = vrot.slane %v8029, 2
  %v8031 = vadd.f32 %v8029, %v8030
  %v8032 = vrot.slane %v8031, 1
  %v8033 = vadd.f32 %v8031, %v8032
  %v8034 = vsel %vm177, %v7911, 0.0
  %v8035 = vrot.slane %v8034, 4
  %v8036 = vadd.f32 %v8034, %v8035
  %v8037 = vrot.slane %v8036, 2
  %v8038 = vadd.f32 %v8036, %v8037
  %v8039 = vrot.slane %v8038, 1
  %v8040 = vadd.f32 %v8038, %v8039
  %v8041 = vsel %vm177, %v7927, 0.0
  %v8042 = vrot.slane %v8041, 4
  %v8043 = vadd.f32 %v8041, %v8042
  %v8044 = vrot.slane %v8043, 2
  %v8045 = vadd.f32 %v8043, %v8044
  %v8046 = vrot.slane %v8045, 1
  %v8047 = vadd.f32 %v8045, %v8046
  %v8048 = vmul.f32 %v7942, %v290
  %v8049 = vmul.f32 %v7949, %v290
  %v8050 = vmul.f32 %v7956, %v290
  %v8051 = vmul.f32 %v7963, %v290
  %v8052 = vmul.f32 %v7970, %v290
  %v8053 = vmul.f32 %v7977, %v290
  %v8054 = vmul.f32 %v7984, %v290
  %v8055 = vmul.f32 %v7991, %v290
  %v8056 = vmul.f32 %v7998, %v290
  %v8057 = vmul.f32 %v8005, %v290
  %v8058 = vmul.f32 %v8012, %v290
  %v8059 = vmul.f32 %v8019, %v290
  %v8060 = vmul.f32 %v8026, %v290
  %v8061 = vmul.f32 %v8033, %v290
  %v8062 = vmul.f32 %v8040, %v290
  %v8063 = vmul.f32 %v8047, %v290
  %v8080 = vcombine.low %v8048, %v8049
  %v8081 = vcombine.low %v8050, %v8051
  %v8082 = vcombine.low %v8052, %v8053
  %v8083 = vcombine.low %v8054, %v8055
  %v8084 = vcombine.low %v8056, %v8057
  %v8085 = vcombine.low %v8058, %v8059
  %v8086 = vcombine.low %v8060, %v8061
  %v8087 = vcombine.low %v8062, %v8063
  %v8096 = vsub.f32 %v7904, %v8080
  %v8097 = vsub.f32 %v7905, %v8081
  %v8098 = vsub.f32 %v7906, %v8082
  %v8099 = vsub.f32 %v7907, %v8083
  %v8100 = vsub.f32 %v7908, %v8084
  %v8101 = vsub.f32 %v7909, %v8085
  %v8102 = vsub.f32 %v7910, %v8086
  %v8103 = vsub.f32 %v7911, %v8087
  %8104 = vset.pattern.permute.xlu0 1
  %8105 = vperm.xlu0 %8104, %v7843
  %v8106 = vpop.permute.xlu0 %8105
  %8108 = vset.pattern.permute.xlu0 1
  %8109 = vperm.xlu0 %8108, %v7847
  %v8110 = vpop.permute.xlu0 %8109
  %8112 = vset.pattern.permute.xlu0 1
  %8113 = vperm.xlu0 %8112, %v7851
  %v8114 = vpop.permute.xlu0 %8113
  %8116 = vset.pattern.permute.xlu0 1
  %8117 = vperm.xlu0 %8116, %v7855
  %v8118 = vpop.permute.xlu0 %8117
  %8120 = vset.pattern.permute.xlu0 1
  %8121 = vperm.xlu0 %8120, %v7859
  %v8122 = vpop.permute.xlu0 %8121
  %8124 = vset.pattern.permute.xlu0 1
  %8125 = vperm.xlu0 %8124, %v7863
  %v8126 = vpop.permute.xlu0 %8125
  %8128 = vset.pattern.permute.xlu0 1
  %8129 = vperm.xlu0 %8128, %v7867
  %v8130 = vpop.permute.xlu0 %8129
  %8132 = vset.pattern.permute.xlu0 1
  %8133 = vperm.xlu0 %8132, %v7871
  %v8134 = vpop.permute.xlu0 %8133
  %v8136 = vmul.f32 %v8096, %v8106
  %v8137 = vmul.f32 %v8097, %v8110
  %v8138 = vmul.f32 %v8098, %v8114
  %v8139 = vmul.f32 %v8099, %v8118
  %v8140 = vmul.f32 %v8100, %v8122
  %v8141 = vmul.f32 %v8101, %v8126
  %v8142 = vmul.f32 %v8102, %v8130
  %v8143 = vmul.f32 %v8103, %v8134
  %v8144 = vadd.f32 %v8136, %v8080
  %v8145 = vadd.f32 %v8137, %v8081
  %v8146 = vadd.f32 %v8138, %v8082
  %v8147 = vadd.f32 %v8139, %v8083
  %v8148 = vadd.f32 %v8140, %v8084
  %v8149 = vadd.f32 %v8141, %v8085
  %v8150 = vadd.f32 %v8142, %v8086
  %v8151 = vadd.f32 %v8143, %v8087
  %v8160 = vcombine.high %v8144, %v8144
  %v8161 = vcombine.high %v8145, %v8145
  %v8162 = vcombine.high %v8146, %v8146
  %v8163 = vcombine.high %v8147, %v8147
  %v8164 = vcombine.high %v8148, %v8148
  %v8165 = vcombine.high %v8149, %v8149
  %v8166 = vcombine.high %v8150, %v8150
  %v8167 = vcombine.high %v8151, %v8151
  %v8176 = vsel %vm177, %v8144, 0.0
  %v8177 = vsel %vm177, %v8160, 0.0
  %v8178 = vadd.f32 %v8176, %v8177
  %8179 = vadd.xlane.f32.xlu0 %v8178
  %v8180 = vpop.xlane.xlu0 %8179
  %v8181 = vsel %vm177, %v8145, 0.0
  %v8182 = vsel %vm177, %v8161, 0.0
  %v8183 = vadd.f32 %v8181, %v8182
  %8184 = vadd.xlane.f32.xlu0 %v8183
  %v8185 = vpop.xlane.xlu0 %8184
  %v8186 = vsel %vm177, %v8146, 0.0
  %v8187 = vsel %vm177, %v8162, 0.0
  %v8188 = vadd.f32 %v8186, %v8187
  %8189 = vadd.xlane.f32.xlu0 %v8188
  %v8190 = vpop.xlane.xlu0 %8189
  %v8191 = vsel %vm177, %v8147, 0.0
  %v8192 = vsel %vm177, %v8163, 0.0
  %v8193 = vadd.f32 %v8191, %v8192
  %8194 = vadd.xlane.f32.xlu0 %v8193
  %v8195 = vpop.xlane.xlu0 %8194
  %v8196 = vsel %vm177, %v8148, 0.0
  %v8197 = vsel %vm177, %v8164, 0.0
  %v8198 = vadd.f32 %v8196, %v8197
  %8199 = vadd.xlane.f32.xlu0 %v8198
  %v8200 = vpop.xlane.xlu0 %8199
  %v8201 = vsel %vm177, %v8149, 0.0
  %v8202 = vsel %vm177, %v8165, 0.0
  %v8203 = vadd.f32 %v8201, %v8202
  %8204 = vadd.xlane.f32.xlu0 %v8203
  %v8205 = vpop.xlane.xlu0 %8204
  %v8206 = vsel %vm177, %v8150, 0.0
  %v8207 = vsel %vm177, %v8166, 0.0
  %v8208 = vadd.f32 %v8206, %v8207
  %8209 = vadd.xlane.f32.xlu0 %v8208
  %v8210 = vpop.xlane.xlu0 %8209
  %v8211 = vsel %vm177, %v8151, 0.0
  %v8212 = vsel %vm177, %v8167, 0.0
  %v8213 = vadd.f32 %v8211, %v8212
  %8214 = vadd.xlane.f32.xlu0 %v8213
  %v8215 = vpop.xlane.xlu0 %8214
  %v8216 = vmul.f32 %v8180, %v459
  %v8217 = vmul.f32 %v8185, %v459
  %v8218 = vmul.f32 %v8190, %v459
  %v8219 = vmul.f32 %v8195, %v459
  %v8220 = vmul.f32 %v8200, %v459
  %v8221 = vmul.f32 %v8205, %v459
  %v8222 = vmul.f32 %v8210, %v459
  %v8223 = vmul.f32 %v8215, %v459
  %v8224 = vsel %vm177, %v8216, 0.0
  %v8225 = vrot.slane %v8224, 4
  %v8226 = vadd.f32 %v8224, %v8225
  %v8227 = vrot.slane %v8226, 2
  %v8228 = vadd.f32 %v8226, %v8227
  %v8229 = vrot.slane %v8228, 1
  %v8230 = vadd.f32 %v8228, %v8229
  %v8231 = vsel %vm177, %v8217, 0.0
  %v8232 = vrot.slane %v8231, 4
  %v8233 = vadd.f32 %v8231, %v8232
  %v8234 = vrot.slane %v8233, 2
  %v8235 = vadd.f32 %v8233, %v8234
  %v8236 = vrot.slane %v8235, 1
  %v8237 = vadd.f32 %v8235, %v8236
  %v8238 = vsel %vm177, %v8218, 0.0
  %v8239 = vrot.slane %v8238, 4
  %v8240 = vadd.f32 %v8238, %v8239
  %v8241 = vrot.slane %v8240, 2
  %v8242 = vadd.f32 %v8240, %v8241
  %v8243 = vrot.slane %v8242, 1
  %v8244 = vadd.f32 %v8242, %v8243
  %v8245 = vsel %vm177, %v8219, 0.0
  %v8246 = vrot.slane %v8245, 4
  %v8247 = vadd.f32 %v8245, %v8246
  %v8248 = vrot.slane %v8247, 2
  %v8249 = vadd.f32 %v8247, %v8248
  %v8250 = vrot.slane %v8249, 1
  %v8251 = vadd.f32 %v8249, %v8250
  %v8252 = vsel %vm177, %v8220, 0.0
  %v8253 = vrot.slane %v8252, 4
  %v8254 = vadd.f32 %v8252, %v8253
  %v8255 = vrot.slane %v8254, 2
  %v8256 = vadd.f32 %v8254, %v8255
  %v8257 = vrot.slane %v8256, 1
  %v8258 = vadd.f32 %v8256, %v8257
  %v8259 = vsel %vm177, %v8221, 0.0
  %v8260 = vrot.slane %v8259, 4
  %v8261 = vadd.f32 %v8259, %v8260
  %v8262 = vrot.slane %v8261, 2
  %v8263 = vadd.f32 %v8261, %v8262
  %v8264 = vrot.slane %v8263, 1
  %v8265 = vadd.f32 %v8263, %v8264
  %v8266 = vsel %vm177, %v8222, 0.0
  %v8267 = vrot.slane %v8266, 4
  %v8268 = vadd.f32 %v8266, %v8267
  %v8269 = vrot.slane %v8268, 2
  %v8270 = vadd.f32 %v8268, %v8269
  %v8271 = vrot.slane %v8270, 1
  %v8272 = vadd.f32 %v8270, %v8271
  %v8273 = vsel %vm177, %v8223, 0.0
  %v8274 = vrot.slane %v8273, 4
  %v8275 = vadd.f32 %v8273, %v8274
  %v8276 = vrot.slane %v8275, 2
  %v8277 = vadd.f32 %v8275, %v8276
  %v8278 = vrot.slane %v8277, 1
  %v8279 = vadd.f32 %v8277, %v8278
  %v8280 = vmul.f32 %v8230, %v290
  %v8281 = vmul.f32 %v8237, %v290
  %v8282 = vmul.f32 %v8244, %v290
  %v8283 = vmul.f32 %v8251, %v290
  %v8284 = vmul.f32 %v8258, %v290
  %v8285 = vmul.f32 %v8265, %v290
  %v8286 = vmul.f32 %v8272, %v290
  %v8287 = vmul.f32 %v8279, %v290
  %v8288 = vsub.f32 %v8144, %v8280
  %v8289 = vsub.f32 %v8145, %v8281
  %v8290 = vsub.f32 %v8146, %v8282
  %v8291 = vsub.f32 %v8147, %v8283
  %v8292 = vsub.f32 %v8148, %v8284
  %v8293 = vsub.f32 %v8149, %v8285
  %v8294 = vsub.f32 %v8150, %v8286
  %v8295 = vsub.f32 %v8151, %v8287
  %8296 = vset.pattern.permute.xlu0 2
  %8297 = vperm.xlu0 %8296, %v7843
  %v8298 = vpop.permute.xlu0 %8297
  %8300 = vset.pattern.permute.xlu0 2
  %8301 = vperm.xlu0 %8300, %v7847
  %v8302 = vpop.permute.xlu0 %8301
  %8304 = vset.pattern.permute.xlu0 2
  %8305 = vperm.xlu0 %8304, %v7851
  %v8306 = vpop.permute.xlu0 %8305
  %8308 = vset.pattern.permute.xlu0 2
  %8309 = vperm.xlu0 %8308, %v7855
  %v8310 = vpop.permute.xlu0 %8309
  %8312 = vset.pattern.permute.xlu0 2
  %8313 = vperm.xlu0 %8312, %v7859
  %v8314 = vpop.permute.xlu0 %8313
  %8316 = vset.pattern.permute.xlu0 2
  %8317 = vperm.xlu0 %8316, %v7863
  %v8318 = vpop.permute.xlu0 %8317
  %8320 = vset.pattern.permute.xlu0 2
  %8321 = vperm.xlu0 %8320, %v7867
  %v8322 = vpop.permute.xlu0 %8321
  %8324 = vset.pattern.permute.xlu0 2
  %8325 = vperm.xlu0 %8324, %v7871
  %v8326 = vpop.permute.xlu0 %8325
  %v8328 = vmul.f32 %v8288, %v8298
  %v8329 = vmul.f32 %v8289, %v8302
  %v8330 = vmul.f32 %v8290, %v8306
  %v8331 = vmul.f32 %v8291, %v8310
  %v8332 = vmul.f32 %v8292, %v8314
  %v8333 = vmul.f32 %v8293, %v8318
  %v8334 = vmul.f32 %v8294, %v8322
  %v8335 = vmul.f32 %v8295, %v8326
  %v8336 = vadd.f32 %v8328, %v8280
  %v8337 = vadd.f32 %v8329, %v8281
  %v8338 = vadd.f32 %v8330, %v8282
  %v8339 = vadd.f32 %v8331, %v8283
  %v8340 = vadd.f32 %v8332, %v8284
  %v8341 = vadd.f32 %v8333, %v8285
  %v8342 = vadd.f32 %v8334, %v8286
  %v8343 = vadd.f32 %v8335, %v8287
  %v8344 = vcombine.high %v7789, %v7789
  %v8346 = vunpack.c.l.s4 1966171168
  %v8347 = vunpack.c.0.s8 %v8346
  %v8348 = vlaneseq
  %v8349 = vshrl.u32 %v8348, 7
  %v8350 = vsub.s32 %v8347, %v8349
  %v8351 = vrot.slane %v7789, %v8350
  %v8353 = vunpack.c.l.s4 1966171168
  %v8354 = vunpack.c.0.s8 %v8353
  %v8355 = vlaneseq
  %v8356 = vshrl.u32 %v8355, 7
  %v8357 = vsub.s32 %v8354, %v8356
  %v8358 = vrot.slane %v8344, %v8357
  %v8359 = vcombine.high %v8351, %v8351
  %v8360 = vcombine.high %v8358, %v8358
  %v8362 = vunpack.c.l.s4 1966171168
  %v8363 = vunpack.c.0.s8 %v8362
  %v8364 = vlaneseq
  %v8365 = vshrl.u32 %v8364, 7
  %v8366 = vsub.s32 %v8363, %v8365
  %v8367 = vrot.slane %v8351, %v8366
  %v8369 = vunpack.c.l.s4 1966171168
  %v8370 = vunpack.c.0.s8 %v8369
  %v8371 = vlaneseq
  %v8372 = vshrl.u32 %v8371, 7
  %v8373 = vsub.s32 %v8370, %v8372
  %v8374 = vrot.slane %v8358, %v8373
  %v8376 = vunpack.c.l.s4 1966171168
  %v8377 = vunpack.c.0.s8 %v8376
  %v8378 = vlaneseq
  %v8379 = vshrl.u32 %v8378, 7
  %v8380 = vsub.s32 %v8377, %v8379
  %v8381 = vrot.slane %v8359, %v8380
  %v8383 = vunpack.c.l.s4 1966171168
  %v8384 = vunpack.c.0.s8 %v8383
  %v8385 = vlaneseq
  %v8386 = vshrl.u32 %v8385, 7
  %v8387 = vsub.s32 %v8384, %v8386
  %v8388 = vrot.slane %v8360, %v8387
  %v8389 = vcombine.high %v8367, %v8367
  %v8390 = vcombine.high %v8374, %v8374
  %v8391 = vcombine.high %v8381, %v8381
  %v8392 = vcombine.high %v8388, %v8388
  %vm8393 = vcmp.eq.s32.totalorder %v8367, 4294967294
  %vm8394 = vcmp.eq.s32.totalorder %v8381, 4294967294
  %vm8395 = vcmp.eq.s32.totalorder %v8389, 4294967294
  %vm8396 = vcmp.eq.s32.totalorder %v8391, 4294967294
  %vm8397 = vcmp.eq.s32.totalorder %v8374, 4294967294
  %vm8398 = vcmp.eq.s32.totalorder %v8388, 4294967294
  %vm8399 = vcmp.eq.s32.totalorder %v8390, 4294967294
  %vm8400 = vcmp.eq.s32.totalorder %v8392, 4294967294
  %v8409 = vcombine.high %v8336, %v8336
  %v8410 = vcombine.high %v8337, %v8337
  %v8411 = vcombine.high %v8338, %v8338
  %v8412 = vcombine.high %v8339, %v8339
  %v8413 = vcombine.high %v8340, %v8340
  %v8414 = vcombine.high %v8341, %v8341
  %v8415 = vcombine.high %v8342, %v8342
  %v8416 = vcombine.high %v8343, %v8343
  %8417 = vrot.lane.b32.xlu0 %v8409, 32
  %v8418 = vpop.permute.xlu0 %8417
  %8419 = vrot.lane.b32.xlu0 %v8410, 32
  %v8420 = vpop.permute.xlu0 %8419
  %8421 = vrot.lane.b32.xlu0 %v8411, 32
  %v8422 = vpop.permute.xlu0 %8421
  %8423 = vrot.lane.b32.xlu0 %v8412, 32
  %v8424 = vpop.permute.xlu0 %8423
  %8425 = vrot.lane.b32.xlu0 %v8413, 32
  %v8426 = vpop.permute.xlu0 %8425
  %8427 = vrot.lane.b32.xlu0 %v8414, 32
  %v8428 = vpop.permute.xlu0 %8427
  %8429 = vrot.lane.b32.xlu0 %v8415, 32
  %v8430 = vpop.permute.xlu0 %8429
  %8431 = vrot.lane.b32.xlu0 %v8416, 32
  %v8432 = vpop.permute.xlu0 %8431
  %8441 = vrot.lane.b32.xlu0 %v8336, 32
  %v8442 = vpop.permute.xlu0 %8441
  %8443 = vrot.lane.b32.xlu0 %v8337, 32
  %v8444 = vpop.permute.xlu0 %8443
  %8445 = vrot.lane.b32.xlu0 %v8338, 32
  %v8446 = vpop.permute.xlu0 %8445
  %8447 = vrot.lane.b32.xlu0 %v8339, 32
  %v8448 = vpop.permute.xlu0 %8447
  %8449 = vrot.lane.b32.xlu0 %v8340, 32
  %v8450 = vpop.permute.xlu0 %8449
  %8451 = vrot.lane.b32.xlu0 %v8341, 32
  %v8452 = vpop.permute.xlu0 %8451
  %8453 = vrot.lane.b32.xlu0 %v8342, 32
  %v8454 = vpop.permute.xlu0 %8453
  %8455 = vrot.lane.b32.xlu0 %v8343, 32
  %v8456 = vpop.permute.xlu0 %8455
  %v8457 = vsel %vm701, %v8442, %v8418
  %v8458 = vsel %vm701, %v8444, %v8420
  %v8459 = vsel %vm701, %v8446, %v8422
  %v8460 = vsel %vm701, %v8448, %v8424
  %v8461 = vsel %vm701, %v8450, %v8426
  %v8462 = vsel %vm701, %v8452, %v8428
  %v8463 = vsel %vm701, %v8454, %v8430
  %v8464 = vsel %vm701, %v8456, %v8432
  %v8481 = vsel %vm701, %v8418, %v8442
  %v8482 = vsel %vm701, %v8420, %v8444
  %v8483 = vsel %vm701, %v8422, %v8446
  %v8484 = vsel %vm701, %v8424, %v8448
  %v8485 = vsel %vm701, %v8426, %v8450
  %v8486 = vsel %vm701, %v8428, %v8452
  %v8487 = vsel %vm701, %v8430, %v8454
  %v8488 = vsel %vm701, %v8432, %v8456
  %v8489 = vsel %vm8393, 1, 0
  %v8490 = vsel %vm8394, 1, 0
  %v8491 = vsel %vm8395, 1, 0
  %v8492 = vsel %vm8396, 1, 0
  %v8493 = vsel %vm8397, 1, 0
  %v8494 = vsel %vm8398, 1, 0
  %v8495 = vsel %vm8399, 1, 0
  %v8496 = vsel %vm8400, 1, 0
  %v8497 = vlaneseq
  %v8498 = vshrl.u32 %v8497, 7
  %v8499 = vsub.s32 0, %v8498
  %v8500 = vrot.slane %v8489, %v8499
  %v8501 = vlaneseq
  %v8502 = vshrl.u32 %v8501, 7
  %v8503 = vsub.s32 0, %v8502
  %v8504 = vrot.slane %v8490, %v8503
  %v8505 = vlaneseq
  %v8506 = vshrl.u32 %v8505, 7
  %v8507 = vsub.s32 0, %v8506
  %v8508 = vrot.slane %v8491, %v8507
  %v8509 = vlaneseq
  %v8510 = vshrl.u32 %v8509, 7
  %v8511 = vsub.s32 0, %v8510
  %v8512 = vrot.slane %v8492, %v8511
  %v8513 = vlaneseq
  %v8514 = vshrl.u32 %v8513, 7
  %v8515 = vsub.s32 0, %v8514
  %v8516 = vrot.slane %v8493, %v8515
  %v8517 = vlaneseq
  %v8518 = vshrl.u32 %v8517, 7
  %v8519 = vsub.s32 0, %v8518
  %v8520 = vrot.slane %v8494, %v8519
  %v8521 = vlaneseq
  %v8522 = vshrl.u32 %v8521, 7
  %v8523 = vsub.s32 0, %v8522
  %v8524 = vrot.slane %v8495, %v8523
  %v8525 = vlaneseq
  %v8526 = vshrl.u32 %v8525, 7
  %v8527 = vsub.s32 0, %v8526
  %v8528 = vrot.slane %v8496, %v8527
  %8529 = vset.pattern.permute.xlu0 0
  %8530 = vperm.xlu0 %8529, %v8500
  %v8531 = vpop.permute.xlu0 %8530
  %8532 = vset.pattern.permute.xlu0 0
  %8533 = vperm.xlu0 %8532, %v8504
  %v8534 = vpop.permute.xlu0 %8533
  %8535 = vset.pattern.permute.xlu0 0
  %8536 = vperm.xlu0 %8535, %v8508
  %v8537 = vpop.permute.xlu0 %8536
  %8538 = vset.pattern.permute.xlu0 0
  %8539 = vperm.xlu0 %8538, %v8512
  %v8540 = vpop.permute.xlu0 %8539
  %8541 = vset.pattern.permute.xlu0 0
  %8542 = vperm.xlu0 %8541, %v8516
  %v8543 = vpop.permute.xlu0 %8542
  %8544 = vset.pattern.permute.xlu0 0
  %8545 = vperm.xlu0 %8544, %v8520
  %v8546 = vpop.permute.xlu0 %8545
  %8547 = vset.pattern.permute.xlu0 0
  %8548 = vperm.xlu0 %8547, %v8524
  %v8549 = vpop.permute.xlu0 %8548
  %8550 = vset.pattern.permute.xlu0 0
  %8551 = vperm.xlu0 %8550, %v8528
  %v8552 = vpop.permute.xlu0 %8551
  %vm8553 = vcmp.eq.s32.totalorder %v8531, 1
  %vm8554 = vcmp.eq.s32.totalorder %v8534, 1
  %vm8555 = vcmp.eq.s32.totalorder %v8537, 1
  %vm8556 = vcmp.eq.s32.totalorder %v8540, 1
  %vm8557 = vcmp.eq.s32.totalorder %v8543, 1
  %vm8558 = vcmp.eq.s32.totalorder %v8546, 1
  %vm8559 = vcmp.eq.s32.totalorder %v8549, 1
  %vm8560 = vcmp.eq.s32.totalorder %v8552, 1
  %v8569 = vsel %vm8553, %v8481, %v8336
  %v8570 = vsel %vm8553, %v8457, %v8409
  %v8571 = vsel %vm8554, %v8482, %v8337
  %v8572 = vsel %vm8554, %v8458, %v8410
  %v8573 = vsel %vm8555, %v8483, %v8338
  %v8574 = vsel %vm8555, %v8459, %v8411
  %v8575 = vsel %vm8556, %v8484, %v8339
  %v8576 = vsel %vm8556, %v8460, %v8412
  %v8577 = vsel %vm8557, %v8485, %v8340
  %v8578 = vsel %vm8557, %v8461, %v8413
  %v8579 = vsel %vm8558, %v8486, %v8341
  %v8580 = vsel %vm8558, %v8462, %v8414
  %v8581 = vsel %vm8559, %v8487, %v8342
  %v8582 = vsel %vm8559, %v8463, %v8415
  %v8583 = vsel %vm8560, %v8488, %v8343
  %v8584 = vsel %vm8560, %v8464, %v8416
  %vm8585 = vcmp.eq.s32.totalorder %v8367, 4294967295
  %vm8586 = vcmp.eq.s32.totalorder %v8381, 4294967295
  %vm8587 = vcmp.eq.s32.totalorder %v8389, 4294967295
  %vm8588 = vcmp.eq.s32.totalorder %v8391, 4294967295
  %vm8589 = vcmp.eq.s32.totalorder %v8374, 4294967295
  %vm8590 = vcmp.eq.s32.totalorder %v8388, 4294967295
  %vm8591 = vcmp.eq.s32.totalorder %v8390, 4294967295
  %vm8592 = vcmp.eq.s32.totalorder %v8392, 4294967295
  %8593 = vrot.lane.b32.xlu0 %v8409, 16
  %v8594 = vpop.permute.xlu0 %8593
  %8595 = vrot.lane.b32.xlu0 %v8410, 16
  %v8596 = vpop.permute.xlu0 %8595
  %8597 = vrot.lane.b32.xlu0 %v8411, 16
  %v8598 = vpop.permute.xlu0 %8597
  %8599 = vrot.lane.b32.xlu0 %v8412, 16
  %v8600 = vpop.permute.xlu0 %8599
  %8601 = vrot.lane.b32.xlu0 %v8413, 16
  %v8602 = vpop.permute.xlu0 %8601
  %8603 = vrot.lane.b32.xlu0 %v8414, 16
  %v8604 = vpop.permute.xlu0 %8603
  %8605 = vrot.lane.b32.xlu0 %v8415, 16
  %v8606 = vpop.permute.xlu0 %8605
  %8607 = vrot.lane.b32.xlu0 %v8416, 16
  %v8608 = vpop.permute.xlu0 %8607
  %8617 = vrot.lane.b32.xlu0 %v8336, 16
  %v8618 = vpop.permute.xlu0 %8617
  %8619 = vrot.lane.b32.xlu0 %v8337, 16
  %v8620 = vpop.permute.xlu0 %8619
  %8621 = vrot.lane.b32.xlu0 %v8338, 16
  %v8622 = vpop.permute.xlu0 %8621
  %8623 = vrot.lane.b32.xlu0 %v8339, 16
  %v8624 = vpop.permute.xlu0 %8623
  %8625 = vrot.lane.b32.xlu0 %v8340, 16
  %v8626 = vpop.permute.xlu0 %8625
  %8627 = vrot.lane.b32.xlu0 %v8341, 16
  %v8628 = vpop.permute.xlu0 %8627
  %8629 = vrot.lane.b32.xlu0 %v8342, 16
  %v8630 = vpop.permute.xlu0 %8629
  %8631 = vrot.lane.b32.xlu0 %v8343, 16
  %v8632 = vpop.permute.xlu0 %8631
  %v8633 = vsel %vm878, %v8618, %v8594
  %v8634 = vsel %vm878, %v8620, %v8596
  %v8635 = vsel %vm878, %v8622, %v8598
  %v8636 = vsel %vm878, %v8624, %v8600
  %v8637 = vsel %vm878, %v8626, %v8602
  %v8638 = vsel %vm878, %v8628, %v8604
  %v8639 = vsel %vm878, %v8630, %v8606
  %v8640 = vsel %vm878, %v8632, %v8608
  %v8657 = vsel %vm878, %v8594, %v8618
  %v8658 = vsel %vm878, %v8596, %v8620
  %v8659 = vsel %vm878, %v8598, %v8622
  %v8660 = vsel %vm878, %v8600, %v8624
  %v8661 = vsel %vm878, %v8602, %v8626
  %v8662 = vsel %vm878, %v8604, %v8628
  %v8663 = vsel %vm878, %v8606, %v8630
  %v8664 = vsel %vm878, %v8608, %v8632
  %v8665 = vsel %vm8585, 1, 0
  %v8666 = vsel %vm8586, 1, 0
  %v8667 = vsel %vm8587, 1, 0
  %v8668 = vsel %vm8588, 1, 0
  %v8669 = vsel %vm8589, 1, 0
  %v8670 = vsel %vm8590, 1, 0
  %v8671 = vsel %vm8591, 1, 0
  %v8672 = vsel %vm8592, 1, 0
  %v8673 = vlaneseq
  %v8674 = vshrl.u32 %v8673, 7
  %v8675 = vsub.s32 0, %v8674
  %v8676 = vrot.slane %v8665, %v8675
  %v8677 = vlaneseq
  %v8678 = vshrl.u32 %v8677, 7
  %v8679 = vsub.s32 0, %v8678
  %v8680 = vrot.slane %v8666, %v8679
  %v8681 = vlaneseq
  %v8682 = vshrl.u32 %v8681, 7
  %v8683 = vsub.s32 0, %v8682
  %v8684 = vrot.slane %v8667, %v8683
  %v8685 = vlaneseq
  %v8686 = vshrl.u32 %v8685, 7
  %v8687 = vsub.s32 0, %v8686
  %v8688 = vrot.slane %v8668, %v8687
  %v8689 = vlaneseq
  %v8690 = vshrl.u32 %v8689, 7
  %v8691 = vsub.s32 0, %v8690
  %v8692 = vrot.slane %v8669, %v8691
  %v8693 = vlaneseq
  %v8694 = vshrl.u32 %v8693, 7
  %v8695 = vsub.s32 0, %v8694
  %v8696 = vrot.slane %v8670, %v8695
  %v8697 = vlaneseq
  %v8698 = vshrl.u32 %v8697, 7
  %v8699 = vsub.s32 0, %v8698
  %v8700 = vrot.slane %v8671, %v8699
  %v8701 = vlaneseq
  %v8702 = vshrl.u32 %v8701, 7
  %v8703 = vsub.s32 0, %v8702
  %v8704 = vrot.slane %v8672, %v8703
  %8705 = vset.pattern.permute.xlu0 0
  %8706 = vperm.xlu0 %8705, %v8676
  %v8707 = vpop.permute.xlu0 %8706
  %8708 = vset.pattern.permute.xlu0 0
  %8709 = vperm.xlu0 %8708, %v8680
  %v8710 = vpop.permute.xlu0 %8709
  %8711 = vset.pattern.permute.xlu0 0
  %8712 = vperm.xlu0 %8711, %v8684
  %v8713 = vpop.permute.xlu0 %8712
  %8714 = vset.pattern.permute.xlu0 0
  %8715 = vperm.xlu0 %8714, %v8688
  %v8716 = vpop.permute.xlu0 %8715
  %8717 = vset.pattern.permute.xlu0 0
  %8718 = vperm.xlu0 %8717, %v8692
  %v8719 = vpop.permute.xlu0 %8718
  %8720 = vset.pattern.permute.xlu0 0
  %8721 = vperm.xlu0 %8720, %v8696
  %v8722 = vpop.permute.xlu0 %8721
  %8723 = vset.pattern.permute.xlu0 0
  %8724 = vperm.xlu0 %8723, %v8700
  %v8725 = vpop.permute.xlu0 %8724
  %8726 = vset.pattern.permute.xlu0 0
  %8727 = vperm.xlu0 %8726, %v8704
  %v8728 = vpop.permute.xlu0 %8727
  %vm8729 = vcmp.eq.s32.totalorder %v8707, 1
  %vm8730 = vcmp.eq.s32.totalorder %v8710, 1
  %vm8731 = vcmp.eq.s32.totalorder %v8713, 1
  %vm8732 = vcmp.eq.s32.totalorder %v8716, 1
  %vm8733 = vcmp.eq.s32.totalorder %v8719, 1
  %vm8734 = vcmp.eq.s32.totalorder %v8722, 1
  %vm8735 = vcmp.eq.s32.totalorder %v8725, 1
  %vm8736 = vcmp.eq.s32.totalorder %v8728, 1
  %v8737 = vsel %vm8729, %v8657, %v8569
  %v8738 = vsel %vm8729, %v8633, %v8570
  %v8739 = vsel %vm8730, %v8658, %v8571
  %v8740 = vsel %vm8730, %v8634, %v8572
  %v8741 = vsel %vm8731, %v8659, %v8573
  %v8742 = vsel %vm8731, %v8635, %v8574
  %v8743 = vsel %vm8732, %v8660, %v8575
  %v8744 = vsel %vm8732, %v8636, %v8576
  %v8745 = vsel %vm8733, %v8661, %v8577
  %v8746 = vsel %vm8733, %v8637, %v8578
  %v8747 = vsel %vm8734, %v8662, %v8579
  %v8748 = vsel %vm8734, %v8638, %v8580
  %v8749 = vsel %vm8735, %v8663, %v8581
  %v8750 = vsel %vm8735, %v8639, %v8582
  %v8751 = vsel %vm8736, %v8664, %v8583
  %v8752 = vsel %vm8736, %v8640, %v8584
  %vm8753 = vcmp.eq.s32.totalorder %v8367, 1
  %vm8754 = vcmp.eq.s32.totalorder %v8381, 1
  %vm8755 = vcmp.eq.s32.totalorder %v8389, 1
  %vm8756 = vcmp.eq.s32.totalorder %v8391, 1
  %vm8757 = vcmp.eq.s32.totalorder %v8374, 1
  %vm8758 = vcmp.eq.s32.totalorder %v8388, 1
  %vm8759 = vcmp.eq.s32.totalorder %v8390, 1
  %vm8760 = vcmp.eq.s32.totalorder %v8392, 1
  %8761 = vrot.lane.b32.xlu0 %v8336, 112
  %v8762 = vpop.permute.xlu0 %8761
  %8763 = vrot.lane.b32.xlu0 %v8409, 112
  %v8764 = vpop.permute.xlu0 %8763
  %8765 = vrot.lane.b32.xlu0 %v8337, 112
  %v8766 = vpop.permute.xlu0 %8765
  %8767 = vrot.lane.b32.xlu0 %v8410, 112
  %v8768 = vpop.permute.xlu0 %8767
  %8769 = vrot.lane.b32.xlu0 %v8338, 112
  %v8770 = vpop.permute.xlu0 %8769
  %8771 = vrot.lane.b32.xlu0 %v8411, 112
  %v8772 = vpop.permute.xlu0 %8771
  %8773 = vrot.lane.b32.xlu0 %v8339, 112
  %v8774 = vpop.permute.xlu0 %8773
  %8775 = vrot.lane.b32.xlu0 %v8412, 112
  %v8776 = vpop.permute.xlu0 %8775
  %8777 = vrot.lane.b32.xlu0 %v8340, 112
  %v8778 = vpop.permute.xlu0 %8777
  %8779 = vrot.lane.b32.xlu0 %v8413, 112
  %v8780 = vpop.permute.xlu0 %8779
  %8781 = vrot.lane.b32.xlu0 %v8341, 112
  %v8782 = vpop.permute.xlu0 %8781
  %8783 = vrot.lane.b32.xlu0 %v8414, 112
  %v8784 = vpop.permute.xlu0 %8783
  %8785 = vrot.lane.b32.xlu0 %v8342, 112
  %v8786 = vpop.permute.xlu0 %8785
  %8787 = vrot.lane.b32.xlu0 %v8415, 112
  %v8788 = vpop.permute.xlu0 %8787
  %8789 = vrot.lane.b32.xlu0 %v8343, 112
  %v8790 = vpop.permute.xlu0 %8789
  %8791 = vrot.lane.b32.xlu0 %v8416, 112
  %v8792 = vpop.permute.xlu0 %8791
  %v8793 = vsel %vm1039, %v8762, %v8764
  %v8794 = vsel %vm1039, %v8766, %v8768
  %v8795 = vsel %vm1039, %v8770, %v8772
  %v8796 = vsel %vm1039, %v8774, %v8776
  %v8797 = vsel %vm1039, %v8778, %v8780
  %v8798 = vsel %vm1039, %v8782, %v8784
  %v8799 = vsel %vm1039, %v8786, %v8788
  %v8800 = vsel %vm1039, %v8790, %v8792
  %v8825 = vsel %vm1039, %v8764, %v8762
  %v8826 = vsel %vm1039, %v8768, %v8766
  %v8827 = vsel %vm1039, %v8772, %v8770
  %v8828 = vsel %vm1039, %v8776, %v8774
  %v8829 = vsel %vm1039, %v8780, %v8778
  %v8830 = vsel %vm1039, %v8784, %v8782
  %v8831 = vsel %vm1039, %v8788, %v8786
  %v8832 = vsel %vm1039, %v8792, %v8790
  %v8833 = vsel %vm8753, 1, 0
  %v8834 = vsel %vm8754, 1, 0
  %v8835 = vsel %vm8755, 1, 0
  %v8836 = vsel %vm8756, 1, 0
  %v8837 = vsel %vm8757, 1, 0
  %v8838 = vsel %vm8758, 1, 0
  %v8839 = vsel %vm8759, 1, 0
  %v8840 = vsel %vm8760, 1, 0
  %v8841 = vlaneseq
  %v8842 = vshrl.u32 %v8841, 7
  %v8843 = vsub.s32 0, %v8842
  %v8844 = vrot.slane %v8833, %v8843
  %v8845 = vlaneseq
  %v8846 = vshrl.u32 %v8845, 7
  %v8847 = vsub.s32 0, %v8846
  %v8848 = vrot.slane %v8834, %v8847
  %v8849 = vlaneseq
  %v8850 = vshrl.u32 %v8849, 7
  %v8851 = vsub.s32 0, %v8850
  %v8852 = vrot.slane %v8835, %v8851
  %v8853 = vlaneseq
  %v8854 = vshrl.u32 %v8853, 7
  %v8855 = vsub.s32 0, %v8854
  %v8856 = vrot.slane %v8836, %v8855
  %v8857 = vlaneseq
  %v8858 = vshrl.u32 %v8857, 7
  %v8859 = vsub.s32 0, %v8858
  %v8860 = vrot.slane %v8837, %v8859
  %v8861 = vlaneseq
  %v8862 = vshrl.u32 %v8861, 7
  %v8863 = vsub.s32 0, %v8862
  %v8864 = vrot.slane %v8838, %v8863
  %v8865 = vlaneseq
  %v8866 = vshrl.u32 %v8865, 7
  %v8867 = vsub.s32 0, %v8866
  %v8868 = vrot.slane %v8839, %v8867
  %v8869 = vlaneseq
  %v8870 = vshrl.u32 %v8869, 7
  %v8871 = vsub.s32 0, %v8870
  %v8872 = vrot.slane %v8840, %v8871
  %8873 = vset.pattern.permute.xlu0 0
  %8874 = vperm.xlu0 %8873, %v8844
  %v8875 = vpop.permute.xlu0 %8874
  %8876 = vset.pattern.permute.xlu0 0
  %8877 = vperm.xlu0 %8876, %v8848
  %v8878 = vpop.permute.xlu0 %8877
  %8879 = vset.pattern.permute.xlu0 0
  %8880 = vperm.xlu0 %8879, %v8852
  %v8881 = vpop.permute.xlu0 %8880
  %8882 = vset.pattern.permute.xlu0 0
  %8883 = vperm.xlu0 %8882, %v8856
  %v8884 = vpop.permute.xlu0 %8883
  %8885 = vset.pattern.permute.xlu0 0
  %8886 = vperm.xlu0 %8885, %v8860
  %v8887 = vpop.permute.xlu0 %8886
  %8888 = vset.pattern.permute.xlu0 0
  %8889 = vperm.xlu0 %8888, %v8864
  %v8890 = vpop.permute.xlu0 %8889
  %8891 = vset.pattern.permute.xlu0 0
  %8892 = vperm.xlu0 %8891, %v8868
  %v8893 = vpop.permute.xlu0 %8892
  %8894 = vset.pattern.permute.xlu0 0
  %8895 = vperm.xlu0 %8894, %v8872
  %v8896 = vpop.permute.xlu0 %8895
  %vm8897 = vcmp.eq.s32.totalorder %v8875, 1
  %vm8898 = vcmp.eq.s32.totalorder %v8878, 1
  %vm8899 = vcmp.eq.s32.totalorder %v8881, 1
  %vm8900 = vcmp.eq.s32.totalorder %v8884, 1
  %vm8901 = vcmp.eq.s32.totalorder %v8887, 1
  %vm8902 = vcmp.eq.s32.totalorder %v8890, 1
  %vm8903 = vcmp.eq.s32.totalorder %v8893, 1
  %vm8904 = vcmp.eq.s32.totalorder %v8896, 1
  %v8905 = vsel %vm8897, %v8793, %v8737
  %v8906 = vsel %vm8897, %v8825, %v8738
  %v8907 = vsel %vm8898, %v8794, %v8739
  %v8908 = vsel %vm8898, %v8826, %v8740
  %v8909 = vsel %vm8899, %v8795, %v8741
  %v8910 = vsel %vm8899, %v8827, %v8742
  %v8911 = vsel %vm8900, %v8796, %v8743
  %v8912 = vsel %vm8900, %v8828, %v8744
  %v8913 = vsel %vm8901, %v8797, %v8745
  %v8914 = vsel %vm8901, %v8829, %v8746
  %v8915 = vsel %vm8902, %v8798, %v8747
  %v8916 = vsel %vm8902, %v8830, %v8748
  %v8917 = vsel %vm8903, %v8799, %v8749
  %v8918 = vsel %vm8903, %v8831, %v8750
  %v8919 = vsel %vm8904, %v8800, %v8751
  %v8920 = vsel %vm8904, %v8832, %v8752
  %vm8921 = vcmp.eq.s32.totalorder %v8367, 2
  %vm8922 = vcmp.eq.s32.totalorder %v8381, 2
  %vm8923 = vcmp.eq.s32.totalorder %v8389, 2
  %vm8924 = vcmp.eq.s32.totalorder %v8391, 2
  %vm8925 = vcmp.eq.s32.totalorder %v8374, 2
  %vm8926 = vcmp.eq.s32.totalorder %v8388, 2
  %vm8927 = vcmp.eq.s32.totalorder %v8390, 2
  %vm8928 = vcmp.eq.s32.totalorder %v8392, 2
  %8929 = vrot.lane.b32.xlu0 %v8336, 96
  %v8930 = vpop.permute.xlu0 %8929
  %8931 = vrot.lane.b32.xlu0 %v8409, 96
  %v8932 = vpop.permute.xlu0 %8931
  %8933 = vrot.lane.b32.xlu0 %v8337, 96
  %v8934 = vpop.permute.xlu0 %8933
  %8935 = vrot.lane.b32.xlu0 %v8410, 96
  %v8936 = vpop.permute.xlu0 %8935
  %8937 = vrot.lane.b32.xlu0 %v8338, 96
  %v8938 = vpop.permute.xlu0 %8937
  %8939 = vrot.lane.b32.xlu0 %v8411, 96
  %v8940 = vpop.permute.xlu0 %8939
  %8941 = vrot.lane.b32.xlu0 %v8339, 96
  %v8942 = vpop.permute.xlu0 %8941
  %8943 = vrot.lane.b32.xlu0 %v8412, 96
  %v8944 = vpop.permute.xlu0 %8943
  %8945 = vrot.lane.b32.xlu0 %v8340, 96
  %v8946 = vpop.permute.xlu0 %8945
  %8947 = vrot.lane.b32.xlu0 %v8413, 96
  %v8948 = vpop.permute.xlu0 %8947
  %8949 = vrot.lane.b32.xlu0 %v8341, 96
  %v8950 = vpop.permute.xlu0 %8949
  %8951 = vrot.lane.b32.xlu0 %v8414, 96
  %v8952 = vpop.permute.xlu0 %8951
  %8953 = vrot.lane.b32.xlu0 %v8342, 96
  %v8954 = vpop.permute.xlu0 %8953
  %8955 = vrot.lane.b32.xlu0 %v8415, 96
  %v8956 = vpop.permute.xlu0 %8955
  %8957 = vrot.lane.b32.xlu0 %v8343, 96
  %v8958 = vpop.permute.xlu0 %8957
  %8959 = vrot.lane.b32.xlu0 %v8416, 96
  %v8960 = vpop.permute.xlu0 %8959
  %v8961 = vsel %vm1208, %v8930, %v8932
  %v8962 = vsel %vm1208, %v8934, %v8936
  %v8963 = vsel %vm1208, %v8938, %v8940
  %v8964 = vsel %vm1208, %v8942, %v8944
  %v8965 = vsel %vm1208, %v8946, %v8948
  %v8966 = vsel %vm1208, %v8950, %v8952
  %v8967 = vsel %vm1208, %v8954, %v8956
  %v8968 = vsel %vm1208, %v8958, %v8960
  %v8993 = vsel %vm1208, %v8932, %v8930
  %v8994 = vsel %vm1208, %v8936, %v8934
  %v8995 = vsel %vm1208, %v8940, %v8938
  %v8996 = vsel %vm1208, %v8944, %v8942
  %v8997 = vsel %vm1208, %v8948, %v8946
  %v8998 = vsel %vm1208, %v8952, %v8950
  %v8999 = vsel %vm1208, %v8956, %v8954
  %v9000 = vsel %vm1208, %v8960, %v8958
  %v9001 = vsel %vm8921, 1, 0
  %v9002 = vsel %vm8922, 1, 0
  %v9003 = vsel %vm8923, 1, 0
  %v9004 = vsel %vm8924, 1, 0
  %v9005 = vsel %vm8925, 1, 0
  %v9006 = vsel %vm8926, 1, 0
  %v9007 = vsel %vm8927, 1, 0
  %v9008 = vsel %vm8928, 1, 0
  %v9009 = vlaneseq
  %v9010 = vshrl.u32 %v9009, 7
  %v9011 = vsub.s32 0, %v9010
  %v9012 = vrot.slane %v9001, %v9011
  %v9013 = vlaneseq
  %v9014 = vshrl.u32 %v9013, 7
  %v9015 = vsub.s32 0, %v9014
  %v9016 = vrot.slane %v9002, %v9015
  %v9017 = vlaneseq
  %v9018 = vshrl.u32 %v9017, 7
  %v9019 = vsub.s32 0, %v9018
  %v9020 = vrot.slane %v9003, %v9019
  %v9021 = vlaneseq
  %v9022 = vshrl.u32 %v9021, 7
  %v9023 = vsub.s32 0, %v9022
  %v9024 = vrot.slane %v9004, %v9023
  %v9025 = vlaneseq
  %v9026 = vshrl.u32 %v9025, 7
  %v9027 = vsub.s32 0, %v9026
  %v9028 = vrot.slane %v9005, %v9027
  %v9029 = vlaneseq
  %v9030 = vshrl.u32 %v9029, 7
  %v9031 = vsub.s32 0, %v9030
  %v9032 = vrot.slane %v9006, %v9031
  %v9033 = vlaneseq
  %v9034 = vshrl.u32 %v9033, 7
  %v9035 = vsub.s32 0, %v9034
  %v9036 = vrot.slane %v9007, %v9035
  %v9037 = vlaneseq
  %v9038 = vshrl.u32 %v9037, 7
  %v9039 = vsub.s32 0, %v9038
  %v9040 = vrot.slane %v9008, %v9039
  %9041 = vset.pattern.permute.xlu0 0
  %9042 = vperm.xlu0 %9041, %v9012
  %v9043 = vpop.permute.xlu0 %9042
  %9044 = vset.pattern.permute.xlu0 0
  %9045 = vperm.xlu0 %9044, %v9016
  %v9046 = vpop.permute.xlu0 %9045
  %9047 = vset.pattern.permute.xlu0 0
  %9048 = vperm.xlu0 %9047, %v9020
  %v9049 = vpop.permute.xlu0 %9048
  %9050 = vset.pattern.permute.xlu0 0
  %9051 = vperm.xlu0 %9050, %v9024
  %v9052 = vpop.permute.xlu0 %9051
  %9053 = vset.pattern.permute.xlu0 0
  %9054 = vperm.xlu0 %9053, %v9028
  %v9055 = vpop.permute.xlu0 %9054
  %9056 = vset.pattern.permute.xlu0 0
  %9057 = vperm.xlu0 %9056, %v9032
  %v9058 = vpop.permute.xlu0 %9057
  %9059 = vset.pattern.permute.xlu0 0
  %9060 = vperm.xlu0 %9059, %v9036
  %v9061 = vpop.permute.xlu0 %9060
  %9062 = vset.pattern.permute.xlu0 0
  %9063 = vperm.xlu0 %9062, %v9040
  %v9064 = vpop.permute.xlu0 %9063
  %vm9065 = vcmp.eq.s32.totalorder %v9043, 1
  %vm9066 = vcmp.eq.s32.totalorder %v9046, 1
  %vm9067 = vcmp.eq.s32.totalorder %v9049, 1
  %vm9068 = vcmp.eq.s32.totalorder %v9052, 1
  %vm9069 = vcmp.eq.s32.totalorder %v9055, 1
  %vm9070 = vcmp.eq.s32.totalorder %v9058, 1
  %vm9071 = vcmp.eq.s32.totalorder %v9061, 1
  %vm9072 = vcmp.eq.s32.totalorder %v9064, 1
  %v9073 = vsel %vm9065, %v8961, %v8905
  %v9074 = vsel %vm9065, %v8993, %v8906
  %v9075 = vsel %vm9066, %v8962, %v8907
  %v9076 = vsel %vm9066, %v8994, %v8908
  %v9077 = vsel %vm9067, %v8963, %v8909
  %v9078 = vsel %vm9067, %v8995, %v8910
  %v9079 = vsel %vm9068, %v8964, %v8911
  %v9080 = vsel %vm9068, %v8996, %v8912
  %v9081 = vsel %vm9069, %v8965, %v8913
  %v9082 = vsel %vm9069, %v8997, %v8914
  %v9083 = vsel %vm9070, %v8966, %v8915
  %v9084 = vsel %vm9070, %v8998, %v8916
  %v9085 = vsel %vm9071, %v8967, %v8917
  %v9086 = vsel %vm9071, %v8999, %v8918
  %v9087 = vsel %vm9072, %v8968, %v8919
  %v9088 = vsel %vm9072, %v9000, %v8920
  %9089 = vset.pattern.permute.xlu0 0
  %9090 = vperm.xlu0 %9089, %v8367
  %v9091 = vpop.permute.xlu0 %9090
  %v9092 = vlaneseq
  %v9093 = vshrl.u32 %v9092, 7
  %v9094 = vsub.s32 0, %v9093
  %v9095 = vrot.slane %v9091, %v9094
  %9096 = vset.pattern.permute.xlu0 0
  %9097 = vperm.xlu0 %9096, %v8381
  %v9098 = vpop.permute.xlu0 %9097
  %v9099 = vlaneseq
  %v9100 = vshrl.u32 %v9099, 7
  %v9101 = vsub.s32 0, %v9100
  %v9102 = vrot.slane %v9098, %v9101
  %9103 = vset.pattern.permute.xlu0 0
  %9104 = vperm.xlu0 %9103, %v8389
  %v9105 = vpop.permute.xlu0 %9104
  %v9106 = vlaneseq
  %v9107 = vshrl.u32 %v9106, 7
  %v9108 = vsub.s32 0, %v9107
  %v9109 = vrot.slane %v9105, %v9108
  %9110 = vset.pattern.permute.xlu0 0
  %9111 = vperm.xlu0 %9110, %v8391
  %v9112 = vpop.permute.xlu0 %9111
  %v9113 = vlaneseq
  %v9114 = vshrl.u32 %v9113, 7
  %v9115 = vsub.s32 0, %v9114
  %v9116 = vrot.slane %v9112, %v9115
  %9117 = vset.pattern.permute.xlu0 0
  %9118 = vperm.xlu0 %9117, %v8374
  %v9119 = vpop.permute.xlu0 %9118
  %v9120 = vlaneseq
  %v9121 = vshrl.u32 %v9120, 7
  %v9122 = vsub.s32 0, %v9121
  %v9123 = vrot.slane %v9119, %v9122
  %9124 = vset.pattern.permute.xlu0 0
  %9125 = vperm.xlu0 %9124, %v8388
  %v9126 = vpop.permute.xlu0 %9125
  %v9127 = vlaneseq
  %v9128 = vshrl.u32 %v9127, 7
  %v9129 = vsub.s32 0, %v9128
  %v9130 = vrot.slane %v9126, %v9129
  %9131 = vset.pattern.permute.xlu0 0
  %9132 = vperm.xlu0 %9131, %v8390
  %v9133 = vpop.permute.xlu0 %9132
  %v9134 = vlaneseq
  %v9135 = vshrl.u32 %v9134, 7
  %v9136 = vsub.s32 0, %v9135
  %v9137 = vrot.slane %v9133, %v9136
  %9138 = vset.pattern.permute.xlu0 0
  %9139 = vperm.xlu0 %9138, %v8392
  %v9140 = vpop.permute.xlu0 %9139
  %v9141 = vlaneseq
  %v9142 = vshrl.u32 %v9141, 7
  %v9143 = vsub.s32 0, %v9142
  %v9144 = vrot.slane %v9140, %v9143
  %v9145 = vadd.s32 %v29, %v9095
  %v9146 = vadd.s32 %v30, %v9095
  %v9147 = vadd.s32 %v29, %v9102
  %v9148 = vadd.s32 %v30, %v9102
  %v9149 = vadd.s32 %v29, %v9109
  %v9150 = vadd.s32 %v30, %v9109
  %v9151 = vadd.s32 %v29, %v9116
  %v9152 = vadd.s32 %v30, %v9116
  %v9153 = vadd.s32 %v29, %v9123
  %v9154 = vadd.s32 %v30, %v9123
  %v9155 = vadd.s32 %v29, %v9130
  %v9156 = vadd.s32 %v30, %v9130
  %v9157 = vadd.s32 %v29, %v9137
  %v9158 = vadd.s32 %v30, %v9137
  %v9159 = vadd.s32 %v29, %v9144
  %v9160 = vadd.s32 %v30, %v9144
  %vm9161 = vcmp.ge.s32.totalorder %v9145, 0
  %vm9162 = vcmp.ge.s32.totalorder %v9146, 0
  %vm9163 = vcmp.ge.s32.totalorder %v9147, 0
  %vm9164 = vcmp.ge.s32.totalorder %v9148, 0
  %vm9165 = vcmp.ge.s32.totalorder %v9149, 0
  %vm9166 = vcmp.ge.s32.totalorder %v9150, 0
  %vm9167 = vcmp.ge.s32.totalorder %v9151, 0
  %vm9168 = vcmp.ge.s32.totalorder %v9152, 0
  %vm9169 = vcmp.ge.s32.totalorder %v9153, 0
  %vm9170 = vcmp.ge.s32.totalorder %v9154, 0
  %vm9171 = vcmp.ge.s32.totalorder %v9155, 0
  %vm9172 = vcmp.ge.s32.totalorder %v9156, 0
  %vm9173 = vcmp.ge.s32.totalorder %v9157, 0
  %vm9174 = vcmp.ge.s32.totalorder %v9158, 0
  %vm9175 = vcmp.ge.s32.totalorder %v9159, 0
  %vm9176 = vcmp.ge.s32.totalorder %v9160, 0
  %vm9177 = vcmp.lt.s32.totalorder %v9145, 16
  %vm9178 = vcmp.lt.s32.totalorder %v9146, 16
  %vm9179 = vcmp.lt.s32.totalorder %v9147, 16
  %vm9180 = vcmp.lt.s32.totalorder %v9148, 16
  %vm9181 = vcmp.lt.s32.totalorder %v9149, 16
  %vm9182 = vcmp.lt.s32.totalorder %v9150, 16
  %vm9183 = vcmp.lt.s32.totalorder %v9151, 16
  %vm9184 = vcmp.lt.s32.totalorder %v9152, 16
  %vm9185 = vcmp.lt.s32.totalorder %v9153, 16
  %vm9186 = vcmp.lt.s32.totalorder %v9154, 16
  %vm9187 = vcmp.lt.s32.totalorder %v9155, 16
  %vm9188 = vcmp.lt.s32.totalorder %v9156, 16
  %vm9189 = vcmp.lt.s32.totalorder %v9157, 16
  %vm9190 = vcmp.lt.s32.totalorder %v9158, 16
  %vm9191 = vcmp.lt.s32.totalorder %v9159, 16
  %vm9192 = vcmp.lt.s32.totalorder %v9160, 16
  %vm9193 = vmand %vm9161, %vm9177
  %vm9194 = vmand %vm9162, %vm9178
  %vm9195 = vmand %vm9163, %vm9179
  %vm9196 = vmand %vm9164, %vm9180
  %vm9197 = vmand %vm9165, %vm9181
  %vm9198 = vmand %vm9166, %vm9182
  %vm9199 = vmand %vm9167, %vm9183
  %vm9200 = vmand %vm9168, %vm9184
  %vm9201 = vmand %vm9169, %vm9185
  %vm9202 = vmand %vm9170, %vm9186
  %vm9203 = vmand %vm9171, %vm9187
  %vm9204 = vmand %vm9172, %vm9188
  %vm9205 = vmand %vm9173, %vm9189
  %vm9206 = vmand %vm9174, %vm9190
  %vm9207 = vmand %vm9175, %vm9191
  %vm9208 = vmand %vm9176, %vm9192
  %v9209 = vsel %vm9193, 1, 0
  %v9210 = vsel %vm9194, 1, 0
  %v9211 = vsel %vm9195, 1, 0
  %v9212 = vsel %vm9196, 1, 0
  %v9213 = vsel %vm9197, 1, 0
  %v9214 = vsel %vm9198, 1, 0
  %v9215 = vsel %vm9199, 1, 0
  %v9216 = vsel %vm9200, 1, 0
  %v9217 = vsel %vm9201, 1, 0
  %v9218 = vsel %vm9202, 1, 0
  %v9219 = vsel %vm9203, 1, 0
  %v9220 = vsel %vm9204, 1, 0
  %v9221 = vsel %vm9205, 1, 0
  %v9222 = vsel %vm9206, 1, 0
  %v9223 = vsel %vm9207, 1, 0
  %v9224 = vsel %vm9208, 1, 0
  %vm9225 = vcmp.eq.s32.totalorder %v9209, 1
  %vm9226 = vcmp.eq.s32.totalorder %v9210, 1
  %vm9227 = vcmp.eq.s32.totalorder %v9211, 1
  %vm9228 = vcmp.eq.s32.totalorder %v9212, 1
  %vm9229 = vcmp.eq.s32.totalorder %v9213, 1
  %vm9230 = vcmp.eq.s32.totalorder %v9214, 1
  %vm9231 = vcmp.eq.s32.totalorder %v9215, 1
  %vm9232 = vcmp.eq.s32.totalorder %v9216, 1
  %vm9233 = vcmp.eq.s32.totalorder %v9217, 1
  %vm9234 = vcmp.eq.s32.totalorder %v9218, 1
  %vm9235 = vcmp.eq.s32.totalorder %v9219, 1
  %vm9236 = vcmp.eq.s32.totalorder %v9220, 1
  %vm9237 = vcmp.eq.s32.totalorder %v9221, 1
  %vm9238 = vcmp.eq.s32.totalorder %v9222, 1
  %vm9239 = vcmp.eq.s32.totalorder %v9223, 1
  %vm9240 = vcmp.eq.s32.totalorder %v9224, 1
  %v9241 = vsel %vm9225, %v9073, 0.0
  %v9242 = vsel %vm9226, %v9074, 0.0
  %v9243 = vsel %vm9227, %v9075, 0.0
  %v9244 = vsel %vm9228, %v9076, 0.0
  %v9245 = vsel %vm9229, %v9077, 0.0
  %v9246 = vsel %vm9230, %v9078, 0.0
  %v9247 = vsel %vm9231, %v9079, 0.0
  %v9248 = vsel %vm9232, %v9080, 0.0
  %v9249 = vsel %vm9233, %v9081, 0.0
  %v9250 = vsel %vm9234, %v9082, 0.0
  %v9251 = vsel %vm9235, %v9083, 0.0
  %v9252 = vsel %vm9236, %v9084, 0.0
  %v9253 = vsel %vm9237, %v9085, 0.0
  %v9254 = vsel %vm9238, %v9086, 0.0
  %v9255 = vsel %vm9239, %v9087, 0.0
  %v9256 = vsel %vm9240, %v9088, 0.0
  %9265 = vrot.lane.b32.xlu0 %v9242, 2
  %v9266 = vpop.permute.xlu0 %9265
  %9267 = vrot.lane.b32.xlu0 %v9244, 2
  %v9268 = vpop.permute.xlu0 %9267
  %9269 = vrot.lane.b32.xlu0 %v9246, 2
  %v9270 = vpop.permute.xlu0 %9269
  %9271 = vrot.lane.b32.xlu0 %v9248, 2
  %v9272 = vpop.permute.xlu0 %9271
  %9273 = vrot.lane.b32.xlu0 %v9250, 2
  %v9274 = vpop.permute.xlu0 %9273
  %9275 = vrot.lane.b32.xlu0 %v9252, 2
  %v9276 = vpop.permute.xlu0 %9275
  %9277 = vrot.lane.b32.xlu0 %v9254, 2
  %v9278 = vpop.permute.xlu0 %9277
  %9279 = vrot.lane.b32.xlu0 %v9256, 2
  %v9280 = vpop.permute.xlu0 %9279
  %9297 = vrot.lane.b32.xlu0 %v9241, 2
  %v9298 = vpop.permute.xlu0 %9297
  %9299 = vrot.lane.b32.xlu0 %v9243, 2
  %v9300 = vpop.permute.xlu0 %9299
  %9301 = vrot.lane.b32.xlu0 %v9245, 2
  %v9302 = vpop.permute.xlu0 %9301
  %9303 = vrot.lane.b32.xlu0 %v9247, 2
  %v9304 = vpop.permute.xlu0 %9303
  %9305 = vrot.lane.b32.xlu0 %v9249, 2
  %v9306 = vpop.permute.xlu0 %9305
  %9307 = vrot.lane.b32.xlu0 %v9251, 2
  %v9308 = vpop.permute.xlu0 %9307
  %9309 = vrot.lane.b32.xlu0 %v9253, 2
  %v9310 = vpop.permute.xlu0 %9309
  %9311 = vrot.lane.b32.xlu0 %v9255, 2
  %v9312 = vpop.permute.xlu0 %9311
  %v9313 = vsel %vm1561, %v9298, %v9266
  %v9314 = vsel %vm1561, %v9300, %v9268
  %v9315 = vsel %vm1561, %v9302, %v9270
  %v9316 = vsel %vm1561, %v9304, %v9272
  %v9317 = vsel %vm1561, %v9306, %v9274
  %v9318 = vsel %vm1561, %v9308, %v9276
  %v9319 = vsel %vm1561, %v9310, %v9278
  %v9320 = vsel %vm1561, %v9312, %v9280
  %v9337 = vsel %vm1561, %v9266, %v9298
  %v9338 = vsel %vm1561, %v9268, %v9300
  %v9339 = vsel %vm1561, %v9270, %v9302
  %v9340 = vsel %vm1561, %v9272, %v9304
  %v9341 = vsel %vm1561, %v9274, %v9306
  %v9342 = vsel %vm1561, %v9276, %v9308
  %v9343 = vsel %vm1561, %v9278, %v9310
  %v9344 = vsel %vm1561, %v9280, %v9312
  %9345 = vset.pattern.permute.xlu0 1
  %9346 = vperm.xlu0 %9345, %v8500
  %v9347 = vpop.permute.xlu0 %9346
  %9348 = vset.pattern.permute.xlu0 1
  %9349 = vperm.xlu0 %9348, %v8504
  %v9350 = vpop.permute.xlu0 %9349
  %9351 = vset.pattern.permute.xlu0 1
  %9352 = vperm.xlu0 %9351, %v8508
  %v9353 = vpop.permute.xlu0 %9352
  %9354 = vset.pattern.permute.xlu0 1
  %9355 = vperm.xlu0 %9354, %v8512
  %v9356 = vpop.permute.xlu0 %9355
  %9357 = vset.pattern.permute.xlu0 1
  %9358 = vperm.xlu0 %9357, %v8516
  %v9359 = vpop.permute.xlu0 %9358
  %9360 = vset.pattern.permute.xlu0 1
  %9361 = vperm.xlu0 %9360, %v8520
  %v9362 = vpop.permute.xlu0 %9361
  %9363 = vset.pattern.permute.xlu0 1
  %9364 = vperm.xlu0 %9363, %v8524
  %v9365 = vpop.permute.xlu0 %9364
  %9366 = vset.pattern.permute.xlu0 1
  %9367 = vperm.xlu0 %9366, %v8528
  %v9368 = vpop.permute.xlu0 %9367
  %vm9369 = vcmp.eq.s32.totalorder %v9347, 1
  %vm9370 = vcmp.eq.s32.totalorder %v9350, 1
  %vm9371 = vcmp.eq.s32.totalorder %v9353, 1
  %vm9372 = vcmp.eq.s32.totalorder %v9356, 1
  %vm9373 = vcmp.eq.s32.totalorder %v9359, 1
  %vm9374 = vcmp.eq.s32.totalorder %v9362, 1
  %vm9375 = vcmp.eq.s32.totalorder %v9365, 1
  %vm9376 = vcmp.eq.s32.totalorder %v9368, 1
  %v9377 = vsel %vm9369, %v9337, %v9241
  %v9378 = vsel %vm9369, %v9313, %v9242
  %v9379 = vsel %vm9370, %v9338, %v9243
  %v9380 = vsel %vm9370, %v9314, %v9244
  %v9381 = vsel %vm9371, %v9339, %v9245
  %v9382 = vsel %vm9371, %v9315, %v9246
  %v9383 = vsel %vm9372, %v9340, %v9247
  %v9384 = vsel %vm9372, %v9316, %v9248
  %v9385 = vsel %vm9373, %v9341, %v9249
  %v9386 = vsel %vm9373, %v9317, %v9250
  %v9387 = vsel %vm9374, %v9342, %v9251
  %v9388 = vsel %vm9374, %v9318, %v9252
  %v9389 = vsel %vm9375, %v9343, %v9253
  %v9390 = vsel %vm9375, %v9319, %v9254
  %v9391 = vsel %vm9376, %v9344, %v9255
  %v9392 = vsel %vm9376, %v9320, %v9256
  %9393 = vrot.lane.b32.xlu0 %v9242, 1
  %v9394 = vpop.permute.xlu0 %9393
  %9395 = vrot.lane.b32.xlu0 %v9244, 1
  %v9396 = vpop.permute.xlu0 %9395
  %9397 = vrot.lane.b32.xlu0 %v9246, 1
  %v9398 = vpop.permute.xlu0 %9397
  %9399 = vrot.lane.b32.xlu0 %v9248, 1
  %v9400 = vpop.permute.xlu0 %9399
  %9401 = vrot.lane.b32.xlu0 %v9250, 1
  %v9402 = vpop.permute.xlu0 %9401
  %9403 = vrot.lane.b32.xlu0 %v9252, 1
  %v9404 = vpop.permute.xlu0 %9403
  %9405 = vrot.lane.b32.xlu0 %v9254, 1
  %v9406 = vpop.permute.xlu0 %9405
  %9407 = vrot.lane.b32.xlu0 %v9256, 1
  %v9408 = vpop.permute.xlu0 %9407
  %9417 = vrot.lane.b32.xlu0 %v9241, 1
  %v9418 = vpop.permute.xlu0 %9417
  %9419 = vrot.lane.b32.xlu0 %v9243, 1
  %v9420 = vpop.permute.xlu0 %9419
  %9421 = vrot.lane.b32.xlu0 %v9245, 1
  %v9422 = vpop.permute.xlu0 %9421
  %9423 = vrot.lane.b32.xlu0 %v9247, 1
  %v9424 = vpop.permute.xlu0 %9423
  %9425 = vrot.lane.b32.xlu0 %v9249, 1
  %v9426 = vpop.permute.xlu0 %9425
  %9427 = vrot.lane.b32.xlu0 %v9251, 1
  %v9428 = vpop.permute.xlu0 %9427
  %9429 = vrot.lane.b32.xlu0 %v9253, 1
  %v9430 = vpop.permute.xlu0 %9429
  %9431 = vrot.lane.b32.xlu0 %v9255, 1
  %v9432 = vpop.permute.xlu0 %9431
  %v9433 = vsel %vm1682, %v9418, %v9394
  %v9434 = vsel %vm1682, %v9420, %v9396
  %v9435 = vsel %vm1682, %v9422, %v9398
  %v9436 = vsel %vm1682, %v9424, %v9400
  %v9437 = vsel %vm1682, %v9426, %v9402
  %v9438 = vsel %vm1682, %v9428, %v9404
  %v9439 = vsel %vm1682, %v9430, %v9406
  %v9440 = vsel %vm1682, %v9432, %v9408
  %v9457 = vsel %vm1682, %v9394, %v9418
  %v9458 = vsel %vm1682, %v9396, %v9420
  %v9459 = vsel %vm1682, %v9398, %v9422
  %v9460 = vsel %vm1682, %v9400, %v9424
  %v9461 = vsel %vm1682, %v9402, %v9426
  %v9462 = vsel %vm1682, %v9404, %v9428
  %v9463 = vsel %vm1682, %v9406, %v9430
  %v9464 = vsel %vm1682, %v9408, %v9432
  %9465 = vset.pattern.permute.xlu0 1
  %9466 = vperm.xlu0 %9465, %v8676
  %v9467 = vpop.permute.xlu0 %9466
  %9468 = vset.pattern.permute.xlu0 1
  %9469 = vperm.xlu0 %9468, %v8680
  %v9470 = vpop.permute.xlu0 %9469
  %9471 = vset.pattern.permute.xlu0 1
  %9472 = vperm.xlu0 %9471, %v8684
  %v9473 = vpop.permute.xlu0 %9472
  %9474 = vset.pattern.permute.xlu0 1
  %9475 = vperm.xlu0 %9474, %v8688
  %v9476 = vpop.permute.xlu0 %9475
  %9477 = vset.pattern.permute.xlu0 1
  %9478 = vperm.xlu0 %9477, %v8692
  %v9479 = vpop.permute.xlu0 %9478
  %9480 = vset.pattern.permute.xlu0 1
  %9481 = vperm.xlu0 %9480, %v8696
  %v9482 = vpop.permute.xlu0 %9481
  %9483 = vset.pattern.permute.xlu0 1
  %9484 = vperm.xlu0 %9483, %v8700
  %v9485 = vpop.permute.xlu0 %9484
  %9486 = vset.pattern.permute.xlu0 1
  %9487 = vperm.xlu0 %9486, %v8704
  %v9488 = vpop.permute.xlu0 %9487
  %vm9489 = vcmp.eq.s32.totalorder %v9467, 1
  %vm9490 = vcmp.eq.s32.totalorder %v9470, 1
  %vm9491 = vcmp.eq.s32.totalorder %v9473, 1
  %vm9492 = vcmp.eq.s32.totalorder %v9476, 1
  %vm9493 = vcmp.eq.s32.totalorder %v9479, 1
  %vm9494 = vcmp.eq.s32.totalorder %v9482, 1
  %vm9495 = vcmp.eq.s32.totalorder %v9485, 1
  %vm9496 = vcmp.eq.s32.totalorder %v9488, 1
  %v9497 = vsel %vm9489, %v9457, %v9377
  %v9498 = vsel %vm9489, %v9433, %v9378
  %v9499 = vsel %vm9490, %v9458, %v9379
  %v9500 = vsel %vm9490, %v9434, %v9380
  %v9501 = vsel %vm9491, %v9459, %v9381
  %v9502 = vsel %vm9491, %v9435, %v9382
  %v9503 = vsel %vm9492, %v9460, %v9383
  %v9504 = vsel %vm9492, %v9436, %v9384
  %v9505 = vsel %vm9493, %v9461, %v9385
  %v9506 = vsel %vm9493, %v9437, %v9386
  %v9507 = vsel %vm9494, %v9462, %v9387
  %v9508 = vsel %vm9494, %v9438, %v9388
  %v9509 = vsel %vm9495, %v9463, %v9389
  %v9510 = vsel %vm9495, %v9439, %v9390
  %v9511 = vsel %vm9496, %v9464, %v9391
  %v9512 = vsel %vm9496, %v9440, %v9392
  %9513 = vrot.lane.b32.xlu0 %v9241, 127
  %v9514 = vpop.permute.xlu0 %9513
  %9515 = vrot.lane.b32.xlu0 %v9242, 127
  %v9516 = vpop.permute.xlu0 %9515
  %9517 = vrot.lane.b32.xlu0 %v9243, 127
  %v9518 = vpop.permute.xlu0 %9517
  %9519 = vrot.lane.b32.xlu0 %v9244, 127
  %v9520 = vpop.permute.xlu0 %9519
  %9521 = vrot.lane.b32.xlu0 %v9245, 127
  %v9522 = vpop.permute.xlu0 %9521
  %9523 = vrot.lane.b32.xlu0 %v9246, 127
  %v9524 = vpop.permute.xlu0 %9523
  %9525 = vrot.lane.b32.xlu0 %v9247, 127
  %v9526 = vpop.permute.xlu0 %9525
  %9527 = vrot.lane.b32.xlu0 %v9248, 127
  %v9528 = vpop.permute.xlu0 %9527
  %9529 = vrot.lane.b32.xlu0 %v9249, 127
  %v9530 = vpop.permute.xlu0 %9529
  %9531 = vrot.lane.b32.xlu0 %v9250, 127
  %v9532 = vpop.permute.xlu0 %9531
  %9533 = vrot.lane.b32.xlu0 %v9251, 127
  %v9534 = vpop.permute.xlu0 %9533
  %9535 = vrot.lane.b32.xlu0 %v9252, 127
  %v9536 = vpop.permute.xlu0 %9535
  %9537 = vrot.lane.b32.xlu0 %v9253, 127
  %v9538 = vpop.permute.xlu0 %9537
  %9539 = vrot.lane.b32.xlu0 %v9254, 127
  %v9540 = vpop.permute.xlu0 %9539
  %9541 = vrot.lane.b32.xlu0 %v9255, 127
  %v9542 = vpop.permute.xlu0 %9541
  %9543 = vrot.lane.b32.xlu0 %v9256, 127
  %v9544 = vpop.permute.xlu0 %9543
  %v9545 = vsel %vm1795, %v9514, %v9516
  %v9546 = vsel %vm1795, %v9518, %v9520
  %v9547 = vsel %vm1795, %v9522, %v9524
  %v9548 = vsel %vm1795, %v9526, %v9528
  %v9549 = vsel %vm1795, %v9530, %v9532
  %v9550 = vsel %vm1795, %v9534, %v9536
  %v9551 = vsel %vm1795, %v9538, %v9540
  %v9552 = vsel %vm1795, %v9542, %v9544
  %v9577 = vsel %vm1795, %v9516, %v9514
  %v9578 = vsel %vm1795, %v9520, %v9518
  %v9579 = vsel %vm1795, %v9524, %v9522
  %v9580 = vsel %vm1795, %v9528, %v9526
  %v9581 = vsel %vm1795, %v9532, %v9530
  %v9582 = vsel %vm1795, %v9536, %v9534
  %v9583 = vsel %vm1795, %v9540, %v9538
  %v9584 = vsel %vm1795, %v9544, %v9542
  %9585 = vset.pattern.permute.xlu0 1
  %9586 = vperm.xlu0 %9585, %v8844
  %v9587 = vpop.permute.xlu0 %9586
  %9588 = vset.pattern.permute.xlu0 1
  %9589 = vperm.xlu0 %9588, %v8848
  %v9590 = vpop.permute.xlu0 %9589
  %9591 = vset.pattern.permute.xlu0 1
  %9592 = vperm.xlu0 %9591, %v8852
  %v9593 = vpop.permute.xlu0 %9592
  %9594 = vset.pattern.permute.xlu0 1
  %9595 = vperm.xlu0 %9594, %v8856
  %v9596 = vpop.permute.xlu0 %9595
  %9597 = vset.pattern.permute.xlu0 1
  %9598 = vperm.xlu0 %9597, %v8860
  %v9599 = vpop.permute.xlu0 %9598
  %9600 = vset.pattern.permute.xlu0 1
  %9601 = vperm.xlu0 %9600, %v8864
  %v9602 = vpop.permute.xlu0 %9601
  %9603 = vset.pattern.permute.xlu0 1
  %9604 = vperm.xlu0 %9603, %v8868
  %v9605 = vpop.permute.xlu0 %9604
  %9606 = vset.pattern.permute.xlu0 1
  %9607 = vperm.xlu0 %9606, %v8872
  %v9608 = vpop.permute.xlu0 %9607
  %vm9609 = vcmp.eq.s32.totalorder %v9587, 1
  %vm9610 = vcmp.eq.s32.totalorder %v9590, 1
  %vm9611 = vcmp.eq.s32.totalorder %v9593, 1
  %vm9612 = vcmp.eq.s32.totalorder %v9596, 1
  %vm9613 = vcmp.eq.s32.totalorder %v9599, 1
  %vm9614 = vcmp.eq.s32.totalorder %v9602, 1
  %vm9615 = vcmp.eq.s32.totalorder %v9605, 1
  %vm9616 = vcmp.eq.s32.totalorder %v9608, 1
  %v9617 = vsel %vm9609, %v9545, %v9497
  %v9618 = vsel %vm9609, %v9577, %v9498
  %v9619 = vsel %vm9610, %v9546, %v9499
  %v9620 = vsel %vm9610, %v9578, %v9500
  %v9621 = vsel %vm9611, %v9547, %v9501
  %v9622 = vsel %vm9611, %v9579, %v9502
  %v9623 = vsel %vm9612, %v9548, %v9503
  %v9624 = vsel %vm9612, %v9580, %v9504
  %v9625 = vsel %vm9613, %v9549, %v9505
  %v9626 = vsel %vm9613, %v9581, %v9506
  %v9627 = vsel %vm9614, %v9550, %v9507
  %v9628 = vsel %vm9614, %v9582, %v9508
  %v9629 = vsel %vm9615, %v9551, %v9509
  %v9630 = vsel %vm9615, %v9583, %v9510
  %v9631 = vsel %vm9616, %v9552, %v9511
  %v9632 = vsel %vm9616, %v9584, %v9512
  %9633 = vrot.lane.b32.xlu0 %v9241, 126
  %v9634 = vpop.permute.xlu0 %9633
  %9635 = vrot.lane.b32.xlu0 %v9242, 126
  %v9636 = vpop.permute.xlu0 %9635
  %9637 = vrot.lane.b32.xlu0 %v9243, 126
  %v9638 = vpop.permute.xlu0 %9637
  %9639 = vrot.lane.b32.xlu0 %v9244, 126
  %v9640 = vpop.permute.xlu0 %9639
  %9641 = vrot.lane.b32.xlu0 %v9245, 126
  %v9642 = vpop.permute.xlu0 %9641
  %9643 = vrot.lane.b32.xlu0 %v9246, 126
  %v9644 = vpop.permute.xlu0 %9643
  %9645 = vrot.lane.b32.xlu0 %v9247, 126
  %v9646 = vpop.permute.xlu0 %9645
  %9647 = vrot.lane.b32.xlu0 %v9248, 126
  %v9648 = vpop.permute.xlu0 %9647
  %9649 = vrot.lane.b32.xlu0 %v9249, 126
  %v9650 = vpop.permute.xlu0 %9649
  %9651 = vrot.lane.b32.xlu0 %v9250, 126
  %v9652 = vpop.permute.xlu0 %9651
  %9653 = vrot.lane.b32.xlu0 %v9251, 126
  %v9654 = vpop.permute.xlu0 %9653
  %9655 = vrot.lane.b32.xlu0 %v9252, 126
  %v9656 = vpop.permute.xlu0 %9655
  %9657 = vrot.lane.b32.xlu0 %v9253, 126
  %v9658 = vpop.permute.xlu0 %9657
  %9659 = vrot.lane.b32.xlu0 %v9254, 126
  %v9660 = vpop.permute.xlu0 %9659
  %9661 = vrot.lane.b32.xlu0 %v9255, 126
  %v9662 = vpop.permute.xlu0 %9661
  %9663 = vrot.lane.b32.xlu0 %v9256, 126
  %v9664 = vpop.permute.xlu0 %9663
  %v9665 = vsel %vm1916, %v9634, %v9636
  %v9666 = vsel %vm1916, %v9638, %v9640
  %v9667 = vsel %vm1916, %v9642, %v9644
  %v9668 = vsel %vm1916, %v9646, %v9648
  %v9669 = vsel %vm1916, %v9650, %v9652
  %v9670 = vsel %vm1916, %v9654, %v9656
  %v9671 = vsel %vm1916, %v9658, %v9660
  %v9672 = vsel %vm1916, %v9662, %v9664
  %v9697 = vsel %vm1916, %v9636, %v9634
  %v9698 = vsel %vm1916, %v9640, %v9638
  %v9699 = vsel %vm1916, %v9644, %v9642
  %v9700 = vsel %vm1916, %v9648, %v9646
  %v9701 = vsel %vm1916, %v9652, %v9650
  %v9702 = vsel %vm1916, %v9656, %v9654
  %v9703 = vsel %vm1916, %v9660, %v9658
  %v9704 = vsel %vm1916, %v9664, %v9662
  %9705 = vset.pattern.permute.xlu0 1
  %9706 = vperm.xlu0 %9705, %v9012
  %v9707 = vpop.permute.xlu0 %9706
  %9708 = vset.pattern.permute.xlu0 1
  %9709 = vperm.xlu0 %9708, %v9016
  %v9710 = vpop.permute.xlu0 %9709
  %9711 = vset.pattern.permute.xlu0 1
  %9712 = vperm.xlu0 %9711, %v9020
  %v9713 = vpop.permute.xlu0 %9712
  %9714 = vset.pattern.permute.xlu0 1
  %9715 = vperm.xlu0 %9714, %v9024
  %v9716 = vpop.permute.xlu0 %9715
  %9717 = vset.pattern.permute.xlu0 1
  %9718 = vperm.xlu0 %9717, %v9028
  %v9719 = vpop.permute.xlu0 %9718
  %9720 = vset.pattern.permute.xlu0 1
  %9721 = vperm.xlu0 %9720, %v9032
  %v9722 = vpop.permute.xlu0 %9721
  %9723 = vset.pattern.permute.xlu0 1
  %9724 = vperm.xlu0 %9723, %v9036
  %v9725 = vpop.permute.xlu0 %9724
  %9726 = vset.pattern.permute.xlu0 1
  %9727 = vperm.xlu0 %9726, %v9040
  %v9728 = vpop.permute.xlu0 %9727
  %vm9729 = vcmp.eq.s32.totalorder %v9707, 1
  %vm9730 = vcmp.eq.s32.totalorder %v9710, 1
  %vm9731 = vcmp.eq.s32.totalorder %v9713, 1
  %vm9732 = vcmp.eq.s32.totalorder %v9716, 1
  %vm9733 = vcmp.eq.s32.totalorder %v9719, 1
  %vm9734 = vcmp.eq.s32.totalorder %v9722, 1
  %vm9735 = vcmp.eq.s32.totalorder %v9725, 1
  %vm9736 = vcmp.eq.s32.totalorder %v9728, 1
  %v9737 = vsel %vm9729, %v9665, %v9617
  %v9738 = vsel %vm9729, %v9697, %v9618
  %v9739 = vsel %vm9730, %v9666, %v9619
  %v9740 = vsel %vm9730, %v9698, %v9620
  %v9741 = vsel %vm9731, %v9667, %v9621
  %v9742 = vsel %vm9731, %v9699, %v9622
  %v9743 = vsel %vm9732, %v9668, %v9623
  %v9744 = vsel %vm9732, %v9700, %v9624
  %v9745 = vsel %vm9733, %v9669, %v9625
  %v9746 = vsel %vm9733, %v9701, %v9626
  %v9747 = vsel %vm9734, %v9670, %v9627
  %v9748 = vsel %vm9734, %v9702, %v9628
  %v9749 = vsel %vm9735, %v9671, %v9629
  %v9750 = vsel %vm9735, %v9703, %v9630
  %v9751 = vsel %vm9736, %v9672, %v9631
  %v9752 = vsel %vm9736, %v9704, %v9632
  %9753 = vset.pattern.permute.xlu0 1
  %9754 = vperm.xlu0 %9753, %v8367
  %v9755 = vpop.permute.xlu0 %9754
  %v9756 = vlaneseq
  %v9757 = vshrl.u32 %v9756, 7
  %v9758 = vsub.s32 0, %v9757
  %v9759 = vrot.slane %v9755, %v9758
  %9760 = vset.pattern.permute.xlu0 1
  %9761 = vperm.xlu0 %9760, %v8381
  %v9762 = vpop.permute.xlu0 %9761
  %v9763 = vlaneseq
  %v9764 = vshrl.u32 %v9763, 7
  %v9765 = vsub.s32 0, %v9764
  %v9766 = vrot.slane %v9762, %v9765
  %9767 = vset.pattern.permute.xlu0 1
  %9768 = vperm.xlu0 %9767, %v8389
  %v9769 = vpop.permute.xlu0 %9768
  %v9770 = vlaneseq
  %v9771 = vshrl.u32 %v9770, 7
  %v9772 = vsub.s32 0, %v9771
  %v9773 = vrot.slane %v9769, %v9772
  %9774 = vset.pattern.permute.xlu0 1
  %9775 = vperm.xlu0 %9774, %v8391
  %v9776 = vpop.permute.xlu0 %9775
  %v9777 = vlaneseq
  %v9778 = vshrl.u32 %v9777, 7
  %v9779 = vsub.s32 0, %v9778
  %v9780 = vrot.slane %v9776, %v9779
  %9781 = vset.pattern.permute.xlu0 1
  %9782 = vperm.xlu0 %9781, %v8374
  %v9783 = vpop.permute.xlu0 %9782
  %v9784 = vlaneseq
  %v9785 = vshrl.u32 %v9784, 7
  %v9786 = vsub.s32 0, %v9785
  %v9787 = vrot.slane %v9783, %v9786
  %9788 = vset.pattern.permute.xlu0 1
  %9789 = vperm.xlu0 %9788, %v8388
  %v9790 = vpop.permute.xlu0 %9789
  %v9791 = vlaneseq
  %v9792 = vshrl.u32 %v9791, 7
  %v9793 = vsub.s32 0, %v9792
  %v9794 = vrot.slane %v9790, %v9793
  %9795 = vset.pattern.permute.xlu0 1
  %9796 = vperm.xlu0 %9795, %v8390
  %v9797 = vpop.permute.xlu0 %9796
  %v9798 = vlaneseq
  %v9799 = vshrl.u32 %v9798, 7
  %v9800 = vsub.s32 0, %v9799
  %v9801 = vrot.slane %v9797, %v9800
  %9802 = vset.pattern.permute.xlu0 1
  %9803 = vperm.xlu0 %9802, %v8392
  %v9804 = vpop.permute.xlu0 %9803
  %v9805 = vlaneseq
  %v9806 = vshrl.u32 %v9805, 7
  %v9807 = vsub.s32 0, %v9806
  %v9808 = vrot.slane %v9804, %v9807
  %v9809 = vadd.s32 %v27, %v9759
  %v9810 = vadd.s32 %v28, %v9759
  %v9811 = vadd.s32 %v27, %v9766
  %v9812 = vadd.s32 %v28, %v9766
  %v9813 = vadd.s32 %v27, %v9773
  %v9814 = vadd.s32 %v28, %v9773
  %v9815 = vadd.s32 %v27, %v9780
  %v9816 = vadd.s32 %v28, %v9780
  %v9817 = vadd.s32 %v27, %v9787
  %v9818 = vadd.s32 %v28, %v9787
  %v9819 = vadd.s32 %v27, %v9794
  %v9820 = vadd.s32 %v28, %v9794
  %v9821 = vadd.s32 %v27, %v9801
  %v9822 = vadd.s32 %v28, %v9801
  %v9823 = vadd.s32 %v27, %v9808
  %v9824 = vadd.s32 %v28, %v9808
  %vm9825 = vcmp.ge.s32.totalorder %v9809, 0
  %vm9826 = vcmp.ge.s32.totalorder %v9810, 0
  %vm9827 = vcmp.ge.s32.totalorder %v9811, 0
  %vm9828 = vcmp.ge.s32.totalorder %v9812, 0
  %vm9829 = vcmp.ge.s32.totalorder %v9813, 0
  %vm9830 = vcmp.ge.s32.totalorder %v9814, 0
  %vm9831 = vcmp.ge.s32.totalorder %v9815, 0
  %vm9832 = vcmp.ge.s32.totalorder %v9816, 0
  %vm9833 = vcmp.ge.s32.totalorder %v9817, 0
  %vm9834 = vcmp.ge.s32.totalorder %v9818, 0
  %vm9835 = vcmp.ge.s32.totalorder %v9819, 0
  %vm9836 = vcmp.ge.s32.totalorder %v9820, 0
  %vm9837 = vcmp.ge.s32.totalorder %v9821, 0
  %vm9838 = vcmp.ge.s32.totalorder %v9822, 0
  %vm9839 = vcmp.ge.s32.totalorder %v9823, 0
  %vm9840 = vcmp.ge.s32.totalorder %v9824, 0
  %vm9841 = vcmp.lt.s32.totalorder %v9809, 16
  %vm9842 = vcmp.lt.s32.totalorder %v9810, 16
  %vm9843 = vcmp.lt.s32.totalorder %v9811, 16
  %vm9844 = vcmp.lt.s32.totalorder %v9812, 16
  %vm9845 = vcmp.lt.s32.totalorder %v9813, 16
  %vm9846 = vcmp.lt.s32.totalorder %v9814, 16
  %vm9847 = vcmp.lt.s32.totalorder %v9815, 16
  %vm9848 = vcmp.lt.s32.totalorder %v9816, 16
  %vm9849 = vcmp.lt.s32.totalorder %v9817, 16
  %vm9850 = vcmp.lt.s32.totalorder %v9818, 16
  %vm9851 = vcmp.lt.s32.totalorder %v9819, 16
  %vm9852 = vcmp.lt.s32.totalorder %v9820, 16
  %vm9853 = vcmp.lt.s32.totalorder %v9821, 16
  %vm9854 = vcmp.lt.s32.totalorder %v9822, 16
  %vm9855 = vcmp.lt.s32.totalorder %v9823, 16
  %vm9856 = vcmp.lt.s32.totalorder %v9824, 16
  %vm9857 = vmand %vm9825, %vm9841
  %vm9858 = vmand %vm9826, %vm9842
  %vm9859 = vmand %vm9827, %vm9843
  %vm9860 = vmand %vm9828, %vm9844
  %vm9861 = vmand %vm9829, %vm9845
  %vm9862 = vmand %vm9830, %vm9846
  %vm9863 = vmand %vm9831, %vm9847
  %vm9864 = vmand %vm9832, %vm9848
  %vm9865 = vmand %vm9833, %vm9849
  %vm9866 = vmand %vm9834, %vm9850
  %vm9867 = vmand %vm9835, %vm9851
  %vm9868 = vmand %vm9836, %vm9852
  %vm9869 = vmand %vm9837, %vm9853
  %vm9870 = vmand %vm9838, %vm9854
  %vm9871 = vmand %vm9839, %vm9855
  %vm9872 = vmand %vm9840, %vm9856
  %v9873 = vsel %vm9857, 1, 0
  %v9874 = vsel %vm9858, 1, 0
  %v9875 = vsel %vm9859, 1, 0
  %v9876 = vsel %vm9860, 1, 0
  %v9877 = vsel %vm9861, 1, 0
  %v9878 = vsel %vm9862, 1, 0
  %v9879 = vsel %vm9863, 1, 0
  %v9880 = vsel %vm9864, 1, 0
  %v9881 = vsel %vm9865, 1, 0
  %v9882 = vsel %vm9866, 1, 0
  %v9883 = vsel %vm9867, 1, 0
  %v9884 = vsel %vm9868, 1, 0
  %v9885 = vsel %vm9869, 1, 0
  %v9886 = vsel %vm9870, 1, 0
  %v9887 = vsel %vm9871, 1, 0
  %v9888 = vsel %vm9872, 1, 0
  %vm9889 = vcmp.eq.s32.totalorder %v9873, 1
  %vm9890 = vcmp.eq.s32.totalorder %v9874, 1
  %vm9891 = vcmp.eq.s32.totalorder %v9875, 1
  %vm9892 = vcmp.eq.s32.totalorder %v9876, 1
  %vm9893 = vcmp.eq.s32.totalorder %v9877, 1
  %vm9894 = vcmp.eq.s32.totalorder %v9878, 1
  %vm9895 = vcmp.eq.s32.totalorder %v9879, 1
  %vm9896 = vcmp.eq.s32.totalorder %v9880, 1
  %vm9897 = vcmp.eq.s32.totalorder %v9881, 1
  %vm9898 = vcmp.eq.s32.totalorder %v9882, 1
  %vm9899 = vcmp.eq.s32.totalorder %v9883, 1
  %vm9900 = vcmp.eq.s32.totalorder %v9884, 1
  %vm9901 = vcmp.eq.s32.totalorder %v9885, 1
  %vm9902 = vcmp.eq.s32.totalorder %v9886, 1
  %vm9903 = vcmp.eq.s32.totalorder %v9887, 1
  %vm9904 = vcmp.eq.s32.totalorder %v9888, 1
  %v9905 = vsel %vm9889, %v9737, 0.0
  %v9906 = vsel %vm9890, %v9738, 0.0
  %v9907 = vsel %vm9891, %v9739, 0.0
  %v9908 = vsel %vm9892, %v9740, 0.0
  %v9909 = vsel %vm9893, %v9741, 0.0
  %v9910 = vsel %vm9894, %v9742, 0.0
  %v9911 = vsel %vm9895, %v9743, 0.0
  %v9912 = vsel %vm9896, %v9744, 0.0
  %v9913 = vsel %vm9897, %v9745, 0.0
  %v9914 = vsel %vm9898, %v9746, 0.0
  %v9915 = vsel %vm9899, %v9747, 0.0
  %v9916 = vsel %vm9900, %v9748, 0.0
  %v9917 = vsel %vm9901, %v9749, 0.0
  %v9918 = vsel %vm9902, %v9750, 0.0
  %v9919 = vsel %vm9903, %v9751, 0.0
  %v9920 = vsel %vm9904, %v9752, 0.0
  %v9921 = vsub.s32 %v8367, 4
  %v9922 = vsub.s32 %v8381, 4
  %v9923 = vsub.s32 %v8389, 4
  %v9924 = vsub.s32 %v8391, 4
  %v9925 = vsub.s32 %v8374, 4
  %v9926 = vsub.s32 %v8388, 4
  %v9927 = vsub.s32 %v8390, 4
  %v9928 = vsub.s32 %v8392, 4
  %9929 = vset.pattern.permute.xlu0 2
  %9930 = vperm.xlu0 %9929, %v9921
  %v9931 = vpop.permute.xlu0 %9930
  %v9932 = vlaneseq
  %v9933 = vshrl.u32 %v9932, 7
  %v9934 = vsub.s32 0, %v9933
  %v9935 = vrot.slane %v9931, %v9934
  %9936 = vset.pattern.permute.xlu0 2
  %9937 = vperm.xlu0 %9936, %v9922
  %v9938 = vpop.permute.xlu0 %9937
  %v9939 = vlaneseq
  %v9940 = vshrl.u32 %v9939, 7
  %v9941 = vsub.s32 0, %v9940
  %v9942 = vrot.slane %v9938, %v9941
  %9943 = vset.pattern.permute.xlu0 2
  %9944 = vperm.xlu0 %9943, %v9923
  %v9945 = vpop.permute.xlu0 %9944
  %v9946 = vlaneseq
  %v9947 = vshrl.u32 %v9946, 7
  %v9948 = vsub.s32 0, %v9947
  %v9949 = vrot.slane %v9945, %v9948
  %9950 = vset.pattern.permute.xlu0 2
  %9951 = vperm.xlu0 %9950, %v9924
  %v9952 = vpop.permute.xlu0 %9951
  %v9953 = vlaneseq
  %v9954 = vshrl.u32 %v9953, 7
  %v9955 = vsub.s32 0, %v9954
  %v9956 = vrot.slane %v9952, %v9955
  %9957 = vset.pattern.permute.xlu0 2
  %9958 = vperm.xlu0 %9957, %v9925
  %v9959 = vpop.permute.xlu0 %9958
  %v9960 = vlaneseq
  %v9961 = vshrl.u32 %v9960, 7
  %v9962 = vsub.s32 0, %v9961
  %v9963 = vrot.slane %v9959, %v9962
  %9964 = vset.pattern.permute.xlu0 2
  %9965 = vperm.xlu0 %9964, %v9926
  %v9966 = vpop.permute.xlu0 %9965
  %v9967 = vlaneseq
  %v9968 = vshrl.u32 %v9967, 7
  %v9969 = vsub.s32 0, %v9968
  %v9970 = vrot.slane %v9966, %v9969
  %9971 = vset.pattern.permute.xlu0 2
  %9972 = vperm.xlu0 %9971, %v9927
  %v9973 = vpop.permute.xlu0 %9972
  %v9974 = vlaneseq
  %v9975 = vshrl.u32 %v9974, 7
  %v9976 = vsub.s32 0, %v9975
  %v9977 = vrot.slane %v9973, %v9976
  %9978 = vset.pattern.permute.xlu0 2
  %9979 = vperm.xlu0 %9978, %v9928
  %v9980 = vpop.permute.xlu0 %9979
  %v9981 = vlaneseq
  %v9982 = vshrl.u32 %v9981, 7
  %v9983 = vsub.s32 0, %v9982
  %v9984 = vrot.slane %v9980, %v9983
  %vm9985 = vcmp.ge.s32.totalorder %v29, %v9935
  %vm9986 = vcmp.ge.s32.totalorder %v30, %v9935
  %vm9987 = vcmp.ge.s32.totalorder %v29, %v9942
  %vm9988 = vcmp.ge.s32.totalorder %v30, %v9942
  %vm9989 = vcmp.ge.s32.totalorder %v29, %v9949
  %vm9990 = vcmp.ge.s32.totalorder %v30, %v9949
  %vm9991 = vcmp.ge.s32.totalorder %v29, %v9956
  %vm9992 = vcmp.ge.s32.totalorder %v30, %v9956
  %vm9993 = vcmp.ge.s32.totalorder %v29, %v9963
  %vm9994 = vcmp.ge.s32.totalorder %v30, %v9963
  %vm9995 = vcmp.ge.s32.totalorder %v29, %v9970
  %vm9996 = vcmp.ge.s32.totalorder %v30, %v9970
  %vm9997 = vcmp.ge.s32.totalorder %v29, %v9977
  %vm9998 = vcmp.ge.s32.totalorder %v30, %v9977
  %vm9999 = vcmp.ge.s32.totalorder %v29, %v9984
  %vm10000 = vcmp.ge.s32.totalorder %v30, %v9984
  %v10001 = vadd.s32 %v9921, 8
  %v10002 = vadd.s32 %v9922, 8
  %v10003 = vadd.s32 %v9923, 8
  %v10004 = vadd.s32 %v9924, 8
  %v10005 = vadd.s32 %v9925, 8
  %v10006 = vadd.s32 %v9926, 8
  %v10007 = vadd.s32 %v9927, 8
  %v10008 = vadd.s32 %v9928, 8
  %10009 = vset.pattern.permute.xlu0 2
  %10010 = vperm.xlu0 %10009, %v10001
  %v10011 = vpop.permute.xlu0 %10010
  %v10012 = vlaneseq
  %v10013 = vshrl.u32 %v10012, 7
  %v10014 = vsub.s32 0, %v10013
  %v10015 = vrot.slane %v10011, %v10014
  %10016 = vset.pattern.permute.xlu0 2
  %10017 = vperm.xlu0 %10016, %v10002
  %v10018 = vpop.permute.xlu0 %10017
  %v10019 = vlaneseq
  %v10020 = vshrl.u32 %v10019, 7
  %v10021 = vsub.s32 0, %v10020
  %v10022 = vrot.slane %v10018, %v10021
  %10023 = vset.pattern.permute.xlu0 2
  %10024 = vperm.xlu0 %10023, %v10003
  %v10025 = vpop.permute.xlu0 %10024
  %v10026 = vlaneseq
  %v10027 = vshrl.u32 %v10026, 7
  %v10028 = vsub.s32 0, %v10027
  %v10029 = vrot.slane %v10025, %v10028
  %10030 = vset.pattern.permute.xlu0 2
  %10031 = vperm.xlu0 %10030, %v10004
  %v10032 = vpop.permute.xlu0 %10031
  %v10033 = vlaneseq
  %v10034 = vshrl.u32 %v10033, 7
  %v10035 = vsub.s32 0, %v10034
  %v10036 = vrot.slane %v10032, %v10035
  %10037 = vset.pattern.permute.xlu0 2
  %10038 = vperm.xlu0 %10037, %v10005
  %v10039 = vpop.permute.xlu0 %10038
  %v10040 = vlaneseq
  %v10041 = vshrl.u32 %v10040, 7
  %v10042 = vsub.s32 0, %v10041
  %v10043 = vrot.slane %v10039, %v10042
  %10044 = vset.pattern.permute.xlu0 2
  %10045 = vperm.xlu0 %10044, %v10006
  %v10046 = vpop.permute.xlu0 %10045
  %v10047 = vlaneseq
  %v10048 = vshrl.u32 %v10047, 7
  %v10049 = vsub.s32 0, %v10048
  %v10050 = vrot.slane %v10046, %v10049
  %10051 = vset.pattern.permute.xlu0 2
  %10052 = vperm.xlu0 %10051, %v10007
  %v10053 = vpop.permute.xlu0 %10052
  %v10054 = vlaneseq
  %v10055 = vshrl.u32 %v10054, 7
  %v10056 = vsub.s32 0, %v10055
  %v10057 = vrot.slane %v10053, %v10056
  %10058 = vset.pattern.permute.xlu0 2
  %10059 = vperm.xlu0 %10058, %v10008
  %v10060 = vpop.permute.xlu0 %10059
  %v10061 = vlaneseq
  %v10062 = vshrl.u32 %v10061, 7
  %v10063 = vsub.s32 0, %v10062
  %v10064 = vrot.slane %v10060, %v10063
  %vm10065 = vcmp.lt.s32.totalorder %v29, %v10015
  %vm10066 = vcmp.lt.s32.totalorder %v30, %v10015
  %vm10067 = vcmp.lt.s32.totalorder %v29, %v10022
  %vm10068 = vcmp.lt.s32.totalorder %v30, %v10022
  %vm10069 = vcmp.lt.s32.totalorder %v29, %v10029
  %vm10070 = vcmp.lt.s32.totalorder %v30, %v10029
  %vm10071 = vcmp.lt.s32.totalorder %v29, %v10036
  %vm10072 = vcmp.lt.s32.totalorder %v30, %v10036
  %vm10073 = vcmp.lt.s32.totalorder %v29, %v10043
  %vm10074 = vcmp.lt.s32.totalorder %v30, %v10043
  %vm10075 = vcmp.lt.s32.totalorder %v29, %v10050
  %vm10076 = vcmp.lt.s32.totalorder %v30, %v10050
  %vm10077 = vcmp.lt.s32.totalorder %v29, %v10057
  %vm10078 = vcmp.lt.s32.totalorder %v30, %v10057
  %vm10079 = vcmp.lt.s32.totalorder %v29, %v10064
  %vm10080 = vcmp.lt.s32.totalorder %v30, %v10064
  %vm10081 = vmand %vm9985, %vm10065
  %vm10082 = vmand %vm9986, %vm10066
  %vm10083 = vmand %vm9987, %vm10067
  %vm10084 = vmand %vm9988, %vm10068
  %vm10085 = vmand %vm9989, %vm10069
  %vm10086 = vmand %vm9990, %vm10070
  %vm10087 = vmand %vm9991, %vm10071
  %vm10088 = vmand %vm9992, %vm10072
  %vm10089 = vmand %vm9993, %vm10073
  %vm10090 = vmand %vm9994, %vm10074
  %vm10091 = vmand %vm9995, %vm10075
  %vm10092 = vmand %vm9996, %vm10076
  %vm10093 = vmand %vm9997, %vm10077
  %vm10094 = vmand %vm9998, %vm10078
  %vm10095 = vmand %vm9999, %vm10079
  %vm10096 = vmand %vm10000, %vm10080
  %10097 = vset.pattern.permute.xlu0 3
  %10098 = vperm.xlu0 %10097, %v9921
  %v10099 = vpop.permute.xlu0 %10098
  %v10100 = vlaneseq
  %v10101 = vshrl.u32 %v10100, 7
  %v10102 = vsub.s32 0, %v10101
  %v10103 = vrot.slane %v10099, %v10102
  %10104 = vset.pattern.permute.xlu0 3
  %10105 = vperm.xlu0 %10104, %v9922
  %v10106 = vpop.permute.xlu0 %10105
  %v10107 = vlaneseq
  %v10108 = vshrl.u32 %v10107, 7
  %v10109 = vsub.s32 0, %v10108
  %v10110 = vrot.slane %v10106, %v10109
  %10111 = vset.pattern.permute.xlu0 3
  %10112 = vperm.xlu0 %10111, %v9923
  %v10113 = vpop.permute.xlu0 %10112
  %v10114 = vlaneseq
  %v10115 = vshrl.u32 %v10114, 7
  %v10116 = vsub.s32 0, %v10115
  %v10117 = vrot.slane %v10113, %v10116
  %10118 = vset.pattern.permute.xlu0 3
  %10119 = vperm.xlu0 %10118, %v9924
  %v10120 = vpop.permute.xlu0 %10119
  %v10121 = vlaneseq
  %v10122 = vshrl.u32 %v10121, 7
  %v10123 = vsub.s32 0, %v10122
  %v10124 = vrot.slane %v10120, %v10123
  %10125 = vset.pattern.permute.xlu0 3
  %10126 = vperm.xlu0 %10125, %v9925
  %v10127 = vpop.permute.xlu0 %10126
  %v10128 = vlaneseq
  %v10129 = vshrl.u32 %v10128, 7
  %v10130 = vsub.s32 0, %v10129
  %v10131 = vrot.slane %v10127, %v10130
  %10132 = vset.pattern.permute.xlu0 3
  %10133 = vperm.xlu0 %10132, %v9926
  %v10134 = vpop.permute.xlu0 %10133
  %v10135 = vlaneseq
  %v10136 = vshrl.u32 %v10135, 7
  %v10137 = vsub.s32 0, %v10136
  %v10138 = vrot.slane %v10134, %v10137
  %10139 = vset.pattern.permute.xlu0 3
  %10140 = vperm.xlu0 %10139, %v9927
  %v10141 = vpop.permute.xlu0 %10140
  %v10142 = vlaneseq
  %v10143 = vshrl.u32 %v10142, 7
  %v10144 = vsub.s32 0, %v10143
  %v10145 = vrot.slane %v10141, %v10144
  %10146 = vset.pattern.permute.xlu0 3
  %10147 = vperm.xlu0 %10146, %v9928
  %v10148 = vpop.permute.xlu0 %10147
  %v10149 = vlaneseq
  %v10150 = vshrl.u32 %v10149, 7
  %v10151 = vsub.s32 0, %v10150
  %v10152 = vrot.slane %v10148, %v10151
  %vm10153 = vcmp.ge.s32.totalorder %v27, %v10103
  %vm10154 = vcmp.ge.s32.totalorder %v28, %v10103
  %vm10155 = vcmp.ge.s32.totalorder %v27, %v10110
  %vm10156 = vcmp.ge.s32.totalorder %v28, %v10110
  %vm10157 = vcmp.ge.s32.totalorder %v27, %v10117
  %vm10158 = vcmp.ge.s32.totalorder %v28, %v10117
  %vm10159 = vcmp.ge.s32.totalorder %v27, %v10124
  %vm10160 = vcmp.ge.s32.totalorder %v28, %v10124
  %vm10161 = vcmp.ge.s32.totalorder %v27, %v10131
  %vm10162 = vcmp.ge.s32.totalorder %v28, %v10131
  %vm10163 = vcmp.ge.s32.totalorder %v27, %v10138
  %vm10164 = vcmp.ge.s32.totalorder %v28, %v10138
  %vm10165 = vcmp.ge.s32.totalorder %v27, %v10145
  %vm10166 = vcmp.ge.s32.totalorder %v28, %v10145
  %vm10167 = vcmp.ge.s32.totalorder %v27, %v10152
  %vm10168 = vcmp.ge.s32.totalorder %v28, %v10152
  %vm10169 = vmand %vm10081, %vm10153
  %vm10170 = vmand %vm10082, %vm10154
  %vm10171 = vmand %vm10083, %vm10155
  %vm10172 = vmand %vm10084, %vm10156
  %vm10173 = vmand %vm10085, %vm10157
  %vm10174 = vmand %vm10086, %vm10158
  %vm10175 = vmand %vm10087, %vm10159
  %vm10176 = vmand %vm10088, %vm10160
  %vm10177 = vmand %vm10089, %vm10161
  %vm10178 = vmand %vm10090, %vm10162
  %vm10179 = vmand %vm10091, %vm10163
  %vm10180 = vmand %vm10092, %vm10164
  %vm10181 = vmand %vm10093, %vm10165
  %vm10182 = vmand %vm10094, %vm10166
  %vm10183 = vmand %vm10095, %vm10167
  %vm10184 = vmand %vm10096, %vm10168
  %10185 = vset.pattern.permute.xlu0 3
  %10186 = vperm.xlu0 %10185, %v10001
  %v10187 = vpop.permute.xlu0 %10186
  %v10188 = vlaneseq
  %v10189 = vshrl.u32 %v10188, 7
  %v10190 = vsub.s32 0, %v10189
  %v10191 = vrot.slane %v10187, %v10190
  %10192 = vset.pattern.permute.xlu0 3
  %10193 = vperm.xlu0 %10192, %v10002
  %v10194 = vpop.permute.xlu0 %10193
  %v10195 = vlaneseq
  %v10196 = vshrl.u32 %v10195, 7
  %v10197 = vsub.s32 0, %v10196
  %v10198 = vrot.slane %v10194, %v10197
  %10199 = vset.pattern.permute.xlu0 3
  %10200 = vperm.xlu0 %10199, %v10003
  %v10201 = vpop.permute.xlu0 %10200
  %v10202 = vlaneseq
  %v10203 = vshrl.u32 %v10202, 7
  %v10204 = vsub.s32 0, %v10203
  %v10205 = vrot.slane %v10201, %v10204
  %10206 = vset.pattern.permute.xlu0 3
  %10207 = vperm.xlu0 %10206, %v10004
  %v10208 = vpop.permute.xlu0 %10207
  %v10209 = vlaneseq
  %v10210 = vshrl.u32 %v10209, 7
  %v10211 = vsub.s32 0, %v10210
  %v10212 = vrot.slane %v10208, %v10211
  %10213 = vset.pattern.permute.xlu0 3
  %10214 = vperm.xlu0 %10213, %v10005
  %v10215 = vpop.permute.xlu0 %10214
  %v10216 = vlaneseq
  %v10217 = vshrl.u32 %v10216, 7
  %v10218 = vsub.s32 0, %v10217
  %v10219 = vrot.slane %v10215, %v10218
  %10220 = vset.pattern.permute.xlu0 3
  %10221 = vperm.xlu0 %10220, %v10006
  %v10222 = vpop.permute.xlu0 %10221
  %v10223 = vlaneseq
  %v10224 = vshrl.u32 %v10223, 7
  %v10225 = vsub.s32 0, %v10224
  %v10226 = vrot.slane %v10222, %v10225
  %10227 = vset.pattern.permute.xlu0 3
  %10228 = vperm.xlu0 %10227, %v10007
  %v10229 = vpop.permute.xlu0 %10228
  %v10230 = vlaneseq
  %v10231 = vshrl.u32 %v10230, 7
  %v10232 = vsub.s32 0, %v10231
  %v10233 = vrot.slane %v10229, %v10232
  %10234 = vset.pattern.permute.xlu0 3
  %10235 = vperm.xlu0 %10234, %v10008
  %v10236 = vpop.permute.xlu0 %10235
  %v10237 = vlaneseq
  %v10238 = vshrl.u32 %v10237, 7
  %v10239 = vsub.s32 0, %v10238
  %v10240 = vrot.slane %v10236, %v10239
  %vm10241 = vcmp.lt.s32.totalorder %v27, %v10191
  %vm10242 = vcmp.lt.s32.totalorder %v28, %v10191
  %vm10243 = vcmp.lt.s32.totalorder %v27, %v10198
  %vm10244 = vcmp.lt.s32.totalorder %v28, %v10198
  %vm10245 = vcmp.lt.s32.totalorder %v27, %v10205
  %vm10246 = vcmp.lt.s32.totalorder %v28, %v10205
  %vm10247 = vcmp.lt.s32.totalorder %v27, %v10212
  %vm10248 = vcmp.lt.s32.totalorder %v28, %v10212
  %vm10249 = vcmp.lt.s32.totalorder %v27, %v10219
  %vm10250 = vcmp.lt.s32.totalorder %v28, %v10219
  %vm10251 = vcmp.lt.s32.totalorder %v27, %v10226
  %vm10252 = vcmp.lt.s32.totalorder %v28, %v10226
  %vm10253 = vcmp.lt.s32.totalorder %v27, %v10233
  %vm10254 = vcmp.lt.s32.totalorder %v28, %v10233
  %vm10255 = vcmp.lt.s32.totalorder %v27, %v10240
  %vm10256 = vcmp.lt.s32.totalorder %v28, %v10240
  %vm10257 = vmand %vm10169, %vm10241
  %vm10258 = vmand %vm10170, %vm10242
  %vm10259 = vmand %vm10171, %vm10243
  %vm10260 = vmand %vm10172, %vm10244
  %vm10261 = vmand %vm10173, %vm10245
  %vm10262 = vmand %vm10174, %vm10246
  %vm10263 = vmand %vm10175, %vm10247
  %vm10264 = vmand %vm10176, %vm10248
  %vm10265 = vmand %vm10177, %vm10249
  %vm10266 = vmand %vm10178, %vm10250
  %vm10267 = vmand %vm10179, %vm10251
  %vm10268 = vmand %vm10180, %vm10252
  %vm10269 = vmand %vm10181, %vm10253
  %vm10270 = vmand %vm10182, %vm10254
  %vm10271 = vmand %vm10183, %vm10255
  %vm10272 = vmand %vm10184, %vm10256
  %v10273 = vsel %vm10257, 1, 0
  %v10274 = vsel %vm10258, 1, 0
  %v10275 = vsel %vm10259, 1, 0
  %v10276 = vsel %vm10260, 1, 0
  %v10277 = vsel %vm10261, 1, 0
  %v10278 = vsel %vm10262, 1, 0
  %v10279 = vsel %vm10263, 1, 0
  %v10280 = vsel %vm10264, 1, 0
  %v10281 = vsel %vm10265, 1, 0
  %v10282 = vsel %vm10266, 1, 0
  %v10283 = vsel %vm10267, 1, 0
  %v10284 = vsel %vm10268, 1, 0
  %v10285 = vsel %vm10269, 1, 0
  %v10286 = vsel %vm10270, 1, 0
  %v10287 = vsel %vm10271, 1, 0
  %v10288 = vsel %vm10272, 1, 0
  %vm10289 = vcmp.eq.s32.totalorder %v10273, 1
  %vm10290 = vcmp.eq.s32.totalorder %v10274, 1
  %vm10291 = vcmp.eq.s32.totalorder %v10275, 1
  %vm10292 = vcmp.eq.s32.totalorder %v10276, 1
  %vm10293 = vcmp.eq.s32.totalorder %v10277, 1
  %vm10294 = vcmp.eq.s32.totalorder %v10278, 1
  %vm10295 = vcmp.eq.s32.totalorder %v10279, 1
  %vm10296 = vcmp.eq.s32.totalorder %v10280, 1
  %vm10297 = vcmp.eq.s32.totalorder %v10281, 1
  %vm10298 = vcmp.eq.s32.totalorder %v10282, 1
  %vm10299 = vcmp.eq.s32.totalorder %v10283, 1
  %vm10300 = vcmp.eq.s32.totalorder %v10284, 1
  %vm10301 = vcmp.eq.s32.totalorder %v10285, 1
  %vm10302 = vcmp.eq.s32.totalorder %v10286, 1
  %vm10303 = vcmp.eq.s32.totalorder %v10287, 1
  %vm10304 = vcmp.eq.s32.totalorder %v10288, 1
  %v10305 = vsel %vm10289, 0.0, %v9905
  %v10306 = vsel %vm10290, 0.0, %v9906
  %v10307 = vsel %vm10291, 0.0, %v9907
  %v10308 = vsel %vm10292, 0.0, %v9908
  %v10309 = vsel %vm10293, 0.0, %v9909
  %v10310 = vsel %vm10294, 0.0, %v9910
  %v10311 = vsel %vm10295, 0.0, %v9911
  %v10312 = vsel %vm10296, 0.0, %v9912
  %v10313 = vsel %vm10297, 0.0, %v9913
  %v10314 = vsel %vm10298, 0.0, %v9914
  %v10315 = vsel %vm10299, 0.0, %v9915
  %v10316 = vsel %vm10300, 0.0, %v9916
  %v10317 = vsel %vm10301, 0.0, %v9917
  %v10318 = vsel %vm10302, 0.0, %v9918
  %v10319 = vsel %vm10303, 0.0, %v9919
  %v10320 = vsel %vm10304, 0.0, %v9920
  %v10337 = vcombine.low %v10305, %v10306
  %v10338 = vcombine.low %v10307, %v10308
  %v10339 = vcombine.low %v10309, %v10310
  %v10340 = vcombine.low %v10311, %v10312
  %v10341 = vcombine.low %v10313, %v10314
  %v10342 = vcombine.low %v10315, %v10316
  %v10343 = vcombine.low %v10317, %v10318
  %v10344 = vcombine.low %v10319, %v10320
  %s10353 = scalar_lea.vmem %s3, 192
  %10354 = vst [vmem:[%s10353] sm:$0x77] %v10337
  %10355 = vst [vmem:[%s10353 + $0x8] sm:$0x77] %v10338
  %10356 = vst [vmem:[%s10353 + $0x10] sm:$0x77] %v10339
  %10357 = vst [vmem:[%s10353 + $0x18] sm:$0x77] %v10340
  %10358 = vst [vmem:[%s10353 + $0x20] sm:$0x77] %v10341
  %10359 = vst [vmem:[%s10353 + $0x28] sm:$0x77] %v10342
  %10360 = vst [vmem:[%s10353 + $0x30] sm:$0x77] %v10343
  %10361 = vst [vmem:[%s10353 + $0x38] sm:$0x77] %v10344
  // Predicated region
  $region14: #{tpu_custom_call.1} parent=0 // pred_check
    _
  $region15: #{tpu_custom_call.1} parent=0 // pred_check_branch
    %10363 = sbr.rel (0) target = $region17
  $region16: #{tpu_custom_call.1} parent=0 // pred_region
    _
  $region17: #{tpu_custom_call.1} parent=0 // pred_fallthru
    _
  // Predicated region
  $region18: #{tpu_custom_call.1} parent=0 // pred_check
    _
  $region19: #{tpu_custom_call.1} parent=0 // pred_check_branch
    %10365 = sbr.rel (0) target = $region21
  $region20: #{tpu_custom_call.1} parent=0 // pred_region
    _
  $region21: #{tpu_custom_call.1} parent=0 // pred_fallthru
    _

</llo_original>
